<compile_context>
chip_gen: v6e
topology: v6e:2x2x1
jax: 0.10.0
libtpu: 0.0.40
codegen_flags: <defaults>
</compile_context>

<pallas_src>
import functools

import jax
import jax.numpy as jnp
from jax.experimental import pallas as pl
from jax.experimental.pallas import tpu as pltpu


# ----------------------------------------------------------------------------
# shared in-kernel math: first MLP layer with tiny K (=3) on the VPU
# ----------------------------------------------------------------------------
def _vpu_first_layer(x, w1, b1):
    """x: (M, K) with K tiny; w1: (K, H); b1: (1, H).  K broadcast-FMAs on the
    VPU instead of an MXU matmul that would waste >= 125/128 of the
    contraction dimension.  Statically unrolled."""
    h = jnp.zeros((x.shape[0], w1.shape[1]), jnp.float32) + b1
    for c in range(x.shape[1]):                       # K <= 4, unrolled
        h = h + x[:, c:c + 1] * w1[c:c + 1, :]
    return h


# ----------------------------------------------------------------------------
# Pallas kernel 1: merged online+target 2-layer point MLP (lane-dense output)
#   w1_both : (3, 2H)   = [W1_online | W1_target]
#   w2_block: (2H, 2D)  = blockdiag(W2_online, W2_target)
#   output  : (tm, 2D)  = [online feats | target feats]   (2D = 128 -> unmasked vst)
# ----------------------------------------------------------------------------
def _dual_mlp2_kernel(x_ref, w1_ref, b1_ref, w2_ref, b2_ref, o_ref):
    h = jnp.maximum(_vpu_first_layer(x_ref[...], w1_ref[...], b1_ref[...]), 0.0)
    out = jnp.dot(h, w2_ref[...], preferred_element_type=jnp.float32) + b2_ref[...]
    o_ref[...] = out.astype(o_ref.dtype)


def pallas_dual_mlp2(x2d, w1, b1, w2, b2, *, row_tile=1024):
    """x2d: (M, K) -> (M, Dout).  VMEM-budgeted row tiling; no jnp.pad copies
    (Pallas masks the partial tail block when M % tm != 0)."""
    M, Kin = x2d.shape
    H = w1.shape[1]
    Dout = w2.shape[1]
    b1 = b1.reshape(1, -1)
    b2 = b2.reshape(1, -1)
    if M <= row_tile:
        tm, grid = M, 1                 # single full block (always layout-legal)
    else:
        tm, grid = row_tile, pl.cdiv(M, row_tile)
    return pl.pallas_call(
        _dual_mlp2_kernel,
        out_shape=jax.ShapeDtypeStruct((M, Dout), jnp.float32),
        grid_spec=pltpu.PrefetchScalarGridSpec(
            num_scalar_prefetch=0,
            grid=(grid,),
            in_specs=[
                pl.BlockSpec((tm, Kin), lambda i: (i, 0)),
                pl.BlockSpec((Kin, H), lambda i: (0, 0)),
                pl.BlockSpec((1, H), lambda i: (0, 0)),
                pl.BlockSpec((H, Dout), lambda i: (0, 0)),
                pl.BlockSpec((1, Dout), lambda i: (0, 0)),
            ],
            out_specs=pl.BlockSpec((tm, Dout), lambda i: (i, 0)),
        ),
        compiler_params=pltpu.CompilerParams(
            dimension_semantics=("parallel",)),
    )(x2d, w1, b1, w2, b2)


# ----------------------------------------------------------------------------
# Pallas kernel 2: patch encoder (2-layer MLP) + max-pool over each patch
# ----------------------------------------------------------------------------
def _patch_mlp_pool_kernel(x_ref, w1_ref, b1_ref, w2_ref, b2_ref, o_ref, *, kp):
    h = jnp.maximum(_vpu_first_layer(x_ref[...], w1_ref[...], b1_ref[...]), 0.0)
    f = jnp.dot(h, w2_ref[...], preferred_element_type=jnp.float32) + b2_ref[...]
    tp = o_ref.shape[0]
    # Leading-dim split reshape (last dim untouched) -> no relayout; sublane
    # reduce goes to the XLU which has slack here.
    o_ref[...] = jnp.max(f.reshape(tp, kp, f.shape[-1]), axis=1).astype(o_ref.dtype)


def pallas_patch_encode_pool(x2d, w1, b1, w2, b2, *, kp, patch_tile=128):
    """x2d: (T*kp, K) -> (T, Dout): per-point MLP then max over the kp points
    of each patch, fused in one kernel."""
    M, Kin = x2d.shape
    T = M // kp
    assert T * kp == M
    H = w1.shape[1]
    Dout = w2.shape[1]
    b1 = b1.reshape(1, -1)
    b2 = b2.reshape(1, -1)
    if T <= patch_tile or T % patch_tile != 0:
        tp, grid = T, 1
    else:
        tp, grid = patch_tile, T // patch_tile
    tm = tp * kp
    return pl.pallas_call(
        functools.partial(_patch_mlp_pool_kernel, kp=kp),
        out_shape=jax.ShapeDtypeStruct((T, Dout), jnp.float32),
        grid_spec=pltpu.PrefetchScalarGridSpec(
            num_scalar_prefetch=0,
            grid=(grid,),
            in_specs=[
                pl.BlockSpec((tm, Kin), lambda i: (i, 0)),
                pl.BlockSpec((Kin, H), lambda i: (0, 0)),
                pl.BlockSpec((1, H), lambda i: (0, 0)),
                pl.BlockSpec((H, Dout), lambda i: (0, 0)),
                pl.BlockSpec((1, Dout), lambda i: (0, 0)),
            ],
            out_specs=pl.BlockSpec((tp, Dout), lambda i: (i, 0)),
        ),
        compiler_params=pltpu.CompilerParams(
            dimension_semantics=("parallel",)),
    )(x2d, w1, b1, w2, b2)


# ----------------------------------------------------------------------------
# Pallas kernel 3: fused cross attention (Q/K/V/O proj + softmax) + projection MLP
#   grid=(2,) over {online, target} attention parameter sets.
#   Query slab (both encoders' features, 128 wide), KV patch features and the
#   projection weights use constant index maps -> DMA'd once, resident in VMEM.
#   wq is a zero-padded (2, 2D, D) stack so param set i reads only its own
#   encoder's 64 feature columns via the matmul itself.
# ----------------------------------------------------------------------------
def _xattn_proj_kernel(q_ref, kv_ref, wq_ref, bq_ref, wk_ref, bk_ref,
                       wv_ref, bv_ref, wo_ref, bo_ref,
                       pw1_ref, pb1_ref, pw2_ref, pb2_ref, o_ref,
                       *, scale, views, batch):
    D = wk_ref.shape[1]
    B = batch
    S = kv_ref.shape[1]
    M_q = q_ref.shape[0]
    N = M_q // (views * B)

    # projections (padded Wq selects online vs target encoder columns)
    q = jnp.dot(q_ref[...], wq_ref[0], preferred_element_type=jnp.float32) + bq_ref[0]
    kvf = kv_ref[...].reshape(B * S, D)
    k = jnp.dot(kvf, wk_ref[0], preferred_element_type=jnp.float32) + bk_ref[0]
    v = jnp.dot(kvf, wv_ref[0], preferred_element_type=jnp.float32) + bv_ref[0]
    k = jnp.concatenate([k.reshape(B, S, D)] * views, axis=0)     # (views*B, S, D)
    v = jnp.concatenate([v.reshape(B, S, D)] * views, axis=0)
    qb = q.reshape(views * B, N, D)

    # attention (batched over views*B)
    s = jnp.einsum('bnd,bsd->bns', qb, k,
                   preferred_element_type=jnp.float32) * scale    # (vB, N, S)
    m = jnp.max(s, axis=-1, keepdims=True)
    p = jnp.exp(s - m)
    p = p / jnp.sum(p, axis=-1, keepdims=True)                    # exact: costs ~nothing here
    attn = jnp.einsum('bns,bsd->bnd', p, v,
                      preferred_element_type=jnp.float32).reshape(M_q, D)
    out = jnp.dot(attn, wo_ref[0], preferred_element_type=jnp.float32) + bo_ref[0]

    # fused projection MLP (64 -> 64 -> 32), shared online projection head
    h = jnp.maximum(
        jnp.dot(out, pw1_ref[...], preferred_element_type=jnp.float32) + pb1_ref[...], 0.0)
    proj = jnp.dot(h, pw2_ref[...], preferred_element_type=jnp.float32) + pb2_ref[...]
    o_ref[0] = proj.astype(o_ref.dtype)


def pallas_xattn_proj(enc_out, kv_feats, wq, bq, wk, bk, wv, bv, wo, bo,
                      pw1, pb1, pw2, pb2, *, views, batch):
    """enc_out: (M_q, 2D) [online | target] encoder feats, kv_feats: (B, S, D).
    Returns (2, M_q, Dp): projected cross-attention output per param set."""
    M_q, D2 = enc_out.shape
    B, S, D = kv_feats.shape
    Dp = pw2.shape[1]
    scale = 1.0 / (D ** 0.5)
    # TODO(synk): for large M_q, add a second grid axis tiling rows of enc_out
    # (kv/weights stay resident via the constant index maps); cast dot operands
    # to bf16 with f32 accumulation when shapes grow MXU-bound.
    return pl.pallas_call(
        functools.partial(_xattn_proj_kernel, scale=scale, views=views, batch=batch),
        out_shape=jax.ShapeDtypeStruct((2, M_q, Dp), jnp.float32),
        grid_spec=pltpu.PrefetchScalarGridSpec(
            num_scalar_prefetch=0,
            grid=(2,),
            in_specs=[
                pl.BlockSpec((M_q, D2), lambda i: (0, 0)),       # queries, resident
                pl.BlockSpec((B, S, D), lambda i: (0, 0, 0)),    # KV feats, resident
                pl.BlockSpec((1, D2, D), lambda i: (i, 0, 0)),   # Wq (zero-padded stack)
                pl.BlockSpec((1, 1, D), lambda i: (i, 0, 0)),    # bq
                pl.BlockSpec((1, D, D), lambda i: (i, 0, 0)),    # Wk
                pl.BlockSpec((1, 1, D), lambda i: (i, 0, 0)),    # bk
                pl.BlockSpec((1, D, D), lambda i: (i, 0, 0)),    # Wv
                pl.BlockSpec((1, 1, D), lambda i: (i, 0, 0)),    # bv
                pl.BlockSpec((1, D, D), lambda i: (i, 0, 0)),    # Wo
                pl.BlockSpec((1, 1, D), lambda i: (i, 0, 0)),    # bo
                pl.BlockSpec((D, D), lambda i: (0, 0)),          # proj W1, resident
                pl.BlockSpec((1, D), lambda i: (0, 0)),          # proj b1
                pl.BlockSpec((D, Dp), lambda i: (0, 0)),         # proj W2
                pl.BlockSpec((1, Dp), lambda i: (0, 0)),         # proj b2
            ],
            out_specs=pl.BlockSpec((1, M_q, Dp), lambda i: (i, 0, 0)),
        ),
        compiler_params=pltpu.CompilerParams(
            dimension_semantics=("parallel",)),                  # maps to both v7x TCs
    )(enc_out, kv_feats, wq, bq, wk, bk, wv, bv, wo, bo, pw1, pb1, pw2, pb2)


# ----------------------------------------------------------------------------
# Parameters (built once in f32 -> no per-call astype copies)
# ----------------------------------------------------------------------------
def init_params(key, d_hidden=32, d_model=64, d_proj=32):
    ks = jax.random.split(key, 16)
    s = 0.05

    def lin(k, din, dout):
        kw, kb = jax.random.split(k)
        return {"w": s * jax.random.normal(kw, (din, dout), jnp.float32),
                "b": s * jax.random.normal(kb, (dout,), jnp.float32)}

    return {
        "encoder":       {"l1": lin(ks[0], 3, d_hidden), "l2": lin(ks[1], d_hidden, d_model)},
        "patch_encoder": {"l1": lin(ks[2], 3, d_hidden), "l2": lin(ks[3], d_hidden, d_model)},
        "xattn": {"q": lin(ks[4], d_model, d_model), "k": lin(ks[5], d_model, d_model),
                  "v": lin(ks[6], d_model, d_model), "o": lin(ks[7], d_model, d_model)},
        "projection":    {"l1": lin(ks[8], d_model, d_model), "l2": lin(ks[9], d_model, d_proj)},
    }


# ----------------------------------------------------------------------------
# Glue (plain JAX) — patch division, downsample stand-in, EMA, loss
# ----------------------------------------------------------------------------
def divide_patches(pts, num_patches=8):
    """(B, N, 3) -> (B, P, N//P, 3)."""
    # TODO(synk): reference uses FPS + kNN grouping; deterministic consecutive grouping here.
    B, N, _ = pts.shape
    return pts.reshape(B, num_patches, N // num_patches, 3)


def down_sample(pts, n_out):
    """Strided stand-in for farthest-point sampling (unused for task_type != 'cls')."""
    # TODO(synk): real FPS is data-dependent; strided subsampling used as placeholder.
    stride = max(1, pts.shape[1] // n_out)
    ds = pts[:, ::stride][:, :n_out]
    return None, ds


def momentum_update(online_params, target_params, m=0.99):
    """target <- copy(online) on first call, EMA afterwards (forward-only here)."""
    if target_params is None:
        return jax.tree_util.tree_map(lambda x: x, online_params)
    return jax.tree_util.tree_map(lambda t, o: m * t + (1.0 - m) * o,
                                  target_params, online_params)


def _neg_cosine(p_, z):
    """BYOL-style negative cosine similarity on already-projected features."""
    # TODO(synk): exact seg_loss_fn of the reference repo is not in the module.
    z = jax.lax.stop_gradient(z)
    p_ = p_ / (jnp.linalg.norm(p_, axis=-1, keepdims=True) + 1e-8)
    z = z / (jnp.linalg.norm(z, axis=-1, keepdims=True) + 1e-8)
    return jnp.mean(2.0 - 2.0 * jnp.sum(p_ * z, axis=-1))


# ----------------------------------------------------------------------------
# jitted forward (pure): glue ops fuse, the 3 pallas_calls run back-to-back
# ----------------------------------------------------------------------------
def _forward_impl(params, tenc, txa, aug1, aug2, *, num_patches, task_type):
    p = params
    if task_type != "cls":
        ds1, ds2 = aug1, aug2
    else:
        _, ds1 = down_sample(aug1, 1024)
        _, ds2 = down_sample(aug2, 1024)

    B, N, _ = ds1.shape
    P = num_patches
    Kp = N // P
    enc = p["encoder"]
    H = enc["l1"]["w"].shape[1]
    D = enc["l2"]["w"].shape[1]

    # ---- merged online+target point encoder: ONE pallas_call, lane-dense (M, 2D) output
    x_all = jnp.concatenate([ds1, ds2], axis=0).reshape(2 * B * N, 3)   # view-major rows
    w1_both = jnp.concatenate([enc["l1"]["w"], tenc["l1"]["w"]], axis=1)           # (3, 2H)
    b1_both = jnp.concatenate([enc["l1"]["b"], tenc["l1"]["b"]], axis=0)           # (2H,)
    zH = jnp.zeros((H, D), jnp.float32)
    w2_block = jnp.concatenate(
        [jnp.concatenate([enc["l2"]["w"], zH], axis=1),
         jnp.concatenate([zH, tenc["l2"]["w"]], axis=1)], axis=0)                  # (2H, 2D)
    b2_both = jnp.concatenate([enc["l2"]["b"], tenc["l2"]["b"]], axis=0)           # (2D,)
    enc_out = pallas_dual_mlp2(x_all, w1_both, b1_both, w2_block, b2_both)         # (2B*N, 2D)

    # ---- patch features: both views in ONE fused MLP + in-kernel max-pool
    pe = p["patch_encoder"]
    patches_all = jnp.concatenate(
        [divide_patches(ds1, P), divide_patches(ds2, P)], axis=1)                  # (B, 2P, Kp, 3)
    patch_features = pallas_patch_encode_pool(
        patches_all.reshape(B * 2 * P * Kp, 3),
        pe["l1"]["w"], pe["l1"]["b"], pe["l2"]["w"], pe["l2"]["b"],
        kp=Kp).reshape(B, 2 * P, D)                                # == cat(pf1, pf2, dim=1)

    # ---- fused cross attention + projection: ONE pallas_call, grid=(2,) param sets
    ox, tx, pr = p["xattn"], txa, p["projection"]
    zD = jnp.zeros((D, D), jnp.float32)
    wq = jnp.stack([jnp.concatenate([ox["q"]["w"], zD], axis=0),
                    jnp.concatenate([zD, tx["q"]["w"]], axis=0)])                  # (2, 2D, D)
    bq = jnp.stack([ox["q"]["b"], tx["q"]["b"]]).reshape(2, 1, D)
    wk = jnp.stack([ox["k"]["w"], tx["k"]["w"]])
    bk = jnp.stack([ox["k"]["b"], tx["k"]["b"]]).reshape(2, 1, D)
    wv = jnp.stack([ox["v"]["w"], tx["v"]["w"]])
    bv = jnp.stack([ox["v"]["b"], tx["v"]["b"]]).reshape(2, 1, D)
    wo = jnp.stack([ox["o"]["w"], tx["o"]["w"]])
    bo = jnp.stack([ox["o"]["b"], tx["o"]["b"]]).reshape(2, 1, D)
    proj = pallas_xattn_proj(
        enc_out, patch_features, wq, bq, wk, bk, wv, bv, wo, bo,
        pr["l1"]["w"], pr["l1"]["b"].reshape(1, -1),
        pr["l2"]["w"], pr["l2"]["b"].reshape(1, -1),
        views=2, batch=B)                                          # (2, 2B*N, Dp)

    Dp = pr["l2"]["w"].shape[1]
    proj = proj.reshape(2, 2, B, N, Dp)      # (param_set, view, B, N, Dp)
    #   param_set 0 = online attention (online encoder feats), 1 = target/target
    loss_1 = _neg_cosine(proj[0, 0], proj[1, 1])   # online(ds1) vs target(ds2)
    loss_2 = _neg_cosine(proj[0, 1], proj[1, 0])   # online(ds2) vs target(ds1)
    return loss_1 + loss_2


# ----------------------------------------------------------------------------
# Base_Structure equivalent
# ----------------------------------------------------------------------------
class BaseStructurePallas:
    def __init__(self, task_type, params, num_patches=8):
        self.task_type = task_type
        self.params = params
        self.num_patches = num_patches
        self.target_encoder_params = None
        self.target_xattn_params = None
        self._fwd = jax.jit(functools.partial(
            _forward_impl, num_patches=num_patches, task_type=task_type))

    def forward(self, aug1, aug2):
        self.target_encoder_params = momentum_update(
            self.params["encoder"], self.target_encoder_params)
        self.target_xattn_params = momentum_update(
            self.params["xattn"], self.target_xattn_params)
        return self._fwd(self.params, self.target_encoder_params,
                         self.target_xattn_params, aug1, aug2)


# ----------------------------------------------------------------------------
if __name__ == "__main__":
    B, N = 2, 128            # batch, points per cloud
    P = 8                    # patches per cloud (Kp = 16 points each)

    key = jax.random.PRNGKey(0)
    k_par, k_a1, k_a2 = jax.random.split(key, 3)

    params = init_params(k_par)
    aug1 = jax.random.normal(k_a1, (B, N, 3), jnp.float32)
    aug2 = jax.random.normal(k_a2, (B, N, 3), jnp.float32)

    model = BaseStructurePallas(task_type="seg", params=params, num_patches=P)
    loss = model.forward(aug1, aug2)
    loss = jax.block_until_ready(loss)
    assert loss.shape == () and jnp.isfinite(loss)
    print("KERNEL_OK")
</pallas_src>

<mosaic_0001>
module attributes {stable_mosaic.version = 11 : i64} {
  func.func @_patch_mlp_pool_kernel(%arg0: i32, %arg1: memref<512x3xf32, #tpu.memory_space<vmem>>, %arg2: memref<3x32xf32, #tpu.memory_space<vmem>>, %arg3: memref<1x32xf32, #tpu.memory_space<vmem>>, %arg4: memref<32x64xf32, #tpu.memory_space<vmem>>, %arg5: memref<1x64xf32, #tpu.memory_space<vmem>>, %arg6: memref<32x64xf32, #tpu.memory_space<vmem>>) attributes {dimension_semantics = [#tpu.dimension_semantics<parallel>], iteration_bounds = array<i64: 1>, scalar_prefetch = 0 : i64, scratch_operands = 0 : i64, tpu.core_type = #tpu.core_type<tc>, window_params = [{transform_indices = @transform_0, window_bounds = array<i64: 512, 3>}, {pipeline_mode = #tpu.pipeline_mode<synchronous>, transform_indices = @transform_1, window_bounds = array<i64: 3, 32>}, {pipeline_mode = #tpu.pipeline_mode<synchronous>, transform_indices = @transform_2, window_bounds = array<i64: 1, 32>}, {pipeline_mode = #tpu.pipeline_mode<synchronous>, transform_indices = @transform_3, window_bounds = array<i64: 32, 64>}, {pipeline_mode = #tpu.pipeline_mode<synchronous>, transform_indices = @transform_4, window_bounds = array<i64: 1, 64>}, {transform_indices = @transform_5, window_bounds = array<i64: 32, 64>}]} {
    %c0 = arith.constant 0 : index
    %c0_0 = arith.constant 0 : index
    %0 = vector.load %arg1[%c0, %c0_0] : memref<512x3xf32, #tpu.memory_space<vmem>>, vector<512x3xf32>
    %c0_1 = arith.constant 0 : index
    %c0_2 = arith.constant 0 : index
    %1 = vector.load %arg2[%c0_1, %c0_2] : memref<3x32xf32, #tpu.memory_space<vmem>>, vector<3x32xf32>
    %c0_3 = arith.constant 0 : index
    %c0_4 = arith.constant 0 : index
    %2 = vector.load %arg3[%c0_3, %c0_4] : memref<1x32xf32, #tpu.memory_space<vmem>>, vector<1x32xf32>
    %cst = arith.constant 0.000000e+00 : f32
    %3 = vector.broadcast %cst : f32 to vector<512x32xf32>
    %4 = vector.broadcast %2 : vector<1x32xf32> to vector<512x32xf32>
    %5 = arith.addf %3, %4 : vector<512x32xf32>
    %6 = vector.extract_strided_slice %0 {offsets = [0, 0], sizes = [512, 1], strides = [1, 1]} : vector<512x3xf32> to vector<512x1xf32>
    %7 = vector.extract_strided_slice %1 {offsets = [0, 0], sizes = [1, 32], strides = [1, 1]} : vector<3x32xf32> to vector<1x32xf32>
    %8 = vector.broadcast %6 : vector<512x1xf32> to vector<512x32xf32>
    %9 = vector.broadcast %7 : vector<1x32xf32> to vector<512x32xf32>
    %10 = arith.mulf %8, %9 : vector<512x32xf32>
    %11 = arith.addf %5, %10 : vector<512x32xf32>
    %12 = vector.extract_strided_slice %0 {offsets = [0, 1], sizes = [512, 1], strides = [1, 1]} : vector<512x3xf32> to vector<512x1xf32>
    %13 = vector.extract_strided_slice %1 {offsets = [1, 0], sizes = [1, 32], strides = [1, 1]} : vector<3x32xf32> to vector<1x32xf32>
    %14 = vector.broadcast %12 : vector<512x1xf32> to vector<512x32xf32>
    %15 = vector.broadcast %13 : vector<1x32xf32> to vector<512x32xf32>
    %16 = arith.mulf %14, %15 : vector<512x32xf32>
    %17 = arith.addf %11, %16 : vector<512x32xf32>
    %18 = vector.extract_strided_slice %0 {offsets = [0, 2], sizes = [512, 1], strides = [1, 1]} : vector<512x3xf32> to vector<512x1xf32>
    %19 = vector.extract_strided_slice %1 {offsets = [2, 0], sizes = [1, 32], strides = [1, 1]} : vector<3x32xf32> to vector<1x32xf32>
    %20 = vector.broadcast %18 : vector<512x1xf32> to vector<512x32xf32>
    %21 = vector.broadcast %19 : vector<1x32xf32> to vector<512x32xf32>
    %22 = arith.mulf %20, %21 : vector<512x32xf32>
    %23 = arith.addf %17, %22 : vector<512x32xf32>
    %cst_5 = arith.constant 0.000000e+00 : f32
    %24 = vector.broadcast %cst_5 : f32 to vector<512x32xf32>
    %25 = arith.maximumf %23, %24 : vector<512x32xf32>
    %c0_6 = arith.constant 0 : index
    %c0_7 = arith.constant 0 : index
    %26 = vector.load %arg4[%c0_6, %c0_7] : memref<32x64xf32, #tpu.memory_space<vmem>>, vector<32x64xf32>
    %cst_8 = arith.constant dense<0.000000e+00> : vector<512x64xf32>
    %27 = tpu.matmul %25, %26, %cst_8 {dimension_numbers = #tpu.dot_dimension_numbers<[1], [0], [0], [1], [0, 0, 1, 1], [], []>} : vector<512x32xf32>, vector<32x64xf32>, vector<512x64xf32> -> vector<512x64xf32>
    %c0_9 = arith.constant 0 : index
    %c0_10 = arith.constant 0 : index
    %28 = vector.load %arg5[%c0_9, %c0_10] : memref<1x64xf32, #tpu.memory_space<vmem>>, vector<1x64xf32>
    %29 = vector.broadcast %28 : vector<1x64xf32> to vector<512x64xf32>
    %30 = arith.addf %27, %29 : vector<512x64xf32>
    %31 = vector.shape_cast %30 : vector<512x64xf32> to vector<32x16x64xf32>
    %cst_11 = arith.constant dense<0xFF800000> : vector<32x64xf32>
    %32 = vector.multi_reduction <maximumf>, %31, %cst_11 [1] : vector<32x16x64xf32> to vector<32x64xf32>
    %c0_12 = arith.constant 0 : index
    %c0_13 = arith.constant 0 : index
    %33 = vector.load %arg6[%c0_12, %c0_13] : memref<32x64xf32, #tpu.memory_space<vmem>>, vector<32x64xf32>
    tpu.vector_store %arg6[%c0_12, %c0_13], %32 {strides = array<i32>} : memref<32x64xf32, #tpu.memory_space<vmem>>, vector<32x64xf32>,
    return
  }
  func.func @transform_0(%arg0: i32) -> (i32, i32) {
    %c0_i32 = arith.constant 0 : i32
    %c0_i32_0 = arith.constant 0 : i32
    return %arg0, %c0_i32 : i32, i32
  }
  func.func @transform_1(%arg0: i32) -> (i32, i32) {
    %c0_i32 = arith.constant 0 : i32
    %c0_i32_0 = arith.constant 0 : i32
    %c0_i32_1 = arith.constant 0 : i32
    return %c0_i32, %c0_i32_0 : i32, i32
  }
  func.func @transform_2(%arg0: i32) -> (i32, i32) {
    %c0_i32 = arith.constant 0 : i32
    %c0_i32_0 = arith.constant 0 : i32
    %c0_i32_1 = arith.constant 0 : i32
    return %c0_i32, %c0_i32_0 : i32, i32
  }
  func.func @transform_3(%arg0: i32) -> (i32, i32) {
    %c0_i32 = arith.constant 0 : i32
    %c0_i32_0 = arith.constant 0 : i32
    %c0_i32_1 = arith.constant 0 : i32
    return %c0_i32, %c0_i32_0 : i32, i32
  }
  func.func @transform_4(%arg0: i32) -> (i32, i32) {
    %c0_i32 = arith.constant 0 : i32
    %c0_i32_0 = arith.constant 0 : i32
    %c0_i32_1 = arith.constant 0 : i32
    return %c0_i32, %c0_i32_0 : i32, i32
  }
  func.func @transform_5(%arg0: i32) -> (i32, i32) {
    %c0_i32 = arith.constant 0 : i32
    %c0_i32_0 = arith.constant 0 : i32
    return %arg0, %c0_i32 : i32, i32
  }
}

module attributes {stable_mosaic.version = 11 : i64} {
  func.func @_dual_mlp2_kernel(%arg0: i32, %arg1: memref<512x3xf32, #tpu.memory_space<vmem>>, %arg2: memref<3x64xf32, #tpu.memory_space<vmem>>, %arg3: memref<1x64xf32, #tpu.memory_space<vmem>>, %arg4: memref<64x128xf32, #tpu.memory_space<vmem>>, %arg5: memref<1x128xf32, #tpu.memory_space<vmem>>, %arg6: memref<512x128xf32, #tpu.memory_space<vmem>>) attributes {dimension_semantics = [#tpu.dimension_semantics<parallel>], iteration_bounds = array<i64: 1>, scalar_prefetch = 0 : i64, scratch_operands = 0 : i64, tpu.core_type = #tpu.core_type<tc>, window_params = [{transform_indices = @transform_0, window_bounds = array<i64: 512, 3>}, {pipeline_mode = #tpu.pipeline_mode<synchronous>, transform_indices = @transform_1, window_bounds = array<i64: 3, 64>}, {pipeline_mode = #tpu.pipeline_mode<synchronous>, transform_indices = @transform_2, window_bounds = array<i64: 1, 64>}, {pipeline_mode = #tpu.pipeline_mode<synchronous>, transform_indices = @transform_3, window_bounds = array<i64: 64, 128>}, {pipeline_mode = #tpu.pipeline_mode<synchronous>, transform_indices = @transform_4, window_bounds = array<i64: 1, 128>}, {transform_indices = @transform_5, window_bounds = array<i64: 512, 128>}]} {
    %c0 = arith.constant 0 : index
    %c0_0 = arith.constant 0 : index
    %0 = vector.load %arg1[%c0, %c0_0] : memref<512x3xf32, #tpu.memory_space<vmem>>, vector<512x3xf32>
    %c0_1 = arith.constant 0 : index
    %c0_2 = arith.constant 0 : index
    %1 = vector.load %arg2[%c0_1, %c0_2] : memref<3x64xf32, #tpu.memory_space<vmem>>, vector<3x64xf32>
    %c0_3 = arith.constant 0 : index
    %c0_4 = arith.constant 0 : index
    %2 = vector.load %arg3[%c0_3, %c0_4] : memref<1x64xf32, #tpu.memory_space<vmem>>, vector<1x64xf32>
    %cst = arith.constant 0.000000e+00 : f32
    %3 = vector.broadcast %cst : f32 to vector<512x64xf32>
    %4 = vector.broadcast %2 : vector<1x64xf32> to vector<512x64xf32>
    %5 = arith.addf %3, %4 : vector<512x64xf32>
    %6 = vector.extract_strided_slice %0 {offsets = [0, 0], sizes = [512, 1], strides = [1, 1]} : vector<512x3xf32> to vector<512x1xf32>
    %7 = vector.extract_strided_slice %1 {offsets = [0, 0], sizes = [1, 64], strides = [1, 1]} : vector<3x64xf32> to vector<1x64xf32>
    %8 = vector.broadcast %6 : vector<512x1xf32> to vector<512x64xf32>
    %9 = vector.broadcast %7 : vector<1x64xf32> to vector<512x64xf32>
    %10 = arith.mulf %8, %9 : vector<512x64xf32>
    %11 = arith.addf %5, %10 : vector<512x64xf32>
    %12 = vector.extract_strided_slice %0 {offsets = [0, 1], sizes = [512, 1], strides = [1, 1]} : vector<512x3xf32> to vector<512x1xf32>
    %13 = vector.extract_strided_slice %1 {offsets = [1, 0], sizes = [1, 64], strides = [1, 1]} : vector<3x64xf32> to vector<1x64xf32>
    %14 = vector.broadcast %12 : vector<512x1xf32> to vector<512x64xf32>
    %15 = vector.broadcast %13 : vector<1x64xf32> to vector<512x64xf32>
    %16 = arith.mulf %14, %15 : vector<512x64xf32>
    %17 = arith.addf %11, %16 : vector<512x64xf32>
    %18 = vector.extract_strided_slice %0 {offsets = [0, 2], sizes = [512, 1], strides = [1, 1]} : vector<512x3xf32> to vector<512x1xf32>
    %19 = vector.extract_strided_slice %1 {offsets = [2, 0], sizes = [1, 64], strides = [1, 1]} : vector<3x64xf32> to vector<1x64xf32>
    %20 = vector.broadcast %18 : vector<512x1xf32> to vector<512x64xf32>
    %21 = vector.broadcast %19 : vector<1x64xf32> to vector<512x64xf32>
    %22 = arith.mulf %20, %21 : vector<512x64xf32>
    %23 = arith.addf %17, %22 : vector<512x64xf32>
    %cst_5 = arith.constant 0.000000e+00 : f32
    %24 = vector.broadcast %cst_5 : f32 to vector<512x64xf32>
    %25 = arith.maximumf %23, %24 : vector<512x64xf32>
    %c0_6 = arith.constant 0 : index
    %c0_7 = arith.constant 0 : index
    %26 = vector.load %arg4[%c0_6, %c0_7] : memref<64x128xf32, #tpu.memory_space<vmem>>, vector<64x128xf32>
    %cst_8 = arith.constant dense<0.000000e+00> : vector<512x128xf32>
    %27 = tpu.matmul %25, %26, %cst_8 {dimension_numbers = #tpu.dot_dimension_numbers<[1], [0], [0], [1], [0, 0, 1, 1], [], []>} : vector<512x64xf32>, vector<64x128xf32>, vector<512x128xf32> -> vector<512x128xf32>
    %c0_9 = arith.constant 0 : index
    %c0_10 = arith.constant 0 : index
    %28 = vector.load %arg5[%c0_9, %c0_10] : memref<1x128xf32, #tpu.memory_space<vmem>>, vector<1x128xf32>
    %29 = vector.broadcast %28 : vector<1x128xf32> to vector<512x128xf32>
    %30 = arith.addf %27, %29 : vector<512x128xf32>
    %c0_11 = arith.constant 0 : index
    %c0_12 = arith.constant 0 : index
    %31 = vector.load %arg6[%c0_11, %c0_12] : memref<512x128xf32, #tpu.memory_space<vmem>>, vector<512x128xf32>
    tpu.vector_store %arg6[%c0_11, %c0_12], %30 {strides = array<i32>} : memref<512x128xf32, #tpu.memory_space<vmem>>, vector<512x128xf32>,
    return
  }
  func.func @transform_0(%arg0: i32) -> (i32, i32) {
    %c0_i32 = arith.constant 0 : i32
    %c0_i32_0 = arith.constant 0 : i32
    return %arg0, %c0_i32 : i32, i32
  }
  func.func @transform_1(%arg0: i32) -> (i32, i32) {
    %c0_i32 = arith.constant 0 : i32
    %c0_i32_0 = arith.constant 0 : i32
    %c0_i32_1 = arith.constant 0 : i32
    return %c0_i32, %c0_i32_0 : i32, i32
  }
  func.func @transform_2(%arg0: i32) -> (i32, i32) {
    %c0_i32 = arith.constant 0 : i32
    %c0_i32_0 = arith.constant 0 : i32
    %c0_i32_1 = arith.constant 0 : i32
    return %c0_i32, %c0_i32_0 : i32, i32
  }
  func.func @transform_3(%arg0: i32) -> (i32, i32) {
    %c0_i32 = arith.constant 0 : i32
    %c0_i32_0 = arith.constant 0 : i32
    %c0_i32_1 = arith.constant 0 : i32
    return %c0_i32, %c0_i32_0 : i32, i32
  }
  func.func @transform_4(%arg0: i32) -> (i32, i32) {
    %c0_i32 = arith.constant 0 : i32
    %c0_i32_0 = arith.constant 0 : i32
    %c0_i32_1 = arith.constant 0 : i32
    return %c0_i32, %c0_i32_0 : i32, i32
  }
  func.func @transform_5(%arg0: i32) -> (i32, i32) {
    %c0_i32 = arith.constant 0 : i32
    %c0_i32_0 = arith.constant 0 : i32
    return %arg0, %c0_i32 : i32, i32
  }
}

module attributes {stable_mosaic.version = 11 : i64} {
  func.func @_xattn_proj_kernel(%arg0: i32, %arg1: memref<512x128xf32, #tpu.memory_space<vmem>>, %arg2: memref<2x16x64xf32, #tpu.memory_space<vmem>>, %arg3: memref<1x128x64xf32, #tpu.memory_space<vmem>>, %arg4: memref<1x1x64xf32, #tpu.memory_space<vmem>>, %arg5: memref<1x64x64xf32, #tpu.memory_space<vmem>>, %arg6: memref<1x1x64xf32, #tpu.memory_space<vmem>>, %arg7: memref<1x64x64xf32, #tpu.memory_space<vmem>>, %arg8: memref<1x1x64xf32, #tpu.memory_space<vmem>>, %arg9: memref<1x64x64xf32, #tpu.memory_space<vmem>>, %arg10: memref<1x1x64xf32, #tpu.memory_space<vmem>>, %arg11: memref<64x64xf32, #tpu.memory_space<vmem>>, %arg12: memref<1x64xf32, #tpu.memory_space<vmem>>, %arg13: memref<64x32xf32, #tpu.memory_space<vmem>>, %arg14: memref<1x32xf32, #tpu.memory_space<vmem>>, %arg15: memref<1x512x32xf32, #tpu.memory_space<vmem>>) attributes {dimension_semantics = [#tpu.dimension_semantics<parallel>], iteration_bounds = array<i64: 2>, scalar_prefetch = 0 : i64, scratch_operands = 0 : i64, tpu.core_type = #tpu.core_type<tc>, window_params = [{pipeline_mode = #tpu.pipeline_mode<synchronous>, transform_indices = @transform_0, window_bounds = array<i64: 512, 128>}, {pipeline_mode = #tpu.pipeline_mode<synchronous>, transform_indices = @transform_1, window_bounds = array<i64: 2, 16, 64>}, {transform_indices = @transform_2, window_bounds = array<i64: 1, 128, 64>}, {transform_indices = @transform_3, window_bounds = array<i64: 1, 1, 64>}, {transform_indices = @transform_4, window_bounds = array<i64: 1, 64, 64>}, {transform_indices = @transform_5, window_bounds = array<i64: 1, 1, 64>}, {transform_indices = @transform_6, window_bounds = array<i64: 1, 64, 64>}, {transform_indices = @transform_7, window_bounds = array<i64: 1, 1, 64>}, {transform_indices = @transform_8, window_bounds = array<i64: 1, 64, 64>}, {transform_indices = @transform_9, window_bounds = array<i64: 1, 1, 64>}, {pipeline_mode = #tpu.pipeline_mode<synchronous>, transform_indices = @transform_10, window_bounds = array<i64: 64, 64>}, {pipeline_mode = #tpu.pipeline_mode<synchronous>, transform_indices = @transform_11, window_bounds = array<i64: 1, 64>}, {pipeline_mode = #tpu.pipeline_mode<synchronous>, transform_indices = @transform_12, window_bounds = array<i64: 64, 32>}, {pipeline_mode = #tpu.pipeline_mode<synchronous>, transform_indices = @transform_13, window_bounds = array<i64: 1, 32>}, {transform_indices = @transform_14, window_bounds = array<i64: 1, 512, 32>}]} {
    %c0 = arith.constant 0 : index
    %c0_0 = arith.constant 0 : index
    %0 = vector.load %arg1[%c0, %c0_0] : memref<512x128xf32, #tpu.memory_space<vmem>>, vector<512x128xf32>
    %c0_1 = arith.constant 0 : index
    %c0_2 = arith.constant 0 : index
    %c0_3 = arith.constant 0 : index
    %1 = vector.load %arg3[%c0_1, %c0_2, %c0_3] : memref<1x128x64xf32, #tpu.memory_space<vmem>>, vector<1x128x64xf32>
    %2 = vector.shape_cast %1 : vector<1x128x64xf32> to vector<128x64xf32>
    %cst = arith.constant dense<0.000000e+00> : vector<512x64xf32>
    %3 = tpu.matmul %0, %2, %cst {dimension_numbers = #tpu.dot_dimension_numbers<[1], [0], [0], [1], [0, 0, 1, 1], [], []>} : vector<512x128xf32>, vector<128x64xf32>, vector<512x64xf32> -> vector<512x64xf32>
    %c0_4 = arith.constant 0 : index
    %c0_5 = arith.constant 0 : index
    %c0_6 = arith.constant 0 : index
    %4 = vector.load %arg4[%c0_4, %c0_5, %c0_6] : memref<1x1x64xf32, #tpu.memory_space<vmem>>, vector<1x1x64xf32>
    %5 = vector.shape_cast %4 : vector<1x1x64xf32> to vector<1x64xf32>
    %6 = vector.broadcast %5 : vector<1x64xf32> to vector<512x64xf32>
    %7 = arith.addf %3, %6 : vector<512x64xf32>
    %c0_7 = arith.constant 0 : index
    %c0_8 = arith.constant 0 : index
    %c0_9 = arith.constant 0 : index
    %8 = vector.load %arg2[%c0_7, %c0_8, %c0_9] : memref<2x16x64xf32, #tpu.memory_space<vmem>>, vector<2x16x64xf32>
    %9 = vector.shape_cast %8 : vector<2x16x64xf32> to vector<32x64xf32>
    %c0_10 = arith.constant 0 : index
    %c0_11 = arith.constant 0 : index
    %c0_12 = arith.constant 0 : index
    %10 = vector.load %arg5[%c0_10, %c0_11, %c0_12] : memref<1x64x64xf32, #tpu.memory_space<vmem>>, vector<1x64x64xf32>
    %11 = vector.shape_cast %10 : vector<1x64x64xf32> to vector<64x64xf32>
    %cst_13 = arith.constant dense<0.000000e+00> : vector<32x64xf32>
    %12 = tpu.matmul %9, %11, %cst_13 {dimension_numbers = #tpu.dot_dimension_numbers<[1], [0], [0], [1], [0, 0, 1, 1], [], []>} : vector<32x64xf32>, vector<64x64xf32>, vector<32x64xf32> -> vector<32x64xf32>
    %c0_14 = arith.constant 0 : index
    %c0_15 = arith.constant 0 : index
    %c0_16 = arith.constant 0 : index
    %13 = vector.load %arg6[%c0_14, %c0_15, %c0_16] : memref<1x1x64xf32, #tpu.memory_space<vmem>>, vector<1x1x64xf32>
    %14 = vector.shape_cast %13 : vector<1x1x64xf32> to vector<1x64xf32>
    %15 = vector.broadcast %14 : vector<1x64xf32> to vector<32x64xf32>
    %16 = arith.addf %12, %15 : vector<32x64xf32>
    %c0_17 = arith.constant 0 : index
    %c0_18 = arith.constant 0 : index
    %c0_19 = arith.constant 0 : index
    %17 = vector.load %arg7[%c0_17, %c0_18, %c0_19] : memref<1x64x64xf32, #tpu.memory_space<vmem>>, vector<1x64x64xf32>
    %18 = vector.shape_cast %17 : vector<1x64x64xf32> to vector<64x64xf32>
    %cst_20 = arith.constant dense<0.000000e+00> : vector<32x64xf32>
    %19 = tpu.matmul %9, %18, %cst_20 {dimension_numbers = #tpu.dot_dimension_numbers<[1], [0], [0], [1], [0, 0, 1, 1], [], []>} : vector<32x64xf32>, vector<64x64xf32>, vector<32x64xf32> -> vector<32x64xf32>
    %c0_21 = arith.constant 0 : index
    %c0_22 = arith.constant 0 : index
    %c0_23 = arith.constant 0 : index
    %20 = vector.load %arg8[%c0_21, %c0_22, %c0_23] : memref<1x1x64xf32, #tpu.memory_space<vmem>>, vector<1x1x64xf32>
    %21 = vector.shape_cast %20 : vector<1x1x64xf32> to vector<1x64xf32>
    %22 = vector.broadcast %21 : vector<1x64xf32> to vector<32x64xf32>
    %23 = arith.addf %19, %22 : vector<32x64xf32>
    %24 = vector.shape_cast %16 : vector<32x64xf32> to vector<2x16x64xf32>
    %25 = tpu.concatenate %24, %24 in 0 : vector<2x16x64xf32>, vector<2x16x64xf32> -> vector<4x16x64xf32>
    %26 = vector.shape_cast %23 : vector<32x64xf32> to vector<2x16x64xf32>
    %27 = tpu.concatenate %26, %26 in 0 : vector<2x16x64xf32>, vector<2x16x64xf32> -> vector<4x16x64xf32>
    %28 = vector.shape_cast %7 : vector<512x64xf32> to vector<4x128x64xf32>
    "tpu.trace_start"() <{level = 10 : i32, message = "bnd,bsd->bns"}> : () -> ()
    %cst_24 = arith.constant dense<0.000000e+00> : vector<4x128x16xf32>
    %29 = tpu.matmul %28, %25, %cst_24 {dimension_numbers = #tpu.dot_dimension_numbers<[2], [2], [1], [1], [0, 0, 0, 1, 1, 1], [0], [0]>} : vector<4x128x64xf32>, vector<4x16x64xf32>, vector<4x128x16xf32> -> vector<4x128x16xf32>
    "tpu.trace_stop"() : () -> ()
    %cst_25 = arith.constant 1.250000e-01 : f32
    %30 = vector.broadcast %cst_25 : f32 to vector<4x128x16xf32>
    %31 = arith.mulf %29, %30 : vector<4x128x16xf32>
    %cst_26 = arith.constant dense<0xFF800000> : vector<4x128xf32>
    %32 = vector.multi_reduction <maximumf>, %31, %cst_26 [2] : vector<4x128x16xf32> to vector<4x128xf32>
    %33 = vector.shape_cast %32 : vector<4x128xf32> to vector<4x128x1xf32>
    %34 = vector.broadcast %33 : vector<4x128x1xf32> to vector<4x128x16xf32>
    %35 = arith.subf %31, %34 : vector<4x128x16xf32>
    %36 = math.exp %35 : vector<4x128x16xf32>
    %cst_27 = arith.constant dense<0.000000e+00> : vector<4x128xf32>
    %37 = vector.multi_reduction <add>, %36, %cst_27 [2] : vector<4x128x16xf32> to vector<4x128xf32>
    %38 = vector.shape_cast %37 : vector<4x128xf32> to vector<4x128x1xf32>
    %39 = vector.broadcast %38 : vector<4x128x1xf32> to vector<4x128x16xf32>
    %40 = arith.divf %36, %39 : vector<4x128x16xf32>
    "tpu.trace_start"() <{level = 10 : i32, message = "bns,bsd->bnd"}> : () -> ()
    %cst_28 = arith.constant dense<0.000000e+00> : vector<4x128x64xf32>
    %41 = tpu.matmul %40, %27, %cst_28 {dimension_numbers = #tpu.dot_dimension_numbers<[2], [1], [1], [2], [0, 0, 0, 1, 1, 2], [0], [0]>} : vector<4x128x16xf32>, vector<4x16x64xf32>, vector<4x128x64xf32> -> vector<4x128x64xf32>
    "tpu.trace_stop"() : () -> ()
    %42 = vector.shape_cast %41 : vector<4x128x64xf32> to vector<512x64xf32>
    %c0_29 = arith.constant 0 : index
    %c0_30 = arith.constant 0 : index
    %c0_31 = arith.constant 0 : index
    %43 = vector.load %arg9[%c0_29, %c0_30, %c0_31] : memref<1x64x64xf32, #tpu.memory_space<vmem>>, vector<1x64x64xf32>
    %44 = vector.shape_cast %43 : vector<1x64x64xf32> to vector<64x64xf32>
    %cst_32 = arith.constant dense<0.000000e+00> : vector<512x64xf32>
    %45 = tpu.matmul %42, %44, %cst_32 {dimension_numbers = #tpu.dot_dimension_numbers<[1], [0], [0], [1], [0, 0, 1, 1], [], []>} : vector<512x64xf32>, vector<64x64xf32>, vector<512x64xf32> -> vector<512x64xf32>
    %c0_33 = arith.constant 0 : index
    %c0_34 = arith.constant 0 : index
    %c0_35 = arith.constant 0 : index
    %46 = vector.load %arg10[%c0_33, %c0_34, %c0_35] : memref<1x1x64xf32, #tpu.memory_space<vmem>>, vector<1x1x64xf32>
    %47 = vector.shape_cast %46 : vector<1x1x64xf32> to vector<1x64xf32>
    %48 = vector.broadcast %47 : vector<1x64xf32> to vector<512x64xf32>
    %49 = arith.addf %45, %48 : vector<512x64xf32>
    %c0_36 = arith.constant 0 : index
    %c0_37 = arith.constant 0 : index
    %50 = vector.load %arg11[%c0_36, %c0_37] : memref<64x64xf32, #tpu.memory_space<vmem>>, vector<64x64xf32>
    %cst_38 = arith.constant dense<0.000000e+00> : vector<512x64xf32>
    %51 = tpu.matmul %49, %50, %cst_38 {dimension_numbers = #tpu.dot_dimension_numbers<[1], [0], [0], [1], [0, 0, 1, 1], [], []>} : vector<512x64xf32>, vector<64x64xf32>, vector<512x64xf32> -> vector<512x64xf32>
    %c0_39 = arith.constant 0 : index
    %c0_40 = arith.constant 0 : index
    %52 = vector.load %arg12[%c0_39, %c0_40] : memref<1x64xf32, #tpu.memory_space<vmem>>, vector<1x64xf32>
    %53 = vector.broadcast %52 : vector<1x64xf32> to vector<512x64xf32>
    %54 = arith.addf %51, %53 : vector<512x64xf32>
    %cst_41 = arith.constant 0.000000e+00 : f32
    %55 = vector.broadcast %cst_41 : f32 to vector<512x64xf32>
    %56 = arith.maximumf %54, %55 : vector<512x64xf32>
    %c0_42 = arith.constant 0 : index
    %c0_43 = arith.constant 0 : index
    %57 = vector.load %arg13[%c0_42, %c0_43] : memref<64x32xf32, #tpu.memory_space<vmem>>, vector<64x32xf32>
    %cst_44 = arith.constant dense<0.000000e+00> : vector<512x32xf32>
    %58 = tpu.matmul %56, %57, %cst_44 {dimension_numbers = #tpu.dot_dimension_numbers<[1], [0], [0], [1], [0, 0, 1, 1], [], []>} : vector<512x64xf32>, vector<64x32xf32>, vector<512x32xf32> -> vector<512x32xf32>
    %c0_45 = arith.constant 0 : index
    %c0_46 = arith.constant 0 : index
    %59 = vector.load %arg14[%c0_45, %c0_46] : memref<1x32xf32, #tpu.memory_space<vmem>>, vector<1x32xf32>
    %60 = vector.broadcast %59 : vector<1x32xf32> to vector<512x32xf32>
    %61 = arith.addf %58, %60 : vector<512x32xf32>
    %c0_47 = arith.constant 0 : index
    %c0_48 = arith.constant 0 : index
    %c0_49 = arith.constant 0 : index
    %62 = vector.load %arg15[%c0_47, %c0_48, %c0_49] : memref<1x512x32xf32, #tpu.memory_space<vmem>>, vector<1x512x32xf32>
    %63 = vector.shape_cast %62 : vector<1x512x32xf32> to vector<512x32xf32>
    %64 = vector.shape_cast %61 : vector<512x32xf32> to vector<1x512x32xf32>
    tpu.vector_store %arg15[%c0_47, %c0_48, %c0_49], %64 {strides = array<i32>} : memref<1x512x32xf32, #tpu.memory_space<vmem>>, vector<1x512x32xf32>,
    return
  }
  func.func @transform_0(%arg0: i32) -> (i32, i32) {
    %c0_i32 = arith.constant 0 : i32
    %c0_i32_0 = arith.constant 0 : i32
    %c0_i32_1 = arith.constant 0 : i32
    return %c0_i32, %c0_i32_0 : i32, i32
  }
  func.func @transform_1(%arg0: i32) -> (i32, i32, i32) {
    %c0_i32 = arith.constant 0 : i32
    %c0_i32_0 = arith.constant 0 : i32
    %c0_i32_1 = arith.constant 0 : i32
    %c0_i32_2 = arith.constant 0 : i32
    return %c0_i32, %c0_i32_0, %c0_i32_1 : i32, i32, i32
  }
  func.func @transform_2(%arg0: i32) -> (i32, i32, i32) {
    %c0_i32 = arith.constant 0 : i32
    %c0_i32_0 = arith.constant 0 : i32
    %c0_i32_1 = arith.constant 0 : i32
    return %arg0, %c0_i32, %c0_i32_0 : i32, i32, i32
  }
  func.func @transform_3(%arg0: i32) -> (i32, i32, i32) {
    %c0_i32 = arith.constant 0 : i32
    %c0_i32_0 = arith.constant 0 : i32
    %c0_i32_1 = arith.constant 0 : i32
    return %arg0, %c0_i32, %c0_i32_0 : i32, i32, i32
  }
  func.func @transform_4(%arg0: i32) -> (i32, i32, i32) {
    %c0_i32 = arith.constant 0 : i32
    %c0_i32_0 = arith.constant 0 : i32
    %c0_i32_1 = arith.constant 0 : i32
    return %arg0, %c0_i32, %c0_i32_0 : i32, i32, i32
  }
  func.func @transform_5(%arg0: i32) -> (i32, i32, i32) {
    %c0_i32 = arith.constant 0 : i32
    %c0_i32_0 = arith.constant 0 : i32
    %c0_i32_1 = arith.constant 0 : i32
    return %arg0, %c0_i32, %c0_i32_0 : i32, i32, i32
  }
  func.func @transform_6(%arg0: i32) -> (i32, i32, i32) {
    %c0_i32 = arith.constant 0 : i32
    %c0_i32_0 = arith.constant 0 : i32
    %c0_i32_1 = arith.constant 0 : i32
    return %arg0, %c0_i32, %c0_i32_0 : i32, i32, i32
  }
  func.func @transform_7(%arg0: i32) -> (i32, i32, i32) {
    %c0_i32 = arith.constant 0 : i32
    %c0_i32_0 = arith.constant 0 : i32
    %c0_i32_1 = arith.constant 0 : i32
    return %arg0, %c0_i32, %c0_i32_0 : i32, i32, i32
  }
  func.func @transform_8(%arg0: i32) -> (i32, i32, i32) {
    %c0_i32 = arith.constant 0 : i32
    %c0_i32_0 = arith.constant 0 : i32
    %c0_i32_1 = arith.constant 0 : i32
    return %arg0, %c0_i32, %c0_i32_0 : i32, i32, i32
  }
  func.func @transform_9(%arg0: i32) -> (i32, i32, i32) {
    %c0_i32 = arith.constant 0 : i32
    %c0_i32_0 = arith.constant 0 : i32
    %c0_i32_1 = arith.constant 0 : i32
    return %arg0, %c0_i32, %c0_i32_0 : i32, i32, i32
  }
  func.func @transform_10(%arg0: i32) -> (i32, i32) {
    %c0_i32 = arith.constant 0 : i32
    %c0_i32_0 = arith.constant 0 : i32
    %c0_i32_1 = arith.constant 0 : i32
    return %c0_i32, %c0_i32_0 : i32, i32
  }
  func.func @transform_11(%arg0: i32) -> (i32, i32) {
    %c0_i32 = arith.constant 0 : i32
    %c0_i32_0 = arith.constant 0 : i32
    %c0_i32_1 = arith.constant 0 : i32
    return %c0_i32, %c0_i32_0 : i32, i32
  }
  func.func @transform_12(%arg0: i32) -> (i32, i32) {
    %c0_i32 = arith.constant 0 : i32
    %c0_i32_0 = arith.constant 0 : i32
    %c0_i32_1 = arith.constant 0 : i32
    return %c0_i32, %c0_i32_0 : i32, i32
  }
  func.func @transform_13(%arg0: i32) -> (i32, i32) {
    %c0_i32 = arith.constant 0 : i32
    %c0_i32_0 = arith.constant 0 : i32
    %c0_i32_1 = arith.constant 0 : i32
    return %c0_i32, %c0_i32_0 : i32, i32
  }
  func.func @transform_14(%arg0: i32) -> (i32, i32, i32) {
    %c0_i32 = arith.constant 0 : i32
    %c0_i32_0 = arith.constant 0 : i32
    %c0_i32_1 = arith.constant 0 : i32
    return %arg0, %c0_i32, %c0_i32_0 : i32, i32, i32
  }
}

</mosaic_0001>

<llo_original>
// kernel: _forward_impl.3
$region0: #{_forward_impl.3}
  #allocation0 [shape = 'u32[]', space=smem, size = 0x4, offset = 0x4, fixed_abs, tag = 'smem constant byte address 0x4 - core index']
  #allocation1 [shape = 'u32[144,128]{1,0:T(1,128)}', space=vmem, size = 0x12000, scoped, tag = 'internal scratch']
  %s0 = inlined_call_operand.vmem [shape: f32[512,3], index: 0, kind: input, shape index: {}]
  %s1 = inlined_call_operand.vmem [shape: f32[3,64], index: 1, kind: input, shape index: {}]
  %s2 = inlined_call_operand.vmem [shape: f32[1,64], index: 2, kind: input, shape index: {}]
  %s3 = inlined_call_operand.vmem [shape: f32[64,128], index: 3, kind: input, shape index: {}]
  %s4 = inlined_call_operand.vmem [shape: f32[1,128], index: 4, kind: input, shape index: {}]
  %s5 = inlined_call_operand.vmem [shape: f32[512,128], index: 5, kind: output, shape index: {}]
  %s6 = sld [smem:[#allocation0]]
  $region30: #{_forward_impl.3} parent=0
    _
  %s8 = ssub.s32 1, %s6
  %s9 = scalar_select 0, %s8, %s6
  // Predicated region
  $region2: #{_forward_impl.3} parent=0 // pred_check
    _
  $region3: #{_forward_impl.3} parent=0 // pred_check_branch
    %11 = sbr.rel (0) target = $region5
  $region4: #{_forward_impl.3} parent=0 // pred_region
    _
  $region5: #{_forward_impl.3} parent=0 // pred_fallthru
    _
  // Predicated region
  $region6: #{_forward_impl.3} parent=0 // pred_check
    _
  $region7: #{_forward_impl.3} parent=0 // pred_check_branch
    %13 = sbr.rel (0) target = $region9
  $region8: #{_forward_impl.3} parent=0 // pred_region
    _
  $region9: #{_forward_impl.3} parent=0 // pred_fallthru
    _
  // Predicated region
  $region10: #{_forward_impl.3} parent=0 // pred_check
    _
  $region11: #{_forward_impl.3} parent=0 // pred_check_branch
    %15 = sbr.rel (0) target = $region13
  $region12: #{_forward_impl.3} parent=0 // pred_region
    _
  $region13: #{_forward_impl.3} parent=0 // pred_fallthru
    _
  // Predicated region
  $region14: #{_forward_impl.3} parent=0 // pred_check
    _
  $region15: #{_forward_impl.3} parent=0 // pred_check_branch
    %17 = sbr.rel (0) target = $region17
  $region16: #{_forward_impl.3} parent=0 // pred_region
    _
  $region17: #{_forward_impl.3} parent=0 // pred_fallthru
    _
  // Predicated region
  $region18: #{_forward_impl.3} parent=0 // pred_check
    _
  $region19: #{_forward_impl.3} parent=0 // pred_check_branch
    %19 = sbr.rel (0) target = $region21
  $region20: #{_forward_impl.3} parent=0 // pred_region
    _
  $region21: #{_forward_impl.3} parent=0 // pred_fallthru
    _
  %v20 = vld [vmem:[%s0] sm:$0xff]
  %v21 = vld [vmem:[%s0 + $0x8] sm:$0xff]
  %v22 = vld [vmem:[%s0 + $0x10] sm:$0xff]
  %v23 = vld [vmem:[%s0 + $0x18] sm:$0xff]
  %v24 = vld [vmem:[%s0 + $0x20] sm:$0xff]
  %v25 = vld [vmem:[%s0 + $0x28] sm:$0xff]
  %v26 = vld [vmem:[%s0 + $0x30] sm:$0xff]
  %v27 = vld [vmem:[%s0 + $0x38] sm:$0xff]
  %v28 = vld [vmem:[%s0 + $0x40] sm:$0xff]
  %v29 = vld [vmem:[%s0 + $0x48] sm:$0xff]
  %v30 = vld [vmem:[%s0 + $0x50] sm:$0xff]
  %v31 = vld [vmem:[%s0 + $0x58] sm:$0xff]
  %v32 = vld [vmem:[%s0 + $0x60] sm:$0xff]
  %v33 = vld [vmem:[%s0 + $0x68] sm:$0xff]
  %v34 = vld [vmem:[%s0 + $0x70] sm:$0xff]
  %v35 = vld [vmem:[%s0 + $0x78] sm:$0xff]
  %v36 = vld [vmem:[%s0 + $0x80] sm:$0xff]
  %v37 = vld [vmem:[%s0 + $0x88] sm:$0xff]
  %v38 = vld [vmem:[%s0 + $0x90] sm:$0xff]
  %v39 = vld [vmem:[%s0 + $0x98] sm:$0xff]
  %v40 = vld [vmem:[%s0 + $0xa0] sm:$0xff]
  %v41 = vld [vmem:[%s0 + $0xa8] sm:$0xff]
  %v42 = vld [vmem:[%s0 + $0xb0] sm:$0xff]
  %v43 = vld [vmem:[%s0 + $0xb8] sm:$0xff]
  %v44 = vld [vmem:[%s0 + $0xc0] sm:$0xff]
  %v45 = vld [vmem:[%s0 + $0xc8] sm:$0xff]
  %v46 = vld [vmem:[%s0 + $0xd0] sm:$0xff]
  %v47 = vld [vmem:[%s0 + $0xd8] sm:$0xff]
  %v48 = vld [vmem:[%s0 + $0xe0] sm:$0xff]
  %v49 = vld [vmem:[%s0 + $0xe8] sm:$0xff]
  %v50 = vld [vmem:[%s0 + $0xf0] sm:$0xff]
  %v51 = vld [vmem:[%s0 + $0xf8] sm:$0xff]
  %v52 = vld [vmem:[%s0 + $0x100] sm:$0xff]
  %v53 = vld [vmem:[%s0 + $0x108] sm:$0xff]
  %v54 = vld [vmem:[%s0 + $0x110] sm:$0xff]
  %v55 = vld [vmem:[%s0 + $0x118] sm:$0xff]
  %v56 = vld [vmem:[%s0 + $0x120] sm:$0xff]
  %v57 = vld [vmem:[%s0 + $0x128] sm:$0xff]
  %v58 = vld [vmem:[%s0 + $0x130] sm:$0xff]
  %v59 = vld [vmem:[%s0 + $0x138] sm:$0xff]
  %v60 = vld [vmem:[%s0 + $0x140] sm:$0xff]
  %v61 = vld [vmem:[%s0 + $0x148] sm:$0xff]
  %v62 = vld [vmem:[%s0 + $0x150] sm:$0xff]
  %v63 = vld [vmem:[%s0 + $0x158] sm:$0xff]
  %v64 = vld [vmem:[%s0 + $0x160] sm:$0xff]
  %v65 = vld [vmem:[%s0 + $0x168] sm:$0xff]
  %v66 = vld [vmem:[%s0 + $0x170] sm:$0xff]
  %v67 = vld [vmem:[%s0 + $0x178] sm:$0xff]
  %v68 = vld [vmem:[%s0 + $0x180] sm:$0xff]
  %v69 = vld [vmem:[%s0 + $0x188] sm:$0xff]
  %v70 = vld [vmem:[%s0 + $0x190] sm:$0xff]
  %v71 = vld [vmem:[%s0 + $0x198] sm:$0xff]
  %v72 = vld [vmem:[%s0 + $0x1a0] sm:$0xff]
  %v73 = vld [vmem:[%s0 + $0x1a8] sm:$0xff]
  %v74 = vld [vmem:[%s0 + $0x1b0] sm:$0xff]
  %v75 = vld [vmem:[%s0 + $0x1b8] sm:$0xff]
  %v76 = vld [vmem:[%s0 + $0x1c0] sm:$0xff]
  %v77 = vld [vmem:[%s0 + $0x1c8] sm:$0xff]
  %v78 = vld [vmem:[%s0 + $0x1d0] sm:$0xff]
  %v79 = vld [vmem:[%s0 + $0x1d8] sm:$0xff]
  %v80 = vld [vmem:[%s0 + $0x1e0] sm:$0xff]
  %v81 = vld [vmem:[%s0 + $0x1e8] sm:$0xff]
  %v82 = vld [vmem:[%s0 + $0x1f0] sm:$0xff]
  %v83 = vld [vmem:[%s0 + $0x1f8] sm:$0xff]
  %v84 = vld [vmem:[%s1] sm:$0x7]
  %v85 = vld [vmem:[%s2] sm:$0x1]
  %v87 = vlaneseq
  %v88 = vshrl.u32 %v87, 7
  %v89 = vsub.s32 0, %v88
  %v90 = vrot.slane %v85, %v89
  %v92 = vadd.f32 %v90, 0.0
  %94 = vset.pattern.permute.xlu0 0
  %95 = vperm.xlu0 %94, %v20
  %v96 = vpop.permute.xlu0 %95
  %99 = vset.pattern.permute.xlu0 0
  %100 = vperm.xlu0 %99, %v21
  %v101 = vpop.permute.xlu0 %100
  %104 = vset.pattern.permute.xlu0 0
  %105 = vperm.xlu0 %104, %v22
  %v106 = vpop.permute.xlu0 %105
  %109 = vset.pattern.permute.xlu0 0
  %110 = vperm.xlu0 %109, %v23
  %v111 = vpop.permute.xlu0 %110
  %114 = vset.pattern.permute.xlu0 0
  %115 = vperm.xlu0 %114, %v24
  %v116 = vpop.permute.xlu0 %115
  %119 = vset.pattern.permute.xlu0 0
  %120 = vperm.xlu0 %119, %v25
  %v121 = vpop.permute.xlu0 %120
  %124 = vset.pattern.permute.xlu0 0
  %125 = vperm.xlu0 %124, %v26
  %v126 = vpop.permute.xlu0 %125
  %129 = vset.pattern.permute.xlu0 0
  %130 = vperm.xlu0 %129, %v27
  %v131 = vpop.permute.xlu0 %130
  %134 = vset.pattern.permute.xlu0 0
  %135 = vperm.xlu0 %134, %v28
  %v136 = vpop.permute.xlu0 %135
  %139 = vset.pattern.permute.xlu0 0
  %140 = vperm.xlu0 %139, %v29
  %v141 = vpop.permute.xlu0 %140
  %144 = vset.pattern.permute.xlu0 0
  %145 = vperm.xlu0 %144, %v30
  %v146 = vpop.permute.xlu0 %145
  %149 = vset.pattern.permute.xlu0 0
  %150 = vperm.xlu0 %149, %v31
  %v151 = vpop.permute.xlu0 %150
  %154 = vset.pattern.permute.xlu0 0
  %155 = vperm.xlu0 %154, %v32
  %v156 = vpop.permute.xlu0 %155
  %159 = vset.pattern.permute.xlu0 0
  %160 = vperm.xlu0 %159, %v33
  %v161 = vpop.permute.xlu0 %160
  %164 = vset.pattern.permute.xlu0 0
  %165 = vperm.xlu0 %164, %v34
  %v166 = vpop.permute.xlu0 %165
  %169 = vset.pattern.permute.xlu0 0
  %170 = vperm.xlu0 %169, %v35
  %v171 = vpop.permute.xlu0 %170
  %174 = vset.pattern.permute.xlu0 0
  %175 = vperm.xlu0 %174, %v36
  %v176 = vpop.permute.xlu0 %175
  %179 = vset.pattern.permute.xlu0 0
  %180 = vperm.xlu0 %179, %v37
  %v181 = vpop.permute.xlu0 %180
  %184 = vset.pattern.permute.xlu0 0
  %185 = vperm.xlu0 %184, %v38
  %v186 = vpop.permute.xlu0 %185
  %189 = vset.pattern.permute.xlu0 0
  %190 = vperm.xlu0 %189, %v39
  %v191 = vpop.permute.xlu0 %190
  %194 = vset.pattern.permute.xlu0 0
  %195 = vperm.xlu0 %194, %v40
  %v196 = vpop.permute.xlu0 %195
  %199 = vset.pattern.permute.xlu0 0
  %200 = vperm.xlu0 %199, %v41
  %v201 = vpop.permute.xlu0 %200
  %204 = vset.pattern.permute.xlu0 0
  %205 = vperm.xlu0 %204, %v42
  %v206 = vpop.permute.xlu0 %205
  %209 = vset.pattern.permute.xlu0 0
  %210 = vperm.xlu0 %209, %v43
  %v211 = vpop.permute.xlu0 %210
  %214 = vset.pattern.permute.xlu0 0
  %215 = vperm.xlu0 %214, %v44
  %v216 = vpop.permute.xlu0 %215
  %219 = vset.pattern.permute.xlu0 0
  %220 = vperm.xlu0 %219, %v45
  %v221 = vpop.permute.xlu0 %220
  %224 = vset.pattern.permute.xlu0 0
  %225 = vperm.xlu0 %224, %v46
  %v226 = vpop.permute.xlu0 %225
  %229 = vset.pattern.permute.xlu0 0
  %230 = vperm.xlu0 %229, %v47
  %v231 = vpop.permute.xlu0 %230
  %234 = vset.pattern.permute.xlu0 0
  %235 = vperm.xlu0 %234, %v48
  %v236 = vpop.permute.xlu0 %235
  %239 = vset.pattern.permute.xlu0 0
  %240 = vperm.xlu0 %239, %v49
  %v241 = vpop.permute.xlu0 %240
  %244 = vset.pattern.permute.xlu0 0
  %245 = vperm.xlu0 %244, %v50
  %v246 = vpop.permute.xlu0 %245
  %249 = vset.pattern.permute.xlu0 0
  %250 = vperm.xlu0 %249, %v51
  %v251 = vpop.permute.xlu0 %250
  %254 = vset.pattern.permute.xlu0 0
  %255 = vperm.xlu0 %254, %v52
  %v256 = vpop.permute.xlu0 %255
  %259 = vset.pattern.permute.xlu0 0
  %260 = vperm.xlu0 %259, %v53
  %v261 = vpop.permute.xlu0 %260
  %264 = vset.pattern.permute.xlu0 0
  %265 = vperm.xlu0 %264, %v54
  %v266 = vpop.permute.xlu0 %265
  %269 = vset.pattern.permute.xlu0 0
  %270 = vperm.xlu0 %269, %v55
  %v271 = vpop.permute.xlu0 %270
  %274 = vset.pattern.permute.xlu0 0
  %275 = vperm.xlu0 %274, %v56
  %v276 = vpop.permute.xlu0 %275
  %279 = vset.pattern.permute.xlu0 0
  %280 = vperm.xlu0 %279, %v57
  %v281 = vpop.permute.xlu0 %280
  %284 = vset.pattern.permute.xlu0 0
  %285 = vperm.xlu0 %284, %v58
  %v286 = vpop.permute.xlu0 %285
  %289 = vset.pattern.permute.xlu0 0
  %290 = vperm.xlu0 %289, %v59
  %v291 = vpop.permute.xlu0 %290
  %294 = vset.pattern.permute.xlu0 0
  %295 = vperm.xlu0 %294, %v60
  %v296 = vpop.permute.xlu0 %295
  %299 = vset.pattern.permute.xlu0 0
  %300 = vperm.xlu0 %299, %v61
  %v301 = vpop.permute.xlu0 %300
  %304 = vset.pattern.permute.xlu0 0
  %305 = vperm.xlu0 %304, %v62
  %v306 = vpop.permute.xlu0 %305
  %309 = vset.pattern.permute.xlu0 0
  %310 = vperm.xlu0 %309, %v63
  %v311 = vpop.permute.xlu0 %310
  %314 = vset.pattern.permute.xlu0 0
  %315 = vperm.xlu0 %314, %v64
  %v316 = vpop.permute.xlu0 %315
  %319 = vset.pattern.permute.xlu0 0
  %320 = vperm.xlu0 %319, %v65
  %v321 = vpop.permute.xlu0 %320
  %324 = vset.pattern.permute.xlu0 0
  %325 = vperm.xlu0 %324, %v66
  %v326 = vpop.permute.xlu0 %325
  %329 = vset.pattern.permute.xlu0 0
  %330 = vperm.xlu0 %329, %v67
  %v331 = vpop.permute.xlu0 %330
  %334 = vset.pattern.permute.xlu0 0
  %335 = vperm.xlu0 %334, %v68
  %v336 = vpop.permute.xlu0 %335
  %339 = vset.pattern.permute.xlu0 0
  %340 = vperm.xlu0 %339, %v69
  %v341 = vpop.permute.xlu0 %340
  %344 = vset.pattern.permute.xlu0 0
  %345 = vperm.xlu0 %344, %v70
  %v346 = vpop.permute.xlu0 %345
  %349 = vset.pattern.permute.xlu0 0
  %350 = vperm.xlu0 %349, %v71
  %v351 = vpop.permute.xlu0 %350
  %354 = vset.pattern.permute.xlu0 0
  %355 = vperm.xlu0 %354, %v72
  %v356 = vpop.permute.xlu0 %355
  %359 = vset.pattern.permute.xlu0 0
  %360 = vperm.xlu0 %359, %v73
  %v361 = vpop.permute.xlu0 %360
  %364 = vset.pattern.permute.xlu0 0
  %365 = vperm.xlu0 %364, %v74
  %v366 = vpop.permute.xlu0 %365
  %369 = vset.pattern.permute.xlu0 0
  %370 = vperm.xlu0 %369, %v75
  %v371 = vpop.permute.xlu0 %370
  %374 = vset.pattern.permute.xlu0 0
  %375 = vperm.xlu0 %374, %v76
  %v376 = vpop.permute.xlu0 %375
  %379 = vset.pattern.permute.xlu0 0
  %380 = vperm.xlu0 %379, %v77
  %v381 = vpop.permute.xlu0 %380
  %384 = vset.pattern.permute.xlu0 0
  %385 = vperm.xlu0 %384, %v78
  %v386 = vpop.permute.xlu0 %385
  %389 = vset.pattern.permute.xlu0 0
  %390 = vperm.xlu0 %389, %v79
  %v391 = vpop.permute.xlu0 %390
  %394 = vset.pattern.permute.xlu0 0
  %395 = vperm.xlu0 %394, %v80
  %v396 = vpop.permute.xlu0 %395
  %399 = vset.pattern.permute.xlu0 0
  %400 = vperm.xlu0 %399, %v81
  %v401 = vpop.permute.xlu0 %400
  %404 = vset.pattern.permute.xlu0 0
  %405 = vperm.xlu0 %404, %v82
  %v406 = vpop.permute.xlu0 %405
  %409 = vset.pattern.permute.xlu0 0
  %410 = vperm.xlu0 %409, %v83
  %v411 = vpop.permute.xlu0 %410
  %v413 = vlaneseq
  %v414 = vshrl.u32 %v413, 7
  %v415 = vsub.s32 0, %v414
  %v416 = vrot.slane %v84, %v415
  %v417 = vmul.f32 %v96, %v416
  %v418 = vmul.f32 %v101, %v416
  %v419 = vmul.f32 %v106, %v416
  %v420 = vmul.f32 %v111, %v416
  %v421 = vmul.f32 %v116, %v416
  %v422 = vmul.f32 %v121, %v416
  %v423 = vmul.f32 %v126, %v416
  %v424 = vmul.f32 %v131, %v416
  %v425 = vmul.f32 %v136, %v416
  %v426 = vmul.f32 %v141, %v416
  %v427 = vmul.f32 %v146, %v416
  %v428 = vmul.f32 %v151, %v416
  %v429 = vmul.f32 %v156, %v416
  %v430 = vmul.f32 %v161, %v416
  %v431 = vmul.f32 %v166, %v416
  %v432 = vmul.f32 %v171, %v416
  %v433 = vmul.f32 %v176, %v416
  %v434 = vmul.f32 %v181, %v416
  %v435 = vmul.f32 %v186, %v416
  %v436 = vmul.f32 %v191, %v416
  %v437 = vmul.f32 %v196, %v416
  %v438 = vmul.f32 %v201, %v416
  %v439 = vmul.f32 %v206, %v416
  %v440 = vmul.f32 %v211, %v416
  %v441 = vmul.f32 %v216, %v416
  %v442 = vmul.f32 %v221, %v416
  %v443 = vmul.f32 %v226, %v416
  %v444 = vmul.f32 %v231, %v416
  %v445 = vmul.f32 %v236, %v416
  %v446 = vmul.f32 %v241, %v416
  %v447 = vmul.f32 %v246, %v416
  %v448 = vmul.f32 %v251, %v416
  %v449 = vmul.f32 %v256, %v416
  %v450 = vmul.f32 %v261, %v416
  %v451 = vmul.f32 %v266, %v416
  %v452 = vmul.f32 %v271, %v416
  %v453 = vmul.f32 %v276, %v416
  %v454 = vmul.f32 %v281, %v416
  %v455 = vmul.f32 %v286, %v416
  %v456 = vmul.f32 %v291, %v416
  %v457 = vmul.f32 %v296, %v416
  %v458 = vmul.f32 %v301, %v416
  %v459 = vmul.f32 %v306, %v416
  %v460 = vmul.f32 %v311, %v416
  %v461 = vmul.f32 %v316, %v416
  %v462 = vmul.f32 %v321, %v416
  %v463 = vmul.f32 %v326, %v416
  %v464 = vmul.f32 %v331, %v416
  %v465 = vmul.f32 %v336, %v416
  %v466 = vmul.f32 %v341, %v416
  %v467 = vmul.f32 %v346, %v416
  %v468 = vmul.f32 %v351, %v416
  %v469 = vmul.f32 %v356, %v416
  %v470 = vmul.f32 %v361, %v416
  %v471 = vmul.f32 %v366, %v416
  %v472 = vmul.f32 %v371, %v416
  %v473 = vmul.f32 %v376, %v416
  %v474 = vmul.f32 %v381, %v416
  %v475 = vmul.f32 %v386, %v416
  %v476 = vmul.f32 %v391, %v416
  %v477 = vmul.f32 %v396, %v416
  %v478 = vmul.f32 %v401, %v416
  %v479 = vmul.f32 %v406, %v416
  %v480 = vmul.f32 %v411, %v416
  %v481 = vadd.f32 %v92, %v417
  %v482 = vadd.f32 %v92, %v418
  %v483 = vadd.f32 %v92, %v419
  %v484 = vadd.f32 %v92, %v420
  %v485 = vadd.f32 %v92, %v421
  %v486 = vadd.f32 %v92, %v422
  %v487 = vadd.f32 %v92, %v423
  %v488 = vadd.f32 %v92, %v424
  %v489 = vadd.f32 %v92, %v425
  %v490 = vadd.f32 %v92, %v426
  %v491 = vadd.f32 %v92, %v427
  %v492 = vadd.f32 %v92, %v428
  %v493 = vadd.f32 %v92, %v429
  %v494 = vadd.f32 %v92, %v430
  %v495 = vadd.f32 %v92, %v431
  %v496 = vadd.f32 %v92, %v432
  %v497 = vadd.f32 %v92, %v433
  %v498 = vadd.f32 %v92, %v434
  %v499 = vadd.f32 %v92, %v435
  %v500 = vadd.f32 %v92, %v436
  %v501 = vadd.f32 %v92, %v437
  %v502 = vadd.f32 %v92, %v438
  %v503 = vadd.f32 %v92, %v439
  %v504 = vadd.f32 %v92, %v440
  %v505 = vadd.f32 %v92, %v441
  %v506 = vadd.f32 %v92, %v442
  %v507 = vadd.f32 %v92, %v443
  %v508 = vadd.f32 %v92, %v444
  %v509 = vadd.f32 %v92, %v445
  %v510 = vadd.f32 %v92, %v446
  %v511 = vadd.f32 %v92, %v447
  %v512 = vadd.f32 %v92, %v448
  %v513 = vadd.f32 %v92, %v449
  %v514 = vadd.f32 %v92, %v450
  %v515 = vadd.f32 %v92, %v451
  %v516 = vadd.f32 %v92, %v452
  %v517 = vadd.f32 %v92, %v453
  %v518 = vadd.f32 %v92, %v454
  %v519 = vadd.f32 %v92, %v455
  %v520 = vadd.f32 %v92, %v456
  %v521 = vadd.f32 %v92, %v457
  %v522 = vadd.f32 %v92, %v458
  %v523 = vadd.f32 %v92, %v459
  %v524 = vadd.f32 %v92, %v460
  %v525 = vadd.f32 %v92, %v461
  %v526 = vadd.f32 %v92, %v462
  %v527 = vadd.f32 %v92, %v463
  %v528 = vadd.f32 %v92, %v464
  %v529 = vadd.f32 %v92, %v465
  %v530 = vadd.f32 %v92, %v466
  %v531 = vadd.f32 %v92, %v467
  %v532 = vadd.f32 %v92, %v468
  %v533 = vadd.f32 %v92, %v469
  %v534 = vadd.f32 %v92, %v470
  %v535 = vadd.f32 %v92, %v471
  %v536 = vadd.f32 %v92, %v472
  %v537 = vadd.f32 %v92, %v473
  %v538 = vadd.f32 %v92, %v474
  %v539 = vadd.f32 %v92, %v475
  %v540 = vadd.f32 %v92, %v476
  %v541 = vadd.f32 %v92, %v477
  %v542 = vadd.f32 %v92, %v478
  %v543 = vadd.f32 %v92, %v479
  %v544 = vadd.f32 %v92, %v480
  %545 = vset.pattern.permute.xlu0 1
  %546 = vperm.xlu0 %545, %v20
  %v547 = vpop.permute.xlu0 %546
  %549 = vset.pattern.permute.xlu0 1
  %550 = vperm.xlu0 %549, %v21
  %v551 = vpop.permute.xlu0 %550
  %553 = vset.pattern.permute.xlu0 1
  %554 = vperm.xlu0 %553, %v22
  %v555 = vpop.permute.xlu0 %554
  %557 = vset.pattern.permute.xlu0 1
  %558 = vperm.xlu0 %557, %v23
  %v559 = vpop.permute.xlu0 %558
  %561 = vset.pattern.permute.xlu0 1
  %562 = vperm.xlu0 %561, %v24
  %v563 = vpop.permute.xlu0 %562
  %565 = vset.pattern.permute.xlu0 1
  %566 = vperm.xlu0 %565, %v25
  %v567 = vpop.permute.xlu0 %566
  %569 = vset.pattern.permute.xlu0 1
  %570 = vperm.xlu0 %569, %v26
  %v571 = vpop.permute.xlu0 %570
  %573 = vset.pattern.permute.xlu0 1
  %574 = vperm.xlu0 %573, %v27
  %v575 = vpop.permute.xlu0 %574
  %577 = vset.pattern.permute.xlu0 1
  %578 = vperm.xlu0 %577, %v28
  %v579 = vpop.permute.xlu0 %578
  %581 = vset.pattern.permute.xlu0 1
  %582 = vperm.xlu0 %581, %v29
  %v583 = vpop.permute.xlu0 %582
  %585 = vset.pattern.permute.xlu0 1
  %586 = vperm.xlu0 %585, %v30
  %v587 = vpop.permute.xlu0 %586
  %589 = vset.pattern.permute.xlu0 1
  %590 = vperm.xlu0 %589, %v31
  %v591 = vpop.permute.xlu0 %590
  %593 = vset.pattern.permute.xlu0 1
  %594 = vperm.xlu0 %593, %v32
  %v595 = vpop.permute.xlu0 %594
  %597 = vset.pattern.permute.xlu0 1
  %598 = vperm.xlu0 %597, %v33
  %v599 = vpop.permute.xlu0 %598
  %601 = vset.pattern.permute.xlu0 1
  %602 = vperm.xlu0 %601, %v34
  %v603 = vpop.permute.xlu0 %602
  %605 = vset.pattern.permute.xlu0 1
  %606 = vperm.xlu0 %605, %v35
  %v607 = vpop.permute.xlu0 %606
  %609 = vset.pattern.permute.xlu0 1
  %610 = vperm.xlu0 %609, %v36
  %v611 = vpop.permute.xlu0 %610
  %613 = vset.pattern.permute.xlu0 1
  %614 = vperm.xlu0 %613, %v37
  %v615 = vpop.permute.xlu0 %614
  %617 = vset.pattern.permute.xlu0 1
  %618 = vperm.xlu0 %617, %v38
  %v619 = vpop.permute.xlu0 %618
  %621 = vset.pattern.permute.xlu0 1
  %622 = vperm.xlu0 %621, %v39
  %v623 = vpop.permute.xlu0 %622
  %625 = vset.pattern.permute.xlu0 1
  %626 = vperm.xlu0 %625, %v40
  %v627 = vpop.permute.xlu0 %626
  %629 = vset.pattern.permute.xlu0 1
  %630 = vperm.xlu0 %629, %v41
  %v631 = vpop.permute.xlu0 %630
  %633 = vset.pattern.permute.xlu0 1
  %634 = vperm.xlu0 %633, %v42
  %v635 = vpop.permute.xlu0 %634
  %637 = vset.pattern.permute.xlu0 1
  %638 = vperm.xlu0 %637, %v43
  %v639 = vpop.permute.xlu0 %638
  %641 = vset.pattern.permute.xlu0 1
  %642 = vperm.xlu0 %641, %v44
  %v643 = vpop.permute.xlu0 %642
  %645 = vset.pattern.permute.xlu0 1
  %646 = vperm.xlu0 %645, %v45
  %v647 = vpop.permute.xlu0 %646
  %649 = vset.pattern.permute.xlu0 1
  %650 = vperm.xlu0 %649, %v46
  %v651 = vpop.permute.xlu0 %650
  %653 = vset.pattern.permute.xlu0 1
  %654 = vperm.xlu0 %653, %v47
  %v655 = vpop.permute.xlu0 %654
  %657 = vset.pattern.permute.xlu0 1
  %658 = vperm.xlu0 %657, %v48
  %v659 = vpop.permute.xlu0 %658
  %661 = vset.pattern.permute.xlu0 1
  %662 = vperm.xlu0 %661, %v49
  %v663 = vpop.permute.xlu0 %662
  %665 = vset.pattern.permute.xlu0 1
  %666 = vperm.xlu0 %665, %v50
  %v667 = vpop.permute.xlu0 %666
  %669 = vset.pattern.permute.xlu0 1
  %670 = vperm.xlu0 %669, %v51
  %v671 = vpop.permute.xlu0 %670
  %673 = vset.pattern.permute.xlu0 1
  %674 = vperm.xlu0 %673, %v52
  %v675 = vpop.permute.xlu0 %674
  %677 = vset.pattern.permute.xlu0 1
  %678 = vperm.xlu0 %677, %v53
  %v679 = vpop.permute.xlu0 %678
  %681 = vset.pattern.permute.xlu0 1
  %682 = vperm.xlu0 %681, %v54
  %v683 = vpop.permute.xlu0 %682
  %685 = vset.pattern.permute.xlu0 1
  %686 = vperm.xlu0 %685, %v55
  %v687 = vpop.permute.xlu0 %686
  %689 = vset.pattern.permute.xlu0 1
  %690 = vperm.xlu0 %689, %v56
  %v691 = vpop.permute.xlu0 %690
  %693 = vset.pattern.permute.xlu0 1
  %694 = vperm.xlu0 %693, %v57
  %v695 = vpop.permute.xlu0 %694
  %697 = vset.pattern.permute.xlu0 1
  %698 = vperm.xlu0 %697, %v58
  %v699 = vpop.permute.xlu0 %698
  %701 = vset.pattern.permute.xlu0 1
  %702 = vperm.xlu0 %701, %v59
  %v703 = vpop.permute.xlu0 %702
  %705 = vset.pattern.permute.xlu0 1
  %706 = vperm.xlu0 %705, %v60
  %v707 = vpop.permute.xlu0 %706
  %709 = vset.pattern.permute.xlu0 1
  %710 = vperm.xlu0 %709, %v61
  %v711 = vpop.permute.xlu0 %710
  %713 = vset.pattern.permute.xlu0 1
  %714 = vperm.xlu0 %713, %v62
  %v715 = vpop.permute.xlu0 %714
  %717 = vset.pattern.permute.xlu0 1
  %718 = vperm.xlu0 %717, %v63
  %v719 = vpop.permute.xlu0 %718
  %721 = vset.pattern.permute.xlu0 1
  %722 = vperm.xlu0 %721, %v64
  %v723 = vpop.permute.xlu0 %722
  %725 = vset.pattern.permute.xlu0 1
  %726 = vperm.xlu0 %725, %v65
  %v727 = vpop.permute.xlu0 %726
  %729 = vset.pattern.permute.xlu0 1
  %730 = vperm.xlu0 %729, %v66
  %v731 = vpop.permute.xlu0 %730
  %733 = vset.pattern.permute.xlu0 1
  %734 = vperm.xlu0 %733, %v67
  %v735 = vpop.permute.xlu0 %734
  %737 = vset.pattern.permute.xlu0 1
  %738 = vperm.xlu0 %737, %v68
  %v739 = vpop.permute.xlu0 %738
  %741 = vset.pattern.permute.xlu0 1
  %742 = vperm.xlu0 %741, %v69
  %v743 = vpop.permute.xlu0 %742
  %745 = vset.pattern.permute.xlu0 1
  %746 = vperm.xlu0 %745, %v70
  %v747 = vpop.permute.xlu0 %746
  %749 = vset.pattern.permute.xlu0 1
  %750 = vperm.xlu0 %749, %v71
  %v751 = vpop.permute.xlu0 %750
  %753 = vset.pattern.permute.xlu0 1
  %754 = vperm.xlu0 %753, %v72
  %v755 = vpop.permute.xlu0 %754
  %757 = vset.pattern.permute.xlu0 1
  %758 = vperm.xlu0 %757, %v73
  %v759 = vpop.permute.xlu0 %758
  %761 = vset.pattern.permute.xlu0 1
  %762 = vperm.xlu0 %761, %v74
  %v763 = vpop.permute.xlu0 %762
  %765 = vset.pattern.permute.xlu0 1
  %766 = vperm.xlu0 %765, %v75
  %v767 = vpop.permute.xlu0 %766
  %769 = vset.pattern.permute.xlu0 1
  %770 = vperm.xlu0 %769, %v76
  %v771 = vpop.permute.xlu0 %770
  %773 = vset.pattern.permute.xlu0 1
  %774 = vperm.xlu0 %773, %v77
  %v775 = vpop.permute.xlu0 %774
  %777 = vset.pattern.permute.xlu0 1
  %778 = vperm.xlu0 %777, %v78
  %v779 = vpop.permute.xlu0 %778
  %781 = vset.pattern.permute.xlu0 1
  %782 = vperm.xlu0 %781, %v79
  %v783 = vpop.permute.xlu0 %782
  %785 = vset.pattern.permute.xlu0 1
  %786 = vperm.xlu0 %785, %v80
  %v787 = vpop.permute.xlu0 %786
  %789 = vset.pattern.permute.xlu0 1
  %790 = vperm.xlu0 %789, %v81
  %v791 = vpop.permute.xlu0 %790
  %793 = vset.pattern.permute.xlu0 1
  %794 = vperm.xlu0 %793, %v82
  %v795 = vpop.permute.xlu0 %794
  %797 = vset.pattern.permute.xlu0 1
  %798 = vperm.xlu0 %797, %v83
  %v799 = vpop.permute.xlu0 %798
  %v801 = vlaneseq
  %v802 = vshrl.u32 %v801, 7
  %v803 = vsub.s32 1, %v802
  %v804 = vrot.slane %v84, %v803
  %v805 = vmul.f32 %v547, %v804
  %v806 = vmul.f32 %v551, %v804
  %v807 = vmul.f32 %v555, %v804
  %v808 = vmul.f32 %v559, %v804
  %v809 = vmul.f32 %v563, %v804
  %v810 = vmul.f32 %v567, %v804
  %v811 = vmul.f32 %v571, %v804
  %v812 = vmul.f32 %v575, %v804
  %v813 = vmul.f32 %v579, %v804
  %v814 = vmul.f32 %v583, %v804
  %v815 = vmul.f32 %v587, %v804
  %v816 = vmul.f32 %v591, %v804
  %v817 = vmul.f32 %v595, %v804
  %v818 = vmul.f32 %v599, %v804
  %v819 = vmul.f32 %v603, %v804
  %v820 = vmul.f32 %v607, %v804
  %v821 = vmul.f32 %v611, %v804
  %v822 = vmul.f32 %v615, %v804
  %v823 = vmul.f32 %v619, %v804
  %v824 = vmul.f32 %v623, %v804
  %v825 = vmul.f32 %v627, %v804
  %v826 = vmul.f32 %v631, %v804
  %v827 = vmul.f32 %v635, %v804
  %v828 = vmul.f32 %v639, %v804
  %v829 = vmul.f32 %v643, %v804
  %v830 = vmul.f32 %v647, %v804
  %v831 = vmul.f32 %v651, %v804
  %v832 = vmul.f32 %v655, %v804
  %v833 = vmul.f32 %v659, %v804
  %v834 = vmul.f32 %v663, %v804
  %v835 = vmul.f32 %v667, %v804
  %v836 = vmul.f32 %v671, %v804
  %v837 = vmul.f32 %v675, %v804
  %v838 = vmul.f32 %v679, %v804
  %v839 = vmul.f32 %v683, %v804
  %v840 = vmul.f32 %v687, %v804
  %v841 = vmul.f32 %v691, %v804
  %v842 = vmul.f32 %v695, %v804
  %v843 = vmul.f32 %v699, %v804
  %v844 = vmul.f32 %v703, %v804
  %v845 = vmul.f32 %v707, %v804
  %v846 = vmul.f32 %v711, %v804
  %v847 = vmul.f32 %v715, %v804
  %v848 = vmul.f32 %v719, %v804
  %v849 = vmul.f32 %v723, %v804
  %v850 = vmul.f32 %v727, %v804
  %v851 = vmul.f32 %v731, %v804
  %v852 = vmul.f32 %v735, %v804
  %v853 = vmul.f32 %v739, %v804
  %v854 = vmul.f32 %v743, %v804
  %v855 = vmul.f32 %v747, %v804
  %v856 = vmul.f32 %v751, %v804
  %v857 = vmul.f32 %v755, %v804
  %v858 = vmul.f32 %v759, %v804
  %v859 = vmul.f32 %v763, %v804
  %v860 = vmul.f32 %v767, %v804
  %v861 = vmul.f32 %v771, %v804
  %v862 = vmul.f32 %v775, %v804
  %v863 = vmul.f32 %v779, %v804
  %v864 = vmul.f32 %v783, %v804
  %v865 = vmul.f32 %v787, %v804
  %v866 = vmul.f32 %v791, %v804
  %v867 = vmul.f32 %v795, %v804
  %v868 = vmul.f32 %v799, %v804
  %v869 = vadd.f32 %v481, %v805
  %v870 = vadd.f32 %v482, %v806
  %v871 = vadd.f32 %v483, %v807
  %v872 = vadd.f32 %v484, %v808
  %v873 = vadd.f32 %v485, %v809
  %v874 = vadd.f32 %v486, %v810
  %v875 = vadd.f32 %v487, %v811
  %v876 = vadd.f32 %v488, %v812
  %v877 = vadd.f32 %v489, %v813
  %v878 = vadd.f32 %v490, %v814
  %v879 = vadd.f32 %v491, %v815
  %v880 = vadd.f32 %v492, %v816
  %v881 = vadd.f32 %v493, %v817
  %v882 = vadd.f32 %v494, %v818
  %v883 = vadd.f32 %v495, %v819
  %v884 = vadd.f32 %v496, %v820
  %v885 = vadd.f32 %v497, %v821
  %v886 = vadd.f32 %v498, %v822
  %v887 = vadd.f32 %v499, %v823
  %v888 = vadd.f32 %v500, %v824
  %v889 = vadd.f32 %v501, %v825
  %v890 = vadd.f32 %v502, %v826
  %v891 = vadd.f32 %v503, %v827
  %v892 = vadd.f32 %v504, %v828
  %v893 = vadd.f32 %v505, %v829
  %v894 = vadd.f32 %v506, %v830
  %v895 = vadd.f32 %v507, %v831
  %v896 = vadd.f32 %v508, %v832
  %v897 = vadd.f32 %v509, %v833
  %v898 = vadd.f32 %v510, %v834
  %v899 = vadd.f32 %v511, %v835
  %v900 = vadd.f32 %v512, %v836
  %v901 = vadd.f32 %v513, %v837
  %v902 = vadd.f32 %v514, %v838
  %v903 = vadd.f32 %v515, %v839
  %v904 = vadd.f32 %v516, %v840
  %v905 = vadd.f32 %v517, %v841
  %v906 = vadd.f32 %v518, %v842
  %v907 = vadd.f32 %v519, %v843
  %v908 = vadd.f32 %v520, %v844
  %v909 = vadd.f32 %v521, %v845
  %v910 = vadd.f32 %v522, %v846
  %v911 = vadd.f32 %v523, %v847
  %v912 = vadd.f32 %v524, %v848
  %v913 = vadd.f32 %v525, %v849
  %v914 = vadd.f32 %v526, %v850
  %v915 = vadd.f32 %v527, %v851
  %v916 = vadd.f32 %v528, %v852
  %v917 = vadd.f32 %v529, %v853
  %v918 = vadd.f32 %v530, %v854
  %v919 = vadd.f32 %v531, %v855
  %v920 = vadd.f32 %v532, %v856
  %v921 = vadd.f32 %v533, %v857
  %v922 = vadd.f32 %v534, %v858
  %v923 = vadd.f32 %v535, %v859
  %v924 = vadd.f32 %v536, %v860
  %v925 = vadd.f32 %v537, %v861
  %v926 = vadd.f32 %v538, %v862
  %v927 = vadd.f32 %v539, %v863
  %v928 = vadd.f32 %v540, %v864
  %v929 = vadd.f32 %v541, %v865
  %v930 = vadd.f32 %v542, %v866
  %v931 = vadd.f32 %v543, %v867
  %v932 = vadd.f32 %v544, %v868
  %933 = vset.pattern.permute.xlu0 2
  %934 = vperm.xlu0 %933, %v20
  %v935 = vpop.permute.xlu0 %934
  %937 = vset.pattern.permute.xlu0 2
  %938 = vperm.xlu0 %937, %v21
  %v939 = vpop.permute.xlu0 %938
  %941 = vset.pattern.permute.xlu0 2
  %942 = vperm.xlu0 %941, %v22
  %v943 = vpop.permute.xlu0 %942
  %945 = vset.pattern.permute.xlu0 2
  %946 = vperm.xlu0 %945, %v23
  %v947 = vpop.permute.xlu0 %946
  %949 = vset.pattern.permute.xlu0 2
  %950 = vperm.xlu0 %949, %v24
  %v951 = vpop.permute.xlu0 %950
  %953 = vset.pattern.permute.xlu0 2
  %954 = vperm.xlu0 %953, %v25
  %v955 = vpop.permute.xlu0 %954
  %957 = vset.pattern.permute.xlu0 2
  %958 = vperm.xlu0 %957, %v26
  %v959 = vpop.permute.xlu0 %958
  %961 = vset.pattern.permute.xlu0 2
  %962 = vperm.xlu0 %961, %v27
  %v963 = vpop.permute.xlu0 %962
  %965 = vset.pattern.permute.xlu0 2
  %966 = vperm.xlu0 %965, %v28
  %v967 = vpop.permute.xlu0 %966
  %969 = vset.pattern.permute.xlu0 2
  %970 = vperm.xlu0 %969, %v29
  %v971 = vpop.permute.xlu0 %970
  %973 = vset.pattern.permute.xlu0 2
  %974 = vperm.xlu0 %973, %v30
  %v975 = vpop.permute.xlu0 %974
  %977 = vset.pattern.permute.xlu0 2
  %978 = vperm.xlu0 %977, %v31
  %v979 = vpop.permute.xlu0 %978
  %981 = vset.pattern.permute.xlu0 2
  %982 = vperm.xlu0 %981, %v32
  %v983 = vpop.permute.xlu0 %982
  %985 = vset.pattern.permute.xlu0 2
  %986 = vperm.xlu0 %985, %v33
  %v987 = vpop.permute.xlu0 %986
  %989 = vset.pattern.permute.xlu0 2
  %990 = vperm.xlu0 %989, %v34
  %v991 = vpop.permute.xlu0 %990
  %993 = vset.pattern.permute.xlu0 2
  %994 = vperm.xlu0 %993, %v35
  %v995 = vpop.permute.xlu0 %994
  %997 = vset.pattern.permute.xlu0 2
  %998 = vperm.xlu0 %997, %v36
  %v999 = vpop.permute.xlu0 %998
  %1001 = vset.pattern.permute.xlu0 2
  %1002 = vperm.xlu0 %1001, %v37
  %v1003 = vpop.permute.xlu0 %1002
  %1005 = vset.pattern.permute.xlu0 2
  %1006 = vperm.xlu0 %1005, %v38
  %v1007 = vpop.permute.xlu0 %1006
  %1009 = vset.pattern.permute.xlu0 2
  %1010 = vperm.xlu0 %1009, %v39
  %v1011 = vpop.permute.xlu0 %1010
  %1013 = vset.pattern.permute.xlu0 2
  %1014 = vperm.xlu0 %1013, %v40
  %v1015 = vpop.permute.xlu0 %1014
  %1017 = vset.pattern.permute.xlu0 2
  %1018 = vperm.xlu0 %1017, %v41
  %v1019 = vpop.permute.xlu0 %1018
  %1021 = vset.pattern.permute.xlu0 2
  %1022 = vperm.xlu0 %1021, %v42
  %v1023 = vpop.permute.xlu0 %1022
  %1025 = vset.pattern.permute.xlu0 2
  %1026 = vperm.xlu0 %1025, %v43
  %v1027 = vpop.permute.xlu0 %1026
  %1029 = vset.pattern.permute.xlu0 2
  %1030 = vperm.xlu0 %1029, %v44
  %v1031 = vpop.permute.xlu0 %1030
  %1033 = vset.pattern.permute.xlu0 2
  %1034 = vperm.xlu0 %1033, %v45
  %v1035 = vpop.permute.xlu0 %1034
  %1037 = vset.pattern.permute.xlu0 2
  %1038 = vperm.xlu0 %1037, %v46
  %v1039 = vpop.permute.xlu0 %1038
  %1041 = vset.pattern.permute.xlu0 2
  %1042 = vperm.xlu0 %1041, %v47
  %v1043 = vpop.permute.xlu0 %1042
  %1045 = vset.pattern.permute.xlu0 2
  %1046 = vperm.xlu0 %1045, %v48
  %v1047 = vpop.permute.xlu0 %1046
  %1049 = vset.pattern.permute.xlu0 2
  %1050 = vperm.xlu0 %1049, %v49
  %v1051 = vpop.permute.xlu0 %1050
  %1053 = vset.pattern.permute.xlu0 2
  %1054 = vperm.xlu0 %1053, %v50
  %v1055 = vpop.permute.xlu0 %1054
  %1057 = vset.pattern.permute.xlu0 2
  %1058 = vperm.xlu0 %1057, %v51
  %v1059 = vpop.permute.xlu0 %1058
  %1061 = vset.pattern.permute.xlu0 2
  %1062 = vperm.xlu0 %1061, %v52
  %v1063 = vpop.permute.xlu0 %1062
  %1065 = vset.pattern.permute.xlu0 2
  %1066 = vperm.xlu0 %1065, %v53
  %v1067 = vpop.permute.xlu0 %1066
  %1069 = vset.pattern.permute.xlu0 2
  %1070 = vperm.xlu0 %1069, %v54
  %v1071 = vpop.permute.xlu0 %1070
  %1073 = vset.pattern.permute.xlu0 2
  %1074 = vperm.xlu0 %1073, %v55
  %v1075 = vpop.permute.xlu0 %1074
  %1077 = vset.pattern.permute.xlu0 2
  %1078 = vperm.xlu0 %1077, %v56
  %v1079 = vpop.permute.xlu0 %1078
  %1081 = vset.pattern.permute.xlu0 2
  %1082 = vperm.xlu0 %1081, %v57
  %v1083 = vpop.permute.xlu0 %1082
  %1085 = vset.pattern.permute.xlu0 2
  %1086 = vperm.xlu0 %1085, %v58
  %v1087 = vpop.permute.xlu0 %1086
  %1089 = vset.pattern.permute.xlu0 2
  %1090 = vperm.xlu0 %1089, %v59
  %v1091 = vpop.permute.xlu0 %1090
  %1093 = vset.pattern.permute.xlu0 2
  %1094 = vperm.xlu0 %1093, %v60
  %v1095 = vpop.permute.xlu0 %1094
  %1097 = vset.pattern.permute.xlu0 2
  %1098 = vperm.xlu0 %1097, %v61
  %v1099 = vpop.permute.xlu0 %1098
  %1101 = vset.pattern.permute.xlu0 2
  %1102 = vperm.xlu0 %1101, %v62
  %v1103 = vpop.permute.xlu0 %1102
  %1105 = vset.pattern.permute.xlu0 2
  %1106 = vperm.xlu0 %1105, %v63
  %v1107 = vpop.permute.xlu0 %1106
  %1109 = vset.pattern.permute.xlu0 2
  %1110 = vperm.xlu0 %1109, %v64
  %v1111 = vpop.permute.xlu0 %1110
  %1113 = vset.pattern.permute.xlu0 2
  %1114 = vperm.xlu0 %1113, %v65
  %v1115 = vpop.permute.xlu0 %1114
  %1117 = vset.pattern.permute.xlu0 2
  %1118 = vperm.xlu0 %1117, %v66
  %v1119 = vpop.permute.xlu0 %1118
  %1121 = vset.pattern.permute.xlu0 2
  %1122 = vperm.xlu0 %1121, %v67
  %v1123 = vpop.permute.xlu0 %1122
  %1125 = vset.pattern.permute.xlu0 2
  %1126 = vperm.xlu0 %1125, %v68
  %v1127 = vpop.permute.xlu0 %1126
  %1129 = vset.pattern.permute.xlu0 2
  %1130 = vperm.xlu0 %1129, %v69
  %v1131 = vpop.permute.xlu0 %1130
  %1133 = vset.pattern.permute.xlu0 2
  %1134 = vperm.xlu0 %1133, %v70
  %v1135 = vpop.permute.xlu0 %1134
  %1137 = vset.pattern.permute.xlu0 2
  %1138 = vperm.xlu0 %1137, %v71
  %v1139 = vpop.permute.xlu0 %1138
  %1141 = vset.pattern.permute.xlu0 2
  %1142 = vperm.xlu0 %1141, %v72
  %v1143 = vpop.permute.xlu0 %1142
  %1145 = vset.pattern.permute.xlu0 2
  %1146 = vperm.xlu0 %1145, %v73
  %v1147 = vpop.permute.xlu0 %1146
  %1149 = vset.pattern.permute.xlu0 2
  %1150 = vperm.xlu0 %1149, %v74
  %v1151 = vpop.permute.xlu0 %1150
  %1153 = vset.pattern.permute.xlu0 2
  %1154 = vperm.xlu0 %1153, %v75
  %v1155 = vpop.permute.xlu0 %1154
  %1157 = vset.pattern.permute.xlu0 2
  %1158 = vperm.xlu0 %1157, %v76
  %v1159 = vpop.permute.xlu0 %1158
  %1161 = vset.pattern.permute.xlu0 2
  %1162 = vperm.xlu0 %1161, %v77
  %v1163 = vpop.permute.xlu0 %1162
  %1165 = vset.pattern.permute.xlu0 2
  %1166 = vperm.xlu0 %1165, %v78
  %v1167 = vpop.permute.xlu0 %1166
  %1169 = vset.pattern.permute.xlu0 2
  %1170 = vperm.xlu0 %1169, %v79
  %v1171 = vpop.permute.xlu0 %1170
  %1173 = vset.pattern.permute.xlu0 2
  %1174 = vperm.xlu0 %1173, %v80
  %v1175 = vpop.permute.xlu0 %1174
  %1177 = vset.pattern.permute.xlu0 2
  %1178 = vperm.xlu0 %1177, %v81
  %v1179 = vpop.permute.xlu0 %1178
  %1181 = vset.pattern.permute.xlu0 2
  %1182 = vperm.xlu0 %1181, %v82
  %v1183 = vpop.permute.xlu0 %1182
  %1185 = vset.pattern.permute.xlu0 2
  %1186 = vperm.xlu0 %1185, %v83
  %v1187 = vpop.permute.xlu0 %1186
  %v1189 = vlaneseq
  %v1190 = vshrl.u32 %v1189, 7
  %v1191 = vsub.s32 2, %v1190
  %v1192 = vrot.slane %v84, %v1191
  %v1193 = vmul.f32 %v935, %v1192
  %v1194 = vmul.f32 %v939, %v1192
  %v1195 = vmul.f32 %v943, %v1192
  %v1196 = vmul.f32 %v947, %v1192
  %v1197 = vmul.f32 %v951, %v1192
  %v1198 = vmul.f32 %v955, %v1192
  %v1199 = vmul.f32 %v959, %v1192
  %v1200 = vmul.f32 %v963, %v1192
  %v1201 = vmul.f32 %v967, %v1192
  %v1202 = vmul.f32 %v971, %v1192
  %v1203 = vmul.f32 %v975, %v1192
  %v1204 = vmul.f32 %v979, %v1192
  %v1205 = vmul.f32 %v983, %v1192
  %v1206 = vmul.f32 %v987, %v1192
  %v1207 = vmul.f32 %v991, %v1192
  %v1208 = vmul.f32 %v995, %v1192
  %v1209 = vmul.f32 %v999, %v1192
  %v1210 = vmul.f32 %v1003, %v1192
  %v1211 = vmul.f32 %v1007, %v1192
  %v1212 = vmul.f32 %v1011, %v1192
  %v1213 = vmul.f32 %v1015, %v1192
  %v1214 = vmul.f32 %v1019, %v1192
  %v1215 = vmul.f32 %v1023, %v1192
  %v1216 = vmul.f32 %v1027, %v1192
  %v1217 = vmul.f32 %v1031, %v1192
  %v1218 = vmul.f32 %v1035, %v1192
  %v1219 = vmul.f32 %v1039, %v1192
  %v1220 = vmul.f32 %v1043, %v1192
  %v1221 = vmul.f32 %v1047, %v1192
  %v1222 = vmul.f32 %v1051, %v1192
  %v1223 = vmul.f32 %v1055, %v1192
  %v1224 = vmul.f32 %v1059, %v1192
  %v1225 = vmul.f32 %v1063, %v1192
  %v1226 = vmul.f32 %v1067, %v1192
  %v1227 = vmul.f32 %v1071, %v1192
  %v1228 = vmul.f32 %v1075, %v1192
  %v1229 = vmul.f32 %v1079, %v1192
  %v1230 = vmul.f32 %v1083, %v1192
  %v1231 = vmul.f32 %v1087, %v1192
  %v1232 = vmul.f32 %v1091, %v1192
  %v1233 = vmul.f32 %v1095, %v1192
  %v1234 = vmul.f32 %v1099, %v1192
  %v1235 = vmul.f32 %v1103, %v1192
  %v1236 = vmul.f32 %v1107, %v1192
  %v1237 = vmul.f32 %v1111, %v1192
  %v1238 = vmul.f32 %v1115, %v1192
  %v1239 = vmul.f32 %v1119, %v1192
  %v1240 = vmul.f32 %v1123, %v1192
  %v1241 = vmul.f32 %v1127, %v1192
  %v1242 = vmul.f32 %v1131, %v1192
  %v1243 = vmul.f32 %v1135, %v1192
  %v1244 = vmul.f32 %v1139, %v1192
  %v1245 = vmul.f32 %v1143, %v1192
  %v1246 = vmul.f32 %v1147, %v1192
  %v1247 = vmul.f32 %v1151, %v1192
  %v1248 = vmul.f32 %v1155, %v1192
  %v1249 = vmul.f32 %v1159, %v1192
  %v1250 = vmul.f32 %v1163, %v1192
  %v1251 = vmul.f32 %v1167, %v1192
  %v1252 = vmul.f32 %v1171, %v1192
  %v1253 = vmul.f32 %v1175, %v1192
  %v1254 = vmul.f32 %v1179, %v1192
  %v1255 = vmul.f32 %v1183, %v1192
  %v1256 = vmul.f32 %v1187, %v1192
  %v1257 = vadd.f32 %v869, %v1193
  %v1258 = vadd.f32 %v870, %v1194
  %v1259 = vadd.f32 %v871, %v1195
  %v1260 = vadd.f32 %v872, %v1196
  %v1261 = vadd.f32 %v873, %v1197
  %v1262 = vadd.f32 %v874, %v1198
  %v1263 = vadd.f32 %v875, %v1199
  %v1264 = vadd.f32 %v876, %v1200
  %v1265 = vadd.f32 %v877, %v1201
  %v1266 = vadd.f32 %v878, %v1202
  %v1267 = vadd.f32 %v879, %v1203
  %v1268 = vadd.f32 %v880, %v1204
  %v1269 = vadd.f32 %v881, %v1205
  %v1270 = vadd.f32 %v882, %v1206
  %v1271 = vadd.f32 %v883, %v1207
  %v1272 = vadd.f32 %v884, %v1208
  %v1273 = vadd.f32 %v885, %v1209
  %v1274 = vadd.f32 %v886, %v1210
  %v1275 = vadd.f32 %v887, %v1211
  %v1276 = vadd.f32 %v888, %v1212
  %v1277 = vadd.f32 %v889, %v1213
  %v1278 = vadd.f32 %v890, %v1214
  %v1279 = vadd.f32 %v891, %v1215
  %v1280 = vadd.f32 %v892, %v1216
  %v1281 = vadd.f32 %v893, %v1217
  %v1282 = vadd.f32 %v894, %v1218
  %v1283 = vadd.f32 %v895, %v1219
  %v1284 = vadd.f32 %v896, %v1220
  %v1285 = vadd.f32 %v897, %v1221
  %v1286 = vadd.f32 %v898, %v1222
  %v1287 = vadd.f32 %v899, %v1223
  %v1288 = vadd.f32 %v900, %v1224
  %v1289 = vadd.f32 %v901, %v1225
  %v1290 = vadd.f32 %v902, %v1226
  %v1291 = vadd.f32 %v903, %v1227
  %v1292 = vadd.f32 %v904, %v1228
  %v1293 = vadd.f32 %v905, %v1229
  %v1294 = vadd.f32 %v906, %v1230
  %v1295 = vadd.f32 %v907, %v1231
  %v1296 = vadd.f32 %v908, %v1232
  %v1297 = vadd.f32 %v909, %v1233
  %v1298 = vadd.f32 %v910, %v1234
  %v1299 = vadd.f32 %v911, %v1235
  %v1300 = vadd.f32 %v912, %v1236
  %v1301 = vadd.f32 %v913, %v1237
  %v1302 = vadd.f32 %v914, %v1238
  %v1303 = vadd.f32 %v915, %v1239
  %v1304 = vadd.f32 %v916, %v1240
  %v1305 = vadd.f32 %v917, %v1241
  %v1306 = vadd.f32 %v918, %v1242
  %v1307 = vadd.f32 %v919, %v1243
  %v1308 = vadd.f32 %v920, %v1244
  %v1309 = vadd.f32 %v921, %v1245
  %v1310 = vadd.f32 %v922, %v1246
  %v1311 = vadd.f32 %v923, %v1247
  %v1312 = vadd.f32 %v924, %v1248
  %v1313 = vadd.f32 %v925, %v1249
  %v1314 = vadd.f32 %v926, %v1250
  %v1315 = vadd.f32 %v927, %v1251
  %v1316 = vadd.f32 %v928, %v1252
  %v1317 = vadd.f32 %v929, %v1253
  %v1318 = vadd.f32 %v930, %v1254
  %v1319 = vadd.f32 %v931, %v1255
  %v1320 = vadd.f32 %v932, %v1256
  %v1321 = vmax.f32 %v1257, 0.0
  %v1322 = vmax.f32 %v1258, 0.0
  %v1323 = vmax.f32 %v1259, 0.0
  %v1324 = vmax.f32 %v1260, 0.0
  %v1325 = vmax.f32 %v1261, 0.0
  %v1326 = vmax.f32 %v1262, 0.0
  %v1327 = vmax.f32 %v1263, 0.0
  %v1328 = vmax.f32 %v1264, 0.0
  %v1329 = vmax.f32 %v1265, 0.0
  %v1330 = vmax.f32 %v1266, 0.0
  %v1331 = vmax.f32 %v1267, 0.0
  %v1332 = vmax.f32 %v1268, 0.0
  %v1333 = vmax.f32 %v1269, 0.0
  %v1334 = vmax.f32 %v1270, 0.0
  %v1335 = vmax.f32 %v1271, 0.0
  %v1336 = vmax.f32 %v1272, 0.0
  %v1337 = vmax.f32 %v1273, 0.0
  %v1338 = vmax.f32 %v1274, 0.0
  %v1339 = vmax.f32 %v1275, 0.0
  %v1340 = vmax.f32 %v1276, 0.0
  %v1341 = vmax.f32 %v1277, 0.0
  %v1342 = vmax.f32 %v1278, 0.0
  %v1343 = vmax.f32 %v1279, 0.0
  %v1344 = vmax.f32 %v1280, 0.0
  %v1345 = vmax.f32 %v1281, 0.0
  %v1346 = vmax.f32 %v1282, 0.0
  %v1347 = vmax.f32 %v1283, 0.0
  %v1348 = vmax.f32 %v1284, 0.0
  %v1349 = vmax.f32 %v1285, 0.0
  %v1350 = vmax.f32 %v1286, 0.0
  %v1351 = vmax.f32 %v1287, 0.0
  %v1352 = vmax.f32 %v1288, 0.0
  %v1353 = vmax.f32 %v1289, 0.0
  %v1354 = vmax.f32 %v1290, 0.0
  %v1355 = vmax.f32 %v1291, 0.0
  %v1356 = vmax.f32 %v1292, 0.0
  %v1357 = vmax.f32 %v1293, 0.0
  %v1358 = vmax.f32 %v1294, 0.0
  %v1359 = vmax.f32 %v1295, 0.0
  %v1360 = vmax.f32 %v1296, 0.0
  %v1361 = vmax.f32 %v1297, 0.0
  %v1362 = vmax.f32 %v1298, 0.0
  %v1363 = vmax.f32 %v1299, 0.0
  %v1364 = vmax.f32 %v1300, 0.0
  %v1365 = vmax.f32 %v1301, 0.0
  %v1366 = vmax.f32 %v1302, 0.0
  %v1367 = vmax.f32 %v1303, 0.0
  %v1368 = vmax.f32 %v1304, 0.0
  %v1369 = vmax.f32 %v1305, 0.0
  %v1370 = vmax.f32 %v1306, 0.0
  %v1371 = vmax.f32 %v1307, 0.0
  %v1372 = vmax.f32 %v1308, 0.0
  %v1373 = vmax.f32 %v1309, 0.0
  %v1374 = vmax.f32 %v1310, 0.0
  %v1375 = vmax.f32 %v1311, 0.0
  %v1376 = vmax.f32 %v1312, 0.0
  %v1377 = vmax.f32 %v1313, 0.0
  %v1378 = vmax.f32 %v1314, 0.0
  %v1379 = vmax.f32 %v1315, 0.0
  %v1380 = vmax.f32 %v1316, 0.0
  %v1381 = vmax.f32 %v1317, 0.0
  %v1382 = vmax.f32 %v1318, 0.0
  %v1383 = vmax.f32 %v1319, 0.0
  %v1384 = vmax.f32 %v1320, 0.0
  %v1385 = vld [vmem:[%s3] sm:$0xff]
  %v1386 = vld [vmem:[%s3 + $0x8] sm:$0xff]
  %v1387 = vld [vmem:[%s3 + $0x10] sm:$0xff]
  %v1388 = vld [vmem:[%s3 + $0x18] sm:$0xff]
  %v1389 = vld [vmem:[%s3 + $0x20] sm:$0xff]
  %v1390 = vld [vmem:[%s3 + $0x28] sm:$0xff]
  %v1391 = vld [vmem:[%s3 + $0x30] sm:$0xff]
  %v1392 = vld [vmem:[%s3 + $0x38] sm:$0xff]
  %v1393 = vld [vmem:[%s4] sm:$0x1]
  %v1395 = vlaneseq
  %v1396 = vshrl.u32 %v1395, 7
  %v1397 = vsub.s32 0, %v1396
  %v1398 = vrot.slane %v1393, %v1397
  %vm1400 = vcmask 523264
  %v1402 = vsel %vm1400, %v1321, 0
  %v1405 = vsel %vm1400, %v1322, 0
  %v1408 = vsel %vm1400, %v1323, 0
  %v1411 = vsel %vm1400, %v1324, 0
  %v1414 = vsel %vm1400, %v1325, 0
  %v1417 = vsel %vm1400, %v1326, 0
  %v1420 = vsel %vm1400, %v1327, 0
  %v1423 = vsel %vm1400, %v1328, 0
  %v1426 = vsel %vm1400, %v1329, 0
  %v1429 = vsel %vm1400, %v1330, 0
  %v1432 = vsel %vm1400, %v1331, 0
  %v1435 = vsel %vm1400, %v1332, 0
  %v1438 = vsel %vm1400, %v1333, 0
  %v1441 = vsel %vm1400, %v1334, 0
  %v1444 = vsel %vm1400, %v1335, 0
  %v1447 = vsel %vm1400, %v1336, 0
  %v1450 = vsel %vm1400, %v1337, 0
  %v1453 = vsel %vm1400, %v1338, 0
  %v1456 = vsel %vm1400, %v1339, 0
  %v1459 = vsel %vm1400, %v1340, 0
  %v1462 = vsel %vm1400, %v1341, 0
  %v1465 = vsel %vm1400, %v1342, 0
  %v1468 = vsel %vm1400, %v1343, 0
  %v1471 = vsel %vm1400, %v1344, 0
  %v1474 = vsel %vm1400, %v1345, 0
  %v1477 = vsel %vm1400, %v1346, 0
  %v1480 = vsel %vm1400, %v1347, 0
  %v1483 = vsel %vm1400, %v1348, 0
  %v1486 = vsel %vm1400, %v1349, 0
  %v1489 = vsel %vm1400, %v1350, 0
  %v1492 = vsel %vm1400, %v1351, 0
  %v1495 = vsel %vm1400, %v1352, 0
  %v1498 = vsel %vm1400, %v1353, 0
  %v1501 = vsel %vm1400, %v1354, 0
  %v1504 = vsel %vm1400, %v1355, 0
  %v1507 = vsel %vm1400, %v1356, 0
  %v1510 = vsel %vm1400, %v1357, 0
  %v1513 = vsel %vm1400, %v1358, 0
  %v1516 = vsel %vm1400, %v1359, 0
  %v1519 = vsel %vm1400, %v1360, 0
  %v1522 = vsel %vm1400, %v1361, 0
  %v1525 = vsel %vm1400, %v1362, 0
  %v1528 = vsel %vm1400, %v1363, 0
  %v1531 = vsel %vm1400, %v1364, 0
  %v1534 = vsel %vm1400, %v1365, 0
  %v1537 = vsel %vm1400, %v1366, 0
  %v1540 = vsel %vm1400, %v1367, 0
  %v1543 = vsel %vm1400, %v1368, 0
  %v1546 = vsel %vm1400, %v1369, 0
  %v1549 = vsel %vm1400, %v1370, 0
  %v1552 = vsel %vm1400, %v1371, 0
  %v1555 = vsel %vm1400, %v1372, 0
  %v1558 = vsel %vm1400, %v1373, 0
  %v1561 = vsel %vm1400, %v1374, 0
  %v1564 = vsel %vm1400, %v1375, 0
  %v1567 = vsel %vm1400, %v1376, 0
  %v1570 = vsel %vm1400, %v1377, 0
  %v1573 = vsel %vm1400, %v1378, 0
  %v1576 = vsel %vm1400, %v1379, 0
  %v1579 = vsel %vm1400, %v1380, 0
  %v1582 = vsel %vm1400, %v1381, 0
  %v1585 = vsel %vm1400, %v1382, 0
  %v1588 = vsel %vm1400, %v1383, 0
  %v1591 = vsel %vm1400, %v1384, 0
  %1593 = vmatprep.subr.mxu0 0.0
  %1594 = vmatpush1.msra.mxu0 0.0
  %1595 = vmatprep.subr.mxu0 0.0
  %1596 = vmatpush1.msra.mxu0 0.0
  %1597 = vmatprep.subr.mxu0 0.0
  %1598 = vmatpush1.msra.mxu0 0.0
  %1599 = vmatprep.subr.mxu0 0.0
  %1600 = vmatpush1.msra.mxu0 0.0
  %1601 = vmatprep.subr.mxu0 0.0
  %1602 = vmatpush1.msra.mxu0 0.0
  %1603 = vmatprep.subr.mxu0 0.0
  %1604 = vmatpush1.msra.mxu0 0.0
  %1605 = vmatprep.subr.mxu0 0.0
  %1606 = vmatpush1.msra.mxu0 0.0
  %1607 = vmatprep.subr.mxu0 0.0
  %1608 = vmatpush1.msra.mxu0 0.0
  %1609 = vmatprep.subr.mxu0 0.0
  %1610 = vmatpush1.msra.mxu0 %v1392
  %1611 = vmatprep.subr.mxu0 0.0
  %1612 = vmatpush1.msra.mxu0 %v1391
  %1613 = vmatprep.subr.mxu0 0.0
  %1614 = vmatpush1.msra.mxu0 %v1390
  %1615 = vmatprep.subr.mxu0 0.0
  %1616 = vmatpush1.msra.mxu0 %v1389
  %1617 = vmatprep.subr.mxu0 0.0
  %1618 = vmatpush1.msra.mxu0 %v1388
  %1619 = vmatprep.subr.mxu0 0.0
  %1620 = vmatpush1.msra.mxu0 %v1387
  %1621 = vmatprep.subr.mxu0 0.0
  %1622 = vmatpush1.msra.mxu0 %v1386
  %1623 = vmatprep.subr.mxu0 0.0
  %1624 = vmatpush1.msra.mxu0 %v1385
  %1625 = vmatprep.subr.mxu0 0.0
  %1626 = vmatpush2.msra.mxu0 0.0
  %1627 = vmatprep.subr.mxu0 0.0
  %1628 = vmatpush2.msra.mxu0 0.0
  %1629 = vmatprep.subr.mxu0 0.0
  %1630 = vmatpush2.msra.mxu0 0.0
  %1631 = vmatprep.subr.mxu0 0.0
  %1632 = vmatpush2.msra.mxu0 0.0
  %1633 = vmatprep.subr.mxu0 0.0
  %1634 = vmatpush2.msra.mxu0 0.0
  %1635 = vmatprep.subr.mxu0 0.0
  %1636 = vmatpush2.msra.mxu0 0.0
  %1637 = vmatprep.subr.mxu0 0.0
  %1638 = vmatpush2.msra.mxu0 0.0
  %1639 = vmatprep.subr.mxu0 0.0
  %1640 = vmatpush2.msra.mxu0 0.0
  %1641 = vmatprep.subr.mxu0 0.0
  %1642 = vmatpush2.msra.mxu0 0.0
  %1643 = vmatprep.subr.mxu0 0.0
  %1644 = vmatpush2.msra.mxu0 0.0
  %1645 = vmatprep.subr.mxu0 0.0
  %1646 = vmatpush2.msra.mxu0 0.0
  %1647 = vmatprep.subr.mxu0 0.0
  %1648 = vmatpush2.msra.mxu0 0.0
  %1649 = vmatprep.subr.mxu0 0.0
  %1650 = vmatpush2.msra.mxu0 0.0
  %1651 = vmatprep.subr.mxu0 0.0
  %1652 = vmatpush2.msra.mxu0 0.0
  %1653 = vmatprep.subr.mxu0 0.0
  %1654 = vmatpush2.msra.mxu0 0.0
  %1655 = vmatprep.subr.mxu0 0.0
  %1656 = vmatpush2.msra.mxu0 0.0
  %1657 = vmatprep.mubr.f32.mxu0 0.0
  %1658 = vmatmul.mubr.f32.gmra.mxu0 %v1402
  %v1659 = vpop.f32.mrf.mxu0
  %v1660 = vadd.f32 %v1398, %v1659
  %v1661 = vpop.f32.mrf.mxu0
  %1662 = vmatprep.mubr.f32.mxu0 0.0
  %1663 = vmatmul.mubr.f32.gmra.mxu0 %v1405
  %v1664 = vpop.f32.mrf.mxu0
  %v1665 = vadd.f32 %v1398, %v1664
  %v1666 = vpop.f32.mrf.mxu0
  %1667 = vmatprep.mubr.f32.mxu0 0.0
  %1668 = vmatmul.mubr.f32.gmra.mxu0 %v1408
  %v1669 = vpop.f32.mrf.mxu0
  %v1670 = vadd.f32 %v1398, %v1669
  %v1671 = vpop.f32.mrf.mxu0
  %1672 = vmatprep.mubr.f32.mxu0 0.0
  %1673 = vmatmul.mubr.f32.gmra.mxu0 %v1411
  %v1674 = vpop.f32.mrf.mxu0
  %v1675 = vadd.f32 %v1398, %v1674
  %v1676 = vpop.f32.mrf.mxu0
  %1677 = vmatprep.mubr.f32.mxu0 0.0
  %1678 = vmatmul.mubr.f32.gmra.mxu0 %v1414
  %v1679 = vpop.f32.mrf.mxu0
  %v1680 = vadd.f32 %v1398, %v1679
  %v1681 = vpop.f32.mrf.mxu0
  %1682 = vmatprep.mubr.f32.mxu0 0.0
  %1683 = vmatmul.mubr.f32.gmra.mxu0 %v1417
  %v1684 = vpop.f32.mrf.mxu0
  %v1685 = vadd.f32 %v1398, %v1684
  %v1686 = vpop.f32.mrf.mxu0
  %1687 = vmatprep.mubr.f32.mxu0 0.0
  %1688 = vmatmul.mubr.f32.gmra.mxu0 %v1420
  %v1689 = vpop.f32.mrf.mxu0
  %v1690 = vadd.f32 %v1398, %v1689
  %v1691 = vpop.f32.mrf.mxu0
  %1692 = vmatprep.mubr.f32.mxu0 0.0
  %1693 = vmatmul.mubr.f32.gmra.mxu0 %v1423
  %v1694 = vpop.f32.mrf.mxu0
  %v1695 = vadd.f32 %v1398, %v1694
  %v1696 = vpop.f32.mrf.mxu0
  %1697 = vmatprep.mubr.f32.mxu0 0.0
  %1698 = vmatmul.mubr.f32.gmra.mxu0 %v1426
  %v1699 = vpop.f32.mrf.mxu0
  %v1700 = vadd.f32 %v1398, %v1699
  %v1701 = vpop.f32.mrf.mxu0
  %1702 = vmatprep.mubr.f32.mxu0 0.0
  %1703 = vmatmul.mubr.f32.gmra.mxu0 %v1429
  %v1704 = vpop.f32.mrf.mxu0
  %v1705 = vadd.f32 %v1398, %v1704
  %v1706 = vpop.f32.mrf.mxu0
  %1707 = vmatprep.mubr.f32.mxu0 0.0
  %1708 = vmatmul.mubr.f32.gmra.mxu0 %v1432
  %v1709 = vpop.f32.mrf.mxu0
  %v1710 = vadd.f32 %v1398, %v1709
  %v1711 = vpop.f32.mrf.mxu0
  %1712 = vmatprep.mubr.f32.mxu0 0.0
  %1713 = vmatmul.mubr.f32.gmra.mxu0 %v1435
  %v1714 = vpop.f32.mrf.mxu0
  %v1715 = vadd.f32 %v1398, %v1714
  %v1716 = vpop.f32.mrf.mxu0
  %1717 = vmatprep.mubr.f32.mxu0 0.0
  %1718 = vmatmul.mubr.f32.gmra.mxu0 %v1438
  %v1719 = vpop.f32.mrf.mxu0
  %v1720 = vadd.f32 %v1398, %v1719
  %v1721 = vpop.f32.mrf.mxu0
  %1722 = vmatprep.mubr.f32.mxu0 0.0
  %1723 = vmatmul.mubr.f32.gmra.mxu0 %v1441
  %v1724 = vpop.f32.mrf.mxu0
  %v1725 = vadd.f32 %v1398, %v1724
  %v1726 = vpop.f32.mrf.mxu0
  %1727 = vmatprep.mubr.f32.mxu0 0.0
  %1728 = vmatmul.mubr.f32.gmra.mxu0 %v1444
  %v1729 = vpop.f32.mrf.mxu0
  %v1730 = vadd.f32 %v1398, %v1729
  %v1731 = vpop.f32.mrf.mxu0
  %1732 = vmatprep.mubr.f32.mxu0 0.0
  %1733 = vmatmul.mubr.f32.gmra.mxu0 %v1447
  %v1734 = vpop.f32.mrf.mxu0
  %v1735 = vadd.f32 %v1398, %v1734
  %v1736 = vpop.f32.mrf.mxu0
  %1737 = vmatprep.mubr.f32.mxu0 0.0
  %1738 = vmatmul.mubr.f32.gmra.mxu0 %v1450
  %v1739 = vpop.f32.mrf.mxu0
  %v1740 = vadd.f32 %v1398, %v1739
  %v1741 = vpop.f32.mrf.mxu0
  %1742 = vmatprep.mubr.f32.mxu0 0.0
  %1743 = vmatmul.mubr.f32.gmra.mxu0 %v1453
  %v1744 = vpop.f32.mrf.mxu0
  %v1745 = vadd.f32 %v1398, %v1744
  %v1746 = vpop.f32.mrf.mxu0
  %1747 = vmatprep.mubr.f32.mxu0 0.0
  %1748 = vmatmul.mubr.f32.gmra.mxu0 %v1456
  %v1749 = vpop.f32.mrf.mxu0
  %v1750 = vadd.f32 %v1398, %v1749
  %v1751 = vpop.f32.mrf.mxu0
  %1752 = vmatprep.mubr.f32.mxu0 0.0
  %1753 = vmatmul.mubr.f32.gmra.mxu0 %v1459
  %v1754 = vpop.f32.mrf.mxu0
  %v1755 = vadd.f32 %v1398, %v1754
  %v1756 = vpop.f32.mrf.mxu0
  %1757 = vmatprep.mubr.f32.mxu0 0.0
  %1758 = vmatmul.mubr.f32.gmra.mxu0 %v1462
  %v1759 = vpop.f32.mrf.mxu0
  %v1760 = vadd.f32 %v1398, %v1759
  %v1761 = vpop.f32.mrf.mxu0
  %1762 = vmatprep.mubr.f32.mxu0 0.0
  %1763 = vmatmul.mubr.f32.gmra.mxu0 %v1465
  %v1764 = vpop.f32.mrf.mxu0
  %v1765 = vadd.f32 %v1398, %v1764
  %v1766 = vpop.f32.mrf.mxu0
  %1767 = vmatprep.mubr.f32.mxu0 0.0
  %1768 = vmatmul.mubr.f32.gmra.mxu0 %v1468
  %v1769 = vpop.f32.mrf.mxu0
  %v1770 = vadd.f32 %v1398, %v1769
  %v1771 = vpop.f32.mrf.mxu0
  %1772 = vmatprep.mubr.f32.mxu0 0.0
  %1773 = vmatmul.mubr.f32.gmra.mxu0 %v1471
  %v1774 = vpop.f32.mrf.mxu0
  %v1775 = vadd.f32 %v1398, %v1774
  %v1776 = vpop.f32.mrf.mxu0
  %1777 = vmatprep.mubr.f32.mxu0 0.0
  %1778 = vmatmul.mubr.f32.gmra.mxu0 %v1474
  %v1779 = vpop.f32.mrf.mxu0
  %v1780 = vadd.f32 %v1398, %v1779
  %v1781 = vpop.f32.mrf.mxu0
  %1782 = vmatprep.mubr.f32.mxu0 0.0
  %1783 = vmatmul.mubr.f32.gmra.mxu0 %v1477
  %v1784 = vpop.f32.mrf.mxu0
  %v1785 = vadd.f32 %v1398, %v1784
  %v1786 = vpop.f32.mrf.mxu0
  %1787 = vmatprep.mubr.f32.mxu0 0.0
  %1788 = vmatmul.mubr.f32.gmra.mxu0 %v1480
  %v1789 = vpop.f32.mrf.mxu0
  %v1790 = vadd.f32 %v1398, %v1789
  %v1791 = vpop.f32.mrf.mxu0
  %1792 = vmatprep.mubr.f32.mxu0 0.0
  %1793 = vmatmul.mubr.f32.gmra.mxu0 %v1483
  %v1794 = vpop.f32.mrf.mxu0
  %v1795 = vadd.f32 %v1398, %v1794
  %v1796 = vpop.f32.mrf.mxu0
  %1797 = vmatprep.mubr.f32.mxu0 0.0
  %1798 = vmatmul.mubr.f32.gmra.mxu0 %v1486
  %v1799 = vpop.f32.mrf.mxu0
  %v1800 = vadd.f32 %v1398, %v1799
  %v1801 = vpop.f32.mrf.mxu0
  %1802 = vmatprep.mubr.f32.mxu0 0.0
  %1803 = vmatmul.mubr.f32.gmra.mxu0 %v1489
  %v1804 = vpop.f32.mrf.mxu0
  %v1805 = vadd.f32 %v1398, %v1804
  %v1806 = vpop.f32.mrf.mxu0
  %1807 = vmatprep.mubr.f32.mxu0 0.0
  %1808 = vmatmul.mubr.f32.gmra.mxu0 %v1492
  %v1809 = vpop.f32.mrf.mxu0
  %v1810 = vadd.f32 %v1398, %v1809
  %v1811 = vpop.f32.mrf.mxu0
  %1812 = vmatprep.mubr.f32.mxu0 0.0
  %1813 = vmatmul.mubr.f32.gmra.mxu0 %v1495
  %v1814 = vpop.f32.mrf.mxu0
  %v1815 = vadd.f32 %v1398, %v1814
  %v1816 = vpop.f32.mrf.mxu0
  %1817 = vmatprep.mubr.f32.mxu0 0.0
  %1818 = vmatmul.mubr.f32.gmra.mxu0 %v1498
  %v1819 = vpop.f32.mrf.mxu0
  %v1820 = vadd.f32 %v1398, %v1819
  %v1821 = vpop.f32.mrf.mxu0
  %1822 = vmatprep.mubr.f32.mxu0 0.0
  %1823 = vmatmul.mubr.f32.gmra.mxu0 %v1501
  %v1824 = vpop.f32.mrf.mxu0
  %v1825 = vadd.f32 %v1398, %v1824
  %v1826 = vpop.f32.mrf.mxu0
  %1827 = vmatprep.mubr.f32.mxu0 0.0
  %1828 = vmatmul.mubr.f32.gmra.mxu0 %v1504
  %v1829 = vpop.f32.mrf.mxu0
  %v1830 = vadd.f32 %v1398, %v1829
  %v1831 = vpop.f32.mrf.mxu0
  %1832 = vmatprep.mubr.f32.mxu0 0.0
  %1833 = vmatmul.mubr.f32.gmra.mxu0 %v1507
  %v1834 = vpop.f32.mrf.mxu0
  %v1835 = vadd.f32 %v1398, %v1834
  %v1836 = vpop.f32.mrf.mxu0
  %1837 = vmatprep.mubr.f32.mxu0 0.0
  %1838 = vmatmul.mubr.f32.gmra.mxu0 %v1510
  %v1839 = vpop.f32.mrf.mxu0
  %v1840 = vadd.f32 %v1398, %v1839
  %v1841 = vpop.f32.mrf.mxu0
  %1842 = vmatprep.mubr.f32.mxu0 0.0
  %1843 = vmatmul.mubr.f32.gmra.mxu0 %v1513
  %v1844 = vpop.f32.mrf.mxu0
  %v1845 = vadd.f32 %v1398, %v1844
  %v1846 = vpop.f32.mrf.mxu0
  %1847 = vmatprep.mubr.f32.mxu0 0.0
  %1848 = vmatmul.mubr.f32.gmra.mxu0 %v1516
  %v1849 = vpop.f32.mrf.mxu0
  %v1850 = vadd.f32 %v1398, %v1849
  %v1851 = vpop.f32.mrf.mxu0
  %1852 = vmatprep.mubr.f32.mxu0 0.0
  %1853 = vmatmul.mubr.f32.gmra.mxu0 %v1519
  %v1854 = vpop.f32.mrf.mxu0
  %v1855 = vadd.f32 %v1398, %v1854
  %v1856 = vpop.f32.mrf.mxu0
  %1857 = vmatprep.mubr.f32.mxu0 0.0
  %1858 = vmatmul.mubr.f32.gmra.mxu0 %v1522
  %v1859 = vpop.f32.mrf.mxu0
  %v1860 = vadd.f32 %v1398, %v1859
  %v1861 = vpop.f32.mrf.mxu0
  %1862 = vmatprep.mubr.f32.mxu0 0.0
  %1863 = vmatmul.mubr.f32.gmra.mxu0 %v1525
  %v1864 = vpop.f32.mrf.mxu0
  %v1865 = vadd.f32 %v1398, %v1864
  %v1866 = vpop.f32.mrf.mxu0
  %1867 = vmatprep.mubr.f32.mxu0 0.0
  %1868 = vmatmul.mubr.f32.gmra.mxu0 %v1528
  %v1869 = vpop.f32.mrf.mxu0
  %v1870 = vadd.f32 %v1398, %v1869
  %v1871 = vpop.f32.mrf.mxu0
  %1872 = vmatprep.mubr.f32.mxu0 0.0
  %1873 = vmatmul.mubr.f32.gmra.mxu0 %v1531
  %v1874 = vpop.f32.mrf.mxu0
  %v1875 = vadd.f32 %v1398, %v1874
  %v1876 = vpop.f32.mrf.mxu0
  %1877 = vmatprep.mubr.f32.mxu0 0.0
  %1878 = vmatmul.mubr.f32.gmra.mxu0 %v1534
  %v1879 = vpop.f32.mrf.mxu0
  %v1880 = vadd.f32 %v1398, %v1879
  %v1881 = vpop.f32.mrf.mxu0
  %1882 = vmatprep.mubr.f32.mxu0 0.0
  %1883 = vmatmul.mubr.f32.gmra.mxu0 %v1537
  %v1884 = vpop.f32.mrf.mxu0
  %v1885 = vadd.f32 %v1398, %v1884
  %v1886 = vpop.f32.mrf.mxu0
  %1887 = vmatprep.mubr.f32.mxu0 0.0
  %1888 = vmatmul.mubr.f32.gmra.mxu0 %v1540
  %v1889 = vpop.f32.mrf.mxu0
  %v1890 = vadd.f32 %v1398, %v1889
  %v1891 = vpop.f32.mrf.mxu0
  %1892 = vmatprep.mubr.f32.mxu0 0.0
  %1893 = vmatmul.mubr.f32.gmra.mxu0 %v1543
  %v1894 = vpop.f32.mrf.mxu0
  %v1895 = vadd.f32 %v1398, %v1894
  %v1896 = vpop.f32.mrf.mxu0
  %1897 = vmatprep.mubr.f32.mxu0 0.0
  %1898 = vmatmul.mubr.f32.gmra.mxu0 %v1546
  %v1899 = vpop.f32.mrf.mxu0
  %v1900 = vadd.f32 %v1398, %v1899
  %v1901 = vpop.f32.mrf.mxu0
  %1902 = vmatprep.mubr.f32.mxu0 0.0
  %1903 = vmatmul.mubr.f32.gmra.mxu0 %v1549
  %v1904 = vpop.f32.mrf.mxu0
  %v1905 = vadd.f32 %v1398, %v1904
  %v1906 = vpop.f32.mrf.mxu0
  %1907 = vmatprep.mubr.f32.mxu0 0.0
  %1908 = vmatmul.mubr.f32.gmra.mxu0 %v1552
  %v1909 = vpop.f32.mrf.mxu0
  %v1910 = vadd.f32 %v1398, %v1909
  %v1911 = vpop.f32.mrf.mxu0
  %1912 = vmatprep.mubr.f32.mxu0 0.0
  %1913 = vmatmul.mubr.f32.gmra.mxu0 %v1555
  %v1914 = vpop.f32.mrf.mxu0
  %v1915 = vadd.f32 %v1398, %v1914
  %v1916 = vpop.f32.mrf.mxu0
  %1917 = vmatprep.mubr.f32.mxu0 0.0
  %1918 = vmatmul.mubr.f32.gmra.mxu0 %v1558
  %v1919 = vpop.f32.mrf.mxu0
  %v1920 = vadd.f32 %v1398, %v1919
  %v1921 = vpop.f32.mrf.mxu0
  %1922 = vmatprep.mubr.f32.mxu0 0.0
  %1923 = vmatmul.mubr.f32.gmra.mxu0 %v1561
  %v1924 = vpop.f32.mrf.mxu0
  %v1925 = vadd.f32 %v1398, %v1924
  %v1926 = vpop.f32.mrf.mxu0
  %1927 = vmatprep.mubr.f32.mxu0 0.0
  %1928 = vmatmul.mubr.f32.gmra.mxu0 %v1564
  %v1929 = vpop.f32.mrf.mxu0
  %v1930 = vadd.f32 %v1398, %v1929
  %v1931 = vpop.f32.mrf.mxu0
  %1932 = vmatprep.mubr.f32.mxu0 0.0
  %1933 = vmatmul.mubr.f32.gmra.mxu0 %v1567
  %v1934 = vpop.f32.mrf.mxu0
  %v1935 = vadd.f32 %v1398, %v1934
  %v1936 = vpop.f32.mrf.mxu0
  %1937 = vmatprep.mubr.f32.mxu0 0.0
  %1938 = vmatmul.mubr.f32.gmra.mxu0 %v1570
  %v1939 = vpop.f32.mrf.mxu0
  %v1940 = vadd.f32 %v1398, %v1939
  %v1941 = vpop.f32.mrf.mxu0
  %1942 = vmatprep.mubr.f32.mxu0 0.0
  %1943 = vmatmul.mubr.f32.gmra.mxu0 %v1573
  %v1944 = vpop.f32.mrf.mxu0
  %v1945 = vadd.f32 %v1398, %v1944
  %v1946 = vpop.f32.mrf.mxu0
  %1947 = vmatprep.mubr.f32.mxu0 0.0
  %1948 = vmatmul.mubr.f32.gmra.mxu0 %v1576
  %v1949 = vpop.f32.mrf.mxu0
  %v1950 = vadd.f32 %v1398, %v1949
  %v1951 = vpop.f32.mrf.mxu0
  %1952 = vmatprep.mubr.f32.mxu0 0.0
  %1953 = vmatmul.mubr.f32.gmra.mxu0 %v1579
  %v1954 = vpop.f32.mrf.mxu0
  %v1955 = vadd.f32 %v1398, %v1954
  %v1956 = vpop.f32.mrf.mxu0
  %1957 = vmatprep.mubr.f32.mxu0 0.0
  %1958 = vmatmul.mubr.f32.gmra.mxu0 %v1582
  %v1959 = vpop.f32.mrf.mxu0
  %v1960 = vadd.f32 %v1398, %v1959
  %v1961 = vpop.f32.mrf.mxu0
  %1962 = vmatprep.mubr.f32.mxu0 0.0
  %1963 = vmatmul.mubr.f32.gmra.mxu0 %v1585
  %v1964 = vpop.f32.mrf.mxu0
  %v1965 = vadd.f32 %v1398, %v1964
  %v1966 = vpop.f32.mrf.mxu0
  %1967 = vmatprep.mubr.f32.mxu0 0.0
  %1968 = vmatmul.mubr.f32.gmra.mxu0 %v1588
  %v1969 = vpop.f32.mrf.mxu0
  %v1970 = vadd.f32 %v1398, %v1969
  %v1971 = vpop.f32.mrf.mxu0
  %1972 = vmatprep.mubr.f32.mxu0 0.0
  %1973 = vmatmul.mubr.f32.gmra.mxu0 %v1591
  %v1974 = vpop.f32.mrf.mxu0
  %v1975 = vadd.f32 %v1398, %v1974
  %v1976 = vpop.f32.mrf.mxu0
  %1977 = vdwg.mxu0
  %1978 = vst [vmem:[%s5] sm:$0xff] %v1660
  %1979 = vst [vmem:[%s5 + $0x8] sm:$0xff] %v1665
  %1980 = vst [vmem:[%s5 + $0x10] sm:$0xff] %v1670
  %1981 = vst [vmem:[%s5 + $0x18] sm:$0xff] %v1675
  %1982 = vst [vmem:[%s5 + $0x20] sm:$0xff] %v1680
  %1983 = vst [vmem:[%s5 + $0x28] sm:$0xff] %v1685
  %1984 = vst [vmem:[%s5 + $0x30] sm:$0xff] %v1690
  %1985 = vst [vmem:[%s5 + $0x38] sm:$0xff] %v1695
  %1986 = vst [vmem:[%s5 + $0x40] sm:$0xff] %v1700
  %1987 = vst [vmem:[%s5 + $0x48] sm:$0xff] %v1705
  %1988 = vst [vmem:[%s5 + $0x50] sm:$0xff] %v1710
  %1989 = vst [vmem:[%s5 + $0x58] sm:$0xff] %v1715
  %1990 = vst [vmem:[%s5 + $0x60] sm:$0xff] %v1720
  %1991 = vst [vmem:[%s5 + $0x68] sm:$0xff] %v1725
  %1992 = vst [vmem:[%s5 + $0x70] sm:$0xff] %v1730
  %1993 = vst [vmem:[%s5 + $0x78] sm:$0xff] %v1735
  %1994 = vst [vmem:[%s5 + $0x80] sm:$0xff] %v1740
  %1995 = vst [vmem:[%s5 + $0x88] sm:$0xff] %v1745
  %1996 = vst [vmem:[%s5 + $0x90] sm:$0xff] %v1750
  %1997 = vst [vmem:[%s5 + $0x98] sm:$0xff] %v1755
  %1998 = vst [vmem:[%s5 + $0xa0] sm:$0xff] %v1760
  %1999 = vst [vmem:[%s5 + $0xa8] sm:$0xff] %v1765
  %2000 = vst [vmem:[%s5 + $0xb0] sm:$0xff] %v1770
  %2001 = vst [vmem:[%s5 + $0xb8] sm:$0xff] %v1775
  %2002 = vst [vmem:[%s5 + $0xc0] sm:$0xff] %v1780
  %2003 = vst [vmem:[%s5 + $0xc8] sm:$0xff] %v1785
  %2004 = vst [vmem:[%s5 + $0xd0] sm:$0xff] %v1790
  %2005 = vst [vmem:[%s5 + $0xd8] sm:$0xff] %v1795
  %2006 = vst [vmem:[%s5 + $0xe0] sm:$0xff] %v1800
  %2007 = vst [vmem:[%s5 + $0xe8] sm:$0xff] %v1805
  %2008 = vst [vmem:[%s5 + $0xf0] sm:$0xff] %v1810
  %2009 = vst [vmem:[%s5 + $0xf8] sm:$0xff] %v1815
  %2010 = vst [vmem:[%s5 + $0x100] sm:$0xff] %v1820
  %2011 = vst [vmem:[%s5 + $0x108] sm:$0xff] %v1825
  %2012 = vst [vmem:[%s5 + $0x110] sm:$0xff] %v1830
  %2013 = vst [vmem:[%s5 + $0x118] sm:$0xff] %v1835
  %2014 = vst [vmem:[%s5 + $0x120] sm:$0xff] %v1840
  %2015 = vst [vmem:[%s5 + $0x128] sm:$0xff] %v1845
  %2016 = vst [vmem:[%s5 + $0x130] sm:$0xff] %v1850
  %2017 = vst [vmem:[%s5 + $0x138] sm:$0xff] %v1855
  %2018 = vst [vmem:[%s5 + $0x140] sm:$0xff] %v1860
  %2019 = vst [vmem:[%s5 + $0x148] sm:$0xff] %v1865
  %2020 = vst [vmem:[%s5 + $0x150] sm:$0xff] %v1870
  %2021 = vst [vmem:[%s5 + $0x158] sm:$0xff] %v1875
  %2022 = vst [vmem:[%s5 + $0x160] sm:$0xff] %v1880
  %2023 = vst [vmem:[%s5 + $0x168] sm:$0xff] %v1885
  %2024 = vst [vmem:[%s5 + $0x170] sm:$0xff] %v1890
  %2025 = vst [vmem:[%s5 + $0x178] sm:$0xff] %v1895
  %2026 = vst [vmem:[%s5 + $0x180] sm:$0xff] %v1900
  %2027 = vst [vmem:[%s5 + $0x188] sm:$0xff] %v1905
  %2028 = vst [vmem:[%s5 + $0x190] sm:$0xff] %v1910
  %2029 = vst [vmem:[%s5 + $0x198] sm:$0xff] %v1915
  %2030 = vst [vmem:[%s5 + $0x1a0] sm:$0xff] %v1920
  %2031 = vst [vmem:[%s5 + $0x1a8] sm:$0xff] %v1925
  %2032 = vst [vmem:[%s5 + $0x1b0] sm:$0xff] %v1930
  %2033 = vst [vmem:[%s5 + $0x1b8] sm:$0xff] %v1935
  %2034 = vst [vmem:[%s5 + $0x1c0] sm:$0xff] %v1940
  %2035 = vst [vmem:[%s5 + $0x1c8] sm:$0xff] %v1945
  %2036 = vst [vmem:[%s5 + $0x1d0] sm:$0xff] %v1950
  %2037 = vst [vmem:[%s5 + $0x1d8] sm:$0xff] %v1955
  %2038 = vst [vmem:[%s5 + $0x1e0] sm:$0xff] %v1960
  %2039 = vst [vmem:[%s5 + $0x1e8] sm:$0xff] %v1965
  %2040 = vst [vmem:[%s5 + $0x1f0] sm:$0xff] %v1970
  %2041 = vst [vmem:[%s5 + $0x1f8] sm:$0xff] %v1975
  // Predicated region
  $region22: #{_forward_impl.3} parent=0 // pred_check
    _
  $region23: #{_forward_impl.3} parent=0 // pred_check_branch
    %2043 = sbr.rel (0) target = $region25
  $region24: #{_forward_impl.3} parent=0 // pred_region
    _
  $region25: #{_forward_impl.3} parent=0 // pred_fallthru
    _
  // Predicated region
  $region26: #{_forward_impl.3} parent=0 // pred_check
    _
  $region27: #{_forward_impl.3} parent=0 // pred_check_branch
    %2045 = sbr.rel (0) target = $region29
  $region28: #{_forward_impl.3} parent=0 // pred_region
    _
  $region29: #{_forward_impl.3} parent=0 // pred_fallthru
    _

// kernel: _forward_impl.4
$region0: #{_forward_impl.4}
  #allocation0 [shape = 'u32[]', space=smem, size = 0x4, offset = 0x4, fixed_abs, tag = 'smem constant byte address 0x4 - core index']
  #allocation1 [shape = 'u32[144,128]{1,0:T(1,128)}', space=vmem, size = 0x12000, scoped, tag = 'internal scratch']
  %s0 = inlined_call_operand.vmem [shape: f32[512,3], index: 0, kind: input, shape index: {}]
  %s1 = inlined_call_operand.vmem [shape: f32[3,32], index: 1, kind: input, shape index: {}]
  %s2 = inlined_call_operand.vmem [shape: f32[1,32], index: 2, kind: input, shape index: {}]
  %s3 = inlined_call_operand.vmem [shape: f32[32,64], index: 3, kind: input, shape index: {}]
  %s4 = inlined_call_operand.vmem [shape: f32[1,64], index: 4, kind: input, shape index: {}]
  %s5 = inlined_call_operand.vmem [shape: f32[32,64], index: 5, kind: output, shape index: {}]
  %s6 = sld [smem:[#allocation0]]
  $region30: #{_forward_impl.4} parent=0
    _
  %s8 = ssub.s32 1, %s6
  %s9 = scalar_select 0, %s8, %s6
  // Predicated region
  $region2: #{_forward_impl.4} parent=0 // pred_check
    _
  $region3: #{_forward_impl.4} parent=0 // pred_check_branch
    %11 = sbr.rel (0) target = $region5
  $region4: #{_forward_impl.4} parent=0 // pred_region
    _
  $region5: #{_forward_impl.4} parent=0 // pred_fallthru
    _
  // Predicated region
  $region6: #{_forward_impl.4} parent=0 // pred_check
    _
  $region7: #{_forward_impl.4} parent=0 // pred_check_branch
    %13 = sbr.rel (0) target = $region9
  $region8: #{_forward_impl.4} parent=0 // pred_region
    _
  $region9: #{_forward_impl.4} parent=0 // pred_fallthru
    _
  // Predicated region
  $region10: #{_forward_impl.4} parent=0 // pred_check
    _
  $region11: #{_forward_impl.4} parent=0 // pred_check_branch
    %15 = sbr.rel (0) target = $region13
  $region12: #{_forward_impl.4} parent=0 // pred_region
    _
  $region13: #{_forward_impl.4} parent=0 // pred_fallthru
    _
  // Predicated region
  $region14: #{_forward_impl.4} parent=0 // pred_check
    _
  $region15: #{_forward_impl.4} parent=0 // pred_check_branch
    %17 = sbr.rel (0) target = $region17
  $region16: #{_forward_impl.4} parent=0 // pred_region
    _
  $region17: #{_forward_impl.4} parent=0 // pred_fallthru
    _
  // Predicated region
  $region18: #{_forward_impl.4} parent=0 // pred_check
    _
  $region19: #{_forward_impl.4} parent=0 // pred_check_branch
    %19 = sbr.rel (0) target = $region21
  $region20: #{_forward_impl.4} parent=0 // pred_region
    _
  $region21: #{_forward_impl.4} parent=0 // pred_fallthru
    _
  %v20 = vld [vmem:[%s0] sm:$0xff]
  %v21 = vld [vmem:[%s0 + $0x8] sm:$0xff]
  %v22 = vld [vmem:[%s0 + $0x10] sm:$0xff]
  %v23 = vld [vmem:[%s0 + $0x18] sm:$0xff]
  %v24 = vld [vmem:[%s0 + $0x20] sm:$0xff]
  %v25 = vld [vmem:[%s0 + $0x28] sm:$0xff]
  %v26 = vld [vmem:[%s0 + $0x30] sm:$0xff]
  %v27 = vld [vmem:[%s0 + $0x38] sm:$0xff]
  %v28 = vld [vmem:[%s0 + $0x40] sm:$0xff]
  %v29 = vld [vmem:[%s0 + $0x48] sm:$0xff]
  %v30 = vld [vmem:[%s0 + $0x50] sm:$0xff]
  %v31 = vld [vmem:[%s0 + $0x58] sm:$0xff]
  %v32 = vld [vmem:[%s0 + $0x60] sm:$0xff]
  %v33 = vld [vmem:[%s0 + $0x68] sm:$0xff]
  %v34 = vld [vmem:[%s0 + $0x70] sm:$0xff]
  %v35 = vld [vmem:[%s0 + $0x78] sm:$0xff]
  %v36 = vld [vmem:[%s0 + $0x80] sm:$0xff]
  %v37 = vld [vmem:[%s0 + $0x88] sm:$0xff]
  %v38 = vld [vmem:[%s0 + $0x90] sm:$0xff]
  %v39 = vld [vmem:[%s0 + $0x98] sm:$0xff]
  %v40 = vld [vmem:[%s0 + $0xa0] sm:$0xff]
  %v41 = vld [vmem:[%s0 + $0xa8] sm:$0xff]
  %v42 = vld [vmem:[%s0 + $0xb0] sm:$0xff]
  %v43 = vld [vmem:[%s0 + $0xb8] sm:$0xff]
  %v44 = vld [vmem:[%s0 + $0xc0] sm:$0xff]
  %v45 = vld [vmem:[%s0 + $0xc8] sm:$0xff]
  %v46 = vld [vmem:[%s0 + $0xd0] sm:$0xff]
  %v47 = vld [vmem:[%s0 + $0xd8] sm:$0xff]
  %v48 = vld [vmem:[%s0 + $0xe0] sm:$0xff]
  %v49 = vld [vmem:[%s0 + $0xe8] sm:$0xff]
  %v50 = vld [vmem:[%s0 + $0xf0] sm:$0xff]
  %v51 = vld [vmem:[%s0 + $0xf8] sm:$0xff]
  %v52 = vld [vmem:[%s0 + $0x100] sm:$0xff]
  %v53 = vld [vmem:[%s0 + $0x108] sm:$0xff]
  %v54 = vld [vmem:[%s0 + $0x110] sm:$0xff]
  %v55 = vld [vmem:[%s0 + $0x118] sm:$0xff]
  %v56 = vld [vmem:[%s0 + $0x120] sm:$0xff]
  %v57 = vld [vmem:[%s0 + $0x128] sm:$0xff]
  %v58 = vld [vmem:[%s0 + $0x130] sm:$0xff]
  %v59 = vld [vmem:[%s0 + $0x138] sm:$0xff]
  %v60 = vld [vmem:[%s0 + $0x140] sm:$0xff]
  %v61 = vld [vmem:[%s0 + $0x148] sm:$0xff]
  %v62 = vld [vmem:[%s0 + $0x150] sm:$0xff]
  %v63 = vld [vmem:[%s0 + $0x158] sm:$0xff]
  %v64 = vld [vmem:[%s0 + $0x160] sm:$0xff]
  %v65 = vld [vmem:[%s0 + $0x168] sm:$0xff]
  %v66 = vld [vmem:[%s0 + $0x170] sm:$0xff]
  %v67 = vld [vmem:[%s0 + $0x178] sm:$0xff]
  %v68 = vld [vmem:[%s0 + $0x180] sm:$0xff]
  %v69 = vld [vmem:[%s0 + $0x188] sm:$0xff]
  %v70 = vld [vmem:[%s0 + $0x190] sm:$0xff]
  %v71 = vld [vmem:[%s0 + $0x198] sm:$0xff]
  %v72 = vld [vmem:[%s0 + $0x1a0] sm:$0xff]
  %v73 = vld [vmem:[%s0 + $0x1a8] sm:$0xff]
  %v74 = vld [vmem:[%s0 + $0x1b0] sm:$0xff]
  %v75 = vld [vmem:[%s0 + $0x1b8] sm:$0xff]
  %v76 = vld [vmem:[%s0 + $0x1c0] sm:$0xff]
  %v77 = vld [vmem:[%s0 + $0x1c8] sm:$0xff]
  %v78 = vld [vmem:[%s0 + $0x1d0] sm:$0xff]
  %v79 = vld [vmem:[%s0 + $0x1d8] sm:$0xff]
  %v80 = vld [vmem:[%s0 + $0x1e0] sm:$0xff]
  %v81 = vld [vmem:[%s0 + $0x1e8] sm:$0xff]
  %v82 = vld [vmem:[%s0 + $0x1f0] sm:$0xff]
  %v83 = vld [vmem:[%s0 + $0x1f8] sm:$0xff]
  %v84 = vld [vmem:[%s1] sm:$0x7]
  %v85 = vld [vmem:[%s2] sm:$0x1]
  %v87 = vlaneseq
  %v88 = vshrl.u32 %v87, 7
  %v89 = vsub.s32 0, %v88
  %v90 = vrot.slane %v85, %v89
  %v92 = vadd.f32 %v90, 0.0
  %94 = vset.pattern.permute.xlu0 0
  %95 = vperm.xlu0 %94, %v20
  %v96 = vpop.permute.xlu0 %95
  %99 = vset.pattern.permute.xlu0 0
  %100 = vperm.xlu0 %99, %v21
  %v101 = vpop.permute.xlu0 %100
  %104 = vset.pattern.permute.xlu0 0
  %105 = vperm.xlu0 %104, %v22
  %v106 = vpop.permute.xlu0 %105
  %109 = vset.pattern.permute.xlu0 0
  %110 = vperm.xlu0 %109, %v23
  %v111 = vpop.permute.xlu0 %110
  %114 = vset.pattern.permute.xlu0 0
  %115 = vperm.xlu0 %114, %v24
  %v116 = vpop.permute.xlu0 %115
  %119 = vset.pattern.permute.xlu0 0
  %120 = vperm.xlu0 %119, %v25
  %v121 = vpop.permute.xlu0 %120
  %124 = vset.pattern.permute.xlu0 0
  %125 = vperm.xlu0 %124, %v26
  %v126 = vpop.permute.xlu0 %125
  %129 = vset.pattern.permute.xlu0 0
  %130 = vperm.xlu0 %129, %v27
  %v131 = vpop.permute.xlu0 %130
  %134 = vset.pattern.permute.xlu0 0
  %135 = vperm.xlu0 %134, %v28
  %v136 = vpop.permute.xlu0 %135
  %139 = vset.pattern.permute.xlu0 0
  %140 = vperm.xlu0 %139, %v29
  %v141 = vpop.permute.xlu0 %140
  %144 = vset.pattern.permute.xlu0 0
  %145 = vperm.xlu0 %144, %v30
  %v146 = vpop.permute.xlu0 %145
  %149 = vset.pattern.permute.xlu0 0
  %150 = vperm.xlu0 %149, %v31
  %v151 = vpop.permute.xlu0 %150
  %154 = vset.pattern.permute.xlu0 0
  %155 = vperm.xlu0 %154, %v32
  %v156 = vpop.permute.xlu0 %155
  %159 = vset.pattern.permute.xlu0 0
  %160 = vperm.xlu0 %159, %v33
  %v161 = vpop.permute.xlu0 %160
  %164 = vset.pattern.permute.xlu0 0
  %165 = vperm.xlu0 %164, %v34
  %v166 = vpop.permute.xlu0 %165
  %169 = vset.pattern.permute.xlu0 0
  %170 = vperm.xlu0 %169, %v35
  %v171 = vpop.permute.xlu0 %170
  %174 = vset.pattern.permute.xlu0 0
  %175 = vperm.xlu0 %174, %v36
  %v176 = vpop.permute.xlu0 %175
  %179 = vset.pattern.permute.xlu0 0
  %180 = vperm.xlu0 %179, %v37
  %v181 = vpop.permute.xlu0 %180
  %184 = vset.pattern.permute.xlu0 0
  %185 = vperm.xlu0 %184, %v38
  %v186 = vpop.permute.xlu0 %185
  %189 = vset.pattern.permute.xlu0 0
  %190 = vperm.xlu0 %189, %v39
  %v191 = vpop.permute.xlu0 %190
  %194 = vset.pattern.permute.xlu0 0
  %195 = vperm.xlu0 %194, %v40
  %v196 = vpop.permute.xlu0 %195
  %199 = vset.pattern.permute.xlu0 0
  %200 = vperm.xlu0 %199, %v41
  %v201 = vpop.permute.xlu0 %200
  %204 = vset.pattern.permute.xlu0 0
  %205 = vperm.xlu0 %204, %v42
  %v206 = vpop.permute.xlu0 %205
  %209 = vset.pattern.permute.xlu0 0
  %210 = vperm.xlu0 %209, %v43
  %v211 = vpop.permute.xlu0 %210
  %214 = vset.pattern.permute.xlu0 0
  %215 = vperm.xlu0 %214, %v44
  %v216 = vpop.permute.xlu0 %215
  %219 = vset.pattern.permute.xlu0 0
  %220 = vperm.xlu0 %219, %v45
  %v221 = vpop.permute.xlu0 %220
  %224 = vset.pattern.permute.xlu0 0
  %225 = vperm.xlu0 %224, %v46
  %v226 = vpop.permute.xlu0 %225
  %229 = vset.pattern.permute.xlu0 0
  %230 = vperm.xlu0 %229, %v47
  %v231 = vpop.permute.xlu0 %230
  %234 = vset.pattern.permute.xlu0 0
  %235 = vperm.xlu0 %234, %v48
  %v236 = vpop.permute.xlu0 %235
  %239 = vset.pattern.permute.xlu0 0
  %240 = vperm.xlu0 %239, %v49
  %v241 = vpop.permute.xlu0 %240
  %244 = vset.pattern.permute.xlu0 0
  %245 = vperm.xlu0 %244, %v50
  %v246 = vpop.permute.xlu0 %245
  %249 = vset.pattern.permute.xlu0 0
  %250 = vperm.xlu0 %249, %v51
  %v251 = vpop.permute.xlu0 %250
  %254 = vset.pattern.permute.xlu0 0
  %255 = vperm.xlu0 %254, %v52
  %v256 = vpop.permute.xlu0 %255
  %259 = vset.pattern.permute.xlu0 0
  %260 = vperm.xlu0 %259, %v53
  %v261 = vpop.permute.xlu0 %260
  %264 = vset.pattern.permute.xlu0 0
  %265 = vperm.xlu0 %264, %v54
  %v266 = vpop.permute.xlu0 %265
  %269 = vset.pattern.permute.xlu0 0
  %270 = vperm.xlu0 %269, %v55
  %v271 = vpop.permute.xlu0 %270
  %274 = vset.pattern.permute.xlu0 0
  %275 = vperm.xlu0 %274, %v56
  %v276 = vpop.permute.xlu0 %275
  %279 = vset.pattern.permute.xlu0 0
  %280 = vperm.xlu0 %279, %v57
  %v281 = vpop.permute.xlu0 %280
  %284 = vset.pattern.permute.xlu0 0
  %285 = vperm.xlu0 %284, %v58
  %v286 = vpop.permute.xlu0 %285
  %289 = vset.pattern.permute.xlu0 0
  %290 = vperm.xlu0 %289, %v59
  %v291 = vpop.permute.xlu0 %290
  %294 = vset.pattern.permute.xlu0 0
  %295 = vperm.xlu0 %294, %v60
  %v296 = vpop.permute.xlu0 %295
  %299 = vset.pattern.permute.xlu0 0
  %300 = vperm.xlu0 %299, %v61
  %v301 = vpop.permute.xlu0 %300
  %304 = vset.pattern.permute.xlu0 0
  %305 = vperm.xlu0 %304, %v62
  %v306 = vpop.permute.xlu0 %305
  %309 = vset.pattern.permute.xlu0 0
  %310 = vperm.xlu0 %309, %v63
  %v311 = vpop.permute.xlu0 %310
  %314 = vset.pattern.permute.xlu0 0
  %315 = vperm.xlu0 %314, %v64
  %v316 = vpop.permute.xlu0 %315
  %319 = vset.pattern.permute.xlu0 0
  %320 = vperm.xlu0 %319, %v65
  %v321 = vpop.permute.xlu0 %320
  %324 = vset.pattern.permute.xlu0 0
  %325 = vperm.xlu0 %324, %v66
  %v326 = vpop.permute.xlu0 %325
  %329 = vset.pattern.permute.xlu0 0
  %330 = vperm.xlu0 %329, %v67
  %v331 = vpop.permute.xlu0 %330
  %334 = vset.pattern.permute.xlu0 0
  %335 = vperm.xlu0 %334, %v68
  %v336 = vpop.permute.xlu0 %335
  %339 = vset.pattern.permute.xlu0 0
  %340 = vperm.xlu0 %339, %v69
  %v341 = vpop.permute.xlu0 %340
  %344 = vset.pattern.permute.xlu0 0
  %345 = vperm.xlu0 %344, %v70
  %v346 = vpop.permute.xlu0 %345
  %349 = vset.pattern.permute.xlu0 0
  %350 = vperm.xlu0 %349, %v71
  %v351 = vpop.permute.xlu0 %350
  %354 = vset.pattern.permute.xlu0 0
  %355 = vperm.xlu0 %354, %v72
  %v356 = vpop.permute.xlu0 %355
  %359 = vset.pattern.permute.xlu0 0
  %360 = vperm.xlu0 %359, %v73
  %v361 = vpop.permute.xlu0 %360
  %364 = vset.pattern.permute.xlu0 0
  %365 = vperm.xlu0 %364, %v74
  %v366 = vpop.permute.xlu0 %365
  %369 = vset.pattern.permute.xlu0 0
  %370 = vperm.xlu0 %369, %v75
  %v371 = vpop.permute.xlu0 %370
  %374 = vset.pattern.permute.xlu0 0
  %375 = vperm.xlu0 %374, %v76
  %v376 = vpop.permute.xlu0 %375
  %379 = vset.pattern.permute.xlu0 0
  %380 = vperm.xlu0 %379, %v77
  %v381 = vpop.permute.xlu0 %380
  %384 = vset.pattern.permute.xlu0 0
  %385 = vperm.xlu0 %384, %v78
  %v386 = vpop.permute.xlu0 %385
  %389 = vset.pattern.permute.xlu0 0
  %390 = vperm.xlu0 %389, %v79
  %v391 = vpop.permute.xlu0 %390
  %394 = vset.pattern.permute.xlu0 0
  %395 = vperm.xlu0 %394, %v80
  %v396 = vpop.permute.xlu0 %395
  %399 = vset.pattern.permute.xlu0 0
  %400 = vperm.xlu0 %399, %v81
  %v401 = vpop.permute.xlu0 %400
  %404 = vset.pattern.permute.xlu0 0
  %405 = vperm.xlu0 %404, %v82
  %v406 = vpop.permute.xlu0 %405
  %409 = vset.pattern.permute.xlu0 0
  %410 = vperm.xlu0 %409, %v83
  %v411 = vpop.permute.xlu0 %410
  %v413 = vlaneseq
  %v414 = vshrl.u32 %v413, 7
  %v415 = vsub.s32 0, %v414
  %v416 = vrot.slane %v84, %v415
  %v417 = vmul.f32 %v96, %v416
  %v418 = vmul.f32 %v101, %v416
  %v419 = vmul.f32 %v106, %v416
  %v420 = vmul.f32 %v111, %v416
  %v421 = vmul.f32 %v116, %v416
  %v422 = vmul.f32 %v121, %v416
  %v423 = vmul.f32 %v126, %v416
  %v424 = vmul.f32 %v131, %v416
  %v425 = vmul.f32 %v136, %v416
  %v426 = vmul.f32 %v141, %v416
  %v427 = vmul.f32 %v146, %v416
  %v428 = vmul.f32 %v151, %v416
  %v429 = vmul.f32 %v156, %v416
  %v430 = vmul.f32 %v161, %v416
  %v431 = vmul.f32 %v166, %v416
  %v432 = vmul.f32 %v171, %v416
  %v433 = vmul.f32 %v176, %v416
  %v434 = vmul.f32 %v181, %v416
  %v435 = vmul.f32 %v186, %v416
  %v436 = vmul.f32 %v191, %v416
  %v437 = vmul.f32 %v196, %v416
  %v438 = vmul.f32 %v201, %v416
  %v439 = vmul.f32 %v206, %v416
  %v440 = vmul.f32 %v211, %v416
  %v441 = vmul.f32 %v216, %v416
  %v442 = vmul.f32 %v221, %v416
  %v443 = vmul.f32 %v226, %v416
  %v444 = vmul.f32 %v231, %v416
  %v445 = vmul.f32 %v236, %v416
  %v446 = vmul.f32 %v241, %v416
  %v447 = vmul.f32 %v246, %v416
  %v448 = vmul.f32 %v251, %v416
  %v449 = vmul.f32 %v256, %v416
  %v450 = vmul.f32 %v261, %v416
  %v451 = vmul.f32 %v266, %v416
  %v452 = vmul.f32 %v271, %v416
  %v453 = vmul.f32 %v276, %v416
  %v454 = vmul.f32 %v281, %v416
  %v455 = vmul.f32 %v286, %v416
  %v456 = vmul.f32 %v291, %v416
  %v457 = vmul.f32 %v296, %v416
  %v458 = vmul.f32 %v301, %v416
  %v459 = vmul.f32 %v306, %v416
  %v460 = vmul.f32 %v311, %v416
  %v461 = vmul.f32 %v316, %v416
  %v462 = vmul.f32 %v321, %v416
  %v463 = vmul.f32 %v326, %v416
  %v464 = vmul.f32 %v331, %v416
  %v465 = vmul.f32 %v336, %v416
  %v466 = vmul.f32 %v341, %v416
  %v467 = vmul.f32 %v346, %v416
  %v468 = vmul.f32 %v351, %v416
  %v469 = vmul.f32 %v356, %v416
  %v470 = vmul.f32 %v361, %v416
  %v471 = vmul.f32 %v366, %v416
  %v472 = vmul.f32 %v371, %v416
  %v473 = vmul.f32 %v376, %v416
  %v474 = vmul.f32 %v381, %v416
  %v475 = vmul.f32 %v386, %v416
  %v476 = vmul.f32 %v391, %v416
  %v477 = vmul.f32 %v396, %v416
  %v478 = vmul.f32 %v401, %v416
  %v479 = vmul.f32 %v406, %v416
  %v480 = vmul.f32 %v411, %v416
  %v481 = vadd.f32 %v92, %v417
  %v482 = vadd.f32 %v92, %v418
  %v483 = vadd.f32 %v92, %v419
  %v484 = vadd.f32 %v92, %v420
  %v485 = vadd.f32 %v92, %v421
  %v486 = vadd.f32 %v92, %v422
  %v487 = vadd.f32 %v92, %v423
  %v488 = vadd.f32 %v92, %v424
  %v489 = vadd.f32 %v92, %v425
  %v490 = vadd.f32 %v92, %v426
  %v491 = vadd.f32 %v92, %v427
  %v492 = vadd.f32 %v92, %v428
  %v493 = vadd.f32 %v92, %v429
  %v494 = vadd.f32 %v92, %v430
  %v495 = vadd.f32 %v92, %v431
  %v496 = vadd.f32 %v92, %v432
  %v497 = vadd.f32 %v92, %v433
  %v498 = vadd.f32 %v92, %v434
  %v499 = vadd.f32 %v92, %v435
  %v500 = vadd.f32 %v92, %v436
  %v501 = vadd.f32 %v92, %v437
  %v502 = vadd.f32 %v92, %v438
  %v503 = vadd.f32 %v92, %v439
  %v504 = vadd.f32 %v92, %v440
  %v505 = vadd.f32 %v92, %v441
  %v506 = vadd.f32 %v92, %v442
  %v507 = vadd.f32 %v92, %v443
  %v508 = vadd.f32 %v92, %v444
  %v509 = vadd.f32 %v92, %v445
  %v510 = vadd.f32 %v92, %v446
  %v511 = vadd.f32 %v92, %v447
  %v512 = vadd.f32 %v92, %v448
  %v513 = vadd.f32 %v92, %v449
  %v514 = vadd.f32 %v92, %v450
  %v515 = vadd.f32 %v92, %v451
  %v516 = vadd.f32 %v92, %v452
  %v517 = vadd.f32 %v92, %v453
  %v518 = vadd.f32 %v92, %v454
  %v519 = vadd.f32 %v92, %v455
  %v520 = vadd.f32 %v92, %v456
  %v521 = vadd.f32 %v92, %v457
  %v522 = vadd.f32 %v92, %v458
  %v523 = vadd.f32 %v92, %v459
  %v524 = vadd.f32 %v92, %v460
  %v525 = vadd.f32 %v92, %v461
  %v526 = vadd.f32 %v92, %v462
  %v527 = vadd.f32 %v92, %v463
  %v528 = vadd.f32 %v92, %v464
  %v529 = vadd.f32 %v92, %v465
  %v530 = vadd.f32 %v92, %v466
  %v531 = vadd.f32 %v92, %v467
  %v532 = vadd.f32 %v92, %v468
  %v533 = vadd.f32 %v92, %v469
  %v534 = vadd.f32 %v92, %v470
  %v535 = vadd.f32 %v92, %v471
  %v536 = vadd.f32 %v92, %v472
  %v537 = vadd.f32 %v92, %v473
  %v538 = vadd.f32 %v92, %v474
  %v539 = vadd.f32 %v92, %v475
  %v540 = vadd.f32 %v92, %v476
  %v541 = vadd.f32 %v92, %v477
  %v542 = vadd.f32 %v92, %v478
  %v543 = vadd.f32 %v92, %v479
  %v544 = vadd.f32 %v92, %v480
  %545 = vset.pattern.permute.xlu0 1
  %546 = vperm.xlu0 %545, %v20
  %v547 = vpop.permute.xlu0 %546
  %549 = vset.pattern.permute.xlu0 1
  %550 = vperm.xlu0 %549, %v21
  %v551 = vpop.permute.xlu0 %550
  %553 = vset.pattern.permute.xlu0 1
  %554 = vperm.xlu0 %553, %v22
  %v555 = vpop.permute.xlu0 %554
  %557 = vset.pattern.permute.xlu0 1
  %558 = vperm.xlu0 %557, %v23
  %v559 = vpop.permute.xlu0 %558
  %561 = vset.pattern.permute.xlu0 1
  %562 = vperm.xlu0 %561, %v24
  %v563 = vpop.permute.xlu0 %562
  %565 = vset.pattern.permute.xlu0 1
  %566 = vperm.xlu0 %565, %v25
  %v567 = vpop.permute.xlu0 %566
  %569 = vset.pattern.permute.xlu0 1
  %570 = vperm.xlu0 %569, %v26
  %v571 = vpop.permute.xlu0 %570
  %573 = vset.pattern.permute.xlu0 1
  %574 = vperm.xlu0 %573, %v27
  %v575 = vpop.permute.xlu0 %574
  %577 = vset.pattern.permute.xlu0 1
  %578 = vperm.xlu0 %577, %v28
  %v579 = vpop.permute.xlu0 %578
  %581 = vset.pattern.permute.xlu0 1
  %582 = vperm.xlu0 %581, %v29
  %v583 = vpop.permute.xlu0 %582
  %585 = vset.pattern.permute.xlu0 1
  %586 = vperm.xlu0 %585, %v30
  %v587 = vpop.permute.xlu0 %586
  %589 = vset.pattern.permute.xlu0 1
  %590 = vperm.xlu0 %589, %v31
  %v591 = vpop.permute.xlu0 %590
  %593 = vset.pattern.permute.xlu0 1
  %594 = vperm.xlu0 %593, %v32
  %v595 = vpop.permute.xlu0 %594
  %597 = vset.pattern.permute.xlu0 1
  %598 = vperm.xlu0 %597, %v33
  %v599 = vpop.permute.xlu0 %598
  %601 = vset.pattern.permute.xlu0 1
  %602 = vperm.xlu0 %601, %v34
  %v603 = vpop.permute.xlu0 %602
  %605 = vset.pattern.permute.xlu0 1
  %606 = vperm.xlu0 %605, %v35
  %v607 = vpop.permute.xlu0 %606
  %609 = vset.pattern.permute.xlu0 1
  %610 = vperm.xlu0 %609, %v36
  %v611 = vpop.permute.xlu0 %610
  %613 = vset.pattern.permute.xlu0 1
  %614 = vperm.xlu0 %613, %v37
  %v615 = vpop.permute.xlu0 %614
  %617 = vset.pattern.permute.xlu0 1
  %618 = vperm.xlu0 %617, %v38
  %v619 = vpop.permute.xlu0 %618
  %621 = vset.pattern.permute.xlu0 1
  %622 = vperm.xlu0 %621, %v39
  %v623 = vpop.permute.xlu0 %622
  %625 = vset.pattern.permute.xlu0 1
  %626 = vperm.xlu0 %625, %v40
  %v627 = vpop.permute.xlu0 %626
  %629 = vset.pattern.permute.xlu0 1
  %630 = vperm.xlu0 %629, %v41
  %v631 = vpop.permute.xlu0 %630
  %633 = vset.pattern.permute.xlu0 1
  %634 = vperm.xlu0 %633, %v42
  %v635 = vpop.permute.xlu0 %634
  %637 = vset.pattern.permute.xlu0 1
  %638 = vperm.xlu0 %637, %v43
  %v639 = vpop.permute.xlu0 %638
  %641 = vset.pattern.permute.xlu0 1
  %642 = vperm.xlu0 %641, %v44
  %v643 = vpop.permute.xlu0 %642
  %645 = vset.pattern.permute.xlu0 1
  %646 = vperm.xlu0 %645, %v45
  %v647 = vpop.permute.xlu0 %646
  %649 = vset.pattern.permute.xlu0 1
  %650 = vperm.xlu0 %649, %v46
  %v651 = vpop.permute.xlu0 %650
  %653 = vset.pattern.permute.xlu0 1
  %654 = vperm.xlu0 %653, %v47
  %v655 = vpop.permute.xlu0 %654
  %657 = vset.pattern.permute.xlu0 1
  %658 = vperm.xlu0 %657, %v48
  %v659 = vpop.permute.xlu0 %658
  %661 = vset.pattern.permute.xlu0 1
  %662 = vperm.xlu0 %661, %v49
  %v663 = vpop.permute.xlu0 %662
  %665 = vset.pattern.permute.xlu0 1
  %666 = vperm.xlu0 %665, %v50
  %v667 = vpop.permute.xlu0 %666
  %669 = vset.pattern.permute.xlu0 1
  %670 = vperm.xlu0 %669, %v51
  %v671 = vpop.permute.xlu0 %670
  %673 = vset.pattern.permute.xlu0 1
  %674 = vperm.xlu0 %673, %v52
  %v675 = vpop.permute.xlu0 %674
  %677 = vset.pattern.permute.xlu0 1
  %678 = vperm.xlu0 %677, %v53
  %v679 = vpop.permute.xlu0 %678
  %681 = vset.pattern.permute.xlu0 1
  %682 = vperm.xlu0 %681, %v54
  %v683 = vpop.permute.xlu0 %682
  %685 = vset.pattern.permute.xlu0 1
  %686 = vperm.xlu0 %685, %v55
  %v687 = vpop.permute.xlu0 %686
  %689 = vset.pattern.permute.xlu0 1
  %690 = vperm.xlu0 %689, %v56
  %v691 = vpop.permute.xlu0 %690
  %693 = vset.pattern.permute.xlu0 1
  %694 = vperm.xlu0 %693, %v57
  %v695 = vpop.permute.xlu0 %694
  %697 = vset.pattern.permute.xlu0 1
  %698 = vperm.xlu0 %697, %v58
  %v699 = vpop.permute.xlu0 %698
  %701 = vset.pattern.permute.xlu0 1
  %702 = vperm.xlu0 %701, %v59
  %v703 = vpop.permute.xlu0 %702
  %705 = vset.pattern.permute.xlu0 1
  %706 = vperm.xlu0 %705, %v60
  %v707 = vpop.permute.xlu0 %706
  %709 = vset.pattern.permute.xlu0 1
  %710 = vperm.xlu0 %709, %v61
  %v711 = vpop.permute.xlu0 %710
  %713 = vset.pattern.permute.xlu0 1
  %714 = vperm.xlu0 %713, %v62
  %v715 = vpop.permute.xlu0 %714
  %717 = vset.pattern.permute.xlu0 1
  %718 = vperm.xlu0 %717, %v63
  %v719 = vpop.permute.xlu0 %718
  %721 = vset.pattern.permute.xlu0 1
  %722 = vperm.xlu0 %721, %v64
  %v723 = vpop.permute.xlu0 %722
  %725 = vset.pattern.permute.xlu0 1
  %726 = vperm.xlu0 %725, %v65
  %v727 = vpop.permute.xlu0 %726
  %729 = vset.pattern.permute.xlu0 1
  %730 = vperm.xlu0 %729, %v66
  %v731 = vpop.permute.xlu0 %730
  %733 = vset.pattern.permute.xlu0 1
  %734 = vperm.xlu0 %733, %v67
  %v735 = vpop.permute.xlu0 %734
  %737 = vset.pattern.permute.xlu0 1
  %738 = vperm.xlu0 %737, %v68
  %v739 = vpop.permute.xlu0 %738
  %741 = vset.pattern.permute.xlu0 1
  %742 = vperm.xlu0 %741, %v69
  %v743 = vpop.permute.xlu0 %742
  %745 = vset.pattern.permute.xlu0 1
  %746 = vperm.xlu0 %745, %v70
  %v747 = vpop.permute.xlu0 %746
  %749 = vset.pattern.permute.xlu0 1
  %750 = vperm.xlu0 %749, %v71
  %v751 = vpop.permute.xlu0 %750
  %753 = vset.pattern.permute.xlu0 1
  %754 = vperm.xlu0 %753, %v72
  %v755 = vpop.permute.xlu0 %754
  %757 = vset.pattern.permute.xlu0 1
  %758 = vperm.xlu0 %757, %v73
  %v759 = vpop.permute.xlu0 %758
  %761 = vset.pattern.permute.xlu0 1
  %762 = vperm.xlu0 %761, %v74
  %v763 = vpop.permute.xlu0 %762
  %765 = vset.pattern.permute.xlu0 1
  %766 = vperm.xlu0 %765, %v75
  %v767 = vpop.permute.xlu0 %766
  %769 = vset.pattern.permute.xlu0 1
  %770 = vperm.xlu0 %769, %v76
  %v771 = vpop.permute.xlu0 %770
  %773 = vset.pattern.permute.xlu0 1
  %774 = vperm.xlu0 %773, %v77
  %v775 = vpop.permute.xlu0 %774
  %777 = vset.pattern.permute.xlu0 1
  %778 = vperm.xlu0 %777, %v78
  %v779 = vpop.permute.xlu0 %778
  %781 = vset.pattern.permute.xlu0 1
  %782 = vperm.xlu0 %781, %v79
  %v783 = vpop.permute.xlu0 %782
  %785 = vset.pattern.permute.xlu0 1
  %786 = vperm.xlu0 %785, %v80
  %v787 = vpop.permute.xlu0 %786
  %789 = vset.pattern.permute.xlu0 1
  %790 = vperm.xlu0 %789, %v81
  %v791 = vpop.permute.xlu0 %790
  %793 = vset.pattern.permute.xlu0 1
  %794 = vperm.xlu0 %793, %v82
  %v795 = vpop.permute.xlu0 %794
  %797 = vset.pattern.permute.xlu0 1
  %798 = vperm.xlu0 %797, %v83
  %v799 = vpop.permute.xlu0 %798
  %v801 = vlaneseq
  %v802 = vshrl.u32 %v801, 7
  %v803 = vsub.s32 1, %v802
  %v804 = vrot.slane %v84, %v803
  %v805 = vmul.f32 %v547, %v804
  %v806 = vmul.f32 %v551, %v804
  %v807 = vmul.f32 %v555, %v804
  %v808 = vmul.f32 %v559, %v804
  %v809 = vmul.f32 %v563, %v804
  %v810 = vmul.f32 %v567, %v804
  %v811 = vmul.f32 %v571, %v804
  %v812 = vmul.f32 %v575, %v804
  %v813 = vmul.f32 %v579, %v804
  %v814 = vmul.f32 %v583, %v804
  %v815 = vmul.f32 %v587, %v804
  %v816 = vmul.f32 %v591, %v804
  %v817 = vmul.f32 %v595, %v804
  %v818 = vmul.f32 %v599, %v804
  %v819 = vmul.f32 %v603, %v804
  %v820 = vmul.f32 %v607, %v804
  %v821 = vmul.f32 %v611, %v804
  %v822 = vmul.f32 %v615, %v804
  %v823 = vmul.f32 %v619, %v804
  %v824 = vmul.f32 %v623, %v804
  %v825 = vmul.f32 %v627, %v804
  %v826 = vmul.f32 %v631, %v804
  %v827 = vmul.f32 %v635, %v804
  %v828 = vmul.f32 %v639, %v804
  %v829 = vmul.f32 %v643, %v804
  %v830 = vmul.f32 %v647, %v804
  %v831 = vmul.f32 %v651, %v804
  %v832 = vmul.f32 %v655, %v804
  %v833 = vmul.f32 %v659, %v804
  %v834 = vmul.f32 %v663, %v804
  %v835 = vmul.f32 %v667, %v804
  %v836 = vmul.f32 %v671, %v804
  %v837 = vmul.f32 %v675, %v804
  %v838 = vmul.f32 %v679, %v804
  %v839 = vmul.f32 %v683, %v804
  %v840 = vmul.f32 %v687, %v804
  %v841 = vmul.f32 %v691, %v804
  %v842 = vmul.f32 %v695, %v804
  %v843 = vmul.f32 %v699, %v804
  %v844 = vmul.f32 %v703, %v804
  %v845 = vmul.f32 %v707, %v804
  %v846 = vmul.f32 %v711, %v804
  %v847 = vmul.f32 %v715, %v804
  %v848 = vmul.f32 %v719, %v804
  %v849 = vmul.f32 %v723, %v804
  %v850 = vmul.f32 %v727, %v804
  %v851 = vmul.f32 %v731, %v804
  %v852 = vmul.f32 %v735, %v804
  %v853 = vmul.f32 %v739, %v804
  %v854 = vmul.f32 %v743, %v804
  %v855 = vmul.f32 %v747, %v804
  %v856 = vmul.f32 %v751, %v804
  %v857 = vmul.f32 %v755, %v804
  %v858 = vmul.f32 %v759, %v804
  %v859 = vmul.f32 %v763, %v804
  %v860 = vmul.f32 %v767, %v804
  %v861 = vmul.f32 %v771, %v804
  %v862 = vmul.f32 %v775, %v804
  %v863 = vmul.f32 %v779, %v804
  %v864 = vmul.f32 %v783, %v804
  %v865 = vmul.f32 %v787, %v804
  %v866 = vmul.f32 %v791, %v804
  %v867 = vmul.f32 %v795, %v804
  %v868 = vmul.f32 %v799, %v804
  %v869 = vadd.f32 %v481, %v805
  %v870 = vadd.f32 %v482, %v806
  %v871 = vadd.f32 %v483, %v807
  %v872 = vadd.f32 %v484, %v808
  %v873 = vadd.f32 %v485, %v809
  %v874 = vadd.f32 %v486, %v810
  %v875 = vadd.f32 %v487, %v811
  %v876 = vadd.f32 %v488, %v812
  %v877 = vadd.f32 %v489, %v813
  %v878 = vadd.f32 %v490, %v814
  %v879 = vadd.f32 %v491, %v815
  %v880 = vadd.f32 %v492, %v816
  %v881 = vadd.f32 %v493, %v817
  %v882 = vadd.f32 %v494, %v818
  %v883 = vadd.f32 %v495, %v819
  %v884 = vadd.f32 %v496, %v820
  %v885 = vadd.f32 %v497, %v821
  %v886 = vadd.f32 %v498, %v822
  %v887 = vadd.f32 %v499, %v823
  %v888 = vadd.f32 %v500, %v824
  %v889 = vadd.f32 %v501, %v825
  %v890 = vadd.f32 %v502, %v826
  %v891 = vadd.f32 %v503, %v827
  %v892 = vadd.f32 %v504, %v828
  %v893 = vadd.f32 %v505, %v829
  %v894 = vadd.f32 %v506, %v830
  %v895 = vadd.f32 %v507, %v831
  %v896 = vadd.f32 %v508, %v832
  %v897 = vadd.f32 %v509, %v833
  %v898 = vadd.f32 %v510, %v834
  %v899 = vadd.f32 %v511, %v835
  %v900 = vadd.f32 %v512, %v836
  %v901 = vadd.f32 %v513, %v837
  %v902 = vadd.f32 %v514, %v838
  %v903 = vadd.f32 %v515, %v839
  %v904 = vadd.f32 %v516, %v840
  %v905 = vadd.f32 %v517, %v841
  %v906 = vadd.f32 %v518, %v842
  %v907 = vadd.f32 %v519, %v843
  %v908 = vadd.f32 %v520, %v844
  %v909 = vadd.f32 %v521, %v845
  %v910 = vadd.f32 %v522, %v846
  %v911 = vadd.f32 %v523, %v847
  %v912 = vadd.f32 %v524, %v848
  %v913 = vadd.f32 %v525, %v849
  %v914 = vadd.f32 %v526, %v850
  %v915 = vadd.f32 %v527, %v851
  %v916 = vadd.f32 %v528, %v852
  %v917 = vadd.f32 %v529, %v853
  %v918 = vadd.f32 %v530, %v854
  %v919 = vadd.f32 %v531, %v855
  %v920 = vadd.f32 %v532, %v856
  %v921 = vadd.f32 %v533, %v857
  %v922 = vadd.f32 %v534, %v858
  %v923 = vadd.f32 %v535, %v859
  %v924 = vadd.f32 %v536, %v860
  %v925 = vadd.f32 %v537, %v861
  %v926 = vadd.f32 %v538, %v862
  %v927 = vadd.f32 %v539, %v863
  %v928 = vadd.f32 %v540, %v864
  %v929 = vadd.f32 %v541, %v865
  %v930 = vadd.f32 %v542, %v866
  %v931 = vadd.f32 %v543, %v867
  %v932 = vadd.f32 %v544, %v868
  %933 = vset.pattern.permute.xlu0 2
  %934 = vperm.xlu0 %933, %v20
  %v935 = vpop.permute.xlu0 %934
  %937 = vset.pattern.permute.xlu0 2
  %938 = vperm.xlu0 %937, %v21
  %v939 = vpop.permute.xlu0 %938
  %941 = vset.pattern.permute.xlu0 2
  %942 = vperm.xlu0 %941, %v22
  %v943 = vpop.permute.xlu0 %942
  %945 = vset.pattern.permute.xlu0 2
  %946 = vperm.xlu0 %945, %v23
  %v947 = vpop.permute.xlu0 %946
  %949 = vset.pattern.permute.xlu0 2
  %950 = vperm.xlu0 %949, %v24
  %v951 = vpop.permute.xlu0 %950
  %953 = vset.pattern.permute.xlu0 2
  %954 = vperm.xlu0 %953, %v25
  %v955 = vpop.permute.xlu0 %954
  %957 = vset.pattern.permute.xlu0 2
  %958 = vperm.xlu0 %957, %v26
  %v959 = vpop.permute.xlu0 %958
  %961 = vset.pattern.permute.xlu0 2
  %962 = vperm.xlu0 %961, %v27
  %v963 = vpop.permute.xlu0 %962
  %965 = vset.pattern.permute.xlu0 2
  %966 = vperm.xlu0 %965, %v28
  %v967 = vpop.permute.xlu0 %966
  %969 = vset.pattern.permute.xlu0 2
  %970 = vperm.xlu0 %969, %v29
  %v971 = vpop.permute.xlu0 %970
  %973 = vset.pattern.permute.xlu0 2
  %974 = vperm.xlu0 %973, %v30
  %v975 = vpop.permute.xlu0 %974
  %977 = vset.pattern.permute.xlu0 2
  %978 = vperm.xlu0 %977, %v31
  %v979 = vpop.permute.xlu0 %978
  %981 = vset.pattern.permute.xlu0 2
  %982 = vperm.xlu0 %981, %v32
  %v983 = vpop.permute.xlu0 %982
  %985 = vset.pattern.permute.xlu0 2
  %986 = vperm.xlu0 %985, %v33
  %v987 = vpop.permute.xlu0 %986
  %989 = vset.pattern.permute.xlu0 2
  %990 = vperm.xlu0 %989, %v34
  %v991 = vpop.permute.xlu0 %990
  %993 = vset.pattern.permute.xlu0 2
  %994 = vperm.xlu0 %993, %v35
  %v995 = vpop.permute.xlu0 %994
  %997 = vset.pattern.permute.xlu0 2
  %998 = vperm.xlu0 %997, %v36
  %v999 = vpop.permute.xlu0 %998
  %1001 = vset.pattern.permute.xlu0 2
  %1002 = vperm.xlu0 %1001, %v37
  %v1003 = vpop.permute.xlu0 %1002
  %1005 = vset.pattern.permute.xlu0 2
  %1006 = vperm.xlu0 %1005, %v38
  %v1007 = vpop.permute.xlu0 %1006
  %1009 = vset.pattern.permute.xlu0 2
  %1010 = vperm.xlu0 %1009, %v39
  %v1011 = vpop.permute.xlu0 %1010
  %1013 = vset.pattern.permute.xlu0 2
  %1014 = vperm.xlu0 %1013, %v40
  %v1015 = vpop.permute.xlu0 %1014
  %1017 = vset.pattern.permute.xlu0 2
  %1018 = vperm.xlu0 %1017, %v41
  %v1019 = vpop.permute.xlu0 %1018
  %1021 = vset.pattern.permute.xlu0 2
  %1022 = vperm.xlu0 %1021, %v42
  %v1023 = vpop.permute.xlu0 %1022
  %1025 = vset.pattern.permute.xlu0 2
  %1026 = vperm.xlu0 %1025, %v43
  %v1027 = vpop.permute.xlu0 %1026
  %1029 = vset.pattern.permute.xlu0 2
  %1030 = vperm.xlu0 %1029, %v44
  %v1031 = vpop.permute.xlu0 %1030
  %1033 = vset.pattern.permute.xlu0 2
  %1034 = vperm.xlu0 %1033, %v45
  %v1035 = vpop.permute.xlu0 %1034
  %1037 = vset.pattern.permute.xlu0 2
  %1038 = vperm.xlu0 %1037, %v46
  %v1039 = vpop.permute.xlu0 %1038
  %1041 = vset.pattern.permute.xlu0 2
  %1042 = vperm.xlu0 %1041, %v47
  %v1043 = vpop.permute.xlu0 %1042
  %1045 = vset.pattern.permute.xlu0 2
  %1046 = vperm.xlu0 %1045, %v48
  %v1047 = vpop.permute.xlu0 %1046
  %1049 = vset.pattern.permute.xlu0 2
  %1050 = vperm.xlu0 %1049, %v49
  %v1051 = vpop.permute.xlu0 %1050
  %1053 = vset.pattern.permute.xlu0 2
  %1054 = vperm.xlu0 %1053, %v50
  %v1055 = vpop.permute.xlu0 %1054
  %1057 = vset.pattern.permute.xlu0 2
  %1058 = vperm.xlu0 %1057, %v51
  %v1059 = vpop.permute.xlu0 %1058
  %1061 = vset.pattern.permute.xlu0 2
  %1062 = vperm.xlu0 %1061, %v52
  %v1063 = vpop.permute.xlu0 %1062
  %1065 = vset.pattern.permute.xlu0 2
  %1066 = vperm.xlu0 %1065, %v53
  %v1067 = vpop.permute.xlu0 %1066
  %1069 = vset.pattern.permute.xlu0 2
  %1070 = vperm.xlu0 %1069, %v54
  %v1071 = vpop.permute.xlu0 %1070
  %1073 = vset.pattern.permute.xlu0 2
  %1074 = vperm.xlu0 %1073, %v55
  %v1075 = vpop.permute.xlu0 %1074
  %1077 = vset.pattern.permute.xlu0 2
  %1078 = vperm.xlu0 %1077, %v56
  %v1079 = vpop.permute.xlu0 %1078
  %1081 = vset.pattern.permute.xlu0 2
  %1082 = vperm.xlu0 %1081, %v57
  %v1083 = vpop.permute.xlu0 %1082
  %1085 = vset.pattern.permute.xlu0 2
  %1086 = vperm.xlu0 %1085, %v58
  %v1087 = vpop.permute.xlu0 %1086
  %1089 = vset.pattern.permute.xlu0 2
  %1090 = vperm.xlu0 %1089, %v59
  %v1091 = vpop.permute.xlu0 %1090
  %1093 = vset.pattern.permute.xlu0 2
  %1094 = vperm.xlu0 %1093, %v60
  %v1095 = vpop.permute.xlu0 %1094
  %1097 = vset.pattern.permute.xlu0 2
  %1098 = vperm.xlu0 %1097, %v61
  %v1099 = vpop.permute.xlu0 %1098
  %1101 = vset.pattern.permute.xlu0 2
  %1102 = vperm.xlu0 %1101, %v62
  %v1103 = vpop.permute.xlu0 %1102
  %1105 = vset.pattern.permute.xlu0 2
  %1106 = vperm.xlu0 %1105, %v63
  %v1107 = vpop.permute.xlu0 %1106
  %1109 = vset.pattern.permute.xlu0 2
  %1110 = vperm.xlu0 %1109, %v64
  %v1111 = vpop.permute.xlu0 %1110
  %1113 = vset.pattern.permute.xlu0 2
  %1114 = vperm.xlu0 %1113, %v65
  %v1115 = vpop.permute.xlu0 %1114
  %1117 = vset.pattern.permute.xlu0 2
  %1118 = vperm.xlu0 %1117, %v66
  %v1119 = vpop.permute.xlu0 %1118
  %1121 = vset.pattern.permute.xlu0 2
  %1122 = vperm.xlu0 %1121, %v67
  %v1123 = vpop.permute.xlu0 %1122
  %1125 = vset.pattern.permute.xlu0 2
  %1126 = vperm.xlu0 %1125, %v68
  %v1127 = vpop.permute.xlu0 %1126
  %1129 = vset.pattern.permute.xlu0 2
  %1130 = vperm.xlu0 %1129, %v69
  %v1131 = vpop.permute.xlu0 %1130
  %1133 = vset.pattern.permute.xlu0 2
  %1134 = vperm.xlu0 %1133, %v70
  %v1135 = vpop.permute.xlu0 %1134
  %1137 = vset.pattern.permute.xlu0 2
  %1138 = vperm.xlu0 %1137, %v71
  %v1139 = vpop.permute.xlu0 %1138
  %1141 = vset.pattern.permute.xlu0 2
  %1142 = vperm.xlu0 %1141, %v72
  %v1143 = vpop.permute.xlu0 %1142
  %1145 = vset.pattern.permute.xlu0 2
  %1146 = vperm.xlu0 %1145, %v73
  %v1147 = vpop.permute.xlu0 %1146
  %1149 = vset.pattern.permute.xlu0 2
  %1150 = vperm.xlu0 %1149, %v74
  %v1151 = vpop.permute.xlu0 %1150
  %1153 = vset.pattern.permute.xlu0 2
  %1154 = vperm.xlu0 %1153, %v75
  %v1155 = vpop.permute.xlu0 %1154
  %1157 = vset.pattern.permute.xlu0 2
  %1158 = vperm.xlu0 %1157, %v76
  %v1159 = vpop.permute.xlu0 %1158
  %1161 = vset.pattern.permute.xlu0 2
  %1162 = vperm.xlu0 %1161, %v77
  %v1163 = vpop.permute.xlu0 %1162
  %1165 = vset.pattern.permute.xlu0 2
  %1166 = vperm.xlu0 %1165, %v78
  %v1167 = vpop.permute.xlu0 %1166
  %1169 = vset.pattern.permute.xlu0 2
  %1170 = vperm.xlu0 %1169, %v79
  %v1171 = vpop.permute.xlu0 %1170
  %1173 = vset.pattern.permute.xlu0 2
  %1174 = vperm.xlu0 %1173, %v80
  %v1175 = vpop.permute.xlu0 %1174
  %1177 = vset.pattern.permute.xlu0 2
  %1178 = vperm.xlu0 %1177, %v81
  %v1179 = vpop.permute.xlu0 %1178
  %1181 = vset.pattern.permute.xlu0 2
  %1182 = vperm.xlu0 %1181, %v82
  %v1183 = vpop.permute.xlu0 %1182
  %1185 = vset.pattern.permute.xlu0 2
  %1186 = vperm.xlu0 %1185, %v83
  %v1187 = vpop.permute.xlu0 %1186
  %v1189 = vlaneseq
  %v1190 = vshrl.u32 %v1189, 7
  %v1191 = vsub.s32 2, %v1190
  %v1192 = vrot.slane %v84, %v1191
  %v1193 = vmul.f32 %v935, %v1192
  %v1194 = vmul.f32 %v939, %v1192
  %v1195 = vmul.f32 %v943, %v1192
  %v1196 = vmul.f32 %v947, %v1192
  %v1197 = vmul.f32 %v951, %v1192
  %v1198 = vmul.f32 %v955, %v1192
  %v1199 = vmul.f32 %v959, %v1192
  %v1200 = vmul.f32 %v963, %v1192
  %v1201 = vmul.f32 %v967, %v1192
  %v1202 = vmul.f32 %v971, %v1192
  %v1203 = vmul.f32 %v975, %v1192
  %v1204 = vmul.f32 %v979, %v1192
  %v1205 = vmul.f32 %v983, %v1192
  %v1206 = vmul.f32 %v987, %v1192
  %v1207 = vmul.f32 %v991, %v1192
  %v1208 = vmul.f32 %v995, %v1192
  %v1209 = vmul.f32 %v999, %v1192
  %v1210 = vmul.f32 %v1003, %v1192
  %v1211 = vmul.f32 %v1007, %v1192
  %v1212 = vmul.f32 %v1011, %v1192
  %v1213 = vmul.f32 %v1015, %v1192
  %v1214 = vmul.f32 %v1019, %v1192
  %v1215 = vmul.f32 %v1023, %v1192
  %v1216 = vmul.f32 %v1027, %v1192
  %v1217 = vmul.f32 %v1031, %v1192
  %v1218 = vmul.f32 %v1035, %v1192
  %v1219 = vmul.f32 %v1039, %v1192
  %v1220 = vmul.f32 %v1043, %v1192
  %v1221 = vmul.f32 %v1047, %v1192
  %v1222 = vmul.f32 %v1051, %v1192
  %v1223 = vmul.f32 %v1055, %v1192
  %v1224 = vmul.f32 %v1059, %v1192
  %v1225 = vmul.f32 %v1063, %v1192
  %v1226 = vmul.f32 %v1067, %v1192
  %v1227 = vmul.f32 %v1071, %v1192
  %v1228 = vmul.f32 %v1075, %v1192
  %v1229 = vmul.f32 %v1079, %v1192
  %v1230 = vmul.f32 %v1083, %v1192
  %v1231 = vmul.f32 %v1087, %v1192
  %v1232 = vmul.f32 %v1091, %v1192
  %v1233 = vmul.f32 %v1095, %v1192
  %v1234 = vmul.f32 %v1099, %v1192
  %v1235 = vmul.f32 %v1103, %v1192
  %v1236 = vmul.f32 %v1107, %v1192
  %v1237 = vmul.f32 %v1111, %v1192
  %v1238 = vmul.f32 %v1115, %v1192
  %v1239 = vmul.f32 %v1119, %v1192
  %v1240 = vmul.f32 %v1123, %v1192
  %v1241 = vmul.f32 %v1127, %v1192
  %v1242 = vmul.f32 %v1131, %v1192
  %v1243 = vmul.f32 %v1135, %v1192
  %v1244 = vmul.f32 %v1139, %v1192
  %v1245 = vmul.f32 %v1143, %v1192
  %v1246 = vmul.f32 %v1147, %v1192
  %v1247 = vmul.f32 %v1151, %v1192
  %v1248 = vmul.f32 %v1155, %v1192
  %v1249 = vmul.f32 %v1159, %v1192
  %v1250 = vmul.f32 %v1163, %v1192
  %v1251 = vmul.f32 %v1167, %v1192
  %v1252 = vmul.f32 %v1171, %v1192
  %v1253 = vmul.f32 %v1175, %v1192
  %v1254 = vmul.f32 %v1179, %v1192
  %v1255 = vmul.f32 %v1183, %v1192
  %v1256 = vmul.f32 %v1187, %v1192
  %v1257 = vadd.f32 %v869, %v1193
  %v1258 = vadd.f32 %v870, %v1194
  %v1259 = vadd.f32 %v871, %v1195
  %v1260 = vadd.f32 %v872, %v1196
  %v1261 = vadd.f32 %v873, %v1197
  %v1262 = vadd.f32 %v874, %v1198
  %v1263 = vadd.f32 %v875, %v1199
  %v1264 = vadd.f32 %v876, %v1200
  %v1265 = vadd.f32 %v877, %v1201
  %v1266 = vadd.f32 %v878, %v1202
  %v1267 = vadd.f32 %v879, %v1203
  %v1268 = vadd.f32 %v880, %v1204
  %v1269 = vadd.f32 %v881, %v1205
  %v1270 = vadd.f32 %v882, %v1206
  %v1271 = vadd.f32 %v883, %v1207
  %v1272 = vadd.f32 %v884, %v1208
  %v1273 = vadd.f32 %v885, %v1209
  %v1274 = vadd.f32 %v886, %v1210
  %v1275 = vadd.f32 %v887, %v1211
  %v1276 = vadd.f32 %v888, %v1212
  %v1277 = vadd.f32 %v889, %v1213
  %v1278 = vadd.f32 %v890, %v1214
  %v1279 = vadd.f32 %v891, %v1215
  %v1280 = vadd.f32 %v892, %v1216
  %v1281 = vadd.f32 %v893, %v1217
  %v1282 = vadd.f32 %v894, %v1218
  %v1283 = vadd.f32 %v895, %v1219
  %v1284 = vadd.f32 %v896, %v1220
  %v1285 = vadd.f32 %v897, %v1221
  %v1286 = vadd.f32 %v898, %v1222
  %v1287 = vadd.f32 %v899, %v1223
  %v1288 = vadd.f32 %v900, %v1224
  %v1289 = vadd.f32 %v901, %v1225
  %v1290 = vadd.f32 %v902, %v1226
  %v1291 = vadd.f32 %v903, %v1227
  %v1292 = vadd.f32 %v904, %v1228
  %v1293 = vadd.f32 %v905, %v1229
  %v1294 = vadd.f32 %v906, %v1230
  %v1295 = vadd.f32 %v907, %v1231
  %v1296 = vadd.f32 %v908, %v1232
  %v1297 = vadd.f32 %v909, %v1233
  %v1298 = vadd.f32 %v910, %v1234
  %v1299 = vadd.f32 %v911, %v1235
  %v1300 = vadd.f32 %v912, %v1236
  %v1301 = vadd.f32 %v913, %v1237
  %v1302 = vadd.f32 %v914, %v1238
  %v1303 = vadd.f32 %v915, %v1239
  %v1304 = vadd.f32 %v916, %v1240
  %v1305 = vadd.f32 %v917, %v1241
  %v1306 = vadd.f32 %v918, %v1242
  %v1307 = vadd.f32 %v919, %v1243
  %v1308 = vadd.f32 %v920, %v1244
  %v1309 = vadd.f32 %v921, %v1245
  %v1310 = vadd.f32 %v922, %v1246
  %v1311 = vadd.f32 %v923, %v1247
  %v1312 = vadd.f32 %v924, %v1248
  %v1313 = vadd.f32 %v925, %v1249
  %v1314 = vadd.f32 %v926, %v1250
  %v1315 = vadd.f32 %v927, %v1251
  %v1316 = vadd.f32 %v928, %v1252
  %v1317 = vadd.f32 %v929, %v1253
  %v1318 = vadd.f32 %v930, %v1254
  %v1319 = vadd.f32 %v931, %v1255
  %v1320 = vadd.f32 %v932, %v1256
  %v1321 = vmax.f32 %v1257, 0.0
  %v1322 = vmax.f32 %v1258, 0.0
  %v1323 = vmax.f32 %v1259, 0.0
  %v1324 = vmax.f32 %v1260, 0.0
  %v1325 = vmax.f32 %v1261, 0.0
  %v1326 = vmax.f32 %v1262, 0.0
  %v1327 = vmax.f32 %v1263, 0.0
  %v1328 = vmax.f32 %v1264, 0.0
  %v1329 = vmax.f32 %v1265, 0.0
  %v1330 = vmax.f32 %v1266, 0.0
  %v1331 = vmax.f32 %v1267, 0.0
  %v1332 = vmax.f32 %v1268, 0.0
  %v1333 = vmax.f32 %v1269, 0.0
  %v1334 = vmax.f32 %v1270, 0.0
  %v1335 = vmax.f32 %v1271, 0.0
  %v1336 = vmax.f32 %v1272, 0.0
  %v1337 = vmax.f32 %v1273, 0.0
  %v1338 = vmax.f32 %v1274, 0.0
  %v1339 = vmax.f32 %v1275, 0.0
  %v1340 = vmax.f32 %v1276, 0.0
  %v1341 = vmax.f32 %v1277, 0.0
  %v1342 = vmax.f32 %v1278, 0.0
  %v1343 = vmax.f32 %v1279, 0.0
  %v1344 = vmax.f32 %v1280, 0.0
  %v1345 = vmax.f32 %v1281, 0.0
  %v1346 = vmax.f32 %v1282, 0.0
  %v1347 = vmax.f32 %v1283, 0.0
  %v1348 = vmax.f32 %v1284, 0.0
  %v1349 = vmax.f32 %v1285, 0.0
  %v1350 = vmax.f32 %v1286, 0.0
  %v1351 = vmax.f32 %v1287, 0.0
  %v1352 = vmax.f32 %v1288, 0.0
  %v1353 = vmax.f32 %v1289, 0.0
  %v1354 = vmax.f32 %v1290, 0.0
  %v1355 = vmax.f32 %v1291, 0.0
  %v1356 = vmax.f32 %v1292, 0.0
  %v1357 = vmax.f32 %v1293, 0.0
  %v1358 = vmax.f32 %v1294, 0.0
  %v1359 = vmax.f32 %v1295, 0.0
  %v1360 = vmax.f32 %v1296, 0.0
  %v1361 = vmax.f32 %v1297, 0.0
  %v1362 = vmax.f32 %v1298, 0.0
  %v1363 = vmax.f32 %v1299, 0.0
  %v1364 = vmax.f32 %v1300, 0.0
  %v1365 = vmax.f32 %v1301, 0.0
  %v1366 = vmax.f32 %v1302, 0.0
  %v1367 = vmax.f32 %v1303, 0.0
  %v1368 = vmax.f32 %v1304, 0.0
  %v1369 = vmax.f32 %v1305, 0.0
  %v1370 = vmax.f32 %v1306, 0.0
  %v1371 = vmax.f32 %v1307, 0.0
  %v1372 = vmax.f32 %v1308, 0.0
  %v1373 = vmax.f32 %v1309, 0.0
  %v1374 = vmax.f32 %v1310, 0.0
  %v1375 = vmax.f32 %v1311, 0.0
  %v1376 = vmax.f32 %v1312, 0.0
  %v1377 = vmax.f32 %v1313, 0.0
  %v1378 = vmax.f32 %v1314, 0.0
  %v1379 = vmax.f32 %v1315, 0.0
  %v1380 = vmax.f32 %v1316, 0.0
  %v1381 = vmax.f32 %v1317, 0.0
  %v1382 = vmax.f32 %v1318, 0.0
  %v1383 = vmax.f32 %v1319, 0.0
  %v1384 = vmax.f32 %v1320, 0.0
  %v1385 = vld [vmem:[%s3] sm:$0xff]
  %v1386 = vld [vmem:[%s3 + $0x8] sm:$0xff]
  %v1387 = vld [vmem:[%s3 + $0x10] sm:$0xff]
  %v1388 = vld [vmem:[%s3 + $0x18] sm:$0xff]
  %v1389 = vld [vmem:[%s4] sm:$0x1]
  %v1391 = vlaneseq
  %v1392 = vshrl.u32 %v1391, 7
  %v1393 = vsub.s32 0, %v1392
  %v1394 = vrot.slane %v1389, %v1393
  %vm1396 = vcmask 261120
  %v1398 = vsel %vm1396, %v1321, 0
  %v1401 = vsel %vm1396, %v1322, 0
  %v1404 = vsel %vm1396, %v1323, 0
  %v1407 = vsel %vm1396, %v1324, 0
  %v1410 = vsel %vm1396, %v1325, 0
  %v1413 = vsel %vm1396, %v1326, 0
  %v1416 = vsel %vm1396, %v1327, 0
  %v1419 = vsel %vm1396, %v1328, 0
  %v1422 = vsel %vm1396, %v1329, 0
  %v1425 = vsel %vm1396, %v1330, 0
  %v1428 = vsel %vm1396, %v1331, 0
  %v1431 = vsel %vm1396, %v1332, 0
  %v1434 = vsel %vm1396, %v1333, 0
  %v1437 = vsel %vm1396, %v1334, 0
  %v1440 = vsel %vm1396, %v1335, 0
  %v1443 = vsel %vm1396, %v1336, 0
  %v1446 = vsel %vm1396, %v1337, 0
  %v1449 = vsel %vm1396, %v1338, 0
  %v1452 = vsel %vm1396, %v1339, 0
  %v1455 = vsel %vm1396, %v1340, 0
  %v1458 = vsel %vm1396, %v1341, 0
  %v1461 = vsel %vm1396, %v1342, 0
  %v1464 = vsel %vm1396, %v1343, 0
  %v1467 = vsel %vm1396, %v1344, 0
  %v1470 = vsel %vm1396, %v1345, 0
  %v1473 = vsel %vm1396, %v1346, 0
  %v1476 = vsel %vm1396, %v1347, 0
  %v1479 = vsel %vm1396, %v1348, 0
  %v1482 = vsel %vm1396, %v1349, 0
  %v1485 = vsel %vm1396, %v1350, 0
  %v1488 = vsel %vm1396, %v1351, 0
  %v1491 = vsel %vm1396, %v1352, 0
  %v1494 = vsel %vm1396, %v1353, 0
  %v1497 = vsel %vm1396, %v1354, 0
  %v1500 = vsel %vm1396, %v1355, 0
  %v1503 = vsel %vm1396, %v1356, 0
  %v1506 = vsel %vm1396, %v1357, 0
  %v1509 = vsel %vm1396, %v1358, 0
  %v1512 = vsel %vm1396, %v1359, 0
  %v1515 = vsel %vm1396, %v1360, 0
  %v1518 = vsel %vm1396, %v1361, 0
  %v1521 = vsel %vm1396, %v1362, 0
  %v1524 = vsel %vm1396, %v1363, 0
  %v1527 = vsel %vm1396, %v1364, 0
  %v1530 = vsel %vm1396, %v1365, 0
  %v1533 = vsel %vm1396, %v1366, 0
  %v1536 = vsel %vm1396, %v1367, 0
  %v1539 = vsel %vm1396, %v1368, 0
  %v1542 = vsel %vm1396, %v1369, 0
  %v1545 = vsel %vm1396, %v1370, 0
  %v1548 = vsel %vm1396, %v1371, 0
  %v1551 = vsel %vm1396, %v1372, 0
  %v1554 = vsel %vm1396, %v1373, 0
  %v1557 = vsel %vm1396, %v1374, 0
  %v1560 = vsel %vm1396, %v1375, 0
  %v1563 = vsel %vm1396, %v1376, 0
  %v1566 = vsel %vm1396, %v1377, 0
  %v1569 = vsel %vm1396, %v1378, 0
  %v1572 = vsel %vm1396, %v1379, 0
  %v1575 = vsel %vm1396, %v1380, 0
  %v1578 = vsel %vm1396, %v1381, 0
  %v1581 = vsel %vm1396, %v1382, 0
  %v1584 = vsel %vm1396, %v1383, 0
  %v1587 = vsel %vm1396, %v1384, 0
  %1589 = vmatprep.subr.mxu0 0.0
  %1590 = vmatpush1.msra.mxu0 0.0
  %1591 = vmatprep.subr.mxu0 0.0
  %1592 = vmatpush1.msra.mxu0 0.0
  %1593 = vmatprep.subr.mxu0 0.0
  %1594 = vmatpush1.msra.mxu0 0.0
  %1595 = vmatprep.subr.mxu0 0.0
  %1596 = vmatpush1.msra.mxu0 0.0
  %1597 = vmatprep.subr.mxu0 0.0
  %1598 = vmatpush1.msra.mxu0 0.0
  %1599 = vmatprep.subr.mxu0 0.0
  %1600 = vmatpush1.msra.mxu0 0.0
  %1601 = vmatprep.subr.mxu0 0.0
  %1602 = vmatpush1.msra.mxu0 0.0
  %1603 = vmatprep.subr.mxu0 0.0
  %1604 = vmatpush1.msra.mxu0 0.0
  %1605 = vmatprep.subr.mxu0 0.0
  %1606 = vmatpush1.msra.mxu0 0.0
  %1607 = vmatprep.subr.mxu0 0.0
  %1608 = vmatpush1.msra.mxu0 0.0
  %1609 = vmatprep.subr.mxu0 0.0
  %1610 = vmatpush1.msra.mxu0 0.0
  %1611 = vmatprep.subr.mxu0 0.0
  %1612 = vmatpush1.msra.mxu0 0.0
  %1613 = vmatprep.subr.mxu0 0.0
  %1614 = vmatpush1.msra.mxu0 %v1388
  %1615 = vmatprep.subr.mxu0 0.0
  %1616 = vmatpush1.msra.mxu0 %v1387
  %1617 = vmatprep.subr.mxu0 0.0
  %1618 = vmatpush1.msra.mxu0 %v1386
  %1619 = vmatprep.subr.mxu0 0.0
  %1620 = vmatpush1.msra.mxu0 %v1385
  %1621 = vmatprep.subr.mxu0 0.0
  %1622 = vmatpush2.msra.mxu0 0.0
  %1623 = vmatprep.subr.mxu0 0.0
  %1624 = vmatpush2.msra.mxu0 0.0
  %1625 = vmatprep.subr.mxu0 0.0
  %1626 = vmatpush2.msra.mxu0 0.0
  %1627 = vmatprep.subr.mxu0 0.0
  %1628 = vmatpush2.msra.mxu0 0.0
  %1629 = vmatprep.subr.mxu0 0.0
  %1630 = vmatpush2.msra.mxu0 0.0
  %1631 = vmatprep.subr.mxu0 0.0
  %1632 = vmatpush2.msra.mxu0 0.0
  %1633 = vmatprep.subr.mxu0 0.0
  %1634 = vmatpush2.msra.mxu0 0.0
  %1635 = vmatprep.subr.mxu0 0.0
  %1636 = vmatpush2.msra.mxu0 0.0
  %1637 = vmatprep.subr.mxu0 0.0
  %1638 = vmatpush2.msra.mxu0 0.0
  %1639 = vmatprep.subr.mxu0 0.0
  %1640 = vmatpush2.msra.mxu0 0.0
  %1641 = vmatprep.subr.mxu0 0.0
  %1642 = vmatpush2.msra.mxu0 0.0
  %1643 = vmatprep.subr.mxu0 0.0
  %1644 = vmatpush2.msra.mxu0 0.0
  %1645 = vmatprep.subr.mxu0 0.0
  %1646 = vmatpush2.msra.mxu0 0.0
  %1647 = vmatprep.subr.mxu0 0.0
  %1648 = vmatpush2.msra.mxu0 0.0
  %1649 = vmatprep.subr.mxu0 0.0
  %1650 = vmatpush2.msra.mxu0 0.0
  %1651 = vmatprep.subr.mxu0 0.0
  %1652 = vmatpush2.msra.mxu0 0.0
  %1653 = vmatprep.mubr.f32.mxu0 0.0
  %1654 = vmatmul.mubr.f32.gmra.mxu0 %v1398
  %v1655 = vpop.f32.mrf.mxu0
  %v1656 = vadd.f32 %v1394, %v1655
  %v1657 = vpop.f32.mrf.mxu0
  %1658 = vmatprep.mubr.f32.mxu0 0.0
  %1659 = vmatmul.mubr.f32.gmra.mxu0 %v1401
  %v1660 = vpop.f32.mrf.mxu0
  %v1661 = vadd.f32 %v1394, %v1660
  %v1662 = vpop.f32.mrf.mxu0
  %1663 = vmatprep.mubr.f32.mxu0 0.0
  %1664 = vmatmul.mubr.f32.gmra.mxu0 %v1404
  %v1665 = vpop.f32.mrf.mxu0
  %v1666 = vadd.f32 %v1394, %v1665
  %v1667 = vpop.f32.mrf.mxu0
  %1668 = vmatprep.mubr.f32.mxu0 0.0
  %1669 = vmatmul.mubr.f32.gmra.mxu0 %v1407
  %v1670 = vpop.f32.mrf.mxu0
  %v1671 = vadd.f32 %v1394, %v1670
  %v1672 = vpop.f32.mrf.mxu0
  %1673 = vmatprep.mubr.f32.mxu0 0.0
  %1674 = vmatmul.mubr.f32.gmra.mxu0 %v1410
  %v1675 = vpop.f32.mrf.mxu0
  %v1676 = vadd.f32 %v1394, %v1675
  %v1677 = vpop.f32.mrf.mxu0
  %1678 = vmatprep.mubr.f32.mxu0 0.0
  %1679 = vmatmul.mubr.f32.gmra.mxu0 %v1413
  %v1680 = vpop.f32.mrf.mxu0
  %v1681 = vadd.f32 %v1394, %v1680
  %v1682 = vpop.f32.mrf.mxu0
  %1683 = vmatprep.mubr.f32.mxu0 0.0
  %1684 = vmatmul.mubr.f32.gmra.mxu0 %v1416
  %v1685 = vpop.f32.mrf.mxu0
  %v1686 = vadd.f32 %v1394, %v1685
  %v1687 = vpop.f32.mrf.mxu0
  %1688 = vmatprep.mubr.f32.mxu0 0.0
  %1689 = vmatmul.mubr.f32.gmra.mxu0 %v1419
  %v1690 = vpop.f32.mrf.mxu0
  %v1691 = vadd.f32 %v1394, %v1690
  %v1692 = vpop.f32.mrf.mxu0
  %1693 = vmatprep.mubr.f32.mxu0 0.0
  %1694 = vmatmul.mubr.f32.gmra.mxu0 %v1422
  %v1695 = vpop.f32.mrf.mxu0
  %v1696 = vadd.f32 %v1394, %v1695
  %v1697 = vpop.f32.mrf.mxu0
  %1698 = vmatprep.mubr.f32.mxu0 0.0
  %1699 = vmatmul.mubr.f32.gmra.mxu0 %v1425
  %v1700 = vpop.f32.mrf.mxu0
  %v1701 = vadd.f32 %v1394, %v1700
  %v1702 = vpop.f32.mrf.mxu0
  %1703 = vmatprep.mubr.f32.mxu0 0.0
  %1704 = vmatmul.mubr.f32.gmra.mxu0 %v1428
  %v1705 = vpop.f32.mrf.mxu0
  %v1706 = vadd.f32 %v1394, %v1705
  %v1707 = vpop.f32.mrf.mxu0
  %1708 = vmatprep.mubr.f32.mxu0 0.0
  %1709 = vmatmul.mubr.f32.gmra.mxu0 %v1431
  %v1710 = vpop.f32.mrf.mxu0
  %v1711 = vadd.f32 %v1394, %v1710
  %v1712 = vpop.f32.mrf.mxu0
  %1713 = vmatprep.mubr.f32.mxu0 0.0
  %1714 = vmatmul.mubr.f32.gmra.mxu0 %v1434
  %v1715 = vpop.f32.mrf.mxu0
  %v1716 = vadd.f32 %v1394, %v1715
  %v1717 = vpop.f32.mrf.mxu0
  %1718 = vmatprep.mubr.f32.mxu0 0.0
  %1719 = vmatmul.mubr.f32.gmra.mxu0 %v1437
  %v1720 = vpop.f32.mrf.mxu0
  %v1721 = vadd.f32 %v1394, %v1720
  %v1722 = vpop.f32.mrf.mxu0
  %1723 = vmatprep.mubr.f32.mxu0 0.0
  %1724 = vmatmul.mubr.f32.gmra.mxu0 %v1440
  %v1725 = vpop.f32.mrf.mxu0
  %v1726 = vadd.f32 %v1394, %v1725
  %v1727 = vpop.f32.mrf.mxu0
  %1728 = vmatprep.mubr.f32.mxu0 0.0
  %1729 = vmatmul.mubr.f32.gmra.mxu0 %v1443
  %v1730 = vpop.f32.mrf.mxu0
  %v1731 = vadd.f32 %v1394, %v1730
  %v1732 = vpop.f32.mrf.mxu0
  %1733 = vmatprep.mubr.f32.mxu0 0.0
  %1734 = vmatmul.mubr.f32.gmra.mxu0 %v1446
  %v1735 = vpop.f32.mrf.mxu0
  %v1736 = vadd.f32 %v1394, %v1735
  %v1737 = vpop.f32.mrf.mxu0
  %1738 = vmatprep.mubr.f32.mxu0 0.0
  %1739 = vmatmul.mubr.f32.gmra.mxu0 %v1449
  %v1740 = vpop.f32.mrf.mxu0
  %v1741 = vadd.f32 %v1394, %v1740
  %v1742 = vpop.f32.mrf.mxu0
  %1743 = vmatprep.mubr.f32.mxu0 0.0
  %1744 = vmatmul.mubr.f32.gmra.mxu0 %v1452
  %v1745 = vpop.f32.mrf.mxu0
  %v1746 = vadd.f32 %v1394, %v1745
  %v1747 = vpop.f32.mrf.mxu0
  %1748 = vmatprep.mubr.f32.mxu0 0.0
  %1749 = vmatmul.mubr.f32.gmra.mxu0 %v1455
  %v1750 = vpop.f32.mrf.mxu0
  %v1751 = vadd.f32 %v1394, %v1750
  %v1752 = vpop.f32.mrf.mxu0
  %1753 = vmatprep.mubr.f32.mxu0 0.0
  %1754 = vmatmul.mubr.f32.gmra.mxu0 %v1458
  %v1755 = vpop.f32.mrf.mxu0
  %v1756 = vadd.f32 %v1394, %v1755
  %v1757 = vpop.f32.mrf.mxu0
  %1758 = vmatprep.mubr.f32.mxu0 0.0
  %1759 = vmatmul.mubr.f32.gmra.mxu0 %v1461
  %v1760 = vpop.f32.mrf.mxu0
  %v1761 = vadd.f32 %v1394, %v1760
  %v1762 = vpop.f32.mrf.mxu0
  %1763 = vmatprep.mubr.f32.mxu0 0.0
  %1764 = vmatmul.mubr.f32.gmra.mxu0 %v1464
  %v1765 = vpop.f32.mrf.mxu0
  %v1766 = vadd.f32 %v1394, %v1765
  %v1767 = vpop.f32.mrf.mxu0
  %1768 = vmatprep.mubr.f32.mxu0 0.0
  %1769 = vmatmul.mubr.f32.gmra.mxu0 %v1467
  %v1770 = vpop.f32.mrf.mxu0
  %v1771 = vadd.f32 %v1394, %v1770
  %v1772 = vpop.f32.mrf.mxu0
  %1773 = vmatprep.mubr.f32.mxu0 0.0
  %1774 = vmatmul.mubr.f32.gmra.mxu0 %v1470
  %v1775 = vpop.f32.mrf.mxu0
  %v1776 = vadd.f32 %v1394, %v1775
  %v1777 = vpop.f32.mrf.mxu0
  %1778 = vmatprep.mubr.f32.mxu0 0.0
  %1779 = vmatmul.mubr.f32.gmra.mxu0 %v1473
  %v1780 = vpop.f32.mrf.mxu0
  %v1781 = vadd.f32 %v1394, %v1780
  %v1782 = vpop.f32.mrf.mxu0
  %1783 = vmatprep.mubr.f32.mxu0 0.0
  %1784 = vmatmul.mubr.f32.gmra.mxu0 %v1476
  %v1785 = vpop.f32.mrf.mxu0
  %v1786 = vadd.f32 %v1394, %v1785
  %v1787 = vpop.f32.mrf.mxu0
  %1788 = vmatprep.mubr.f32.mxu0 0.0
  %1789 = vmatmul.mubr.f32.gmra.mxu0 %v1479
  %v1790 = vpop.f32.mrf.mxu0
  %v1791 = vadd.f32 %v1394, %v1790
  %v1792 = vpop.f32.mrf.mxu0
  %1793 = vmatprep.mubr.f32.mxu0 0.0
  %1794 = vmatmul.mubr.f32.gmra.mxu0 %v1482
  %v1795 = vpop.f32.mrf.mxu0
  %v1796 = vadd.f32 %v1394, %v1795
  %v1797 = vpop.f32.mrf.mxu0
  %1798 = vmatprep.mubr.f32.mxu0 0.0
  %1799 = vmatmul.mubr.f32.gmra.mxu0 %v1485
  %v1800 = vpop.f32.mrf.mxu0
  %v1801 = vadd.f32 %v1394, %v1800
  %v1802 = vpop.f32.mrf.mxu0
  %1803 = vmatprep.mubr.f32.mxu0 0.0
  %1804 = vmatmul.mubr.f32.gmra.mxu0 %v1488
  %v1805 = vpop.f32.mrf.mxu0
  %v1806 = vadd.f32 %v1394, %v1805
  %v1807 = vpop.f32.mrf.mxu0
  %1808 = vmatprep.mubr.f32.mxu0 0.0
  %1809 = vmatmul.mubr.f32.gmra.mxu0 %v1491
  %v1810 = vpop.f32.mrf.mxu0
  %v1811 = vadd.f32 %v1394, %v1810
  %v1812 = vpop.f32.mrf.mxu0
  %1813 = vmatprep.mubr.f32.mxu0 0.0
  %1814 = vmatmul.mubr.f32.gmra.mxu0 %v1494
  %v1815 = vpop.f32.mrf.mxu0
  %v1816 = vadd.f32 %v1394, %v1815
  %v1817 = vpop.f32.mrf.mxu0
  %1818 = vmatprep.mubr.f32.mxu0 0.0
  %1819 = vmatmul.mubr.f32.gmra.mxu0 %v1497
  %v1820 = vpop.f32.mrf.mxu0
  %v1821 = vadd.f32 %v1394, %v1820
  %v1822 = vpop.f32.mrf.mxu0
  %1823 = vmatprep.mubr.f32.mxu0 0.0
  %1824 = vmatmul.mubr.f32.gmra.mxu0 %v1500
  %v1825 = vpop.f32.mrf.mxu0
  %v1826 = vadd.f32 %v1394, %v1825
  %v1827 = vpop.f32.mrf.mxu0
  %1828 = vmatprep.mubr.f32.mxu0 0.0
  %1829 = vmatmul.mubr.f32.gmra.mxu0 %v1503
  %v1830 = vpop.f32.mrf.mxu0
  %v1831 = vadd.f32 %v1394, %v1830
  %v1832 = vpop.f32.mrf.mxu0
  %1833 = vmatprep.mubr.f32.mxu0 0.0
  %1834 = vmatmul.mubr.f32.gmra.mxu0 %v1506
  %v1835 = vpop.f32.mrf.mxu0
  %v1836 = vadd.f32 %v1394, %v1835
  %v1837 = vpop.f32.mrf.mxu0
  %1838 = vmatprep.mubr.f32.mxu0 0.0
  %1839 = vmatmul.mubr.f32.gmra.mxu0 %v1509
  %v1840 = vpop.f32.mrf.mxu0
  %v1841 = vadd.f32 %v1394, %v1840
  %v1842 = vpop.f32.mrf.mxu0
  %1843 = vmatprep.mubr.f32.mxu0 0.0
  %1844 = vmatmul.mubr.f32.gmra.mxu0 %v1512
  %v1845 = vpop.f32.mrf.mxu0
  %v1846 = vadd.f32 %v1394, %v1845
  %v1847 = vpop.f32.mrf.mxu0
  %1848 = vmatprep.mubr.f32.mxu0 0.0
  %1849 = vmatmul.mubr.f32.gmra.mxu0 %v1515
  %v1850 = vpop.f32.mrf.mxu0
  %v1851 = vadd.f32 %v1394, %v1850
  %v1852 = vpop.f32.mrf.mxu0
  %1853 = vmatprep.mubr.f32.mxu0 0.0
  %1854 = vmatmul.mubr.f32.gmra.mxu0 %v1518
  %v1855 = vpop.f32.mrf.mxu0
  %v1856 = vadd.f32 %v1394, %v1855
  %v1857 = vpop.f32.mrf.mxu0
  %1858 = vmatprep.mubr.f32.mxu0 0.0
  %1859 = vmatmul.mubr.f32.gmra.mxu0 %v1521
  %v1860 = vpop.f32.mrf.mxu0
  %v1861 = vadd.f32 %v1394, %v1860
  %v1862 = vpop.f32.mrf.mxu0
  %1863 = vmatprep.mubr.f32.mxu0 0.0
  %1864 = vmatmul.mubr.f32.gmra.mxu0 %v1524
  %v1865 = vpop.f32.mrf.mxu0
  %v1866 = vadd.f32 %v1394, %v1865
  %v1867 = vpop.f32.mrf.mxu0
  %1868 = vmatprep.mubr.f32.mxu0 0.0
  %1869 = vmatmul.mubr.f32.gmra.mxu0 %v1527
  %v1870 = vpop.f32.mrf.mxu0
  %v1871 = vadd.f32 %v1394, %v1870
  %v1872 = vpop.f32.mrf.mxu0
  %1873 = vmatprep.mubr.f32.mxu0 0.0
  %1874 = vmatmul.mubr.f32.gmra.mxu0 %v1530
  %v1875 = vpop.f32.mrf.mxu0
  %v1876 = vadd.f32 %v1394, %v1875
  %v1877 = vpop.f32.mrf.mxu0
  %1878 = vmatprep.mubr.f32.mxu0 0.0
  %1879 = vmatmul.mubr.f32.gmra.mxu0 %v1533
  %v1880 = vpop.f32.mrf.mxu0
  %v1881 = vadd.f32 %v1394, %v1880
  %v1882 = vpop.f32.mrf.mxu0
  %1883 = vmatprep.mubr.f32.mxu0 0.0
  %1884 = vmatmul.mubr.f32.gmra.mxu0 %v1536
  %v1885 = vpop.f32.mrf.mxu0
  %v1886 = vadd.f32 %v1394, %v1885
  %v1887 = vpop.f32.mrf.mxu0
  %1888 = vmatprep.mubr.f32.mxu0 0.0
  %1889 = vmatmul.mubr.f32.gmra.mxu0 %v1539
  %v1890 = vpop.f32.mrf.mxu0
  %v1891 = vadd.f32 %v1394, %v1890
  %v1892 = vpop.f32.mrf.mxu0
  %1893 = vmatprep.mubr.f32.mxu0 0.0
  %1894 = vmatmul.mubr.f32.gmra.mxu0 %v1542
  %v1895 = vpop.f32.mrf.mxu0
  %v1896 = vadd.f32 %v1394, %v1895
  %v1897 = vpop.f32.mrf.mxu0
  %1898 = vmatprep.mubr.f32.mxu0 0.0
  %1899 = vmatmul.mubr.f32.gmra.mxu0 %v1545
  %v1900 = vpop.f32.mrf.mxu0
  %v1901 = vadd.f32 %v1394, %v1900
  %v1902 = vpop.f32.mrf.mxu0
  %1903 = vmatprep.mubr.f32.mxu0 0.0
  %1904 = vmatmul.mubr.f32.gmra.mxu0 %v1548
  %v1905 = vpop.f32.mrf.mxu0
  %v1906 = vadd.f32 %v1394, %v1905
  %v1907 = vpop.f32.mrf.mxu0
  %1908 = vmatprep.mubr.f32.mxu0 0.0
  %1909 = vmatmul.mubr.f32.gmra.mxu0 %v1551
  %v1910 = vpop.f32.mrf.mxu0
  %v1911 = vadd.f32 %v1394, %v1910
  %v1912 = vpop.f32.mrf.mxu0
  %1913 = vmatprep.mubr.f32.mxu0 0.0
  %1914 = vmatmul.mubr.f32.gmra.mxu0 %v1554
  %v1915 = vpop.f32.mrf.mxu0
  %v1916 = vadd.f32 %v1394, %v1915
  %v1917 = vpop.f32.mrf.mxu0
  %1918 = vmatprep.mubr.f32.mxu0 0.0
  %1919 = vmatmul.mubr.f32.gmra.mxu0 %v1557
  %v1920 = vpop.f32.mrf.mxu0
  %v1921 = vadd.f32 %v1394, %v1920
  %v1922 = vpop.f32.mrf.mxu0
  %1923 = vmatprep.mubr.f32.mxu0 0.0
  %1924 = vmatmul.mubr.f32.gmra.mxu0 %v1560
  %v1925 = vpop.f32.mrf.mxu0
  %v1926 = vadd.f32 %v1394, %v1925
  %v1927 = vpop.f32.mrf.mxu0
  %1928 = vmatprep.mubr.f32.mxu0 0.0
  %1929 = vmatmul.mubr.f32.gmra.mxu0 %v1563
  %v1930 = vpop.f32.mrf.mxu0
  %v1931 = vadd.f32 %v1394, %v1930
  %v1932 = vpop.f32.mrf.mxu0
  %1933 = vmatprep.mubr.f32.mxu0 0.0
  %1934 = vmatmul.mubr.f32.gmra.mxu0 %v1566
  %v1935 = vpop.f32.mrf.mxu0
  %v1936 = vadd.f32 %v1394, %v1935
  %v1937 = vpop.f32.mrf.mxu0
  %1938 = vmatprep.mubr.f32.mxu0 0.0
  %1939 = vmatmul.mubr.f32.gmra.mxu0 %v1569
  %v1940 = vpop.f32.mrf.mxu0
  %v1941 = vadd.f32 %v1394, %v1940
  %v1942 = vpop.f32.mrf.mxu0
  %1943 = vmatprep.mubr.f32.mxu0 0.0
  %1944 = vmatmul.mubr.f32.gmra.mxu0 %v1572
  %v1945 = vpop.f32.mrf.mxu0
  %v1946 = vadd.f32 %v1394, %v1945
  %v1947 = vpop.f32.mrf.mxu0
  %1948 = vmatprep.mubr.f32.mxu0 0.0
  %1949 = vmatmul.mubr.f32.gmra.mxu0 %v1575
  %v1950 = vpop.f32.mrf.mxu0
  %v1951 = vadd.f32 %v1394, %v1950
  %v1952 = vpop.f32.mrf.mxu0
  %1953 = vmatprep.mubr.f32.mxu0 0.0
  %1954 = vmatmul.mubr.f32.gmra.mxu0 %v1578
  %v1955 = vpop.f32.mrf.mxu0
  %v1956 = vadd.f32 %v1394, %v1955
  %v1957 = vpop.f32.mrf.mxu0
  %1958 = vmatprep.mubr.f32.mxu0 0.0
  %1959 = vmatmul.mubr.f32.gmra.mxu0 %v1581
  %v1960 = vpop.f32.mrf.mxu0
  %v1961 = vadd.f32 %v1394, %v1960
  %v1962 = vpop.f32.mrf.mxu0
  %1963 = vmatprep.mubr.f32.mxu0 0.0
  %1964 = vmatmul.mubr.f32.gmra.mxu0 %v1584
  %v1965 = vpop.f32.mrf.mxu0
  %v1966 = vadd.f32 %v1394, %v1965
  %v1967 = vpop.f32.mrf.mxu0
  %1968 = vmatprep.mubr.f32.mxu0 0.0
  %1969 = vmatmul.mubr.f32.gmra.mxu0 %v1587
  %v1970 = vpop.f32.mrf.mxu0
  %v1971 = vadd.f32 %v1394, %v1970
  %v1972 = vpop.f32.mrf.mxu0
  %1973 = vdwg.mxu0
  %vm1974 = vcmask 523264
  %v1975 = vsel %vm1974, %v1656, -inf
  %v1976 = vsel %vm1974, %v1661, -inf
  %v1977 = vmax.f32 %v1975, %v1976
  %v1978 = vrot.slane %v1977, 4
  %v1979 = vmax.f32 %v1977, %v1978
  %v1980 = vrot.slane %v1979, 2
  %v1981 = vmax.f32 %v1979, %v1980
  %v1982 = vrot.slane %v1981, 1
  %v1983 = vmax.f32 %v1981, %v1982
  %v1984 = vsel %vm1974, %v1666, -inf
  %v1985 = vsel %vm1974, %v1671, -inf
  %v1986 = vmax.f32 %v1984, %v1985
  %v1987 = vrot.slane %v1986, 4
  %v1988 = vmax.f32 %v1986, %v1987
  %v1989 = vrot.slane %v1988, 2
  %v1990 = vmax.f32 %v1988, %v1989
  %v1991 = vrot.slane %v1990, 1
  %v1992 = vmax.f32 %v1990, %v1991
  %v1993 = vsel %vm1974, %v1676, -inf
  %v1994 = vsel %vm1974, %v1681, -inf
  %v1995 = vmax.f32 %v1993, %v1994
  %v1996 = vrot.slane %v1995, 4
  %v1997 = vmax.f32 %v1995, %v1996
  %v1998 = vrot.slane %v1997, 2
  %v1999 = vmax.f32 %v1997, %v1998
  %v2000 = vrot.slane %v1999, 1
  %v2001 = vmax.f32 %v1999, %v2000
  %v2002 = vsel %vm1974, %v1686, -inf
  %v2003 = vsel %vm1974, %v1691, -inf
  %v2004 = vmax.f32 %v2002, %v2003
  %v2005 = vrot.slane %v2004, 4
  %v2006 = vmax.f32 %v2004, %v2005
  %v2007 = vrot.slane %v2006, 2
  %v2008 = vmax.f32 %v2006, %v2007
  %v2009 = vrot.slane %v2008, 1
  %v2010 = vmax.f32 %v2008, %v2009
  %v2011 = vsel %vm1974, %v1696, -inf
  %v2012 = vsel %vm1974, %v1701, -inf
  %v2013 = vmax.f32 %v2011, %v2012
  %v2014 = vrot.slane %v2013, 4
  %v2015 = vmax.f32 %v2013, %v2014
  %v2016 = vrot.slane %v2015, 2
  %v2017 = vmax.f32 %v2015, %v2016
  %v2018 = vrot.slane %v2017, 1
  %v2019 = vmax.f32 %v2017, %v2018
  %v2020 = vsel %vm1974, %v1706, -inf
  %v2021 = vsel %vm1974, %v1711, -inf
  %v2022 = vmax.f32 %v2020, %v2021
  %v2023 = vrot.slane %v2022, 4
  %v2024 = vmax.f32 %v2022, %v2023
  %v2025 = vrot.slane %v2024, 2
  %v2026 = vmax.f32 %v2024, %v2025
  %v2027 = vrot.slane %v2026, 1
  %v2028 = vmax.f32 %v2026, %v2027
  %v2029 = vsel %vm1974, %v1716, -inf
  %v2030 = vsel %vm1974, %v1721, -inf
  %v2031 = vmax.f32 %v2029, %v2030
  %v2032 = vrot.slane %v2031, 4
  %v2033 = vmax.f32 %v2031, %v2032
  %v2034 = vrot.slane %v2033, 2
  %v2035 = vmax.f32 %v2033, %v2034
  %v2036 = vrot.slane %v2035, 1
  %v2037 = vmax.f32 %v2035, %v2036
  %v2038 = vsel %vm1974, %v1726, -inf
  %v2039 = vsel %vm1974, %v1731, -inf
  %v2040 = vmax.f32 %v2038, %v2039
  %v2041 = vrot.slane %v2040, 4
  %v2042 = vmax.f32 %v2040, %v2041
  %v2043 = vrot.slane %v2042, 2
  %v2044 = vmax.f32 %v2042, %v2043
  %v2045 = vrot.slane %v2044, 1
  %v2046 = vmax.f32 %v2044, %v2045
  %v2047 = vsel %vm1974, %v1736, -inf
  %v2048 = vsel %vm1974, %v1741, -inf
  %v2049 = vmax.f32 %v2047, %v2048
  %v2050 = vrot.slane %v2049, 4
  %v2051 = vmax.f32 %v2049, %v2050
  %v2052 = vrot.slane %v2051, 2
  %v2053 = vmax.f32 %v2051, %v2052
  %v2054 = vrot.slane %v2053, 1
  %v2055 = vmax.f32 %v2053, %v2054
  %v2056 = vsel %vm1974, %v1746, -inf
  %v2057 = vsel %vm1974, %v1751, -inf
  %v2058 = vmax.f32 %v2056, %v2057
  %v2059 = vrot.slane %v2058, 4
  %v2060 = vmax.f32 %v2058, %v2059
  %v2061 = vrot.slane %v2060, 2
  %v2062 = vmax.f32 %v2060, %v2061
  %v2063 = vrot.slane %v2062, 1
  %v2064 = vmax.f32 %v2062, %v2063
  %v2065 = vsel %vm1974, %v1756, -inf
  %v2066 = vsel %vm1974, %v1761, -inf
  %v2067 = vmax.f32 %v2065, %v2066
  %v2068 = vrot.slane %v2067, 4
  %v2069 = vmax.f32 %v2067, %v2068
  %v2070 = vrot.slane %v2069, 2
  %v2071 = vmax.f32 %v2069, %v2070
  %v2072 = vrot.slane %v2071, 1
  %v2073 = vmax.f32 %v2071, %v2072
  %v2074 = vsel %vm1974, %v1766, -inf
  %v2075 = vsel %vm1974, %v1771, -inf
  %v2076 = vmax.f32 %v2074, %v2075
  %v2077 = vrot.slane %v2076, 4
  %v2078 = vmax.f32 %v2076, %v2077
  %v2079 = vrot.slane %v2078, 2
  %v2080 = vmax.f32 %v2078, %v2079
  %v2081 = vrot.slane %v2080, 1
  %v2082 = vmax.f32 %v2080, %v2081
  %v2083 = vsel %vm1974, %v1776, -inf
  %v2084 = vsel %vm1974, %v1781, -inf
  %v2085 = vmax.f32 %v2083, %v2084
  %v2086 = vrot.slane %v2085, 4
  %v2087 = vmax.f32 %v2085, %v2086
  %v2088 = vrot.slane %v2087, 2
  %v2089 = vmax.f32 %v2087, %v2088
  %v2090 = vrot.slane %v2089, 1
  %v2091 = vmax.f32 %v2089, %v2090
  %v2092 = vsel %vm1974, %v1786, -inf
  %v2093 = vsel %vm1974, %v1791, -inf
  %v2094 = vmax.f32 %v2092, %v2093
  %v2095 = vrot.slane %v2094, 4
  %v2096 = vmax.f32 %v2094, %v2095
  %v2097 = vrot.slane %v2096, 2
  %v2098 = vmax.f32 %v2096, %v2097
  %v2099 = vrot.slane %v2098, 1
  %v2100 = vmax.f32 %v2098, %v2099
  %v2101 = vsel %vm1974, %v1796, -inf
  %v2102 = vsel %vm1974, %v1801, -inf
  %v2103 = vmax.f32 %v2101, %v2102
  %v2104 = vrot.slane %v2103, 4
  %v2105 = vmax.f32 %v2103, %v2104
  %v2106 = vrot.slane %v2105, 2
  %v2107 = vmax.f32 %v2105, %v2106
  %v2108 = vrot.slane %v2107, 1
  %v2109 = vmax.f32 %v2107, %v2108
  %v2110 = vsel %vm1974, %v1806, -inf
  %v2111 = vsel %vm1974, %v1811, -inf
  %v2112 = vmax.f32 %v2110, %v2111
  %v2113 = vrot.slane %v2112, 4
  %v2114 = vmax.f32 %v2112, %v2113
  %v2115 = vrot.slane %v2114, 2
  %v2116 = vmax.f32 %v2114, %v2115
  %v2117 = vrot.slane %v2116, 1
  %v2118 = vmax.f32 %v2116, %v2117
  %v2119 = vsel %vm1974, %v1816, -inf
  %v2120 = vsel %vm1974, %v1821, -inf
  %v2121 = vmax.f32 %v2119, %v2120
  %v2122 = vrot.slane %v2121, 4
  %v2123 = vmax.f32 %v2121, %v2122
  %v2124 = vrot.slane %v2123, 2
  %v2125 = vmax.f32 %v2123, %v2124
  %v2126 = vrot.slane %v2125, 1
  %v2127 = vmax.f32 %v2125, %v2126
  %v2128 = vsel %vm1974, %v1826, -inf
  %v2129 = vsel %vm1974, %v1831, -inf
  %v2130 = vmax.f32 %v2128, %v2129
  %v2131 = vrot.slane %v2130, 4
  %v2132 = vmax.f32 %v2130, %v2131
  %v2133 = vrot.slane %v2132, 2
  %v2134 = vmax.f32 %v2132, %v2133
  %v2135 = vrot.slane %v2134, 1
  %v2136 = vmax.f32 %v2134, %v2135
  %v2137 = vsel %vm1974, %v1836, -inf
  %v2138 = vsel %vm1974, %v1841, -inf
  %v2139 = vmax.f32 %v2137, %v2138
  %v2140 = vrot.slane %v2139, 4
  %v2141 = vmax.f32 %v2139, %v2140
  %v2142 = vrot.slane %v2141, 2
  %v2143 = vmax.f32 %v2141, %v2142
  %v2144 = vrot.slane %v2143, 1
  %v2145 = vmax.f32 %v2143, %v2144
  %v2146 = vsel %vm1974, %v1846, -inf
  %v2147 = vsel %vm1974, %v1851, -inf
  %v2148 = vmax.f32 %v2146, %v2147
  %v2149 = vrot.slane %v2148, 4
  %v2150 = vmax.f32 %v2148, %v2149
  %v2151 = vrot.slane %v2150, 2
  %v2152 = vmax.f32 %v2150, %v2151
  %v2153 = vrot.slane %v2152, 1
  %v2154 = vmax.f32 %v2152, %v2153
  %v2155 = vsel %vm1974, %v1856, -inf
  %v2156 = vsel %vm1974, %v1861, -inf
  %v2157 = vmax.f32 %v2155, %v2156
  %v2158 = vrot.slane %v2157, 4
  %v2159 = vmax.f32 %v2157, %v2158
  %v2160 = vrot.slane %v2159, 2
  %v2161 = vmax.f32 %v2159, %v2160
  %v2162 = vrot.slane %v2161, 1
  %v2163 = vmax.f32 %v2161, %v2162
  %v2164 = vsel %vm1974, %v1866, -inf
  %v2165 = vsel %vm1974, %v1871, -inf
  %v2166 = vmax.f32 %v2164, %v2165
  %v2167 = vrot.slane %v2166, 4
  %v2168 = vmax.f32 %v2166, %v2167
  %v2169 = vrot.slane %v2168, 2
  %v2170 = vmax.f32 %v2168, %v2169
  %v2171 = vrot.slane %v2170, 1
  %v2172 = vmax.f32 %v2170, %v2171
  %v2173 = vsel %vm1974, %v1876, -inf
  %v2174 = vsel %vm1974, %v1881, -inf
  %v2175 = vmax.f32 %v2173, %v2174
  %v2176 = vrot.slane %v2175, 4
  %v2177 = vmax.f32 %v2175, %v2176
  %v2178 = vrot.slane %v2177, 2
  %v2179 = vmax.f32 %v2177, %v2178
  %v2180 = vrot.slane %v2179, 1
  %v2181 = vmax.f32 %v2179, %v2180
  %v2182 = vsel %vm1974, %v1886, -inf
  %v2183 = vsel %vm1974, %v1891, -inf
  %v2184 = vmax.f32 %v2182, %v2183
  %v2185 = vrot.slane %v2184, 4
  %v2186 = vmax.f32 %v2184, %v2185
  %v2187 = vrot.slane %v2186, 2
  %v2188 = vmax.f32 %v2186, %v2187
  %v2189 = vrot.slane %v2188, 1
  %v2190 = vmax.f32 %v2188, %v2189
  %v2191 = vsel %vm1974, %v1896, -inf
  %v2192 = vsel %vm1974, %v1901, -inf
  %v2193 = vmax.f32 %v2191, %v2192
  %v2194 = vrot.slane %v2193, 4
  %v2195 = vmax.f32 %v2193, %v2194
  %v2196 = vrot.slane %v2195, 2
  %v2197 = vmax.f32 %v2195, %v2196
  %v2198 = vrot.slane %v2197, 1
  %v2199 = vmax.f32 %v2197, %v2198
  %v2200 = vsel %vm1974, %v1906, -inf
  %v2201 = vsel %vm1974, %v1911, -inf
  %v2202 = vmax.f32 %v2200, %v2201
  %v2203 = vrot.slane %v2202, 4
  %v2204 = vmax.f32 %v2202, %v2203
  %v2205 = vrot.slane %v2204, 2
  %v2206 = vmax.f32 %v2204, %v2205
  %v2207 = vrot.slane %v2206, 1
  %v2208 = vmax.f32 %v2206, %v2207
  %v2209 = vsel %vm1974, %v1916, -inf
  %v2210 = vsel %vm1974, %v1921, -inf
  %v2211 = vmax.f32 %v2209, %v2210
  %v2212 = vrot.slane %v2211, 4
  %v2213 = vmax.f32 %v2211, %v2212
  %v2214 = vrot.slane %v2213, 2
  %v2215 = vmax.f32 %v2213, %v2214
  %v2216 = vrot.slane %v2215, 1
  %v2217 = vmax.f32 %v2215, %v2216
  %v2218 = vsel %vm1974, %v1926, -inf
  %v2219 = vsel %vm1974, %v1931, -inf
  %v2220 = vmax.f32 %v2218, %v2219
  %v2221 = vrot.slane %v2220, 4
  %v2222 = vmax.f32 %v2220, %v2221
  %v2223 = vrot.slane %v2222, 2
  %v2224 = vmax.f32 %v2222, %v2223
  %v2225 = vrot.slane %v2224, 1
  %v2226 = vmax.f32 %v2224, %v2225
  %v2227 = vsel %vm1974, %v1936, -inf
  %v2228 = vsel %vm1974, %v1941, -inf
  %v2229 = vmax.f32 %v2227, %v2228
  %v2230 = vrot.slane %v2229, 4
  %v2231 = vmax.f32 %v2229, %v2230
  %v2232 = vrot.slane %v2231, 2
  %v2233 = vmax.f32 %v2231, %v2232
  %v2234 = vrot.slane %v2233, 1
  %v2235 = vmax.f32 %v2233, %v2234
  %v2236 = vsel %vm1974, %v1946, -inf
  %v2237 = vsel %vm1974, %v1951, -inf
  %v2238 = vmax.f32 %v2236, %v2237
  %v2239 = vrot.slane %v2238, 4
  %v2240 = vmax.f32 %v2238, %v2239
  %v2241 = vrot.slane %v2240, 2
  %v2242 = vmax.f32 %v2240, %v2241
  %v2243 = vrot.slane %v2242, 1
  %v2244 = vmax.f32 %v2242, %v2243
  %v2245 = vsel %vm1974, %v1956, -inf
  %v2246 = vsel %vm1974, %v1961, -inf
  %v2247 = vmax.f32 %v2245, %v2246
  %v2248 = vrot.slane %v2247, 4
  %v2249 = vmax.f32 %v2247, %v2248
  %v2250 = vrot.slane %v2249, 2
  %v2251 = vmax.f32 %v2249, %v2250
  %v2252 = vrot.slane %v2251, 1
  %v2253 = vmax.f32 %v2251, %v2252
  %v2254 = vsel %vm1974, %v1966, -inf
  %v2255 = vsel %vm1974, %v1971, -inf
  %v2256 = vmax.f32 %v2254, %v2255
  %v2257 = vrot.slane %v2256, 4
  %v2258 = vmax.f32 %v2256, %v2257
  %v2259 = vrot.slane %v2258, 2
  %v2260 = vmax.f32 %v2258, %v2259
  %v2261 = vrot.slane %v2260, 1
  %v2262 = vmax.f32 %v2260, %v2261
  %vm2295 = vcmask 1041409
  %v2296 = vsel %vm2295, %v1992, %v1983
  %vm2297 = vcmask 1042434
  %v2298 = vsel %vm2297, %v2001, %v2296
  %vm2299 = vcmask 1043459
  %v2300 = vsel %vm2299, %v2010, %v2298
  %vm2301 = vcmask 1044484
  %v2302 = vsel %vm2301, %v2019, %v2300
  %vm2303 = vcmask 1045509
  %v2304 = vsel %vm2303, %v2028, %v2302
  %vm2305 = vcmask 1046534
  %v2306 = vsel %vm2305, %v2037, %v2304
  %vm2307 = vcmask 1047559
  %v2308 = vsel %vm2307, %v2046, %v2306
  %v2309 = vsel %vm2295, %v2064, %v2055
  %v2310 = vsel %vm2297, %v2073, %v2309
  %v2311 = vsel %vm2299, %v2082, %v2310
  %v2312 = vsel %vm2301, %v2091, %v2311
  %v2313 = vsel %vm2303, %v2100, %v2312
  %v2314 = vsel %vm2305, %v2109, %v2313
  %v2315 = vsel %vm2307, %v2118, %v2314
  %v2316 = vsel %vm2295, %v2136, %v2127
  %v2317 = vsel %vm2297, %v2145, %v2316
  %v2318 = vsel %vm2299, %v2154, %v2317
  %v2319 = vsel %vm2301, %v2163, %v2318
  %v2320 = vsel %vm2303, %v2172, %v2319
  %v2321 = vsel %vm2305, %v2181, %v2320
  %v2322 = vsel %vm2307, %v2190, %v2321
  %v2323 = vsel %vm2295, %v2208, %v2199
  %v2324 = vsel %vm2297, %v2217, %v2323
  %v2325 = vsel %vm2299, %v2226, %v2324
  %v2326 = vsel %vm2301, %v2235, %v2325
  %v2327 = vsel %vm2303, %v2244, %v2326
  %v2328 = vsel %vm2305, %v2253, %v2327
  %v2329 = vsel %vm2307, %v2262, %v2328
  %2334 = vst.msk [vmem:[%s5] sm:$0xff] %vm1974, %v2308
  %2335 = vst.msk [vmem:[%s5 + $0x8] sm:$0xff] %vm1974, %v2315
  %2336 = vst.msk [vmem:[%s5 + $0x10] sm:$0xff] %vm1974, %v2322
  %2337 = vst.msk [vmem:[%s5 + $0x18] sm:$0xff] %vm1974, %v2329
  // Predicated region
  $region22: #{_forward_impl.4} parent=0 // pred_check
    _
  $region23: #{_forward_impl.4} parent=0 // pred_check_branch
    %2339 = sbr.rel (0) target = $region25
  $region24: #{_forward_impl.4} parent=0 // pred_region
    _
  $region25: #{_forward_impl.4} parent=0 // pred_fallthru
    _
  // Predicated region
  $region26: #{_forward_impl.4} parent=0 // pred_check
    _
  $region27: #{_forward_impl.4} parent=0 // pred_check_branch
    %2341 = sbr.rel (0) target = $region29
  $region28: #{_forward_impl.4} parent=0 // pred_region
    _
  $region29: #{_forward_impl.4} parent=0 // pred_fallthru
    _

// kernel: _forward_impl.5
$region0: #{_forward_impl.5}
  #allocation0 [shape = 'u32[]', space=smem, size = 0x4, offset = 0x4, fixed_abs, tag = 'smem constant byte address 0x4 - core index']
  #allocation1 [shape = 'u32[144,128]{1,0:T(1,128)}', space=vmem, size = 0x12000, scoped, tag = 'internal scratch']
  %s0 = inlined_call_operand.vmem [shape: f32[512,128], index: 0, kind: input, shape index: {}]
  %s1 = inlined_call_operand.vmem [shape: f32[2,16,64], index: 1, kind: input, shape index: {}]
  %s2 = inlined_call_operand.vmem [shape: f32[2,128,64], index: 2, kind: input, shape index: {}]
  %s3 = inlined_call_operand.vmem [shape: f32[2,1,64], index: 3, kind: input, shape index: {}]
  %s4 = inlined_call_operand.vmem [shape: f32[2,64,64], index: 4, kind: input, shape index: {}]
  %s5 = inlined_call_operand.vmem [shape: f32[2,1,64], index: 5, kind: input, shape index: {}]
  %s6 = inlined_call_operand.vmem [shape: f32[2,64,64], index: 6, kind: input, shape index: {}]
  %s7 = inlined_call_operand.vmem [shape: f32[2,1,64], index: 7, kind: input, shape index: {}]
  %s8 = inlined_call_operand.vmem [shape: f32[2,64,64], index: 8, kind: input, shape index: {}]
  %s9 = inlined_call_operand.vmem [shape: f32[2,1,64], index: 9, kind: input, shape index: {}]
  %s10 = inlined_call_operand.vmem [shape: f32[64,64], index: 10, kind: input, shape index: {}]
  %s11 = inlined_call_operand.vmem [shape: f32[1,64], index: 11, kind: input, shape index: {}]
  %s12 = inlined_call_operand.vmem [shape: f32[64,32], index: 12, kind: input, shape index: {}]
  %s13 = inlined_call_operand.vmem [shape: f32[1,32], index: 13, kind: input, shape index: {}]
  %s14 = inlined_call_operand.vmem [shape: f32[2,512,32], index: 14, kind: output, shape index: {}]
  %s15 = sld [smem:[#allocation0]]
  $region89: #{_forward_impl.5} parent=0
    _
  %s17 = ssub.s32 1, %s15
  %s18 = scalar_select 0, %s17, %s15
  loop: start=0, step=1, limit=4
  $region2: #{_forward_impl.5} parent=0 // loop_pre_header
    _
  $region3: #{_forward_impl.5} parent=0 // loop_header
    %s20 = sphi 0, %s24
    %p21 = scmp.ge.s32.totalorder %s20, 4
    %s28 = sphi 0, %s28
    %s30 = sphi 0, %s28
    %s31 = sphi 0, %s30
    %s45 = sphi 0, %s31
    %s49 = sphi 0, %s49
    %s51 = sphi 0, %s49
    %s52 = sphi 0, %s51
    %s66 = sphi 0, %s52
    %s72 = sphi 0, %s74
    %s75 = sphi 0, %s72
    %s76 = sphi 0, %s75
    %s92 = sphi 0, %s76
    %s98 = sphi 0, %s100
    %s101 = sphi 0, %s98
    %s102 = sphi 0, %s101
    %s118 = sphi 0, %s102
    %s124 = sphi 0, %s126
    %s127 = sphi 0, %s124
    %s128 = sphi 0, %s127
    %s144 = sphi 0, %s128
    %s150 = sphi 0, %s152
    %s153 = sphi 0, %s150
    %s154 = sphi 0, %s153
    %s170 = sphi 0, %s154
    %s176 = sphi 0, %s178
    %s179 = sphi 0, %s176
    %s180 = sphi 0, %s179
    %s196 = sphi 0, %s180
    %s202 = sphi 0, %s204
    %s205 = sphi 0, %s202
    %s206 = sphi 0, %s205
    %s222 = sphi 0, %s206
    %s228 = sphi 0, %s230
    %s231 = sphi 0, %s228
    %s232 = sphi 0, %s231
    %s248 = sphi 0, %s232
    %s254 = sphi 0, %s256
    %s257 = sphi 0, %s254
    %s258 = sphi 0, %s257
    %s274 = sphi 0, %s258
    %s278 = sphi 0, %s278
    %s280 = sphi 0, %s278
    %s281 = sphi 0, %s280
    %s295 = sphi 0, %s281
    %s299 = sphi 0, %s299
    %s301 = sphi 0, %s299
    %s302 = sphi 0, %s301
    %s316 = sphi 0, %s302
    %s320 = sphi 0, %s320
    %s322 = sphi 0, %s320
    %s323 = sphi 0, %s322
    %s337 = sphi 0, %s323
    %s341 = sphi 0, %s341
    %s343 = sphi 0, %s341
    %s344 = sphi 0, %s343
    %s358 = sphi 0, %s344
    %s364 = sphi 0, %s366
    %s367 = sphi 0, %s364
    %s368 = sphi 0, %s367
    %s384 = sphi 0, %s368
  $region4: #{_forward_impl.5} parent=0 // loop_header_branch
    %23 = sbr.rel (%p21) target = $region8
  $region5: #{_forward_impl.5} parent=0 // loop_body
    %s25 = ssub.s32 %s20, 1
    %s26 = ssub.s32 %s20, 2
    %s27 = sadd.s32 %s20, 1
    %s29 = sadd.s32 %s28, 1
    %p32 = scmp.eq.s32.totalorder %s20, 1
    %p33 = scmp.ne.s32.totalorder %s28, %s30
    %p34 = scmp.eq.s32.totalorder %s20, 0
    %p35 = por %p33, %p34
    %p36 = scmp.ne.s32.totalorder %s28, %s30
    %p37 = scmp.eq.s32.totalorder %s25, 1
    %p38 = por %p36, %p37
    %p39 = scmp.ne.s32.totalorder %s30, %s31
    %p40 = scmp.eq.s32.totalorder %s25, 0
    %p41 = por %p39, %p40
    %p42 = scmp.ne.s32.totalorder %s30, %s31
    %p43 = scmp.eq.s32.totalorder %s26, 1
    %p44 = por %p42, %p43
    %p46 = scmp.ne.s32.totalorder %s31, %s45
    %p47 = scmp.eq.s32.totalorder %s26, 0
    %p48 = por %p46, %p47
    %s50 = sadd.s32 %s49, 1
    %p53 = scmp.eq.s32.totalorder %s20, 1
    %p54 = scmp.ne.s32.totalorder %s49, %s51
    %p55 = scmp.eq.s32.totalorder %s20, 0
    %p56 = por %p54, %p55
    %p57 = scmp.ne.s32.totalorder %s49, %s51
    %p58 = scmp.eq.s32.totalorder %s25, 1
    %p59 = por %p57, %p58
    %p60 = scmp.ne.s32.totalorder %s51, %s52
    %p61 = scmp.eq.s32.totalorder %s25, 0
    %p62 = por %p60, %p61
    %p63 = scmp.ne.s32.totalorder %s51, %s52
    %p64 = scmp.eq.s32.totalorder %s26, 1
    %p65 = por %p63, %p64
    %p67 = scmp.ne.s32.totalorder %s52, %s66
    %p68 = scmp.eq.s32.totalorder %s26, 0
    %p69 = por %p67, %p68
    %s70 = ssub.s32 %s20, %s27
    %p71 = scmp.eq.s32.totalorder %s70, 0
    %s73 = sadd.s32 %s72, 1
    %s74 = scalar_select %p71, %s72, %s73
    %p77 = pneg %p71
    %p78 = scmp.eq.s32.totalorder %s20, 1
    %p79 = por %p77, %p78
    %p80 = scmp.ne.s32.totalorder %s72, %s75
    %p81 = scmp.eq.s32.totalorder %s20, 0
    %p82 = por %p80, %p81
    %p83 = scmp.ne.s32.totalorder %s72, %s75
    %p84 = scmp.eq.s32.totalorder %s25, 1
    %p85 = por %p83, %p84
    %p86 = scmp.ne.s32.totalorder %s75, %s76
    %p87 = scmp.eq.s32.totalorder %s25, 0
    %p88 = por %p86, %p87
    %p89 = scmp.ne.s32.totalorder %s75, %s76
    %p90 = scmp.eq.s32.totalorder %s26, 1
    %p91 = por %p89, %p90
    %p93 = scmp.ne.s32.totalorder %s76, %s92
    %p94 = scmp.eq.s32.totalorder %s26, 0
    %p95 = por %p93, %p94
    %s96 = ssub.s32 %s20, %s27
    %p97 = scmp.eq.s32.totalorder %s96, 0
    %s99 = sadd.s32 %s98, 1
    %s100 = scalar_select %p97, %s98, %s99
    %p103 = pneg %p97
    %p104 = scmp.eq.s32.totalorder %s20, 1
    %p105 = por %p103, %p104
    %p106 = scmp.ne.s32.totalorder %s98, %s101
    %p107 = scmp.eq.s32.totalorder %s20, 0
    %p108 = por %p106, %p107
    %p109 = scmp.ne.s32.totalorder %s98, %s101
    %p110 = scmp.eq.s32.totalorder %s25, 1
    %p111 = por %p109, %p110
    %p112 = scmp.ne.s32.totalorder %s101, %s102
    %p113 = scmp.eq.s32.totalorder %s25, 0
    %p114 = por %p112, %p113
    %p115 = scmp.ne.s32.totalorder %s101, %s102
    %p116 = scmp.eq.s32.totalorder %s26, 1
    %p117 = por %p115, %p116
    %p119 = scmp.ne.s32.totalorder %s102, %s118
    %p120 = scmp.eq.s32.totalorder %s26, 0
    %p121 = por %p119, %p120
    %s122 = ssub.s32 %s20, %s27
    %p123 = scmp.eq.s32.totalorder %s122, 0
    %s125 = sadd.s32 %s124, 1
    %s126 = scalar_select %p123, %s124, %s125
    %p129 = pneg %p123
    %p130 = scmp.eq.s32.totalorder %s20, 1
    %p131 = por %p129, %p130
    %p132 = scmp.ne.s32.totalorder %s124, %s127
    %p133 = scmp.eq.s32.totalorder %s20, 0
    %p134 = por %p132, %p133
    %p135 = scmp.ne.s32.totalorder %s124, %s127
    %p136 = scmp.eq.s32.totalorder %s25, 1
    %p137 = por %p135, %p136
    %p138 = scmp.ne.s32.totalorder %s127, %s128
    %p139 = scmp.eq.s32.totalorder %s25, 0
    %p140 = por %p138, %p139
    %p141 = scmp.ne.s32.totalorder %s127, %s128
    %p142 = scmp.eq.s32.totalorder %s26, 1
    %p143 = por %p141, %p142
    %p145 = scmp.ne.s32.totalorder %s128, %s144
    %p146 = scmp.eq.s32.totalorder %s26, 0
    %p147 = por %p145, %p146
    %s148 = ssub.s32 %s20, %s27
    %p149 = scmp.eq.s32.totalorder %s148, 0
    %s151 = sadd.s32 %s150, 1
    %s152 = scalar_select %p149, %s150, %s151
    %p155 = pneg %p149
    %p156 = scmp.eq.s32.totalorder %s20, 1
    %p157 = por %p155, %p156
    %p158 = scmp.ne.s32.totalorder %s150, %s153
    %p159 = scmp.eq.s32.totalorder %s20, 0
    %p160 = por %p158, %p159
    %p161 = scmp.ne.s32.totalorder %s150, %s153
    %p162 = scmp.eq.s32.totalorder %s25, 1
    %p163 = por %p161, %p162
    %p164 = scmp.ne.s32.totalorder %s153, %s154
    %p165 = scmp.eq.s32.totalorder %s25, 0
    %p166 = por %p164, %p165
    %p167 = scmp.ne.s32.totalorder %s153, %s154
    %p168 = scmp.eq.s32.totalorder %s26, 1
    %p169 = por %p167, %p168
    %p171 = scmp.ne.s32.totalorder %s154, %s170
    %p172 = scmp.eq.s32.totalorder %s26, 0
    %p173 = por %p171, %p172
    %s174 = ssub.s32 %s20, %s27
    %p175 = scmp.eq.s32.totalorder %s174, 0
    %s177 = sadd.s32 %s176, 1
    %s178 = scalar_select %p175, %s176, %s177
    %p181 = pneg %p175
    %p182 = scmp.eq.s32.totalorder %s20, 1
    %p183 = por %p181, %p182
    %p184 = scmp.ne.s32.totalorder %s176, %s179
    %p185 = scmp.eq.s32.totalorder %s20, 0
    %p186 = por %p184, %p185
    %p187 = scmp.ne.s32.totalorder %s176, %s179
    %p188 = scmp.eq.s32.totalorder %s25, 1
    %p189 = por %p187, %p188
    %p190 = scmp.ne.s32.totalorder %s179, %s180
    %p191 = scmp.eq.s32.totalorder %s25, 0
    %p192 = por %p190, %p191
    %p193 = scmp.ne.s32.totalorder %s179, %s180
    %p194 = scmp.eq.s32.totalorder %s26, 1
    %p195 = por %p193, %p194
    %p197 = scmp.ne.s32.totalorder %s180, %s196
    %p198 = scmp.eq.s32.totalorder %s26, 0
    %p199 = por %p197, %p198
    %s200 = ssub.s32 %s20, %s27
    %p201 = scmp.eq.s32.totalorder %s200, 0
    %s203 = sadd.s32 %s202, 1
    %s204 = scalar_select %p201, %s202, %s203
    %p207 = pneg %p201
    %p208 = scmp.eq.s32.totalorder %s20, 1
    %p209 = por %p207, %p208
    %p210 = scmp.ne.s32.totalorder %s202, %s205
    %p211 = scmp.eq.s32.totalorder %s20, 0
    %p212 = por %p210, %p211
    %p213 = scmp.ne.s32.totalorder %s202, %s205
    %p214 = scmp.eq.s32.totalorder %s25, 1
    %p215 = por %p213, %p214
    %p216 = scmp.ne.s32.totalorder %s205, %s206
    %p217 = scmp.eq.s32.totalorder %s25, 0
    %p218 = por %p216, %p217
    %p219 = scmp.ne.s32.totalorder %s205, %s206
    %p220 = scmp.eq.s32.totalorder %s26, 1
    %p221 = por %p219, %p220
    %p223 = scmp.ne.s32.totalorder %s206, %s222
    %p224 = scmp.eq.s32.totalorder %s26, 0
    %p225 = por %p223, %p224
    %s226 = ssub.s32 %s20, %s27
    %p227 = scmp.eq.s32.totalorder %s226, 0
    %s229 = sadd.s32 %s228, 1
    %s230 = scalar_select %p227, %s228, %s229
    %p233 = pneg %p227
    %p234 = scmp.eq.s32.totalorder %s20, 1
    %p235 = por %p233, %p234
    %p236 = scmp.ne.s32.totalorder %s228, %s231
    %p237 = scmp.eq.s32.totalorder %s20, 0
    %p238 = por %p236, %p237
    %p239 = scmp.ne.s32.totalorder %s228, %s231
    %p240 = scmp.eq.s32.totalorder %s25, 1
    %p241 = por %p239, %p240
    %p242 = scmp.ne.s32.totalorder %s231, %s232
    %p243 = scmp.eq.s32.totalorder %s25, 0
    %p244 = por %p242, %p243
    %p245 = scmp.ne.s32.totalorder %s231, %s232
    %p246 = scmp.eq.s32.totalorder %s26, 1
    %p247 = por %p245, %p246
    %p249 = scmp.ne.s32.totalorder %s232, %s248
    %p250 = scmp.eq.s32.totalorder %s26, 0
    %p251 = por %p249, %p250
    %s252 = ssub.s32 %s20, %s27
    %p253 = scmp.eq.s32.totalorder %s252, 0
    %s255 = sadd.s32 %s254, 1
    %s256 = scalar_select %p253, %s254, %s255
    %p259 = pneg %p253
    %p260 = scmp.eq.s32.totalorder %s20, 1
    %p261 = por %p259, %p260
    %p262 = scmp.ne.s32.totalorder %s254, %s257
    %p263 = scmp.eq.s32.totalorder %s20, 0
    %p264 = por %p262, %p263
    %p265 = scmp.ne.s32.totalorder %s254, %s257
    %p266 = scmp.eq.s32.totalorder %s25, 1
    %p267 = por %p265, %p266
    %p268 = scmp.ne.s32.totalorder %s257, %s258
    %p269 = scmp.eq.s32.totalorder %s25, 0
    %p270 = por %p268, %p269
    %p271 = scmp.ne.s32.totalorder %s257, %s258
    %p272 = scmp.eq.s32.totalorder %s26, 1
    %p273 = por %p271, %p272
    %p275 = scmp.ne.s32.totalorder %s258, %s274
    %p276 = scmp.eq.s32.totalorder %s26, 0
    %p277 = por %p275, %p276
    %s279 = sadd.s32 %s278, 1
    %p282 = scmp.eq.s32.totalorder %s20, 1
    %p283 = scmp.ne.s32.totalorder %s278, %s280
    %p284 = scmp.eq.s32.totalorder %s20, 0
    %p285 = por %p283, %p284
    %p286 = scmp.ne.s32.totalorder %s278, %s280
    %p287 = scmp.eq.s32.totalorder %s25, 1
    %p288 = por %p286, %p287
    %p289 = scmp.ne.s32.totalorder %s280, %s281
    %p290 = scmp.eq.s32.totalorder %s25, 0
    %p291 = por %p289, %p290
    %p292 = scmp.ne.s32.totalorder %s280, %s281
    %p293 = scmp.eq.s32.totalorder %s26, 1
    %p294 = por %p292, %p293
    %p296 = scmp.ne.s32.totalorder %s281, %s295
    %p297 = scmp.eq.s32.totalorder %s26, 0
    %p298 = por %p296, %p297
    %s300 = sadd.s32 %s299, 1
    %p303 = scmp.eq.s32.totalorder %s20, 1
    %p304 = scmp.ne.s32.totalorder %s299, %s301
    %p305 = scmp.eq.s32.totalorder %s20, 0
    %p306 = por %p304, %p305
    %p307 = scmp.ne.s32.totalorder %s299, %s301
    %p308 = scmp.eq.s32.totalorder %s25, 1
    %p309 = por %p307, %p308
    %p310 = scmp.ne.s32.totalorder %s301, %s302
    %p311 = scmp.eq.s32.totalorder %s25, 0
    %p312 = por %p310, %p311
    %p313 = scmp.ne.s32.totalorder %s301, %s302
    %p314 = scmp.eq.s32.totalorder %s26, 1
    %p315 = por %p313, %p314
    %p317 = scmp.ne.s32.totalorder %s302, %s316
    %p318 = scmp.eq.s32.totalorder %s26, 0
    %p319 = por %p317, %p318
    %s321 = sadd.s32 %s320, 1
    %p324 = scmp.eq.s32.totalorder %s20, 1
    %p325 = scmp.ne.s32.totalorder %s320, %s322
    %p326 = scmp.eq.s32.totalorder %s20, 0
    %p327 = por %p325, %p326
    %p328 = scmp.ne.s32.totalorder %s320, %s322
    %p329 = scmp.eq.s32.totalorder %s25, 1
    %p330 = por %p328, %p329
    %p331 = scmp.ne.s32.totalorder %s322, %s323
    %p332 = scmp.eq.s32.totalorder %s25, 0
    %p333 = por %p331, %p332
    %p334 = scmp.ne.s32.totalorder %s322, %s323
    %p335 = scmp.eq.s32.totalorder %s26, 1
    %p336 = por %p334, %p335
    %p338 = scmp.ne.s32.totalorder %s323, %s337
    %p339 = scmp.eq.s32.totalorder %s26, 0
    %p340 = por %p338, %p339
    %s342 = sadd.s32 %s341, 1
    %p345 = scmp.eq.s32.totalorder %s20, 1
    %p346 = scmp.ne.s32.totalorder %s341, %s343
    %p347 = scmp.eq.s32.totalorder %s20, 0
    %p348 = por %p346, %p347
    %p349 = scmp.ne.s32.totalorder %s341, %s343
    %p350 = scmp.eq.s32.totalorder %s25, 1
    %p351 = por %p349, %p350
    %p352 = scmp.ne.s32.totalorder %s343, %s344
    %p353 = scmp.eq.s32.totalorder %s25, 0
    %p354 = por %p352, %p353
    %p355 = scmp.ne.s32.totalorder %s343, %s344
    %p356 = scmp.eq.s32.totalorder %s26, 1
    %p357 = por %p355, %p356
    %p359 = scmp.ne.s32.totalorder %s344, %s358
    %p360 = scmp.eq.s32.totalorder %s26, 0
    %p361 = por %p359, %p360
    %s362 = ssub.s32 %s20, %s27
    %p363 = scmp.eq.s32.totalorder %s362, 0
    %s365 = sadd.s32 %s364, 1
    %s366 = scalar_select %p363, %s364, %s365
    %p369 = pneg %p363
    %p370 = scmp.eq.s32.totalorder %s20, 1
    %p371 = por %p369, %p370
    %p372 = scmp.ne.s32.totalorder %s364, %s367
    %p373 = scmp.eq.s32.totalorder %s20, 0
    %p374 = por %p372, %p373
    %p375 = scmp.ne.s32.totalorder %s364, %s367
    %p376 = scmp.eq.s32.totalorder %s25, 1
    %p377 = por %p375, %p376
    %p378 = scmp.ne.s32.totalorder %s367, %s368
    %p379 = scmp.eq.s32.totalorder %s25, 0
    %p380 = por %p378, %p379
    %p381 = scmp.ne.s32.totalorder %s367, %s368
    %p382 = scmp.eq.s32.totalorder %s26, 1
    %p383 = por %p381, %p382
    %p385 = scmp.ne.s32.totalorder %s368, %s384
    %p386 = scmp.eq.s32.totalorder %s26, 0
    %p387 = por %p385, %p386
    %p388 = scmp.le.s32.totalorder 1, %s20
    %p389 = scmp.lt.s32.totalorder %s20, 3
    %p390 = pnand %p388, %p389
    %p391 = pneg %p390
    // Predicated region
    $region9: #{_forward_impl.5} parent=5 // pred_check
      _
    $region10: #{_forward_impl.5} parent=5 // pred_check_branch
      %393 = sbr.rel (%p390) target = $region12
    $region11: #{_forward_impl.5} parent=5 // pred_region
      %s394 = ssub.s32 %s20, 1
      // Predicated region
      $region13: #{_forward_impl.5} parent=11 // pred_check
        %p395 = pneg %p41
      $region14: #{_forward_impl.5} parent=11 // pred_check_branch
        %397 = sbr.rel (%p395) target = $region16
      $region15: #{_forward_impl.5} parent=11 // pred_region
        _
      $region16: #{_forward_impl.5} parent=11 // pred_fallthru
        _
      // Predicated region
      $region17: #{_forward_impl.5} parent=11 // pred_check
        %p398 = pneg %p62
      $region18: #{_forward_impl.5} parent=11 // pred_check_branch
        %400 = sbr.rel (%p398) target = $region20
      $region19: #{_forward_impl.5} parent=11 // pred_region
        _
      $region20: #{_forward_impl.5} parent=11 // pred_fallthru
        _
      // Predicated region
      $region21: #{_forward_impl.5} parent=11 // pred_check
        %p401 = pneg %p291
      $region22: #{_forward_impl.5} parent=11 // pred_check_branch
        %403 = sbr.rel (%p401) target = $region24
      $region23: #{_forward_impl.5} parent=11 // pred_region
        _
      $region24: #{_forward_impl.5} parent=11 // pred_fallthru
        _
      // Predicated region
      $region25: #{_forward_impl.5} parent=11 // pred_check
        %p404 = pneg %p312
      $region26: #{_forward_impl.5} parent=11 // pred_check_branch
        %406 = sbr.rel (%p404) target = $region28
      $region27: #{_forward_impl.5} parent=11 // pred_region
        _
      $region28: #{_forward_impl.5} parent=11 // pred_fallthru
        _
      // Predicated region
      $region29: #{_forward_impl.5} parent=11 // pred_check
        %p407 = pneg %p333
      $region30: #{_forward_impl.5} parent=11 // pred_check_branch
        %409 = sbr.rel (%p407) target = $region32
      $region31: #{_forward_impl.5} parent=11 // pred_region
        _
      $region32: #{_forward_impl.5} parent=11 // pred_fallthru
        _
      // Predicated region
      $region33: #{_forward_impl.5} parent=11 // pred_check
        %p410 = pneg %p354
      $region34: #{_forward_impl.5} parent=11 // pred_check_branch
        %412 = sbr.rel (%p410) target = $region36
      $region35: #{_forward_impl.5} parent=11 // pred_region
        _
      $region36: #{_forward_impl.5} parent=11 // pred_fallthru
        _
    $region12: #{_forward_impl.5} parent=5 // pred_fallthru
      _
    %p413 = scmp.lt.s32.totalorder %s20, 2
    // Predicated region
    $region37: #{_forward_impl.5} parent=5 // pred_check
      %p414 = pneg %p413
    $region38: #{_forward_impl.5} parent=5 // pred_check_branch
      %416 = sbr.rel (%p414) target = $region40
    $region39: #{_forward_impl.5} parent=5 // pred_region
      // Predicated region
      $region41: #{_forward_impl.5} parent=39 // pred_check
        %p417 = pneg %p82
      $region42: #{_forward_impl.5} parent=39 // pred_check_branch
        %419 = sbr.rel (%p417) target = $region44
      $region43: #{_forward_impl.5} parent=39 // pred_region
        %p420 = scmp.lt.s32.totalorder %s20, 1
        %s421 = scalar_select %p420, %s20, 1
        %s422 = smul.addr %s421, 16
        %s423 = smul.addr %s422, 8
        %s424 = scalar_lea.vmem %s2, %s423
      $region44: #{_forward_impl.5} parent=39 // pred_fallthru
        _
      // Predicated region
      $region45: #{_forward_impl.5} parent=39 // pred_check
        %p425 = pneg %p108
      $region46: #{_forward_impl.5} parent=39 // pred_check_branch
        %427 = sbr.rel (%p425) target = $region48
      $region47: #{_forward_impl.5} parent=39 // pred_region
        %p428 = scmp.lt.s32.totalorder %s20, 1
        %s429 = scalar_select %p428, %s20, 1
        %s430 = scalar_lea.vmem %s3, %s429
      $region48: #{_forward_impl.5} parent=39 // pred_fallthru
        _
      // Predicated region
      $region49: #{_forward_impl.5} parent=39 // pred_check
        %p431 = pneg %p134
      $region50: #{_forward_impl.5} parent=39 // pred_check_branch
        %433 = sbr.rel (%p431) target = $region52
      $region51: #{_forward_impl.5} parent=39 // pred_region
        %p434 = scmp.lt.s32.totalorder %s20, 1
        %s435 = scalar_select %p434, %s20, 1
        %s436 = smul.addr %s435, 8
        %s437 = smul.addr %s436, 8
        %s438 = scalar_lea.vmem %s4, %s437
      $region52: #{_forward_impl.5} parent=39 // pred_fallthru
        _
      // Predicated region
      $region53: #{_forward_impl.5} parent=39 // pred_check
        %p439 = pneg %p160
      $region54: #{_forward_impl.5} parent=39 // pred_check_branch
        %441 = sbr.rel (%p439) target = $region56
      $region55: #{_forward_impl.5} parent=39 // pred_region
        %p442 = scmp.lt.s32.totalorder %s20, 1
        %s443 = scalar_select %p442, %s20, 1
        %s444 = scalar_lea.vmem %s5, %s443
      $region56: #{_forward_impl.5} parent=39 // pred_fallthru
        _
      // Predicated region
      $region57: #{_forward_impl.5} parent=39 // pred_check
        %p445 = pneg %p186
      $region58: #{_forward_impl.5} parent=39 // pred_check_branch
        %447 = sbr.rel (%p445) target = $region60
      $region59: #{_forward_impl.5} parent=39 // pred_region
        %p448 = scmp.lt.s32.totalorder %s20, 1
        %s449 = scalar_select %p448, %s20, 1
        %s450 = smul.addr %s449, 8
        %s451 = smul.addr %s450, 8
        %s452 = scalar_lea.vmem %s6, %s451
      $region60: #{_forward_impl.5} parent=39 // pred_fallthru
        _
      // Predicated region
      $region61: #{_forward_impl.5} parent=39 // pred_check
        %p453 = pneg %p212
      $region62: #{_forward_impl.5} parent=39 // pred_check_branch
        %455 = sbr.rel (%p453) target = $region64
      $region63: #{_forward_impl.5} parent=39 // pred_region
        %p456 = scmp.lt.s32.totalorder %s20, 1
        %s457 = scalar_select %p456, %s20, 1
        %s458 = scalar_lea.vmem %s7, %s457
      $region64: #{_forward_impl.5} parent=39 // pred_fallthru
        _
      // Predicated region
      $region65: #{_forward_impl.5} parent=39 // pred_check
        %p459 = pneg %p238
      $region66: #{_forward_impl.5} parent=39 // pred_check_branch
        %461 = sbr.rel (%p459) target = $region68
      $region67: #{_forward_impl.5} parent=39 // pred_region
        %p462 = scmp.lt.s32.totalorder %s20, 1
        %s463 = scalar_select %p462, %s20, 1
        %s464 = smul.addr %s463, 8
        %s465 = smul.addr %s464, 8
        %s466 = scalar_lea.vmem %s8, %s465
      $region68: #{_forward_impl.5} parent=39 // pred_fallthru
        _
      // Predicated region
      $region69: #{_forward_impl.5} parent=39 // pred_check
        %p467 = pneg %p264
      $region70: #{_forward_impl.5} parent=39 // pred_check_branch
        %469 = sbr.rel (%p467) target = $region72
      $region71: #{_forward_impl.5} parent=39 // pred_region
        %p470 = scmp.lt.s32.totalorder %s20, 1
        %s471 = scalar_select %p470, %s20, 1
        %s472 = scalar_lea.vmem %s9, %s471
      $region72: #{_forward_impl.5} parent=39 // pred_fallthru
        _
    $region40: #{_forward_impl.5} parent=5 // pred_fallthru
      _
    %p473 = scmp.le.s32.totalorder 1, %s20
    %p474 = scmp.lt.s32.totalorder %s20, 3
    %p475 = pnand %p473, %p474
    %p476 = pneg %p475
    // Predicated region
    $region73: #{_forward_impl.5} parent=5 // pred_check
      _
    $region74: #{_forward_impl.5} parent=5 // pred_check_branch
      %478 = sbr.rel (%p475) target = $region76
    $region75: #{_forward_impl.5} parent=5 // pred_region
      %s479 = ssub.s32 %s20, 1
      %p480 = pneg %p41
      %p481 = pneg %p38
      %p482 = pneg %p62
      %p483 = pneg %p59
      %p484 = scmp.lt.s32.totalorder %s25, 1
      %s485 = scalar_select %p484, %s25, 1
      %s486 = smul.addr %s485, 16
      %s487 = smul.addr %s486, 8
      %s488 = scalar_lea.vmem %s2, %s487
      %p489 = pneg %p88
      %p490 = pneg %p85
      %p491 = scmp.lt.s32.totalorder %s25, 1
      %s492 = scalar_select %p491, %s25, 1
      %s493 = scalar_lea.vmem %s3, %s492
      %p494 = pneg %p114
      %p495 = pneg %p111
      %p496 = scmp.lt.s32.totalorder %s25, 1
      %s497 = scalar_select %p496, %s25, 1
      %s498 = smul.addr %s497, 8
      %s499 = smul.addr %s498, 8
      %s500 = scalar_lea.vmem %s4, %s499
      %p501 = pneg %p140
      %p502 = pneg %p137
      %p503 = scmp.lt.s32.totalorder %s25, 1
      %s504 = scalar_select %p503, %s25, 1
      %s505 = scalar_lea.vmem %s5, %s504
      %p506 = pneg %p166
      %p507 = pneg %p163
      %p508 = scmp.lt.s32.totalorder %s25, 1
      %s509 = scalar_select %p508, %s25, 1
      %s510 = smul.addr %s509, 8
      %s511 = smul.addr %s510, 8
      %s512 = scalar_lea.vmem %s6, %s511
      %p513 = pneg %p192
      %p514 = pneg %p189
      %p515 = scmp.lt.s32.totalorder %s25, 1
      %s516 = scalar_select %p515, %s25, 1
      %s517 = scalar_lea.vmem %s7, %s516
      %p518 = pneg %p218
      %p519 = pneg %p215
      %p520 = scmp.lt.s32.totalorder %s25, 1
      %s521 = scalar_select %p520, %s25, 1
      %s522 = smul.addr %s521, 8
      %s523 = smul.addr %s522, 8
      %s524 = scalar_lea.vmem %s8, %s523
      %p525 = pneg %p244
      %p526 = pneg %p241
      %p527 = scmp.lt.s32.totalorder %s25, 1
      %s528 = scalar_select %p527, %s25, 1
      %s529 = scalar_lea.vmem %s9, %s528
      %p530 = pneg %p270
      %p531 = pneg %p267
      %p532 = pneg %p291
      %p533 = pneg %p288
      %p534 = pneg %p312
      %p535 = pneg %p309
      %p536 = pneg %p333
      %p537 = pneg %p330
      %p538 = pneg %p354
      %p539 = pneg %p351
      %p540 = pneg %p380
      %p541 = pneg %p377
      %p542 = scmp.lt.s32.totalorder %s25, 1
      %s543 = scalar_select %p542, %s25, 1
      %s544 = smul.addr %s543, 64
      %s545 = smul.addr %s544, 8
      %s546 = scalar_lea.vmem %s14, %s545
      %p547 = scmp.lt.s32.totalorder %s25, 1
      %s548 = scalar_select %p547, %s25, 1
      %s549 = smul.addr %s548, 16
      %s550 = smul.addr %s549, 8
      %s551 = scalar_lea.vmem %s2, %s550
      %p552 = scmp.lt.s32.totalorder %s25, 1
      %s553 = scalar_select %p552, %s25, 1
      %s554 = scalar_lea.vmem %s3, %s553
      %p555 = scmp.lt.s32.totalorder %s25, 1
      %s556 = scalar_select %p555, %s25, 1
      %s557 = smul.addr %s556, 8
      %s558 = smul.addr %s557, 8
      %s559 = scalar_lea.vmem %s4, %s558
      %p560 = scmp.lt.s32.totalorder %s25, 1
      %s561 = scalar_select %p560, %s25, 1
      %s562 = scalar_lea.vmem %s5, %s561
      %p563 = scmp.lt.s32.totalorder %s25, 1
      %s564 = scalar_select %p563, %s25, 1
      %s565 = smul.addr %s564, 8
      %s566 = smul.addr %s565, 8
      %s567 = scalar_lea.vmem %s6, %s566
      %p568 = scmp.lt.s32.totalorder %s25, 1
      %s569 = scalar_select %p568, %s25, 1
      %s570 = scalar_lea.vmem %s7, %s569
      %p571 = scmp.lt.s32.totalorder %s25, 1
      %s572 = scalar_select %p571, %s25, 1
      %s573 = smul.addr %s572, 8
      %s574 = smul.addr %s573, 8
      %s575 = scalar_lea.vmem %s8, %s574
      %p576 = scmp.lt.s32.totalorder %s25, 1
      %s577 = scalar_select %p576, %s25, 1
      %s578 = scalar_lea.vmem %s9, %s577
      %p579 = scmp.lt.s32.totalorder %s25, 1
      %s580 = scalar_select %p579, %s25, 1
      %s581 = smul.addr %s580, 64
      %s582 = smul.addr %s581, 8
      %s583 = scalar_lea.vmem %s14, %s582
      %v584 = vld [vmem:[%s0] sm:$0xff]
      %v585 = vld [vmem:[%s0 + $0x8] sm:$0xff]
      %v586 = vld [vmem:[%s0 + $0x10] sm:$0xff]
      %v587 = vld [vmem:[%s0 + $0x18] sm:$0xff]
      %v588 = vld [vmem:[%s0 + $0x20] sm:$0xff]
      %v589 = vld [vmem:[%s0 + $0x28] sm:$0xff]
      %v590 = vld [vmem:[%s0 + $0x30] sm:$0xff]
      %v591 = vld [vmem:[%s0 + $0x38] sm:$0xff]
      %v592 = vld [vmem:[%s0 + $0x40] sm:$0xff]
      %v593 = vld [vmem:[%s0 + $0x48] sm:$0xff]
      %v594 = vld [vmem:[%s0 + $0x50] sm:$0xff]
      %v595 = vld [vmem:[%s0 + $0x58] sm:$0xff]
      %v596 = vld [vmem:[%s0 + $0x60] sm:$0xff]
      %v597 = vld [vmem:[%s0 + $0x68] sm:$0xff]
      %v598 = vld [vmem:[%s0 + $0x70] sm:$0xff]
      %v599 = vld [vmem:[%s0 + $0x78] sm:$0xff]
      %v600 = vld [vmem:[%s0 + $0x80] sm:$0xff]
      %v601 = vld [vmem:[%s0 + $0x88] sm:$0xff]
      %v602 = vld [vmem:[%s0 + $0x90] sm:$0xff]
      %v603 = vld [vmem:[%s0 + $0x98] sm:$0xff]
      %v604 = vld [vmem:[%s0 + $0xa0] sm:$0xff]
      %v605 = vld [vmem:[%s0 + $0xa8] sm:$0xff]
      %v606 = vld [vmem:[%s0 + $0xb0] sm:$0xff]
      %v607 = vld [vmem:[%s0 + $0xb8] sm:$0xff]
      %v608 = vld [vmem:[%s0 + $0xc0] sm:$0xff]
      %v609 = vld [vmem:[%s0 + $0xc8] sm:$0xff]
      %v610 = vld [vmem:[%s0 + $0xd0] sm:$0xff]
      %v611 = vld [vmem:[%s0 + $0xd8] sm:$0xff]
      %v612 = vld [vmem:[%s0 + $0xe0] sm:$0xff]
      %v613 = vld [vmem:[%s0 + $0xe8] sm:$0xff]
      %v614 = vld [vmem:[%s0 + $0xf0] sm:$0xff]
      %v615 = vld [vmem:[%s0 + $0xf8] sm:$0xff]
      %v616 = vld [vmem:[%s0 + $0x100] sm:$0xff]
      %v617 = vld [vmem:[%s0 + $0x108] sm:$0xff]
      %v618 = vld [vmem:[%s0 + $0x110] sm:$0xff]
      %v619 = vld [vmem:[%s0 + $0x118] sm:$0xff]
      %v620 = vld [vmem:[%s0 + $0x120] sm:$0xff]
      %v621 = vld [vmem:[%s0 + $0x128] sm:$0xff]
      %v622 = vld [vmem:[%s0 + $0x130] sm:$0xff]
      %v623 = vld [vmem:[%s0 + $0x138] sm:$0xff]
      %v624 = vld [vmem:[%s0 + $0x140] sm:$0xff]
      %v625 = vld [vmem:[%s0 + $0x148] sm:$0xff]
      %v626 = vld [vmem:[%s0 + $0x150] sm:$0xff]
      %v627 = vld [vmem:[%s0 + $0x158] sm:$0xff]
      %v628 = vld [vmem:[%s0 + $0x160] sm:$0xff]
      %v629 = vld [vmem:[%s0 + $0x168] sm:$0xff]
      %v630 = vld [vmem:[%s0 + $0x170] sm:$0xff]
      %v631 = vld [vmem:[%s0 + $0x178] sm:$0xff]
      %v632 = vld [vmem:[%s0 + $0x180] sm:$0xff]
      %v633 = vld [vmem:[%s0 + $0x188] sm:$0xff]
      %v634 = vld [vmem:[%s0 + $0x190] sm:$0xff]
      %v635 = vld [vmem:[%s0 + $0x198] sm:$0xff]
      %v636 = vld [vmem:[%s0 + $0x1a0] sm:$0xff]
      %v637 = vld [vmem:[%s0 + $0x1a8] sm:$0xff]
      %v638 = vld [vmem:[%s0 + $0x1b0] sm:$0xff]
      %v639 = vld [vmem:[%s0 + $0x1b8] sm:$0xff]
      %v640 = vld [vmem:[%s0 + $0x1c0] sm:$0xff]
      %v641 = vld [vmem:[%s0 + $0x1c8] sm:$0xff]
      %v642 = vld [vmem:[%s0 + $0x1d0] sm:$0xff]
      %v643 = vld [vmem:[%s0 + $0x1d8] sm:$0xff]
      %v644 = vld [vmem:[%s0 + $0x1e0] sm:$0xff]
      %v645 = vld [vmem:[%s0 + $0x1e8] sm:$0xff]
      %v646 = vld [vmem:[%s0 + $0x1f0] sm:$0xff]
      %v647 = vld [vmem:[%s0 + $0x1f8] sm:$0xff]
      %v648 = vld [vmem:[%s551] sm:$0xff]
      %v649 = vld [vmem:[%s551 + $0x8] sm:$0xff]
      %v650 = vld [vmem:[%s551 + $0x10] sm:$0xff]
      %v651 = vld [vmem:[%s551 + $0x18] sm:$0xff]
      %v652 = vld [vmem:[%s551 + $0x20] sm:$0xff]
      %v653 = vld [vmem:[%s551 + $0x28] sm:$0xff]
      %v654 = vld [vmem:[%s551 + $0x30] sm:$0xff]
      %v655 = vld [vmem:[%s551 + $0x38] sm:$0xff]
      %v656 = vld [vmem:[%s551 + $0x40] sm:$0xff]
      %v657 = vld [vmem:[%s551 + $0x48] sm:$0xff]
      %v658 = vld [vmem:[%s551 + $0x50] sm:$0xff]
      %v659 = vld [vmem:[%s551 + $0x58] sm:$0xff]
      %v660 = vld [vmem:[%s551 + $0x60] sm:$0xff]
      %v661 = vld [vmem:[%s551 + $0x68] sm:$0xff]
      %v662 = vld [vmem:[%s551 + $0x70] sm:$0xff]
      %v663 = vld [vmem:[%s551 + $0x78] sm:$0xff]
      %v664 = vld [vmem:[%s554] sm:$0x1]
      %v666 = vlaneseq
      %v667 = vshrl.u32 %v666, 7
      %v668 = vsub.s32 0, %v667
      %v669 = vrot.slane %v664, %v668
      %671 = vmatprep.subr.mxu0 0.0
      %672 = vmatpush1.msra.mxu0 %v663
      %673 = vmatprep.subr.mxu0 0.0
      %674 = vmatpush1.msra.mxu0 %v662
      %675 = vmatprep.subr.mxu0 0.0
      %676 = vmatpush1.msra.mxu0 %v661
      %677 = vmatprep.subr.mxu0 0.0
      %678 = vmatpush1.msra.mxu0 %v660
      %679 = vmatprep.subr.mxu0 0.0
      %680 = vmatpush1.msra.mxu0 %v659
      %681 = vmatprep.subr.mxu0 0.0
      %682 = vmatpush1.msra.mxu0 %v658
      %683 = vmatprep.subr.mxu0 0.0
      %684 = vmatpush1.msra.mxu0 %v657
      %685 = vmatprep.subr.mxu0 0.0
      %686 = vmatpush1.msra.mxu0 %v656
      %687 = vmatprep.subr.mxu0 0.0
      %688 = vmatpush1.msra.mxu0 %v655
      %689 = vmatprep.subr.mxu0 0.0
      %690 = vmatpush1.msra.mxu0 %v654
      %691 = vmatprep.subr.mxu0 0.0
      %692 = vmatpush1.msra.mxu0 %v653
      %693 = vmatprep.subr.mxu0 0.0
      %694 = vmatpush1.msra.mxu0 %v652
      %695 = vmatprep.subr.mxu0 0.0
      %696 = vmatpush1.msra.mxu0 %v651
      %697 = vmatprep.subr.mxu0 0.0
      %698 = vmatpush1.msra.mxu0 %v650
      %699 = vmatprep.subr.mxu0 0.0
      %700 = vmatpush1.msra.mxu0 %v649
      %701 = vmatprep.subr.mxu0 0.0
      %702 = vmatpush1.msra.mxu0 %v648
      %703 = vmatprep.subr.mxu0 0.0
      %704 = vmatpush2.msra.mxu0 0.0
      %705 = vmatprep.subr.mxu0 0.0
      %706 = vmatpush2.msra.mxu0 0.0
      %707 = vmatprep.subr.mxu0 0.0
      %708 = vmatpush2.msra.mxu0 0.0
      %709 = vmatprep.subr.mxu0 0.0
      %710 = vmatpush2.msra.mxu0 0.0
      %711 = vmatprep.subr.mxu0 0.0
      %712 = vmatpush2.msra.mxu0 0.0
      %713 = vmatprep.subr.mxu0 0.0
      %714 = vmatpush2.msra.mxu0 0.0
      %715 = vmatprep.subr.mxu0 0.0
      %716 = vmatpush2.msra.mxu0 0.0
      %717 = vmatprep.subr.mxu0 0.0
      %718 = vmatpush2.msra.mxu0 0.0
      %719 = vmatprep.subr.mxu0 0.0
      %720 = vmatpush2.msra.mxu0 0.0
      %721 = vmatprep.subr.mxu0 0.0
      %722 = vmatpush2.msra.mxu0 0.0
      %723 = vmatprep.subr.mxu0 0.0
      %724 = vmatpush2.msra.mxu0 0.0
      %725 = vmatprep.subr.mxu0 0.0
      %726 = vmatpush2.msra.mxu0 0.0
      %727 = vmatprep.subr.mxu0 0.0
      %728 = vmatpush2.msra.mxu0 0.0
      %729 = vmatprep.subr.mxu0 0.0
      %730 = vmatpush2.msra.mxu0 0.0
      %731 = vmatprep.subr.mxu0 0.0
      %732 = vmatpush2.msra.mxu0 0.0
      %733 = vmatprep.subr.mxu0 0.0
      %734 = vmatpush2.msra.mxu0 0.0
      %735 = vmatprep.mubr.f32.mxu0 0.0
      %736 = vmatmul.mubr.f32.gmra.mxu0 %v584
      %v737 = vpop.f32.mrf.mxu0
      %v738 = vadd.f32 %v669, %v737
      %v739 = vpop.f32.mrf.mxu0
      %740 = vmatprep.mubr.f32.mxu0 0.0
      %741 = vmatmul.mubr.f32.gmra.mxu0 %v585
      %v742 = vpop.f32.mrf.mxu0
      %v743 = vadd.f32 %v669, %v742
      %v744 = vpop.f32.mrf.mxu0
      %745 = vmatprep.mubr.f32.mxu0 0.0
      %746 = vmatmul.mubr.f32.gmra.mxu0 %v586
      %v747 = vpop.f32.mrf.mxu0
      %v748 = vadd.f32 %v669, %v747
      %v749 = vpop.f32.mrf.mxu0
      %750 = vmatprep.mubr.f32.mxu0 0.0
      %751 = vmatmul.mubr.f32.gmra.mxu0 %v587
      %v752 = vpop.f32.mrf.mxu0
      %v753 = vadd.f32 %v669, %v752
      %v754 = vpop.f32.mrf.mxu0
      %755 = vmatprep.mubr.f32.mxu0 0.0
      %756 = vmatmul.mubr.f32.gmra.mxu0 %v588
      %v757 = vpop.f32.mrf.mxu0
      %v758 = vadd.f32 %v669, %v757
      %v759 = vpop.f32.mrf.mxu0
      %760 = vmatprep.mubr.f32.mxu0 0.0
      %761 = vmatmul.mubr.f32.gmra.mxu0 %v589
      %v762 = vpop.f32.mrf.mxu0
      %v763 = vadd.f32 %v669, %v762
      %v764 = vpop.f32.mrf.mxu0
      %765 = vmatprep.mubr.f32.mxu0 0.0
      %766 = vmatmul.mubr.f32.gmra.mxu0 %v590
      %v767 = vpop.f32.mrf.mxu0
      %v768 = vadd.f32 %v669, %v767
      %v769 = vpop.f32.mrf.mxu0
      %770 = vmatprep.mubr.f32.mxu0 0.0
      %771 = vmatmul.mubr.f32.gmra.mxu0 %v591
      %v772 = vpop.f32.mrf.mxu0
      %v773 = vadd.f32 %v669, %v772
      %v774 = vpop.f32.mrf.mxu0
      %775 = vmatprep.mubr.f32.mxu0 0.0
      %776 = vmatmul.mubr.f32.gmra.mxu0 %v592
      %v777 = vpop.f32.mrf.mxu0
      %v778 = vadd.f32 %v669, %v777
      %v779 = vpop.f32.mrf.mxu0
      %780 = vmatprep.mubr.f32.mxu0 0.0
      %781 = vmatmul.mubr.f32.gmra.mxu0 %v593
      %v782 = vpop.f32.mrf.mxu0
      %v783 = vadd.f32 %v669, %v782
      %v784 = vpop.f32.mrf.mxu0
      %785 = vmatprep.mubr.f32.mxu0 0.0
      %786 = vmatmul.mubr.f32.gmra.mxu0 %v594
      %v787 = vpop.f32.mrf.mxu0
      %v788 = vadd.f32 %v669, %v787
      %v789 = vpop.f32.mrf.mxu0
      %790 = vmatprep.mubr.f32.mxu0 0.0
      %791 = vmatmul.mubr.f32.gmra.mxu0 %v595
      %v792 = vpop.f32.mrf.mxu0
      %v793 = vadd.f32 %v669, %v792
      %v794 = vpop.f32.mrf.mxu0
      %795 = vmatprep.mubr.f32.mxu0 0.0
      %796 = vmatmul.mubr.f32.gmra.mxu0 %v596
      %v797 = vpop.f32.mrf.mxu0
      %v798 = vadd.f32 %v669, %v797
      %v799 = vpop.f32.mrf.mxu0
      %800 = vmatprep.mubr.f32.mxu0 0.0
      %801 = vmatmul.mubr.f32.gmra.mxu0 %v597
      %v802 = vpop.f32.mrf.mxu0
      %v803 = vadd.f32 %v669, %v802
      %v804 = vpop.f32.mrf.mxu0
      %805 = vmatprep.mubr.f32.mxu0 0.0
      %806 = vmatmul.mubr.f32.gmra.mxu0 %v598
      %v807 = vpop.f32.mrf.mxu0
      %v808 = vadd.f32 %v669, %v807
      %v809 = vpop.f32.mrf.mxu0
      %810 = vmatprep.mubr.f32.mxu0 0.0
      %811 = vmatmul.mubr.f32.gmra.mxu0 %v599
      %v812 = vpop.f32.mrf.mxu0
      %v813 = vadd.f32 %v669, %v812
      %v814 = vpop.f32.mrf.mxu0
      %815 = vmatprep.mubr.f32.mxu0 0.0
      %816 = vmatmul.mubr.f32.gmra.mxu0 %v600
      %v817 = vpop.f32.mrf.mxu0
      %v818 = vadd.f32 %v669, %v817
      %v819 = vpop.f32.mrf.mxu0
      %820 = vmatprep.mubr.f32.mxu0 0.0
      %821 = vmatmul.mubr.f32.gmra.mxu0 %v601
      %v822 = vpop.f32.mrf.mxu0
      %v823 = vadd.f32 %v669, %v822
      %v824 = vpop.f32.mrf.mxu0
      %825 = vmatprep.mubr.f32.mxu0 0.0
      %826 = vmatmul.mubr.f32.gmra.mxu0 %v602
      %v827 = vpop.f32.mrf.mxu0
      %v828 = vadd.f32 %v669, %v827
      %v829 = vpop.f32.mrf.mxu0
      %830 = vmatprep.mubr.f32.mxu0 0.0
      %831 = vmatmul.mubr.f32.gmra.mxu0 %v603
      %v832 = vpop.f32.mrf.mxu0
      %v833 = vadd.f32 %v669, %v832
      %v834 = vpop.f32.mrf.mxu0
      %835 = vmatprep.mubr.f32.mxu0 0.0
      %836 = vmatmul.mubr.f32.gmra.mxu0 %v604
      %v837 = vpop.f32.mrf.mxu0
      %v838 = vadd.f32 %v669, %v837
      %v839 = vpop.f32.mrf.mxu0
      %840 = vmatprep.mubr.f32.mxu0 0.0
      %841 = vmatmul.mubr.f32.gmra.mxu0 %v605
      %v842 = vpop.f32.mrf.mxu0
      %v843 = vadd.f32 %v669, %v842
      %v844 = vpop.f32.mrf.mxu0
      %845 = vmatprep.mubr.f32.mxu0 0.0
      %846 = vmatmul.mubr.f32.gmra.mxu0 %v606
      %v847 = vpop.f32.mrf.mxu0
      %v848 = vadd.f32 %v669, %v847
      %v849 = vpop.f32.mrf.mxu0
      %850 = vmatprep.mubr.f32.mxu0 0.0
      %851 = vmatmul.mubr.f32.gmra.mxu0 %v607
      %v852 = vpop.f32.mrf.mxu0
      %v853 = vadd.f32 %v669, %v852
      %v854 = vpop.f32.mrf.mxu0
      %855 = vmatprep.mubr.f32.mxu0 0.0
      %856 = vmatmul.mubr.f32.gmra.mxu0 %v608
      %v857 = vpop.f32.mrf.mxu0
      %v858 = vadd.f32 %v669, %v857
      %v859 = vpop.f32.mrf.mxu0
      %860 = vmatprep.mubr.f32.mxu0 0.0
      %861 = vmatmul.mubr.f32.gmra.mxu0 %v609
      %v862 = vpop.f32.mrf.mxu0
      %v863 = vadd.f32 %v669, %v862
      %v864 = vpop.f32.mrf.mxu0
      %865 = vmatprep.mubr.f32.mxu0 0.0
      %866 = vmatmul.mubr.f32.gmra.mxu0 %v610
      %v867 = vpop.f32.mrf.mxu0
      %v868 = vadd.f32 %v669, %v867
      %v869 = vpop.f32.mrf.mxu0
      %870 = vmatprep.mubr.f32.mxu0 0.0
      %871 = vmatmul.mubr.f32.gmra.mxu0 %v611
      %v872 = vpop.f32.mrf.mxu0
      %v873 = vadd.f32 %v669, %v872
      %v874 = vpop.f32.mrf.mxu0
      %875 = vmatprep.mubr.f32.mxu0 0.0
      %876 = vmatmul.mubr.f32.gmra.mxu0 %v612
      %v877 = vpop.f32.mrf.mxu0
      %v878 = vadd.f32 %v669, %v877
      %v879 = vpop.f32.mrf.mxu0
      %880 = vmatprep.mubr.f32.mxu0 0.0
      %881 = vmatmul.mubr.f32.gmra.mxu0 %v613
      %v882 = vpop.f32.mrf.mxu0
      %v883 = vadd.f32 %v669, %v882
      %v884 = vpop.f32.mrf.mxu0
      %885 = vmatprep.mubr.f32.mxu0 0.0
      %886 = vmatmul.mubr.f32.gmra.mxu0 %v614
      %v887 = vpop.f32.mrf.mxu0
      %v888 = vadd.f32 %v669, %v887
      %v889 = vpop.f32.mrf.mxu0
      %890 = vmatprep.mubr.f32.mxu0 0.0
      %891 = vmatmul.mubr.f32.gmra.mxu0 %v615
      %v892 = vpop.f32.mrf.mxu0
      %v893 = vadd.f32 %v669, %v892
      %v894 = vpop.f32.mrf.mxu0
      %895 = vmatprep.mubr.f32.mxu0 0.0
      %896 = vmatmul.mubr.f32.gmra.mxu0 %v616
      %v897 = vpop.f32.mrf.mxu0
      %v898 = vadd.f32 %v669, %v897
      %v899 = vpop.f32.mrf.mxu0
      %900 = vmatprep.mubr.f32.mxu0 0.0
      %901 = vmatmul.mubr.f32.gmra.mxu0 %v617
      %v902 = vpop.f32.mrf.mxu0
      %v903 = vadd.f32 %v669, %v902
      %v904 = vpop.f32.mrf.mxu0
      %905 = vmatprep.mubr.f32.mxu0 0.0
      %906 = vmatmul.mubr.f32.gmra.mxu0 %v618
      %v907 = vpop.f32.mrf.mxu0
      %v908 = vadd.f32 %v669, %v907
      %v909 = vpop.f32.mrf.mxu0
      %910 = vmatprep.mubr.f32.mxu0 0.0
      %911 = vmatmul.mubr.f32.gmra.mxu0 %v619
      %v912 = vpop.f32.mrf.mxu0
      %v913 = vadd.f32 %v669, %v912
      %v914 = vpop.f32.mrf.mxu0
      %915 = vmatprep.mubr.f32.mxu0 0.0
      %916 = vmatmul.mubr.f32.gmra.mxu0 %v620
      %v917 = vpop.f32.mrf.mxu0
      %v918 = vadd.f32 %v669, %v917
      %v919 = vpop.f32.mrf.mxu0
      %920 = vmatprep.mubr.f32.mxu0 0.0
      %921 = vmatmul.mubr.f32.gmra.mxu0 %v621
      %v922 = vpop.f32.mrf.mxu0
      %v923 = vadd.f32 %v669, %v922
      %v924 = vpop.f32.mrf.mxu0
      %925 = vmatprep.mubr.f32.mxu0 0.0
      %926 = vmatmul.mubr.f32.gmra.mxu0 %v622
      %v927 = vpop.f32.mrf.mxu0
      %v928 = vadd.f32 %v669, %v927
      %v929 = vpop.f32.mrf.mxu0
      %930 = vmatprep.mubr.f32.mxu0 0.0
      %931 = vmatmul.mubr.f32.gmra.mxu0 %v623
      %v932 = vpop.f32.mrf.mxu0
      %v933 = vadd.f32 %v669, %v932
      %v934 = vpop.f32.mrf.mxu0
      %935 = vmatprep.mubr.f32.mxu0 0.0
      %936 = vmatmul.mubr.f32.gmra.mxu0 %v624
      %v937 = vpop.f32.mrf.mxu0
      %v938 = vadd.f32 %v669, %v937
      %v939 = vpop.f32.mrf.mxu0
      %940 = vmatprep.mubr.f32.mxu0 0.0
      %941 = vmatmul.mubr.f32.gmra.mxu0 %v625
      %v942 = vpop.f32.mrf.mxu0
      %v943 = vadd.f32 %v669, %v942
      %v944 = vpop.f32.mrf.mxu0
      %945 = vmatprep.mubr.f32.mxu0 0.0
      %946 = vmatmul.mubr.f32.gmra.mxu0 %v626
      %v947 = vpop.f32.mrf.mxu0
      %v948 = vadd.f32 %v669, %v947
      %v949 = vpop.f32.mrf.mxu0
      %950 = vmatprep.mubr.f32.mxu0 0.0
      %951 = vmatmul.mubr.f32.gmra.mxu0 %v627
      %v952 = vpop.f32.mrf.mxu0
      %v953 = vadd.f32 %v669, %v952
      %v954 = vpop.f32.mrf.mxu0
      %955 = vmatprep.mubr.f32.mxu0 0.0
      %956 = vmatmul.mubr.f32.gmra.mxu0 %v628
      %v957 = vpop.f32.mrf.mxu0
      %v958 = vadd.f32 %v669, %v957
      %v959 = vpop.f32.mrf.mxu0
      %960 = vmatprep.mubr.f32.mxu0 0.0
      %961 = vmatmul.mubr.f32.gmra.mxu0 %v629
      %v962 = vpop.f32.mrf.mxu0
      %v963 = vadd.f32 %v669, %v962
      %v964 = vpop.f32.mrf.mxu0
      %965 = vmatprep.mubr.f32.mxu0 0.0
      %966 = vmatmul.mubr.f32.gmra.mxu0 %v630
      %v967 = vpop.f32.mrf.mxu0
      %v968 = vadd.f32 %v669, %v967
      %v969 = vpop.f32.mrf.mxu0
      %970 = vmatprep.mubr.f32.mxu0 0.0
      %971 = vmatmul.mubr.f32.gmra.mxu0 %v631
      %v972 = vpop.f32.mrf.mxu0
      %v973 = vadd.f32 %v669, %v972
      %v974 = vpop.f32.mrf.mxu0
      %975 = vmatprep.mubr.f32.mxu0 0.0
      %976 = vmatmul.mubr.f32.gmra.mxu0 %v632
      %v977 = vpop.f32.mrf.mxu0
      %v978 = vadd.f32 %v669, %v977
      %v979 = vpop.f32.mrf.mxu0
      %980 = vmatprep.mubr.f32.mxu0 0.0
      %981 = vmatmul.mubr.f32.gmra.mxu0 %v633
      %v982 = vpop.f32.mrf.mxu0
      %v983 = vadd.f32 %v669, %v982
      %v984 = vpop.f32.mrf.mxu0
      %985 = vmatprep.mubr.f32.mxu0 0.0
      %986 = vmatmul.mubr.f32.gmra.mxu0 %v634
      %v987 = vpop.f32.mrf.mxu0
      %v988 = vadd.f32 %v669, %v987
      %v989 = vpop.f32.mrf.mxu0
      %990 = vmatprep.mubr.f32.mxu0 0.0
      %991 = vmatmul.mubr.f32.gmra.mxu0 %v635
      %v992 = vpop.f32.mrf.mxu0
      %v993 = vadd.f32 %v669, %v992
      %v994 = vpop.f32.mrf.mxu0
      %995 = vmatprep.mubr.f32.mxu0 0.0
      %996 = vmatmul.mubr.f32.gmra.mxu0 %v636
      %v997 = vpop.f32.mrf.mxu0
      %v998 = vadd.f32 %v669, %v997
      %v999 = vpop.f32.mrf.mxu0
      %1000 = vmatprep.mubr.f32.mxu0 0.0
      %1001 = vmatmul.mubr.f32.gmra.mxu0 %v637
      %v1002 = vpop.f32.mrf.mxu0
      %v1003 = vadd.f32 %v669, %v1002
      %v1004 = vpop.f32.mrf.mxu0
      %1005 = vmatprep.mubr.f32.mxu0 0.0
      %1006 = vmatmul.mubr.f32.gmra.mxu0 %v638
      %v1007 = vpop.f32.mrf.mxu0
      %v1008 = vadd.f32 %v669, %v1007
      %v1009 = vpop.f32.mrf.mxu0
      %1010 = vmatprep.mubr.f32.mxu0 0.0
      %1011 = vmatmul.mubr.f32.gmra.mxu0 %v639
      %v1012 = vpop.f32.mrf.mxu0
      %v1013 = vadd.f32 %v669, %v1012
      %v1014 = vpop.f32.mrf.mxu0
      %1015 = vmatprep.mubr.f32.mxu0 0.0
      %1016 = vmatmul.mubr.f32.gmra.mxu0 %v640
      %v1017 = vpop.f32.mrf.mxu0
      %v1018 = vadd.f32 %v669, %v1017
      %v1019 = vpop.f32.mrf.mxu0
      %1020 = vmatprep.mubr.f32.mxu0 0.0
      %1021 = vmatmul.mubr.f32.gmra.mxu0 %v641
      %v1022 = vpop.f32.mrf.mxu0
      %v1023 = vadd.f32 %v669, %v1022
      %v1024 = vpop.f32.mrf.mxu0
      %1025 = vmatprep.mubr.f32.mxu0 0.0
      %1026 = vmatmul.mubr.f32.gmra.mxu0 %v642
      %v1027 = vpop.f32.mrf.mxu0
      %v1028 = vadd.f32 %v669, %v1027
      %v1029 = vpop.f32.mrf.mxu0
      %1030 = vmatprep.mubr.f32.mxu0 0.0
      %1031 = vmatmul.mubr.f32.gmra.mxu0 %v643
      %v1032 = vpop.f32.mrf.mxu0
      %v1033 = vadd.f32 %v669, %v1032
      %v1034 = vpop.f32.mrf.mxu0
      %1035 = vmatprep.mubr.f32.mxu0 0.0
      %1036 = vmatmul.mubr.f32.gmra.mxu0 %v644
      %v1037 = vpop.f32.mrf.mxu0
      %v1038 = vadd.f32 %v669, %v1037
      %v1039 = vpop.f32.mrf.mxu0
      %1040 = vmatprep.mubr.f32.mxu0 0.0
      %1041 = vmatmul.mubr.f32.gmra.mxu0 %v645
      %v1042 = vpop.f32.mrf.mxu0
      %v1043 = vadd.f32 %v669, %v1042
      %v1044 = vpop.f32.mrf.mxu0
      %1045 = vmatprep.mubr.f32.mxu0 0.0
      %1046 = vmatmul.mubr.f32.gmra.mxu0 %v646
      %v1047 = vpop.f32.mrf.mxu0
      %v1048 = vadd.f32 %v669, %v1047
      %v1049 = vpop.f32.mrf.mxu0
      %1050 = vmatprep.mubr.f32.mxu0 0.0
      %1051 = vmatmul.mubr.f32.gmra.mxu0 %v647
      %v1052 = vpop.f32.mrf.mxu0
      %v1053 = vadd.f32 %v669, %v1052
      %v1054 = vpop.f32.mrf.mxu0
      %1055 = vdwg.mxu0
      %v1056 = vld [vmem:[%s1] sm:$0xff]
      %v1057 = vld [vmem:[%s1 + $0x8] sm:$0xff]
      %v1058 = vld [vmem:[%s1 + $0x10] sm:$0xff]
      %v1059 = vld [vmem:[%s1 + $0x18] sm:$0xff]
      %v1060 = vld [vmem:[%s559] sm:$0xff]
      %v1061 = vld [vmem:[%s559 + $0x8] sm:$0xff]
      %v1062 = vld [vmem:[%s559 + $0x10] sm:$0xff]
      %v1063 = vld [vmem:[%s559 + $0x18] sm:$0xff]
      %v1064 = vld [vmem:[%s559 + $0x20] sm:$0xff]
      %v1065 = vld [vmem:[%s559 + $0x28] sm:$0xff]
      %v1066 = vld [vmem:[%s559 + $0x30] sm:$0xff]
      %v1067 = vld [vmem:[%s559 + $0x38] sm:$0xff]
      %v1068 = vld [vmem:[%s562] sm:$0x1]
      %v1070 = vlaneseq
      %v1071 = vshrl.u32 %v1070, 7
      %v1072 = vsub.s32 0, %v1071
      %v1073 = vrot.slane %v1068, %v1072
      %vm1075 = vcmask 523264
      %v1077 = vsel %vm1075, %v1056, 0
      %v1080 = vsel %vm1075, %v1057, 0
      %v1083 = vsel %vm1075, %v1058, 0
      %v1086 = vsel %vm1075, %v1059, 0
      %1088 = vmatprep.subr.mxu0 0.0
      %1089 = vmatpush1.msra.mxu0 0.0
      %1090 = vmatprep.subr.mxu0 0.0
      %1091 = vmatpush1.msra.mxu0 0.0
      %1092 = vmatprep.subr.mxu0 0.0
      %1093 = vmatpush1.msra.mxu0 0.0
      %1094 = vmatprep.subr.mxu0 0.0
      %1095 = vmatpush1.msra.mxu0 0.0
      %1096 = vmatprep.subr.mxu0 0.0
      %1097 = vmatpush1.msra.mxu0 0.0
      %1098 = vmatprep.subr.mxu0 0.0
      %1099 = vmatpush1.msra.mxu0 0.0
      %1100 = vmatprep.subr.mxu0 0.0
      %1101 = vmatpush1.msra.mxu0 0.0
      %1102 = vmatprep.subr.mxu0 0.0
      %1103 = vmatpush1.msra.mxu0 0.0
      %1104 = vmatprep.subr.mxu0 0.0
      %1105 = vmatpush1.msra.mxu0 %v1067
      %1106 = vmatprep.subr.mxu0 0.0
      %1107 = vmatpush1.msra.mxu0 %v1066
      %1108 = vmatprep.subr.mxu0 0.0
      %1109 = vmatpush1.msra.mxu0 %v1065
      %1110 = vmatprep.subr.mxu0 0.0
      %1111 = vmatpush1.msra.mxu0 %v1064
      %1112 = vmatprep.subr.mxu0 0.0
      %1113 = vmatpush1.msra.mxu0 %v1063
      %1114 = vmatprep.subr.mxu0 0.0
      %1115 = vmatpush1.msra.mxu0 %v1062
      %1116 = vmatprep.subr.mxu0 0.0
      %1117 = vmatpush1.msra.mxu0 %v1061
      %1118 = vmatprep.subr.mxu0 0.0
      %1119 = vmatpush1.msra.mxu0 %v1060
      %1120 = vmatprep.subr.mxu0 0.0
      %1121 = vmatpush2.msra.mxu0 0.0
      %1122 = vmatprep.subr.mxu0 0.0
      %1123 = vmatpush2.msra.mxu0 0.0
      %1124 = vmatprep.subr.mxu0 0.0
      %1125 = vmatpush2.msra.mxu0 0.0
      %1126 = vmatprep.subr.mxu0 0.0
      %1127 = vmatpush2.msra.mxu0 0.0
      %1128 = vmatprep.subr.mxu0 0.0
      %1129 = vmatpush2.msra.mxu0 0.0
      %1130 = vmatprep.subr.mxu0 0.0
      %1131 = vmatpush2.msra.mxu0 0.0
      %1132 = vmatprep.subr.mxu0 0.0
      %1133 = vmatpush2.msra.mxu0 0.0
      %1134 = vmatprep.subr.mxu0 0.0
      %1135 = vmatpush2.msra.mxu0 0.0
      %1136 = vmatprep.subr.mxu0 0.0
      %1137 = vmatpush2.msra.mxu0 0.0
      %1138 = vmatprep.subr.mxu0 0.0
      %1139 = vmatpush2.msra.mxu0 0.0
      %1140 = vmatprep.subr.mxu0 0.0
      %1141 = vmatpush2.msra.mxu0 0.0
      %1142 = vmatprep.subr.mxu0 0.0
      %1143 = vmatpush2.msra.mxu0 0.0
      %1144 = vmatprep.subr.mxu0 0.0
      %1145 = vmatpush2.msra.mxu0 0.0
      %1146 = vmatprep.subr.mxu0 0.0
      %1147 = vmatpush2.msra.mxu0 0.0
      %1148 = vmatprep.subr.mxu0 0.0
      %1149 = vmatpush2.msra.mxu0 0.0
      %1150 = vmatprep.subr.mxu0 0.0
      %1151 = vmatpush2.msra.mxu0 0.0
      %1152 = vmatprep.mubr.f32.mxu0 0.0
      %1153 = vmatmul.mubr.f32.gmra.mxu0 %v1077
      %v1154 = vpop.f32.mrf.mxu0
      %v1155 = vadd.f32 %v1073, %v1154
      %v1156 = vpop.f32.mrf.mxu0
      %1157 = vmatprep.mubr.f32.mxu0 0.0
      %1158 = vmatmul.mubr.f32.gmra.mxu0 %v1080
      %v1159 = vpop.f32.mrf.mxu0
      %v1160 = vadd.f32 %v1073, %v1159
      %v1161 = vpop.f32.mrf.mxu0
      %1162 = vmatprep.mubr.f32.mxu0 0.0
      %1163 = vmatmul.mubr.f32.gmra.mxu0 %v1083
      %v1164 = vpop.f32.mrf.mxu0
      %v1165 = vadd.f32 %v1073, %v1164
      %v1166 = vpop.f32.mrf.mxu0
      %1167 = vmatprep.mubr.f32.mxu0 0.0
      %1168 = vmatmul.mubr.f32.gmra.mxu0 %v1086
      %v1169 = vpop.f32.mrf.mxu0
      %v1170 = vadd.f32 %v1073, %v1169
      %v1171 = vpop.f32.mrf.mxu0
      %1172 = vdwg.mxu0
      %v1173 = vld [vmem:[%s567] sm:$0xff]
      %v1174 = vld [vmem:[%s567 + $0x8] sm:$0xff]
      %v1175 = vld [vmem:[%s567 + $0x10] sm:$0xff]
      %v1176 = vld [vmem:[%s567 + $0x18] sm:$0xff]
      %v1177 = vld [vmem:[%s567 + $0x20] sm:$0xff]
      %v1178 = vld [vmem:[%s567 + $0x28] sm:$0xff]
      %v1179 = vld [vmem:[%s567 + $0x30] sm:$0xff]
      %v1180 = vld [vmem:[%s567 + $0x38] sm:$0xff]
      %v1181 = vld [vmem:[%s570] sm:$0x1]
      %v1183 = vlaneseq
      %v1184 = vshrl.u32 %v1183, 7
      %v1185 = vsub.s32 0, %v1184
      %v1186 = vrot.slane %v1181, %v1185
      %1188 = vmatprep.subr.mxu0 0.0
      %1189 = vmatpush1.msra.mxu0 0.0
      %1190 = vmatprep.subr.mxu0 0.0
      %1191 = vmatpush1.msra.mxu0 0.0
      %1192 = vmatprep.subr.mxu0 0.0
      %1193 = vmatpush1.msra.mxu0 0.0
      %1194 = vmatprep.subr.mxu0 0.0
      %1195 = vmatpush1.msra.mxu0 0.0
      %1196 = vmatprep.subr.mxu0 0.0
      %1197 = vmatpush1.msra.mxu0 0.0
      %1198 = vmatprep.subr.mxu0 0.0
      %1199 = vmatpush1.msra.mxu0 0.0
      %1200 = vmatprep.subr.mxu0 0.0
      %1201 = vmatpush1.msra.mxu0 0.0
      %1202 = vmatprep.subr.mxu0 0.0
      %1203 = vmatpush1.msra.mxu0 0.0
      %1204 = vmatprep.subr.mxu0 0.0
      %1205 = vmatpush1.msra.mxu0 %v1180
      %1206 = vmatprep.subr.mxu0 0.0
      %1207 = vmatpush1.msra.mxu0 %v1179
      %1208 = vmatprep.subr.mxu0 0.0
      %1209 = vmatpush1.msra.mxu0 %v1178
      %1210 = vmatprep.subr.mxu0 0.0
      %1211 = vmatpush1.msra.mxu0 %v1177
      %1212 = vmatprep.subr.mxu0 0.0
      %1213 = vmatpush1.msra.mxu0 %v1176
      %1214 = vmatprep.subr.mxu0 0.0
      %1215 = vmatpush1.msra.mxu0 %v1175
      %1216 = vmatprep.subr.mxu0 0.0
      %1217 = vmatpush1.msra.mxu0 %v1174
      %1218 = vmatprep.subr.mxu0 0.0
      %1219 = vmatpush1.msra.mxu0 %v1173
      %1220 = vmatprep.subr.mxu0 0.0
      %1221 = vmatpush2.msra.mxu0 0.0
      %1222 = vmatprep.subr.mxu0 0.0
      %1223 = vmatpush2.msra.mxu0 0.0
      %1224 = vmatprep.subr.mxu0 0.0
      %1225 = vmatpush2.msra.mxu0 0.0
      %1226 = vmatprep.subr.mxu0 0.0
      %1227 = vmatpush2.msra.mxu0 0.0
      %1228 = vmatprep.subr.mxu0 0.0
      %1229 = vmatpush2.msra.mxu0 0.0
      %1230 = vmatprep.subr.mxu0 0.0
      %1231 = vmatpush2.msra.mxu0 0.0
      %1232 = vmatprep.subr.mxu0 0.0
      %1233 = vmatpush2.msra.mxu0 0.0
      %1234 = vmatprep.subr.mxu0 0.0
      %1235 = vmatpush2.msra.mxu0 0.0
      %1236 = vmatprep.subr.mxu0 0.0
      %1237 = vmatpush2.msra.mxu0 0.0
      %1238 = vmatprep.subr.mxu0 0.0
      %1239 = vmatpush2.msra.mxu0 0.0
      %1240 = vmatprep.subr.mxu0 0.0
      %1241 = vmatpush2.msra.mxu0 0.0
      %1242 = vmatprep.subr.mxu0 0.0
      %1243 = vmatpush2.msra.mxu0 0.0
      %1244 = vmatprep.subr.mxu0 0.0
      %1245 = vmatpush2.msra.mxu0 0.0
      %1246 = vmatprep.subr.mxu0 0.0
      %1247 = vmatpush2.msra.mxu0 0.0
      %1248 = vmatprep.subr.mxu0 0.0
      %1249 = vmatpush2.msra.mxu0 0.0
      %1250 = vmatprep.subr.mxu0 0.0
      %1251 = vmatpush2.msra.mxu0 0.0
      %1252 = vmatprep.mubr.f32.mxu0 0.0
      %1253 = vmatmul.mubr.f32.gmra.mxu0 %v1077
      %v1254 = vpop.f32.mrf.mxu0
      %v1255 = vadd.f32 %v1186, %v1254
      %v1256 = vpop.f32.mrf.mxu0
      %1257 = vmatprep.mubr.f32.mxu0 0.0
      %1258 = vmatmul.mubr.f32.gmra.mxu0 %v1080
      %v1259 = vpop.f32.mrf.mxu0
      %v1260 = vadd.f32 %v1186, %v1259
      %v1261 = vpop.f32.mrf.mxu0
      %1262 = vmatprep.mubr.f32.mxu0 0.0
      %1263 = vmatmul.mubr.f32.gmra.mxu0 %v1083
      %v1264 = vpop.f32.mrf.mxu0
      %v1265 = vadd.f32 %v1186, %v1264
      %v1266 = vpop.f32.mrf.mxu0
      %1267 = vmatprep.mubr.f32.mxu0 0.0
      %1268 = vmatmul.mubr.f32.gmra.mxu0 %v1086
      %v1269 = vpop.f32.mrf.mxu0
      %v1270 = vadd.f32 %v1186, %v1269
      %v1271 = vpop.f32.mrf.mxu0
      %1272 = vdwg.mxu0
      %v1274 = vsel %vm1075, %v738, 0
      %v1277 = vsel %vm1075, %v743, 0
      %v1280 = vsel %vm1075, %v748, 0
      %v1283 = vsel %vm1075, %v753, 0
      %v1286 = vsel %vm1075, %v758, 0
      %v1289 = vsel %vm1075, %v763, 0
      %v1292 = vsel %vm1075, %v768, 0
      %v1295 = vsel %vm1075, %v773, 0
      %v1298 = vsel %vm1075, %v778, 0
      %v1301 = vsel %vm1075, %v783, 0
      %v1304 = vsel %vm1075, %v788, 0
      %v1307 = vsel %vm1075, %v793, 0
      %v1310 = vsel %vm1075, %v798, 0
      %v1313 = vsel %vm1075, %v803, 0
      %v1316 = vsel %vm1075, %v808, 0
      %v1319 = vsel %vm1075, %v813, 0
      %v1322 = vsel %vm1075, %v1155, 0
      %v1325 = vsel %vm1075, %v1160, 0
      %1327 = vmatprep.subr.mxu0 0.0
      %1328 = vmatpush1.xpose.msra.mxu0 0.0
      %1329 = vmatprep.subr.mxu0 0.0
      %1330 = vmatpush1.xpose.msra.mxu0 0.0
      %1331 = vmatprep.subr.mxu0 0.0
      %1332 = vmatpush1.xpose.msra.mxu0 0.0
      %1333 = vmatprep.subr.mxu0 0.0
      %1334 = vmatpush1.xpose.msra.mxu0 0.0
      %1335 = vmatprep.subr.mxu0 0.0
      %1336 = vmatpush1.xpose.msra.mxu0 0.0
      %1337 = vmatprep.subr.mxu0 0.0
      %1338 = vmatpush1.xpose.msra.mxu0 0.0
      %1339 = vmatprep.subr.mxu0 0.0
      %1340 = vmatpush1.xpose.msra.mxu0 0.0
      %1341 = vmatprep.subr.mxu0 0.0
      %1342 = vmatpush1.xpose.msra.mxu0 0.0
      %1343 = vmatprep.subr.mxu0 0.0
      %1344 = vmatpush1.xpose.msra.mxu0 0.0
      %1345 = vmatprep.subr.mxu0 0.0
      %1346 = vmatpush1.xpose.msra.mxu0 0.0
      %1347 = vmatprep.subr.mxu0 0.0
      %1348 = vmatpush1.xpose.msra.mxu0 0.0
      %1349 = vmatprep.subr.mxu0 0.0
      %1350 = vmatpush1.xpose.msra.mxu0 0.0
      %1351 = vmatprep.subr.mxu0 0.0
      %1352 = vmatpush1.xpose.msra.mxu0 0.0
      %1353 = vmatprep.subr.mxu0 0.0
      %1354 = vmatpush1.xpose.msra.mxu0 0.0
      %1355 = vmatprep.subr.mxu0 0.0
      %1356 = vmatpush1.xpose.msra.mxu0 %v1325
      %1357 = vmatprep.subr.mxu0 0.0
      %1358 = vmatpush1.xpose.msra.mxu0 %v1322
      %1359 = vmatprep.subr.mxu0 0.0
      %1360 = vmatpush2.xpose.msra.mxu0 0.0
      %1361 = vmatprep.subr.mxu0 0.0
      %1362 = vmatpush2.xpose.msra.mxu0 0.0
      %1363 = vmatprep.subr.mxu0 0.0
      %1364 = vmatpush2.xpose.msra.mxu0 0.0
      %1365 = vmatprep.subr.mxu0 0.0
      %1366 = vmatpush2.xpose.msra.mxu0 0.0
      %1367 = vmatprep.subr.mxu0 0.0
      %1368 = vmatpush2.xpose.msra.mxu0 0.0
      %1369 = vmatprep.subr.mxu0 0.0
      %1370 = vmatpush2.xpose.msra.mxu0 0.0
      %1371 = vmatprep.subr.mxu0 0.0
      %1372 = vmatpush2.xpose.msra.mxu0 0.0
      %1373 = vmatprep.subr.mxu0 0.0
      %1374 = vmatpush2.xpose.msra.mxu0 0.0
      %1375 = vmatprep.subr.mxu0 0.0
      %1376 = vmatpush2.xpose.msra.mxu0 0.0
      %1377 = vmatprep.subr.mxu0 0.0
      %1378 = vmatpush2.xpose.msra.mxu0 0.0
      %1379 = vmatprep.subr.mxu0 0.0
      %1380 = vmatpush2.xpose.msra.mxu0 0.0
      %1381 = vmatprep.subr.mxu0 0.0
      %1382 = vmatpush2.xpose.msra.mxu0 0.0
      %1383 = vmatprep.subr.mxu0 0.0
      %1384 = vmatpush2.xpose.msra.mxu0 0.0
      %1385 = vmatprep.subr.mxu0 0.0
      %1386 = vmatpush2.xpose.msra.mxu0 0.0
      %1387 = vmatprep.subr.mxu0 0.0
      %1388 = vmatpush2.xpose.msra.mxu0 0.0
      %1389 = vmatprep.subr.mxu0 0.0
      %1390 = vmatpush2.xpose.msra.mxu0 0.0
      %1391 = vmatprep.mubr.f32.mxu0 0.0
      %1392 = vmatmul.mubr.f32.gmra.mxu0 %v1274
      %v1393 = vpop.f32.mrf.mxu0
      %v1394 = vadd.f32 0.0, %v1393
      %v1395 = vpop.f32.mrf.mxu0
      %1396 = vmatprep.mubr.f32.mxu0 0.0
      %1397 = vmatmul.mubr.f32.gmra.mxu0 %v1277
      %v1398 = vpop.f32.mrf.mxu0
      %v1399 = vadd.f32 0.0, %v1398
      %v1400 = vpop.f32.mrf.mxu0
      %1401 = vmatprep.mubr.f32.mxu0 0.0
      %1402 = vmatmul.mubr.f32.gmra.mxu0 %v1280
      %v1403 = vpop.f32.mrf.mxu0
      %v1404 = vadd.f32 0.0, %v1403
      %v1405 = vpop.f32.mrf.mxu0
      %1406 = vmatprep.mubr.f32.mxu0 0.0
      %1407 = vmatmul.mubr.f32.gmra.mxu0 %v1283
      %v1408 = vpop.f32.mrf.mxu0
      %v1409 = vadd.f32 0.0, %v1408
      %v1410 = vpop.f32.mrf.mxu0
      %1411 = vmatprep.mubr.f32.mxu0 0.0
      %1412 = vmatmul.mubr.f32.gmra.mxu0 %v1286
      %v1413 = vpop.f32.mrf.mxu0
      %v1414 = vadd.f32 0.0, %v1413
      %v1415 = vpop.f32.mrf.mxu0
      %1416 = vmatprep.mubr.f32.mxu0 0.0
      %1417 = vmatmul.mubr.f32.gmra.mxu0 %v1289
      %v1418 = vpop.f32.mrf.mxu0
      %v1419 = vadd.f32 0.0, %v1418
      %v1420 = vpop.f32.mrf.mxu0
      %1421 = vmatprep.mubr.f32.mxu0 0.0
      %1422 = vmatmul.mubr.f32.gmra.mxu0 %v1292
      %v1423 = vpop.f32.mrf.mxu0
      %v1424 = vadd.f32 0.0, %v1423
      %v1425 = vpop.f32.mrf.mxu0
      %1426 = vmatprep.mubr.f32.mxu0 0.0
      %1427 = vmatmul.mubr.f32.gmra.mxu0 %v1295
      %v1428 = vpop.f32.mrf.mxu0
      %v1429 = vadd.f32 0.0, %v1428
      %v1430 = vpop.f32.mrf.mxu0
      %1431 = vmatprep.mubr.f32.mxu0 0.0
      %1432 = vmatmul.mubr.f32.gmra.mxu0 %v1298
      %v1433 = vpop.f32.mrf.mxu0
      %v1434 = vadd.f32 0.0, %v1433
      %v1435 = vpop.f32.mrf.mxu0
      %1436 = vmatprep.mubr.f32.mxu0 0.0
      %1437 = vmatmul.mubr.f32.gmra.mxu0 %v1301
      %v1438 = vpop.f32.mrf.mxu0
      %v1439 = vadd.f32 0.0, %v1438
      %v1440 = vpop.f32.mrf.mxu0
      %1441 = vmatprep.mubr.f32.mxu0 0.0
      %1442 = vmatmul.mubr.f32.gmra.mxu0 %v1304
      %v1443 = vpop.f32.mrf.mxu0
      %v1444 = vadd.f32 0.0, %v1443
      %v1445 = vpop.f32.mrf.mxu0
      %1446 = vmatprep.mubr.f32.mxu0 0.0
      %1447 = vmatmul.mubr.f32.gmra.mxu0 %v1307
      %v1448 = vpop.f32.mrf.mxu0
      %v1449 = vadd.f32 0.0, %v1448
      %v1450 = vpop.f32.mrf.mxu0
      %1451 = vmatprep.mubr.f32.mxu0 0.0
      %1452 = vmatmul.mubr.f32.gmra.mxu0 %v1310
      %v1453 = vpop.f32.mrf.mxu0
      %v1454 = vadd.f32 0.0, %v1453
      %v1455 = vpop.f32.mrf.mxu0
      %1456 = vmatprep.mubr.f32.mxu0 0.0
      %1457 = vmatmul.mubr.f32.gmra.mxu0 %v1313
      %v1458 = vpop.f32.mrf.mxu0
      %v1459 = vadd.f32 0.0, %v1458
      %v1460 = vpop.f32.mrf.mxu0
      %1461 = vmatprep.mubr.f32.mxu0 0.0
      %1462 = vmatmul.mubr.f32.gmra.mxu0 %v1316
      %v1463 = vpop.f32.mrf.mxu0
      %v1464 = vadd.f32 0.0, %v1463
      %v1465 = vpop.f32.mrf.mxu0
      %1466 = vmatprep.mubr.f32.mxu0 0.0
      %1467 = vmatmul.mubr.f32.gmra.mxu0 %v1319
      %v1468 = vpop.f32.mrf.mxu0
      %v1469 = vadd.f32 0.0, %v1468
      %v1470 = vpop.f32.mrf.mxu0
      %1471 = vdwg.mxu0
      %v1473 = vsel %vm1075, %v818, 0
      %v1476 = vsel %vm1075, %v823, 0
      %v1479 = vsel %vm1075, %v828, 0
      %v1482 = vsel %vm1075, %v833, 0
      %v1485 = vsel %vm1075, %v838, 0
      %v1488 = vsel %vm1075, %v843, 0
      %v1491 = vsel %vm1075, %v848, 0
      %v1494 = vsel %vm1075, %v853, 0
      %v1497 = vsel %vm1075, %v858, 0
      %v1500 = vsel %vm1075, %v863, 0
      %v1503 = vsel %vm1075, %v868, 0
      %v1506 = vsel %vm1075, %v873, 0
      %v1509 = vsel %vm1075, %v878, 0
      %v1512 = vsel %vm1075, %v883, 0
      %v1515 = vsel %vm1075, %v888, 0
      %v1518 = vsel %vm1075, %v893, 0
      %v1521 = vsel %vm1075, %v1165, 0
      %v1524 = vsel %vm1075, %v1170, 0
      %1526 = vmatprep.subr.mxu0 0.0
      %1527 = vmatpush1.xpose.msra.mxu0 0.0
      %1528 = vmatprep.subr.mxu0 0.0
      %1529 = vmatpush1.xpose.msra.mxu0 0.0
      %1530 = vmatprep.subr.mxu0 0.0
      %1531 = vmatpush1.xpose.msra.mxu0 0.0
      %1532 = vmatprep.subr.mxu0 0.0
      %1533 = vmatpush1.xpose.msra.mxu0 0.0
      %1534 = vmatprep.subr.mxu0 0.0
      %1535 = vmatpush1.xpose.msra.mxu0 0.0
      %1536 = vmatprep.subr.mxu0 0.0
      %1537 = vmatpush1.xpose.msra.mxu0 0.0
      %1538 = vmatprep.subr.mxu0 0.0
      %1539 = vmatpush1.xpose.msra.mxu0 0.0
      %1540 = vmatprep.subr.mxu0 0.0
      %1541 = vmatpush1.xpose.msra.mxu0 0.0
      %1542 = vmatprep.subr.mxu0 0.0
      %1543 = vmatpush1.xpose.msra.mxu0 0.0
      %1544 = vmatprep.subr.mxu0 0.0
      %1545 = vmatpush1.xpose.msra.mxu0 0.0
      %1546 = vmatprep.subr.mxu0 0.0
      %1547 = vmatpush1.xpose.msra.mxu0 0.0
      %1548 = vmatprep.subr.mxu0 0.0
      %1549 = vmatpush1.xpose.msra.mxu0 0.0
      %1550 = vmatprep.subr.mxu0 0.0
      %1551 = vmatpush1.xpose.msra.mxu0 0.0
      %1552 = vmatprep.subr.mxu0 0.0
      %1553 = vmatpush1.xpose.msra.mxu0 0.0
      %1554 = vmatprep.subr.mxu0 0.0
      %1555 = vmatpush1.xpose.msra.mxu0 %v1524
      %1556 = vmatprep.subr.mxu0 0.0
      %1557 = vmatpush1.xpose.msra.mxu0 %v1521
      %1558 = vmatprep.subr.mxu0 0.0
      %1559 = vmatpush2.xpose.msra.mxu0 0.0
      %1560 = vmatprep.subr.mxu0 0.0
      %1561 = vmatpush2.xpose.msra.mxu0 0.0
      %1562 = vmatprep.subr.mxu0 0.0
      %1563 = vmatpush2.xpose.msra.mxu0 0.0
      %1564 = vmatprep.subr.mxu0 0.0
      %1565 = vmatpush2.xpose.msra.mxu0 0.0
      %1566 = vmatprep.subr.mxu0 0.0
      %1567 = vmatpush2.xpose.msra.mxu0 0.0
      %1568 = vmatprep.subr.mxu0 0.0
      %1569 = vmatpush2.xpose.msra.mxu0 0.0
      %1570 = vmatprep.subr.mxu0 0.0
      %1571 = vmatpush2.xpose.msra.mxu0 0.0
      %1572 = vmatprep.subr.mxu0 0.0
      %1573 = vmatpush2.xpose.msra.mxu0 0.0
      %1574 = vmatprep.subr.mxu0 0.0
      %1575 = vmatpush2.xpose.msra.mxu0 0.0
      %1576 = vmatprep.subr.mxu0 0.0
      %1577 = vmatpush2.xpose.msra.mxu0 0.0
      %1578 = vmatprep.subr.mxu0 0.0
      %1579 = vmatpush2.xpose.msra.mxu0 0.0
      %1580 = vmatprep.subr.mxu0 0.0
      %1581 = vmatpush2.xpose.msra.mxu0 0.0
      %1582 = vmatprep.subr.mxu0 0.0
      %1583 = vmatpush2.xpose.msra.mxu0 0.0
      %1584 = vmatprep.subr.mxu0 0.0
      %1585 = vmatpush2.xpose.msra.mxu0 0.0
      %1586 = vmatprep.subr.mxu0 0.0
      %1587 = vmatpush2.xpose.msra.mxu0 0.0
      %1588 = vmatprep.subr.mxu0 0.0
      %1589 = vmatpush2.xpose.msra.mxu0 0.0
      %1590 = vmatprep.mubr.f32.mxu0 0.0
      %1591 = vmatmul.mubr.f32.gmra.mxu0 %v1473
      %v1592 = vpop.f32.mrf.mxu0
      %v1593 = vadd.f32 0.0, %v1592
      %v1594 = vpop.f32.mrf.mxu0
      %1595 = vmatprep.mubr.f32.mxu0 0.0
      %1596 = vmatmul.mubr.f32.gmra.mxu0 %v1476
      %v1597 = vpop.f32.mrf.mxu0
      %v1598 = vadd.f32 0.0, %v1597
      %v1599 = vpop.f32.mrf.mxu0
      %1600 = vmatprep.mubr.f32.mxu0 0.0
      %1601 = vmatmul.mubr.f32.gmra.mxu0 %v1479
      %v1602 = vpop.f32.mrf.mxu0
      %v1603 = vadd.f32 0.0, %v1602
      %v1604 = vpop.f32.mrf.mxu0
      %1605 = vmatprep.mubr.f32.mxu0 0.0
      %1606 = vmatmul.mubr.f32.gmra.mxu0 %v1482
      %v1607 = vpop.f32.mrf.mxu0
      %v1608 = vadd.f32 0.0, %v1607
      %v1609 = vpop.f32.mrf.mxu0
      %1610 = vmatprep.mubr.f32.mxu0 0.0
      %1611 = vmatmul.mubr.f32.gmra.mxu0 %v1485
      %v1612 = vpop.f32.mrf.mxu0
      %v1613 = vadd.f32 0.0, %v1612
      %v1614 = vpop.f32.mrf.mxu0
      %1615 = vmatprep.mubr.f32.mxu0 0.0
      %1616 = vmatmul.mubr.f32.gmra.mxu0 %v1488
      %v1617 = vpop.f32.mrf.mxu0
      %v1618 = vadd.f32 0.0, %v1617
      %v1619 = vpop.f32.mrf.mxu0
      %1620 = vmatprep.mubr.f32.mxu0 0.0
      %1621 = vmatmul.mubr.f32.gmra.mxu0 %v1491
      %v1622 = vpop.f32.mrf.mxu0
      %v1623 = vadd.f32 0.0, %v1622
      %v1624 = vpop.f32.mrf.mxu0
      %1625 = vmatprep.mubr.f32.mxu0 0.0
      %1626 = vmatmul.mubr.f32.gmra.mxu0 %v1494
      %v1627 = vpop.f32.mrf.mxu0
      %v1628 = vadd.f32 0.0, %v1627
      %v1629 = vpop.f32.mrf.mxu0
      %1630 = vmatprep.mubr.f32.mxu0 0.0
      %1631 = vmatmul.mubr.f32.gmra.mxu0 %v1497
      %v1632 = vpop.f32.mrf.mxu0
      %v1633 = vadd.f32 0.0, %v1632
      %v1634 = vpop.f32.mrf.mxu0
      %1635 = vmatprep.mubr.f32.mxu0 0.0
      %1636 = vmatmul.mubr.f32.gmra.mxu0 %v1500
      %v1637 = vpop.f32.mrf.mxu0
      %v1638 = vadd.f32 0.0, %v1637
      %v1639 = vpop.f32.mrf.mxu0
      %1640 = vmatprep.mubr.f32.mxu0 0.0
      %1641 = vmatmul.mubr.f32.gmra.mxu0 %v1503
      %v1642 = vpop.f32.mrf.mxu0
      %v1643 = vadd.f32 0.0, %v1642
      %v1644 = vpop.f32.mrf.mxu0
      %1645 = vmatprep.mubr.f32.mxu0 0.0
      %1646 = vmatmul.mubr.f32.gmra.mxu0 %v1506
      %v1647 = vpop.f32.mrf.mxu0
      %v1648 = vadd.f32 0.0, %v1647
      %v1649 = vpop.f32.mrf.mxu0
      %1650 = vmatprep.mubr.f32.mxu0 0.0
      %1651 = vmatmul.mubr.f32.gmra.mxu0 %v1509
      %v1652 = vpop.f32.mrf.mxu0
      %v1653 = vadd.f32 0.0, %v1652
      %v1654 = vpop.f32.mrf.mxu0
      %1655 = vmatprep.mubr.f32.mxu0 0.0
      %1656 = vmatmul.mubr.f32.gmra.mxu0 %v1512
      %v1657 = vpop.f32.mrf.mxu0
      %v1658 = vadd.f32 0.0, %v1657
      %v1659 = vpop.f32.mrf.mxu0
      %1660 = vmatprep.mubr.f32.mxu0 0.0
      %1661 = vmatmul.mubr.f32.gmra.mxu0 %v1515
      %v1662 = vpop.f32.mrf.mxu0
      %v1663 = vadd.f32 0.0, %v1662
      %v1664 = vpop.f32.mrf.mxu0
      %1665 = vmatprep.mubr.f32.mxu0 0.0
      %1666 = vmatmul.mubr.f32.gmra.mxu0 %v1518
      %v1667 = vpop.f32.mrf.mxu0
      %v1668 = vadd.f32 0.0, %v1667
      %v1669 = vpop.f32.mrf.mxu0
      %1670 = vdwg.mxu0
      %v1672 = vsel %vm1075, %v898, 0
      %v1675 = vsel %vm1075, %v903, 0
      %v1678 = vsel %vm1075, %v908, 0
      %v1681 = vsel %vm1075, %v913, 0
      %v1684 = vsel %vm1075, %v918, 0
      %v1687 = vsel %vm1075, %v923, 0
      %v1690 = vsel %vm1075, %v928, 0
      %v1693 = vsel %vm1075, %v933, 0
      %v1696 = vsel %vm1075, %v938, 0
      %v1699 = vsel %vm1075, %v943, 0
      %v1702 = vsel %vm1075, %v948, 0
      %v1705 = vsel %vm1075, %v953, 0
      %v1708 = vsel %vm1075, %v958, 0
      %v1711 = vsel %vm1075, %v963, 0
      %v1714 = vsel %vm1075, %v968, 0
      %v1717 = vsel %vm1075, %v973, 0
      %1719 = vmatprep.subr.mxu0 0.0
      %1720 = vmatpush1.xpose.msra.mxu0 0.0
      %1721 = vmatprep.subr.mxu0 0.0
      %1722 = vmatpush1.xpose.msra.mxu0 0.0
      %1723 = vmatprep.subr.mxu0 0.0
      %1724 = vmatpush1.xpose.msra.mxu0 0.0
      %1725 = vmatprep.subr.mxu0 0.0
      %1726 = vmatpush1.xpose.msra.mxu0 0.0
      %1727 = vmatprep.subr.mxu0 0.0
      %1728 = vmatpush1.xpose.msra.mxu0 0.0
      %1729 = vmatprep.subr.mxu0 0.0
      %1730 = vmatpush1.xpose.msra.mxu0 0.0
      %1731 = vmatprep.subr.mxu0 0.0
      %1732 = vmatpush1.xpose.msra.mxu0 0.0
      %1733 = vmatprep.subr.mxu0 0.0
      %1734 = vmatpush1.xpose.msra.mxu0 0.0
      %1735 = vmatprep.subr.mxu0 0.0
      %1736 = vmatpush1.xpose.msra.mxu0 0.0
      %1737 = vmatprep.subr.mxu0 0.0
      %1738 = vmatpush1.xpose.msra.mxu0 0.0
      %1739 = vmatprep.subr.mxu0 0.0
      %1740 = vmatpush1.xpose.msra.mxu0 0.0
      %1741 = vmatprep.subr.mxu0 0.0
      %1742 = vmatpush1.xpose.msra.mxu0 0.0
      %1743 = vmatprep.subr.mxu0 0.0
      %1744 = vmatpush1.xpose.msra.mxu0 0.0
      %1745 = vmatprep.subr.mxu0 0.0
      %1746 = vmatpush1.xpose.msra.mxu0 0.0
      %1747 = vmatprep.subr.mxu0 0.0
      %1748 = vmatpush1.xpose.msra.mxu0 %v1325
      %1749 = vmatprep.subr.mxu0 0.0
      %1750 = vmatpush1.xpose.msra.mxu0 %v1322
      %1751 = vmatprep.subr.mxu0 0.0
      %1752 = vmatpush2.xpose.msra.mxu0 0.0
      %1753 = vmatprep.subr.mxu0 0.0
      %1754 = vmatpush2.xpose.msra.mxu0 0.0
      %1755 = vmatprep.subr.mxu0 0.0
      %1756 = vmatpush2.xpose.msra.mxu0 0.0
      %1757 = vmatprep.subr.mxu0 0.0
      %1758 = vmatpush2.xpose.msra.mxu0 0.0
      %1759 = vmatprep.subr.mxu0 0.0
      %1760 = vmatpush2.xpose.msra.mxu0 0.0
      %1761 = vmatprep.subr.mxu0 0.0
      %1762 = vmatpush2.xpose.msra.mxu0 0.0
      %1763 = vmatprep.subr.mxu0 0.0
      %1764 = vmatpush2.xpose.msra.mxu0 0.0
      %1765 = vmatprep.subr.mxu0 0.0
      %1766 = vmatpush2.xpose.msra.mxu0 0.0
      %1767 = vmatprep.subr.mxu0 0.0
      %1768 = vmatpush2.xpose.msra.mxu0 0.0
      %1769 = vmatprep.subr.mxu0 0.0
      %1770 = vmatpush2.xpose.msra.mxu0 0.0
      %1771 = vmatprep.subr.mxu0 0.0
      %1772 = vmatpush2.xpose.msra.mxu0 0.0
      %1773 = vmatprep.subr.mxu0 0.0
      %1774 = vmatpush2.xpose.msra.mxu0 0.0
      %1775 = vmatprep.subr.mxu0 0.0
      %1776 = vmatpush2.xpose.msra.mxu0 0.0
      %1777 = vmatprep.subr.mxu0 0.0
      %1778 = vmatpush2.xpose.msra.mxu0 0.0
      %1779 = vmatprep.subr.mxu0 0.0
      %1780 = vmatpush2.xpose.msra.mxu0 0.0
      %1781 = vmatprep.subr.mxu0 0.0
      %1782 = vmatpush2.xpose.msra.mxu0 0.0
      %1783 = vmatprep.mubr.f32.mxu0 0.0
      %1784 = vmatmul.mubr.f32.gmra.mxu0 %v1672
      %v1785 = vpop.f32.mrf.mxu0
      %v1786 = vadd.f32 0.0, %v1785
      %v1787 = vpop.f32.mrf.mxu0
      %1788 = vmatprep.mubr.f32.mxu0 0.0
      %1789 = vmatmul.mubr.f32.gmra.mxu0 %v1675
      %v1790 = vpop.f32.mrf.mxu0
      %v1791 = vadd.f32 0.0, %v1790
      %v1792 = vpop.f32.mrf.mxu0
      %1793 = vmatprep.mubr.f32.mxu0 0.0
      %1794 = vmatmul.mubr.f32.gmra.mxu0 %v1678
      %v1795 = vpop.f32.mrf.mxu0
      %v1796 = vadd.f32 0.0, %v1795
      %v1797 = vpop.f32.mrf.mxu0
      %1798 = vmatprep.mubr.f32.mxu0 0.0
      %1799 = vmatmul.mubr.f32.gmra.mxu0 %v1681
      %v1800 = vpop.f32.mrf.mxu0
      %v1801 = vadd.f32 0.0, %v1800
      %v1802 = vpop.f32.mrf.mxu0
      %1803 = vmatprep.mubr.f32.mxu0 0.0
      %1804 = vmatmul.mubr.f32.gmra.mxu0 %v1684
      %v1805 = vpop.f32.mrf.mxu0
      %v1806 = vadd.f32 0.0, %v1805
      %v1807 = vpop.f32.mrf.mxu0
      %1808 = vmatprep.mubr.f32.mxu0 0.0
      %1809 = vmatmul.mubr.f32.gmra.mxu0 %v1687
      %v1810 = vpop.f32.mrf.mxu0
      %v1811 = vadd.f32 0.0, %v1810
      %v1812 = vpop.f32.mrf.mxu0
      %1813 = vmatprep.mubr.f32.mxu0 0.0
      %1814 = vmatmul.mubr.f32.gmra.mxu0 %v1690
      %v1815 = vpop.f32.mrf.mxu0
      %v1816 = vadd.f32 0.0, %v1815
      %v1817 = vpop.f32.mrf.mxu0
      %1818 = vmatprep.mubr.f32.mxu0 0.0
      %1819 = vmatmul.mubr.f32.gmra.mxu0 %v1693
      %v1820 = vpop.f32.mrf.mxu0
      %v1821 = vadd.f32 0.0, %v1820
      %v1822 = vpop.f32.mrf.mxu0
      %1823 = vmatprep.mubr.f32.mxu0 0.0
      %1824 = vmatmul.mubr.f32.gmra.mxu0 %v1696
      %v1825 = vpop.f32.mrf.mxu0
      %v1826 = vadd.f32 0.0, %v1825
      %v1827 = vpop.f32.mrf.mxu0
      %1828 = vmatprep.mubr.f32.mxu0 0.0
      %1829 = vmatmul.mubr.f32.gmra.mxu0 %v1699
      %v1830 = vpop.f32.mrf.mxu0
      %v1831 = vadd.f32 0.0, %v1830
      %v1832 = vpop.f32.mrf.mxu0
      %1833 = vmatprep.mubr.f32.mxu0 0.0
      %1834 = vmatmul.mubr.f32.gmra.mxu0 %v1702
      %v1835 = vpop.f32.mrf.mxu0
      %v1836 = vadd.f32 0.0, %v1835
      %v1837 = vpop.f32.mrf.mxu0
      %1838 = vmatprep.mubr.f32.mxu0 0.0
      %1839 = vmatmul.mubr.f32.gmra.mxu0 %v1705
      %v1840 = vpop.f32.mrf.mxu0
      %v1841 = vadd.f32 0.0, %v1840
      %v1842 = vpop.f32.mrf.mxu0
      %1843 = vmatprep.mubr.f32.mxu0 0.0
      %1844 = vmatmul.mubr.f32.gmra.mxu0 %v1708
      %v1845 = vpop.f32.mrf.mxu0
      %v1846 = vadd.f32 0.0, %v1845
      %v1847 = vpop.f32.mrf.mxu0
      %1848 = vmatprep.mubr.f32.mxu0 0.0
      %1849 = vmatmul.mubr.f32.gmra.mxu0 %v1711
      %v1850 = vpop.f32.mrf.mxu0
      %v1851 = vadd.f32 0.0, %v1850
      %v1852 = vpop.f32.mrf.mxu0
      %1853 = vmatprep.mubr.f32.mxu0 0.0
      %1854 = vmatmul.mubr.f32.gmra.mxu0 %v1714
      %v1855 = vpop.f32.mrf.mxu0
      %v1856 = vadd.f32 0.0, %v1855
      %v1857 = vpop.f32.mrf.mxu0
      %1858 = vmatprep.mubr.f32.mxu0 0.0
      %1859 = vmatmul.mubr.f32.gmra.mxu0 %v1717
      %v1860 = vpop.f32.mrf.mxu0
      %v1861 = vadd.f32 0.0, %v1860
      %v1862 = vpop.f32.mrf.mxu0
      %1863 = vdwg.mxu0
      %v1865 = vsel %vm1075, %v978, 0
      %v1868 = vsel %vm1075, %v983, 0
      %v1871 = vsel %vm1075, %v988, 0
      %v1874 = vsel %vm1075, %v993, 0
      %v1877 = vsel %vm1075, %v998, 0
      %v1880 = vsel %vm1075, %v1003, 0
      %v1883 = vsel %vm1075, %v1008, 0
      %v1886 = vsel %vm1075, %v1013, 0
      %v1889 = vsel %vm1075, %v1018, 0
      %v1892 = vsel %vm1075, %v1023, 0
      %v1895 = vsel %vm1075, %v1028, 0
      %v1898 = vsel %vm1075, %v1033, 0
      %v1901 = vsel %vm1075, %v1038, 0
      %v1904 = vsel %vm1075, %v1043, 0
      %v1907 = vsel %vm1075, %v1048, 0
      %v1910 = vsel %vm1075, %v1053, 0
      %1912 = vmatprep.subr.mxu0 0.0
      %1913 = vmatpush1.xpose.msra.mxu0 0.0
      %1914 = vmatprep.subr.mxu0 0.0
      %1915 = vmatpush1.xpose.msra.mxu0 0.0
      %1916 = vmatprep.subr.mxu0 0.0
      %1917 = vmatpush1.xpose.msra.mxu0 0.0
      %1918 = vmatprep.subr.mxu0 0.0
      %1919 = vmatpush1.xpose.msra.mxu0 0.0
      %1920 = vmatprep.subr.mxu0 0.0
      %1921 = vmatpush1.xpose.msra.mxu0 0.0
      %1922 = vmatprep.subr.mxu0 0.0
      %1923 = vmatpush1.xpose.msra.mxu0 0.0
      %1924 = vmatprep.subr.mxu0 0.0
      %1925 = vmatpush1.xpose.msra.mxu0 0.0
      %1926 = vmatprep.subr.mxu0 0.0
      %1927 = vmatpush1.xpose.msra.mxu0 0.0
      %1928 = vmatprep.subr.mxu0 0.0
      %1929 = vmatpush1.xpose.msra.mxu0 0.0
      %1930 = vmatprep.subr.mxu0 0.0
      %1931 = vmatpush1.xpose.msra.mxu0 0.0
      %1932 = vmatprep.subr.mxu0 0.0
      %1933 = vmatpush1.xpose.msra.mxu0 0.0
      %1934 = vmatprep.subr.mxu0 0.0
      %1935 = vmatpush1.xpose.msra.mxu0 0.0
      %1936 = vmatprep.subr.mxu0 0.0
      %1937 = vmatpush1.xpose.msra.mxu0 0.0
      %1938 = vmatprep.subr.mxu0 0.0
      %1939 = vmatpush1.xpose.msra.mxu0 0.0
      %1940 = vmatprep.subr.mxu0 0.0
      %1941 = vmatpush1.xpose.msra.mxu0 %v1524
      %1942 = vmatprep.subr.mxu0 0.0
      %1943 = vmatpush1.xpose.msra.mxu0 %v1521
      %1944 = vmatprep.subr.mxu0 0.0
      %1945 = vmatpush2.xpose.msra.mxu0 0.0
      %1946 = vmatprep.subr.mxu0 0.0
      %1947 = vmatpush2.xpose.msra.mxu0 0.0
      %1948 = vmatprep.subr.mxu0 0.0
      %1949 = vmatpush2.xpose.msra.mxu0 0.0
      %1950 = vmatprep.subr.mxu0 0.0
      %1951 = vmatpush2.xpose.msra.mxu0 0.0
      %1952 = vmatprep.subr.mxu0 0.0
      %1953 = vmatpush2.xpose.msra.mxu0 0.0
      %1954 = vmatprep.subr.mxu0 0.0
      %1955 = vmatpush2.xpose.msra.mxu0 0.0
      %1956 = vmatprep.subr.mxu0 0.0
      %1957 = vmatpush2.xpose.msra.mxu0 0.0
      %1958 = vmatprep.subr.mxu0 0.0
      %1959 = vmatpush2.xpose.msra.mxu0 0.0
      %1960 = vmatprep.subr.mxu0 0.0
      %1961 = vmatpush2.xpose.msra.mxu0 0.0
      %1962 = vmatprep.subr.mxu0 0.0
      %1963 = vmatpush2.xpose.msra.mxu0 0.0
      %1964 = vmatprep.subr.mxu0 0.0
      %1965 = vmatpush2.xpose.msra.mxu0 0.0
      %1966 = vmatprep.subr.mxu0 0.0
      %1967 = vmatpush2.xpose.msra.mxu0 0.0
      %1968 = vmatprep.subr.mxu0 0.0
      %1969 = vmatpush2.xpose.msra.mxu0 0.0
      %1970 = vmatprep.subr.mxu0 0.0
      %1971 = vmatpush2.xpose.msra.mxu0 0.0
      %1972 = vmatprep.subr.mxu0 0.0
      %1973 = vmatpush2.xpose.msra.mxu0 0.0
      %1974 = vmatprep.subr.mxu0 0.0
      %1975 = vmatpush2.xpose.msra.mxu0 0.0
      %1976 = vmatprep.mubr.f32.mxu0 0.0
      %1977 = vmatmul.mubr.f32.gmra.mxu0 %v1865
      %v1978 = vpop.f32.mrf.mxu0
      %v1979 = vadd.f32 0.0, %v1978
      %v1980 = vpop.f32.mrf.mxu0
      %1981 = vmatprep.mubr.f32.mxu0 0.0
      %1982 = vmatmul.mubr.f32.gmra.mxu0 %v1868
      %v1983 = vpop.f32.mrf.mxu0
      %v1984 = vadd.f32 0.0, %v1983
      %v1985 = vpop.f32.mrf.mxu0
      %1986 = vmatprep.mubr.f32.mxu0 0.0
      %1987 = vmatmul.mubr.f32.gmra.mxu0 %v1871
      %v1988 = vpop.f32.mrf.mxu0
      %v1989 = vadd.f32 0.0, %v1988
      %v1990 = vpop.f32.mrf.mxu0
      %1991 = vmatprep.mubr.f32.mxu0 0.0
      %1992 = vmatmul.mubr.f32.gmra.mxu0 %v1874
      %v1993 = vpop.f32.mrf.mxu0
      %v1994 = vadd.f32 0.0, %v1993
      %v1995 = vpop.f32.mrf.mxu0
      %1996 = vmatprep.mubr.f32.mxu0 0.0
      %1997 = vmatmul.mubr.f32.gmra.mxu0 %v1877
      %v1998 = vpop.f32.mrf.mxu0
      %v1999 = vadd.f32 0.0, %v1998
      %v2000 = vpop.f32.mrf.mxu0
      %2001 = vmatprep.mubr.f32.mxu0 0.0
      %2002 = vmatmul.mubr.f32.gmra.mxu0 %v1880
      %v2003 = vpop.f32.mrf.mxu0
      %v2004 = vadd.f32 0.0, %v2003
      %v2005 = vpop.f32.mrf.mxu0
      %2006 = vmatprep.mubr.f32.mxu0 0.0
      %2007 = vmatmul.mubr.f32.gmra.mxu0 %v1883
      %v2008 = vpop.f32.mrf.mxu0
      %v2009 = vadd.f32 0.0, %v2008
      %v2010 = vpop.f32.mrf.mxu0
      %2011 = vmatprep.mubr.f32.mxu0 0.0
      %2012 = vmatmul.mubr.f32.gmra.mxu0 %v1886
      %v2013 = vpop.f32.mrf.mxu0
      %v2014 = vadd.f32 0.0, %v2013
      %v2015 = vpop.f32.mrf.mxu0
      %2016 = vmatprep.mubr.f32.mxu0 0.0
      %2017 = vmatmul.mubr.f32.gmra.mxu0 %v1889
      %v2018 = vpop.f32.mrf.mxu0
      %v2019 = vadd.f32 0.0, %v2018
      %v2020 = vpop.f32.mrf.mxu0
      %2021 = vmatprep.mubr.f32.mxu0 0.0
      %2022 = vmatmul.mubr.f32.gmra.mxu0 %v1892
      %v2023 = vpop.f32.mrf.mxu0
      %v2024 = vadd.f32 0.0, %v2023
      %v2025 = vpop.f32.mrf.mxu0
      %2026 = vmatprep.mubr.f32.mxu0 0.0
      %2027 = vmatmul.mubr.f32.gmra.mxu0 %v1895
      %v2028 = vpop.f32.mrf.mxu0
      %v2029 = vadd.f32 0.0, %v2028
      %v2030 = vpop.f32.mrf.mxu0
      %2031 = vmatprep.mubr.f32.mxu0 0.0
      %2032 = vmatmul.mubr.f32.gmra.mxu0 %v1898
      %v2033 = vpop.f32.mrf.mxu0
      %v2034 = vadd.f32 0.0, %v2033
      %v2035 = vpop.f32.mrf.mxu0
      %2036 = vmatprep.mubr.f32.mxu0 0.0
      %2037 = vmatmul.mubr.f32.gmra.mxu0 %v1901
      %v2038 = vpop.f32.mrf.mxu0
      %v2039 = vadd.f32 0.0, %v2038
      %v2040 = vpop.f32.mrf.mxu0
      %2041 = vmatprep.mubr.f32.mxu0 0.0
      %2042 = vmatmul.mubr.f32.gmra.mxu0 %v1904
      %v2043 = vpop.f32.mrf.mxu0
      %v2044 = vadd.f32 0.0, %v2043
      %v2045 = vpop.f32.mrf.mxu0
      %2046 = vmatprep.mubr.f32.mxu0 0.0
      %2047 = vmatmul.mubr.f32.gmra.mxu0 %v1907
      %v2048 = vpop.f32.mrf.mxu0
      %v2049 = vadd.f32 0.0, %v2048
      %v2050 = vpop.f32.mrf.mxu0
      %2051 = vmatprep.mubr.f32.mxu0 0.0
      %2052 = vmatmul.mubr.f32.gmra.mxu0 %v1910
      %v2053 = vpop.f32.mrf.mxu0
      %v2054 = vadd.f32 0.0, %v2053
      %v2055 = vpop.f32.mrf.mxu0
      %2056 = vdwg.mxu0
      %v2057 = vmul.f32 %v1394, 0.125
      %v2058 = vmul.f32 %v1399, 0.125
      %v2059 = vmul.f32 %v1404, 0.125
      %v2060 = vmul.f32 %v1409, 0.125
      %v2061 = vmul.f32 %v1414, 0.125
      %v2062 = vmul.f32 %v1419, 0.125
      %v2063 = vmul.f32 %v1424, 0.125
      %v2064 = vmul.f32 %v1429, 0.125
      %v2065 = vmul.f32 %v1434, 0.125
      %v2066 = vmul.f32 %v1439, 0.125
      %v2067 = vmul.f32 %v1444, 0.125
      %v2068 = vmul.f32 %v1449, 0.125
      %v2069 = vmul.f32 %v1454, 0.125
      %v2070 = vmul.f32 %v1459, 0.125
      %v2071 = vmul.f32 %v1464, 0.125
      %v2072 = vmul.f32 %v1469, 0.125
      %v2073 = vmul.f32 %v1593, 0.125
      %v2074 = vmul.f32 %v1598, 0.125
      %v2075 = vmul.f32 %v1603, 0.125
      %v2076 = vmul.f32 %v1608, 0.125
      %v2077 = vmul.f32 %v1613, 0.125
      %v2078 = vmul.f32 %v1618, 0.125
      %v2079 = vmul.f32 %v1623, 0.125
      %v2080 = vmul.f32 %v1628, 0.125
      %v2081 = vmul.f32 %v1633, 0.125
      %v2082 = vmul.f32 %v1638, 0.125
      %v2083 = vmul.f32 %v1643, 0.125
      %v2084 = vmul.f32 %v1648, 0.125
      %v2085 = vmul.f32 %v1653, 0.125
      %v2086 = vmul.f32 %v1658, 0.125
      %v2087 = vmul.f32 %v1663, 0.125
      %v2088 = vmul.f32 %v1668, 0.125
      %v2089 = vmul.f32 %v1786, 0.125
      %v2090 = vmul.f32 %v1791, 0.125
      %v2091 = vmul.f32 %v1796, 0.125
      %v2092 = vmul.f32 %v1801, 0.125
      %v2093 = vmul.f32 %v1806, 0.125
      %v2094 = vmul.f32 %v1811, 0.125
      %v2095 = vmul.f32 %v1816, 0.125
      %v2096 = vmul.f32 %v1821, 0.125
      %v2097 = vmul.f32 %v1826, 0.125
      %v2098 = vmul.f32 %v1831, 0.125
      %v2099 = vmul.f32 %v1836, 0.125
      %v2100 = vmul.f32 %v1841, 0.125
      %v2101 = vmul.f32 %v1846, 0.125
      %v2102 = vmul.f32 %v1851, 0.125
      %v2103 = vmul.f32 %v1856, 0.125
      %v2104 = vmul.f32 %v1861, 0.125
      %v2105 = vmul.f32 %v1979, 0.125
      %v2106 = vmul.f32 %v1984, 0.125
      %v2107 = vmul.f32 %v1989, 0.125
      %v2108 = vmul.f32 %v1994, 0.125
      %v2109 = vmul.f32 %v1999, 0.125
      %v2110 = vmul.f32 %v2004, 0.125
      %v2111 = vmul.f32 %v2009, 0.125
      %v2112 = vmul.f32 %v2014, 0.125
      %v2113 = vmul.f32 %v2019, 0.125
      %v2114 = vmul.f32 %v2024, 0.125
      %v2115 = vmul.f32 %v2029, 0.125
      %v2116 = vmul.f32 %v2034, 0.125
      %v2117 = vmul.f32 %v2039, 0.125
      %v2118 = vmul.f32 %v2044, 0.125
      %v2119 = vmul.f32 %v2049, 0.125
      %v2120 = vmul.f32 %v2054, 0.125
      %vm2121 = vcmask 130048
      %v2122 = vsel %vm2121, %v2057, -inf
      %2123 = vmax.xlane.f32.xlu0 %v2122
      %v2124 = vpop.xlane.xlu0 %2123
      %v2125 = vsel %vm2121, %v2058, -inf
      %2126 = vmax.xlane.f32.xlu0 %v2125
      %v2127 = vpop.xlane.xlu0 %2126
      %v2128 = vsel %vm2121, %v2059, -inf
      %2129 = vmax.xlane.f32.xlu0 %v2128
      %v2130 = vpop.xlane.xlu0 %2129
      %v2131 = vsel %vm2121, %v2060, -inf
      %2132 = vmax.xlane.f32.xlu0 %v2131
      %v2133 = vpop.xlane.xlu0 %2132
      %v2134 = vsel %vm2121, %v2061, -inf
      %2135 = vmax.xlane.f32.xlu0 %v2134
      %v2136 = vpop.xlane.xlu0 %2135
      %v2137 = vsel %vm2121, %v2062, -inf
      %2138 = vmax.xlane.f32.xlu0 %v2137
      %v2139 = vpop.xlane.xlu0 %2138
      %v2140 = vsel %vm2121, %v2063, -inf
      %2141 = vmax.xlane.f32.xlu0 %v2140
      %v2142 = vpop.xlane.xlu0 %2141
      %v2143 = vsel %vm2121, %v2064, -inf
      %2144 = vmax.xlane.f32.xlu0 %v2143
      %v2145 = vpop.xlane.xlu0 %2144
      %v2146 = vsel %vm2121, %v2065, -inf
      %2147 = vmax.xlane.f32.xlu0 %v2146
      %v2148 = vpop.xlane.xlu0 %2147
      %v2149 = vsel %vm2121, %v2066, -inf
      %2150 = vmax.xlane.f32.xlu0 %v2149
      %v2151 = vpop.xlane.xlu0 %2150
      %v2152 = vsel %vm2121, %v2067, -inf
      %2153 = vmax.xlane.f32.xlu0 %v2152
      %v2154 = vpop.xlane.xlu0 %2153
      %v2155 = vsel %vm2121, %v2068, -inf
      %2156 = vmax.xlane.f32.xlu0 %v2155
      %v2157 = vpop.xlane.xlu0 %2156
      %v2158 = vsel %vm2121, %v2069, -inf
      %2159 = vmax.xlane.f32.xlu0 %v2158
      %v2160 = vpop.xlane.xlu0 %2159
      %v2161 = vsel %vm2121, %v2070, -inf
      %2162 = vmax.xlane.f32.xlu0 %v2161
      %v2163 = vpop.xlane.xlu0 %2162
      %v2164 = vsel %vm2121, %v2071, -inf
      %2165 = vmax.xlane.f32.xlu0 %v2164
      %v2166 = vpop.xlane.xlu0 %2165
      %v2167 = vsel %vm2121, %v2072, -inf
      %2168 = vmax.xlane.f32.xlu0 %v2167
      %v2169 = vpop.xlane.xlu0 %2168
      %v2170 = vsel %vm2121, %v2073, -inf
      %2171 = vmax.xlane.f32.xlu0 %v2170
      %v2172 = vpop.xlane.xlu0 %2171
      %v2173 = vsel %vm2121, %v2074, -inf
      %2174 = vmax.xlane.f32.xlu0 %v2173
      %v2175 = vpop.xlane.xlu0 %2174
      %v2176 = vsel %vm2121, %v2075, -inf
      %2177 = vmax.xlane.f32.xlu0 %v2176
      %v2178 = vpop.xlane.xlu0 %2177
      %v2179 = vsel %vm2121, %v2076, -inf
      %2180 = vmax.xlane.f32.xlu0 %v2179
      %v2181 = vpop.xlane.xlu0 %2180
      %v2182 = vsel %vm2121, %v2077, -inf
      %2183 = vmax.xlane.f32.xlu0 %v2182
      %v2184 = vpop.xlane.xlu0 %2183
      %v2185 = vsel %vm2121, %v2078, -inf
      %2186 = vmax.xlane.f32.xlu0 %v2185
      %v2187 = vpop.xlane.xlu0 %2186
      %v2188 = vsel %vm2121, %v2079, -inf
      %2189 = vmax.xlane.f32.xlu0 %v2188
      %v2190 = vpop.xlane.xlu0 %2189
      %v2191 = vsel %vm2121, %v2080, -inf
      %2192 = vmax.xlane.f32.xlu0 %v2191
      %v2193 = vpop.xlane.xlu0 %2192
      %v2194 = vsel %vm2121, %v2081, -inf
      %2195 = vmax.xlane.f32.xlu0 %v2194
      %v2196 = vpop.xlane.xlu0 %2195
      %v2197 = vsel %vm2121, %v2082, -inf
      %2198 = vmax.xlane.f32.xlu0 %v2197
      %v2199 = vpop.xlane.xlu0 %2198
      %v2200 = vsel %vm2121, %v2083, -inf
      %2201 = vmax.xlane.f32.xlu0 %v2200
      %v2202 = vpop.xlane.xlu0 %2201
      %v2203 = vsel %vm2121, %v2084, -inf
      %2204 = vmax.xlane.f32.xlu0 %v2203
      %v2205 = vpop.xlane.xlu0 %2204
      %v2206 = vsel %vm2121, %v2085, -inf
      %2207 = vmax.xlane.f32.xlu0 %v2206
      %v2208 = vpop.xlane.xlu0 %2207
      %v2209 = vsel %vm2121, %v2086, -inf
      %2210 = vmax.xlane.f32.xlu0 %v2209
      %v2211 = vpop.xlane.xlu0 %2210
      %v2212 = vsel %vm2121, %v2087, -inf
      %2213 = vmax.xlane.f32.xlu0 %v2212
      %v2214 = vpop.xlane.xlu0 %2213
      %v2215 = vsel %vm2121, %v2088, -inf
      %2216 = vmax.xlane.f32.xlu0 %v2215
      %v2217 = vpop.xlane.xlu0 %2216
      %v2218 = vsel %vm2121, %v2089, -inf
      %2219 = vmax.xlane.f32.xlu0 %v2218
      %v2220 = vpop.xlane.xlu0 %2219
      %v2221 = vsel %vm2121, %v2090, -inf
      %2222 = vmax.xlane.f32.xlu0 %v2221
      %v2223 = vpop.xlane.xlu0 %2222
      %v2224 = vsel %vm2121, %v2091, -inf
      %2225 = vmax.xlane.f32.xlu0 %v2224
      %v2226 = vpop.xlane.xlu0 %2225
      %v2227 = vsel %vm2121, %v2092, -inf
      %2228 = vmax.xlane.f32.xlu0 %v2227
      %v2229 = vpop.xlane.xlu0 %2228
      %v2230 = vsel %vm2121, %v2093, -inf
      %2231 = vmax.xlane.f32.xlu0 %v2230
      %v2232 = vpop.xlane.xlu0 %2231
      %v2233 = vsel %vm2121, %v2094, -inf
      %2234 = vmax.xlane.f32.xlu0 %v2233
      %v2235 = vpop.xlane.xlu0 %2234
      %v2236 = vsel %vm2121, %v2095, -inf
      %2237 = vmax.xlane.f32.xlu0 %v2236
      %v2238 = vpop.xlane.xlu0 %2237
      %v2239 = vsel %vm2121, %v2096, -inf
      %2240 = vmax.xlane.f32.xlu0 %v2239
      %v2241 = vpop.xlane.xlu0 %2240
      %v2242 = vsel %vm2121, %v2097, -inf
      %2243 = vmax.xlane.f32.xlu0 %v2242
      %v2244 = vpop.xlane.xlu0 %2243
      %v2245 = vsel %vm2121, %v2098, -inf
      %2246 = vmax.xlane.f32.xlu0 %v2245
      %v2247 = vpop.xlane.xlu0 %2246
      %v2248 = vsel %vm2121, %v2099, -inf
      %2249 = vmax.xlane.f32.xlu0 %v2248
      %v2250 = vpop.xlane.xlu0 %2249
      %v2251 = vsel %vm2121, %v2100, -inf
      %2252 = vmax.xlane.f32.xlu0 %v2251
      %v2253 = vpop.xlane.xlu0 %2252
      %v2254 = vsel %vm2121, %v2101, -inf
      %2255 = vmax.xlane.f32.xlu0 %v2254
      %v2256 = vpop.xlane.xlu0 %2255
      %v2257 = vsel %vm2121, %v2102, -inf
      %2258 = vmax.xlane.f32.xlu0 %v2257
      %v2259 = vpop.xlane.xlu0 %2258
      %v2260 = vsel %vm2121, %v2103, -inf
      %2261 = vmax.xlane.f32.xlu0 %v2260
      %v2262 = vpop.xlane.xlu0 %2261
      %v2263 = vsel %vm2121, %v2104, -inf
      %2264 = vmax.xlane.f32.xlu0 %v2263
      %v2265 = vpop.xlane.xlu0 %2264
      %v2266 = vsel %vm2121, %v2105, -inf
      %2267 = vmax.xlane.f32.xlu0 %v2266
      %v2268 = vpop.xlane.xlu0 %2267
      %v2269 = vsel %vm2121, %v2106, -inf
      %2270 = vmax.xlane.f32.xlu0 %v2269
      %v2271 = vpop.xlane.xlu0 %2270
      %v2272 = vsel %vm2121, %v2107, -inf
      %2273 = vmax.xlane.f32.xlu0 %v2272
      %v2274 = vpop.xlane.xlu0 %2273
      %v2275 = vsel %vm2121, %v2108, -inf
      %2276 = vmax.xlane.f32.xlu0 %v2275
      %v2277 = vpop.xlane.xlu0 %2276
      %v2278 = vsel %vm2121, %v2109, -inf
      %2279 = vmax.xlane.f32.xlu0 %v2278
      %v2280 = vpop.xlane.xlu0 %2279
      %v2281 = vsel %vm2121, %v2110, -inf
      %2282 = vmax.xlane.f32.xlu0 %v2281
      %v2283 = vpop.xlane.xlu0 %2282
      %v2284 = vsel %vm2121, %v2111, -inf
      %2285 = vmax.xlane.f32.xlu0 %v2284
      %v2286 = vpop.xlane.xlu0 %2285
      %v2287 = vsel %vm2121, %v2112, -inf
      %2288 = vmax.xlane.f32.xlu0 %v2287
      %v2289 = vpop.xlane.xlu0 %2288
      %v2290 = vsel %vm2121, %v2113, -inf
      %2291 = vmax.xlane.f32.xlu0 %v2290
      %v2292 = vpop.xlane.xlu0 %2291
      %v2293 = vsel %vm2121, %v2114, -inf
      %2294 = vmax.xlane.f32.xlu0 %v2293
      %v2295 = vpop.xlane.xlu0 %2294
      %v2296 = vsel %vm2121, %v2115, -inf
      %2297 = vmax.xlane.f32.xlu0 %v2296
      %v2298 = vpop.xlane.xlu0 %2297
      %v2299 = vsel %vm2121, %v2116, -inf
      %2300 = vmax.xlane.f32.xlu0 %v2299
      %v2301 = vpop.xlane.xlu0 %2300
      %v2302 = vsel %vm2121, %v2117, -inf
      %2303 = vmax.xlane.f32.xlu0 %v2302
      %v2304 = vpop.xlane.xlu0 %2303
      %v2305 = vsel %vm2121, %v2118, -inf
      %2306 = vmax.xlane.f32.xlu0 %v2305
      %v2307 = vpop.xlane.xlu0 %2306
      %v2308 = vsel %vm2121, %v2119, -inf
      %2309 = vmax.xlane.f32.xlu0 %v2308
      %v2310 = vpop.xlane.xlu0 %2309
      %v2311 = vsel %vm2121, %v2120, -inf
      %2312 = vmax.xlane.f32.xlu0 %v2311
      %v2313 = vpop.xlane.xlu0 %2312
      %v2314 = vsub.f32 %v2057, %v2124
      %v2315 = vsub.f32 %v2058, %v2127
      %v2316 = vsub.f32 %v2059, %v2130
      %v2317 = vsub.f32 %v2060, %v2133
      %v2318 = vsub.f32 %v2061, %v2136
      %v2319 = vsub.f32 %v2062, %v2139
      %v2320 = vsub.f32 %v2063, %v2142
      %v2321 = vsub.f32 %v2064, %v2145
      %v2322 = vsub.f32 %v2065, %v2148
      %v2323 = vsub.f32 %v2066, %v2151
      %v2324 = vsub.f32 %v2067, %v2154
      %v2325 = vsub.f32 %v2068, %v2157
      %v2326 = vsub.f32 %v2069, %v2160
      %v2327 = vsub.f32 %v2070, %v2163
      %v2328 = vsub.f32 %v2071, %v2166
      %v2329 = vsub.f32 %v2072, %v2169
      %v2330 = vsub.f32 %v2073, %v2172
      %v2331 = vsub.f32 %v2074, %v2175
      %v2332 = vsub.f32 %v2075, %v2178
      %v2333 = vsub.f32 %v2076, %v2181
      %v2334 = vsub.f32 %v2077, %v2184
      %v2335 = vsub.f32 %v2078, %v2187
      %v2336 = vsub.f32 %v2079, %v2190
      %v2337 = vsub.f32 %v2080, %v2193
      %v2338 = vsub.f32 %v2081, %v2196
      %v2339 = vsub.f32 %v2082, %v2199
      %v2340 = vsub.f32 %v2083, %v2202
      %v2341 = vsub.f32 %v2084, %v2205
      %v2342 = vsub.f32 %v2085, %v2208
      %v2343 = vsub.f32 %v2086, %v2211
      %v2344 = vsub.f32 %v2087, %v2214
      %v2345 = vsub.f32 %v2088, %v2217
      %v2346 = vsub.f32 %v2089, %v2220
      %v2347 = vsub.f32 %v2090, %v2223
      %v2348 = vsub.f32 %v2091, %v2226
      %v2349 = vsub.f32 %v2092, %v2229
      %v2350 = vsub.f32 %v2093, %v2232
      %v2351 = vsub.f32 %v2094, %v2235
      %v2352 = vsub.f32 %v2095, %v2238
      %v2353 = vsub.f32 %v2096, %v2241
      %v2354 = vsub.f32 %v2097, %v2244
      %v2355 = vsub.f32 %v2098, %v2247
      %v2356 = vsub.f32 %v2099, %v2250
      %v2357 = vsub.f32 %v2100, %v2253
      %v2358 = vsub.f32 %v2101, %v2256
      %v2359 = vsub.f32 %v2102, %v2259
      %v2360 = vsub.f32 %v2103, %v2262
      %v2361 = vsub.f32 %v2104, %v2265
      %v2362 = vsub.f32 %v2105, %v2268
      %v2363 = vsub.f32 %v2106, %v2271
      %v2364 = vsub.f32 %v2107, %v2274
      %v2365 = vsub.f32 %v2108, %v2277
      %v2366 = vsub.f32 %v2109, %v2280
      %v2367 = vsub.f32 %v2110, %v2283
      %v2368 = vsub.f32 %v2111, %v2286
      %v2369 = vsub.f32 %v2112, %v2289
      %v2370 = vsub.f32 %v2113, %v2292
      %v2371 = vsub.f32 %v2114, %v2295
      %v2372 = vsub.f32 %v2115, %v2298
      %v2373 = vsub.f32 %v2116, %v2301
      %v2374 = vsub.f32 %v2117, %v2304
      %v2375 = vsub.f32 %v2118, %v2307
      %v2376 = vsub.f32 %v2119, %v2310
      %v2377 = vsub.f32 %v2120, %v2313
      %v2378 = vmul.f32 %v2314, 1.442695
      %v2379 = vpow.pop %v2378
      %v2380 = vmul.f32 %v2315, 1.442695
      %v2381 = vpow.pop %v2380
      %v2382 = vmul.f32 %v2316, 1.442695
      %v2383 = vpow.pop %v2382
      %v2384 = vmul.f32 %v2317, 1.442695
      %v2385 = vpow.pop %v2384
      %v2386 = vmul.f32 %v2318, 1.442695
      %v2387 = vpow.pop %v2386
      %v2388 = vmul.f32 %v2319, 1.442695
      %v2389 = vpow.pop %v2388
      %v2390 = vmul.f32 %v2320, 1.442695
      %v2391 = vpow.pop %v2390
      %v2392 = vmul.f32 %v2321, 1.442695
      %v2393 = vpow.pop %v2392
      %v2394 = vmul.f32 %v2322, 1.442695
      %v2395 = vpow.pop %v2394
      %v2396 = vmul.f32 %v2323, 1.442695
      %v2397 = vpow.pop %v2396
      %v2398 = vmul.f32 %v2324, 1.442695
      %v2399 = vpow.pop %v2398
      %v2400 = vmul.f32 %v2325, 1.442695
      %v2401 = vpow.pop %v2400
      %v2402 = vmul.f32 %v2326, 1.442695
      %v2403 = vpow.pop %v2402
      %v2404 = vmul.f32 %v2327, 1.442695
      %v2405 = vpow.pop %v2404
      %v2406 = vmul.f32 %v2328, 1.442695
      %v2407 = vpow.pop %v2406
      %v2408 = vmul.f32 %v2329, 1.442695
      %v2409 = vpow.pop %v2408
      %v2410 = vmul.f32 %v2330, 1.442695
      %v2411 = vpow.pop %v2410
      %v2412 = vmul.f32 %v2331, 1.442695
      %v2413 = vpow.pop %v2412
      %v2414 = vmul.f32 %v2332, 1.442695
      %v2415 = vpow.pop %v2414
      %v2416 = vmul.f32 %v2333, 1.442695
      %v2417 = vpow.pop %v2416
      %v2418 = vmul.f32 %v2334, 1.442695
      %v2419 = vpow.pop %v2418
      %v2420 = vmul.f32 %v2335, 1.442695
      %v2421 = vpow.pop %v2420
      %v2422 = vmul.f32 %v2336, 1.442695
      %v2423 = vpow.pop %v2422
      %v2424 = vmul.f32 %v2337, 1.442695
      %v2425 = vpow.pop %v2424
      %v2426 = vmul.f32 %v2338, 1.442695
      %v2427 = vpow.pop %v2426
      %v2428 = vmul.f32 %v2339, 1.442695
      %v2429 = vpow.pop %v2428
      %v2430 = vmul.f32 %v2340, 1.442695
      %v2431 = vpow.pop %v2430
      %v2432 = vmul.f32 %v2341, 1.442695
      %v2433 = vpow.pop %v2432
      %v2434 = vmul.f32 %v2342, 1.442695
      %v2435 = vpow.pop %v2434
      %v2436 = vmul.f32 %v2343, 1.442695
      %v2437 = vpow.pop %v2436
      %v2438 = vmul.f32 %v2344, 1.442695
      %v2439 = vpow.pop %v2438
      %v2440 = vmul.f32 %v2345, 1.442695
      %v2441 = vpow.pop %v2440
      %v2442 = vmul.f32 %v2346, 1.442695
      %v2443 = vpow.pop %v2442
      %v2444 = vmul.f32 %v2347, 1.442695
      %v2445 = vpow.pop %v2444
      %v2446 = vmul.f32 %v2348, 1.442695
      %v2447 = vpow.pop %v2446
      %v2448 = vmul.f32 %v2349, 1.442695
      %v2449 = vpow.pop %v2448
      %v2450 = vmul.f32 %v2350, 1.442695
      %v2451 = vpow.pop %v2450
      %v2452 = vmul.f32 %v2351, 1.442695
      %v2453 = vpow.pop %v2452
      %v2454 = vmul.f32 %v2352, 1.442695
      %v2455 = vpow.pop %v2454
      %v2456 = vmul.f32 %v2353, 1.442695
      %v2457 = vpow.pop %v2456
      %v2458 = vmul.f32 %v2354, 1.442695
      %v2459 = vpow.pop %v2458
      %v2460 = vmul.f32 %v2355, 1.442695
      %v2461 = vpow.pop %v2460
      %v2462 = vmul.f32 %v2356, 1.442695
      %v2463 = vpow.pop %v2462
      %v2464 = vmul.f32 %v2357, 1.442695
      %v2465 = vpow.pop %v2464
      %v2466 = vmul.f32 %v2358, 1.442695
      %v2467 = vpow.pop %v2466
      %v2468 = vmul.f32 %v2359, 1.442695
      %v2469 = vpow.pop %v2468
      %v2470 = vmul.f32 %v2360, 1.442695
      %v2471 = vpow.pop %v2470
      %v2472 = vmul.f32 %v2361, 1.442695
      %v2473 = vpow.pop %v2472
      %v2474 = vmul.f32 %v2362, 1.442695
      %v2475 = vpow.pop %v2474
      %v2476 = vmul.f32 %v2363, 1.442695
      %v2477 = vpow.pop %v2476
      %v2478 = vmul.f32 %v2364, 1.442695
      %v2479 = vpow.pop %v2478
      %v2480 = vmul.f32 %v2365, 1.442695
      %v2481 = vpow.pop %v2480
      %v2482 = vmul.f32 %v2366, 1.442695
      %v2483 = vpow.pop %v2482
      %v2484 = vmul.f32 %v2367, 1.442695
      %v2485 = vpow.pop %v2484
      %v2486 = vmul.f32 %v2368, 1.442695
      %v2487 = vpow.pop %v2486
      %v2488 = vmul.f32 %v2369, 1.442695
      %v2489 = vpow.pop %v2488
      %v2490 = vmul.f32 %v2370, 1.442695
      %v2491 = vpow.pop %v2490
      %v2492 = vmul.f32 %v2371, 1.442695
      %v2493 = vpow.pop %v2492
      %v2494 = vmul.f32 %v2372, 1.442695
      %v2495 = vpow.pop %v2494
      %v2496 = vmul.f32 %v2373, 1.442695
      %v2497 = vpow.pop %v2496
      %v2498 = vmul.f32 %v2374, 1.442695
      %v2499 = vpow.pop %v2498
      %v2500 = vmul.f32 %v2375, 1.442695
      %v2501 = vpow.pop %v2500
      %v2502 = vmul.f32 %v2376, 1.442695
      %v2503 = vpow.pop %v2502
      %v2504 = vmul.f32 %v2377, 1.442695
      %v2505 = vpow.pop %v2504
      %v2506 = vsel %vm2121, %v2379, 0.0
      %2507 = vadd.xlane.f32.xlu0 %v2506
      %v2508 = vpop.xlane.xlu0 %2507
      %v2509 = vsel %vm2121, %v2381, 0.0
      %2510 = vadd.xlane.f32.xlu0 %v2509
      %v2511 = vpop.xlane.xlu0 %2510
      %v2512 = vsel %vm2121, %v2383, 0.0
      %2513 = vadd.xlane.f32.xlu0 %v2512
      %v2514 = vpop.xlane.xlu0 %2513
      %v2515 = vsel %vm2121, %v2385, 0.0
      %2516 = vadd.xlane.f32.xlu0 %v2515
      %v2517 = vpop.xlane.xlu0 %2516
      %v2518 = vsel %vm2121, %v2387, 0.0
      %2519 = vadd.xlane.f32.xlu0 %v2518
      %v2520 = vpop.xlane.xlu0 %2519
      %v2521 = vsel %vm2121, %v2389, 0.0
      %2522 = vadd.xlane.f32.xlu0 %v2521
      %v2523 = vpop.xlane.xlu0 %2522
      %v2524 = vsel %vm2121, %v2391, 0.0
      %2525 = vadd.xlane.f32.xlu0 %v2524
      %v2526 = vpop.xlane.xlu0 %2525
      %v2527 = vsel %vm2121, %v2393, 0.0
      %2528 = vadd.xlane.f32.xlu0 %v2527
      %v2529 = vpop.xlane.xlu0 %2528
      %v2530 = vsel %vm2121, %v2395, 0.0
      %2531 = vadd.xlane.f32.xlu0 %v2530
      %v2532 = vpop.xlane.xlu0 %2531
      %v2533 = vsel %vm2121, %v2397, 0.0
      %2534 = vadd.xlane.f32.xlu0 %v2533
      %v2535 = vpop.xlane.xlu0 %2534
      %v2536 = vsel %vm2121, %v2399, 0.0
      %2537 = vadd.xlane.f32.xlu0 %v2536
      %v2538 = vpop.xlane.xlu0 %2537
      %v2539 = vsel %vm2121, %v2401, 0.0
      %2540 = vadd.xlane.f32.xlu0 %v2539
      %v2541 = vpop.xlane.xlu0 %2540
      %v2542 = vsel %vm2121, %v2403, 0.0
      %2543 = vadd.xlane.f32.xlu0 %v2542
      %v2544 = vpop.xlane.xlu0 %2543
      %v2545 = vsel %vm2121, %v2405, 0.0
      %2546 = vadd.xlane.f32.xlu0 %v2545
      %v2547 = vpop.xlane.xlu0 %2546
      %v2548 = vsel %vm2121, %v2407, 0.0
      %2549 = vadd.xlane.f32.xlu0 %v2548
      %v2550 = vpop.xlane.xlu0 %2549
      %v2551 = vsel %vm2121, %v2409, 0.0
      %2552 = vadd.xlane.f32.xlu0 %v2551
      %v2553 = vpop.xlane.xlu0 %2552
      %v2554 = vsel %vm2121, %v2411, 0.0
      %2555 = vadd.xlane.f32.xlu0 %v2554
      %v2556 = vpop.xlane.xlu0 %2555
      %v2557 = vsel %vm2121, %v2413, 0.0
      %2558 = vadd.xlane.f32.xlu0 %v2557
      %v2559 = vpop.xlane.xlu0 %2558
      %v2560 = vsel %vm2121, %v2415, 0.0
      %2561 = vadd.xlane.f32.xlu0 %v2560
      %v2562 = vpop.xlane.xlu0 %2561
      %v2563 = vsel %vm2121, %v2417, 0.0
      %2564 = vadd.xlane.f32.xlu0 %v2563
      %v2565 = vpop.xlane.xlu0 %2564
      %v2566 = vsel %vm2121, %v2419, 0.0
      %2567 = vadd.xlane.f32.xlu0 %v2566
      %v2568 = vpop.xlane.xlu0 %2567
      %v2569 = vsel %vm2121, %v2421, 0.0
      %2570 = vadd.xlane.f32.xlu0 %v2569
      %v2571 = vpop.xlane.xlu0 %2570
      %v2572 = vsel %vm2121, %v2423, 0.0
      %2573 = vadd.xlane.f32.xlu0 %v2572
      %v2574 = vpop.xlane.xlu0 %2573
      %v2575 = vsel %vm2121, %v2425, 0.0
      %2576 = vadd.xlane.f32.xlu0 %v2575
      %v2577 = vpop.xlane.xlu0 %2576
      %v2578 = vsel %vm2121, %v2427, 0.0
      %2579 = vadd.xlane.f32.xlu0 %v2578
      %v2580 = vpop.xlane.xlu0 %2579
      %v2581 = vsel %vm2121, %v2429, 0.0
      %2582 = vadd.xlane.f32.xlu0 %v2581
      %v2583 = vpop.xlane.xlu0 %2582
      %v2584 = vsel %vm2121, %v2431, 0.0
      %2585 = vadd.xlane.f32.xlu0 %v2584
      %v2586 = vpop.xlane.xlu0 %2585
      %v2587 = vsel %vm2121, %v2433, 0.0
      %2588 = vadd.xlane.f32.xlu0 %v2587
      %v2589 = vpop.xlane.xlu0 %2588
      %v2590 = vsel %vm2121, %v2435, 0.0
      %2591 = vadd.xlane.f32.xlu0 %v2590
      %v2592 = vpop.xlane.xlu0 %2591
      %v2593 = vsel %vm2121, %v2437, 0.0
      %2594 = vadd.xlane.f32.xlu0 %v2593
      %v2595 = vpop.xlane.xlu0 %2594
      %v2596 = vsel %vm2121, %v2439, 0.0
      %2597 = vadd.xlane.f32.xlu0 %v2596
      %v2598 = vpop.xlane.xlu0 %2597
      %v2599 = vsel %vm2121, %v2441, 0.0
      %2600 = vadd.xlane.f32.xlu0 %v2599
      %v2601 = vpop.xlane.xlu0 %2600
      %v2602 = vsel %vm2121, %v2443, 0.0
      %2603 = vadd.xlane.f32.xlu0 %v2602
      %v2604 = vpop.xlane.xlu0 %2603
      %v2605 = vsel %vm2121, %v2445, 0.0
      %2606 = vadd.xlane.f32.xlu0 %v2605
      %v2607 = vpop.xlane.xlu0 %2606
      %v2608 = vsel %vm2121, %v2447, 0.0
      %2609 = vadd.xlane.f32.xlu0 %v2608
      %v2610 = vpop.xlane.xlu0 %2609
      %v2611 = vsel %vm2121, %v2449, 0.0
      %2612 = vadd.xlane.f32.xlu0 %v2611
      %v2613 = vpop.xlane.xlu0 %2612
      %v2614 = vsel %vm2121, %v2451, 0.0
      %2615 = vadd.xlane.f32.xlu0 %v2614
      %v2616 = vpop.xlane.xlu0 %2615
      %v2617 = vsel %vm2121, %v2453, 0.0
      %2618 = vadd.xlane.f32.xlu0 %v2617
      %v2619 = vpop.xlane.xlu0 %2618
      %v2620 = vsel %vm2121, %v2455, 0.0
      %2621 = vadd.xlane.f32.xlu0 %v2620
      %v2622 = vpop.xlane.xlu0 %2621
      %v2623 = vsel %vm2121, %v2457, 0.0
      %2624 = vadd.xlane.f32.xlu0 %v2623
      %v2625 = vpop.xlane.xlu0 %2624
      %v2626 = vsel %vm2121, %v2459, 0.0
      %2627 = vadd.xlane.f32.xlu0 %v2626
      %v2628 = vpop.xlane.xlu0 %2627
      %v2629 = vsel %vm2121, %v2461, 0.0
      %2630 = vadd.xlane.f32.xlu0 %v2629
      %v2631 = vpop.xlane.xlu0 %2630
      %v2632 = vsel %vm2121, %v2463, 0.0
      %2633 = vadd.xlane.f32.xlu0 %v2632
      %v2634 = vpop.xlane.xlu0 %2633
      %v2635 = vsel %vm2121, %v2465, 0.0
      %2636 = vadd.xlane.f32.xlu0 %v2635
      %v2637 = vpop.xlane.xlu0 %2636
      %v2638 = vsel %vm2121, %v2467, 0.0
      %2639 = vadd.xlane.f32.xlu0 %v2638
      %v2640 = vpop.xlane.xlu0 %2639
      %v2641 = vsel %vm2121, %v2469, 0.0
      %2642 = vadd.xlane.f32.xlu0 %v2641
      %v2643 = vpop.xlane.xlu0 %2642
      %v2644 = vsel %vm2121, %v2471, 0.0
      %2645 = vadd.xlane.f32.xlu0 %v2644
      %v2646 = vpop.xlane.xlu0 %2645
      %v2647 = vsel %vm2121, %v2473, 0.0
      %2648 = vadd.xlane.f32.xlu0 %v2647
      %v2649 = vpop.xlane.xlu0 %2648
      %v2650 = vsel %vm2121, %v2475, 0.0
      %2651 = vadd.xlane.f32.xlu0 %v2650
      %v2652 = vpop.xlane.xlu0 %2651
      %v2653 = vsel %vm2121, %v2477, 0.0
      %2654 = vadd.xlane.f32.xlu0 %v2653
      %v2655 = vpop.xlane.xlu0 %2654
      %v2656 = vsel %vm2121, %v2479, 0.0
      %2657 = vadd.xlane.f32.xlu0 %v2656
      %v2658 = vpop.xlane.xlu0 %2657
      %v2659 = vsel %vm2121, %v2481, 0.0
      %2660 = vadd.xlane.f32.xlu0 %v2659
      %v2661 = vpop.xlane.xlu0 %2660
      %v2662 = vsel %vm2121, %v2483, 0.0
      %2663 = vadd.xlane.f32.xlu0 %v2662
      %v2664 = vpop.xlane.xlu0 %2663
      %v2665 = vsel %vm2121, %v2485, 0.0
      %2666 = vadd.xlane.f32.xlu0 %v2665
      %v2667 = vpop.xlane.xlu0 %2666
      %v2668 = vsel %vm2121, %v2487, 0.0
      %2669 = vadd.xlane.f32.xlu0 %v2668
      %v2670 = vpop.xlane.xlu0 %2669
      %v2671 = vsel %vm2121, %v2489, 0.0
      %2672 = vadd.xlane.f32.xlu0 %v2671
      %v2673 = vpop.xlane.xlu0 %2672
      %v2674 = vsel %vm2121, %v2491, 0.0
      %2675 = vadd.xlane.f32.xlu0 %v2674
      %v2676 = vpop.xlane.xlu0 %2675
      %v2677 = vsel %vm2121, %v2493, 0.0
      %2678 = vadd.xlane.f32.xlu0 %v2677
      %v2679 = vpop.xlane.xlu0 %2678
      %v2680 = vsel %vm2121, %v2495, 0.0
      %2681 = vadd.xlane.f32.xlu0 %v2680
      %v2682 = vpop.xlane.xlu0 %2681
      %v2683 = vsel %vm2121, %v2497, 0.0
      %2684 = vadd.xlane.f32.xlu0 %v2683
      %v2685 = vpop.xlane.xlu0 %2684
      %v2686 = vsel %vm2121, %v2499, 0.0
      %2687 = vadd.xlane.f32.xlu0 %v2686
      %v2688 = vpop.xlane.xlu0 %2687
      %v2689 = vsel %vm2121, %v2501, 0.0
      %2690 = vadd.xlane.f32.xlu0 %v2689
      %v2691 = vpop.xlane.xlu0 %2690
      %v2692 = vsel %vm2121, %v2503, 0.0
      %2693 = vadd.xlane.f32.xlu0 %v2692
      %v2694 = vpop.xlane.xlu0 %2693
      %v2695 = vsel %vm2121, %v2505, 0.0
      %2696 = vadd.xlane.f32.xlu0 %v2695
      %v2697 = vpop.xlane.xlu0 %2696
      %v2698 = vrcp.pop %v2508
      %v2699 = vmul.f32 %v2379, %v2698
      %v2700 = vrcp.pop %v2511
      %v2701 = vmul.f32 %v2381, %v2700
      %v2702 = vrcp.pop %v2514
      %v2703 = vmul.f32 %v2383, %v2702
      %v2704 = vrcp.pop %v2517
      %v2705 = vmul.f32 %v2385, %v2704
      %v2706 = vrcp.pop %v2520
      %v2707 = vmul.f32 %v2387, %v2706
      %v2708 = vrcp.pop %v2523
      %v2709 = vmul.f32 %v2389, %v2708
      %v2710 = vrcp.pop %v2526
      %v2711 = vmul.f32 %v2391, %v2710
      %v2712 = vrcp.pop %v2529
      %v2713 = vmul.f32 %v2393, %v2712
      %v2714 = vrcp.pop %v2532
      %v2715 = vmul.f32 %v2395, %v2714
      %v2716 = vrcp.pop %v2535
      %v2717 = vmul.f32 %v2397, %v2716
      %v2718 = vrcp.pop %v2538
      %v2719 = vmul.f32 %v2399, %v2718
      %v2720 = vrcp.pop %v2541
      %v2721 = vmul.f32 %v2401, %v2720
      %v2722 = vrcp.pop %v2544
      %v2723 = vmul.f32 %v2403, %v2722
      %v2724 = vrcp.pop %v2547
      %v2725 = vmul.f32 %v2405, %v2724
      %v2726 = vrcp.pop %v2550
      %v2727 = vmul.f32 %v2407, %v2726
      %v2728 = vrcp.pop %v2553
      %v2729 = vmul.f32 %v2409, %v2728
      %v2730 = vrcp.pop %v2556
      %v2731 = vmul.f32 %v2411, %v2730
      %v2732 = vrcp.pop %v2559
      %v2733 = vmul.f32 %v2413, %v2732
      %v2734 = vrcp.pop %v2562
      %v2735 = vmul.f32 %v2415, %v2734
      %v2736 = vrcp.pop %v2565
      %v2737 = vmul.f32 %v2417, %v2736
      %v2738 = vrcp.pop %v2568
      %v2739 = vmul.f32 %v2419, %v2738
      %v2740 = vrcp.pop %v2571
      %v2741 = vmul.f32 %v2421, %v2740
      %v2742 = vrcp.pop %v2574
      %v2743 = vmul.f32 %v2423, %v2742
      %v2744 = vrcp.pop %v2577
      %v2745 = vmul.f32 %v2425, %v2744
      %v2746 = vrcp.pop %v2580
      %v2747 = vmul.f32 %v2427, %v2746
      %v2748 = vrcp.pop %v2583
      %v2749 = vmul.f32 %v2429, %v2748
      %v2750 = vrcp.pop %v2586
      %v2751 = vmul.f32 %v2431, %v2750
      %v2752 = vrcp.pop %v2589
      %v2753 = vmul.f32 %v2433, %v2752
      %v2754 = vrcp.pop %v2592
      %v2755 = vmul.f32 %v2435, %v2754
      %v2756 = vrcp.pop %v2595
      %v2757 = vmul.f32 %v2437, %v2756
      %v2758 = vrcp.pop %v2598
      %v2759 = vmul.f32 %v2439, %v2758
      %v2760 = vrcp.pop %v2601
      %v2761 = vmul.f32 %v2441, %v2760
      %v2762 = vrcp.pop %v2604
      %v2763 = vmul.f32 %v2443, %v2762
      %v2764 = vrcp.pop %v2607
      %v2765 = vmul.f32 %v2445, %v2764
      %v2766 = vrcp.pop %v2610
      %v2767 = vmul.f32 %v2447, %v2766
      %v2768 = vrcp.pop %v2613
      %v2769 = vmul.f32 %v2449, %v2768
      %v2770 = vrcp.pop %v2616
      %v2771 = vmul.f32 %v2451, %v2770
      %v2772 = vrcp.pop %v2619
      %v2773 = vmul.f32 %v2453, %v2772
      %v2774 = vrcp.pop %v2622
      %v2775 = vmul.f32 %v2455, %v2774
      %v2776 = vrcp.pop %v2625
      %v2777 = vmul.f32 %v2457, %v2776
      %v2778 = vrcp.pop %v2628
      %v2779 = vmul.f32 %v2459, %v2778
      %v2780 = vrcp.pop %v2631
      %v2781 = vmul.f32 %v2461, %v2780
      %v2782 = vrcp.pop %v2634
      %v2783 = vmul.f32 %v2463, %v2782
      %v2784 = vrcp.pop %v2637
      %v2785 = vmul.f32 %v2465, %v2784
      %v2786 = vrcp.pop %v2640
      %v2787 = vmul.f32 %v2467, %v2786
      %v2788 = vrcp.pop %v2643
      %v2789 = vmul.f32 %v2469, %v2788
      %v2790 = vrcp.pop %v2646
      %v2791 = vmul.f32 %v2471, %v2790
      %v2792 = vrcp.pop %v2649
      %v2793 = vmul.f32 %v2473, %v2792
      %v2794 = vrcp.pop %v2652
      %v2795 = vmul.f32 %v2475, %v2794
      %v2796 = vrcp.pop %v2655
      %v2797 = vmul.f32 %v2477, %v2796
      %v2798 = vrcp.pop %v2658
      %v2799 = vmul.f32 %v2479, %v2798
      %v2800 = vrcp.pop %v2661
      %v2801 = vmul.f32 %v2481, %v2800
      %v2802 = vrcp.pop %v2664
      %v2803 = vmul.f32 %v2483, %v2802
      %v2804 = vrcp.pop %v2667
      %v2805 = vmul.f32 %v2485, %v2804
      %v2806 = vrcp.pop %v2670
      %v2807 = vmul.f32 %v2487, %v2806
      %v2808 = vrcp.pop %v2673
      %v2809 = vmul.f32 %v2489, %v2808
      %v2810 = vrcp.pop %v2676
      %v2811 = vmul.f32 %v2491, %v2810
      %v2812 = vrcp.pop %v2679
      %v2813 = vmul.f32 %v2493, %v2812
      %v2814 = vrcp.pop %v2682
      %v2815 = vmul.f32 %v2495, %v2814
      %v2816 = vrcp.pop %v2685
      %v2817 = vmul.f32 %v2497, %v2816
      %v2818 = vrcp.pop %v2688
      %v2819 = vmul.f32 %v2499, %v2818
      %v2820 = vrcp.pop %v2691
      %v2821 = vmul.f32 %v2501, %v2820
      %v2822 = vrcp.pop %v2694
      %v2823 = vmul.f32 %v2503, %v2822
      %v2824 = vrcp.pop %v2697
      %v2825 = vmul.f32 %v2505, %v2824
      %v2827 = vsel %vm2121, %v2699, 0
      %v2830 = vsel %vm2121, %v2701, 0
      %v2833 = vsel %vm2121, %v2703, 0
      %v2836 = vsel %vm2121, %v2705, 0
      %v2839 = vsel %vm2121, %v2707, 0
      %v2842 = vsel %vm2121, %v2709, 0
      %v2845 = vsel %vm2121, %v2711, 0
      %v2848 = vsel %vm2121, %v2713, 0
      %v2851 = vsel %vm2121, %v2715, 0
      %v2854 = vsel %vm2121, %v2717, 0
      %v2857 = vsel %vm2121, %v2719, 0
      %v2860 = vsel %vm2121, %v2721, 0
      %v2863 = vsel %vm2121, %v2723, 0
      %v2866 = vsel %vm2121, %v2725, 0
      %v2869 = vsel %vm2121, %v2727, 0
      %v2872 = vsel %vm2121, %v2729, 0
      %2874 = vmatprep.subr.mxu0 0.0
      %2875 = vmatpush1.msra.mxu0 0.0
      %2876 = vmatprep.subr.mxu0 0.0
      %2877 = vmatpush1.msra.mxu0 0.0
      %2878 = vmatprep.subr.mxu0 0.0
      %2879 = vmatpush1.msra.mxu0 0.0
      %2880 = vmatprep.subr.mxu0 0.0
      %2881 = vmatpush1.msra.mxu0 0.0
      %2882 = vmatprep.subr.mxu0 0.0
      %2883 = vmatpush1.msra.mxu0 0.0
      %2884 = vmatprep.subr.mxu0 0.0
      %2885 = vmatpush1.msra.mxu0 0.0
      %2886 = vmatprep.subr.mxu0 0.0
      %2887 = vmatpush1.msra.mxu0 0.0
      %2888 = vmatprep.subr.mxu0 0.0
      %2889 = vmatpush1.msra.mxu0 0.0
      %2890 = vmatprep.subr.mxu0 0.0
      %2891 = vmatpush1.msra.mxu0 0.0
      %2892 = vmatprep.subr.mxu0 0.0
      %2893 = vmatpush1.msra.mxu0 0.0
      %2894 = vmatprep.subr.mxu0 0.0
      %2895 = vmatpush1.msra.mxu0 0.0
      %2896 = vmatprep.subr.mxu0 0.0
      %2897 = vmatpush1.msra.mxu0 0.0
      %2898 = vmatprep.subr.mxu0 0.0
      %2899 = vmatpush1.msra.mxu0 0.0
      %2900 = vmatprep.subr.mxu0 0.0
      %2901 = vmatpush1.msra.mxu0 0.0
      %2902 = vmatprep.subr.mxu0 0.0
      %2903 = vmatpush1.msra.mxu0 %v1260
      %2904 = vmatprep.subr.mxu0 0.0
      %2905 = vmatpush1.msra.mxu0 %v1255
      %2906 = vmatprep.subr.mxu0 0.0
      %2907 = vmatpush2.msra.mxu0 0.0
      %2908 = vmatprep.subr.mxu0 0.0
      %2909 = vmatpush2.msra.mxu0 0.0
      %2910 = vmatprep.subr.mxu0 0.0
      %2911 = vmatpush2.msra.mxu0 0.0
      %2912 = vmatprep.subr.mxu0 0.0
      %2913 = vmatpush2.msra.mxu0 0.0
      %2914 = vmatprep.subr.mxu0 0.0
      %2915 = vmatpush2.msra.mxu0 0.0
      %2916 = vmatprep.subr.mxu0 0.0
      %2917 = vmatpush2.msra.mxu0 0.0
      %2918 = vmatprep.subr.mxu0 0.0
      %2919 = vmatpush2.msra.mxu0 0.0
      %2920 = vmatprep.subr.mxu0 0.0
      %2921 = vmatpush2.msra.mxu0 0.0
      %2922 = vmatprep.subr.mxu0 0.0
      %2923 = vmatpush2.msra.mxu0 0.0
      %2924 = vmatprep.subr.mxu0 0.0
      %2925 = vmatpush2.msra.mxu0 0.0
      %2926 = vmatprep.subr.mxu0 0.0
      %2927 = vmatpush2.msra.mxu0 0.0
      %2928 = vmatprep.subr.mxu0 0.0
      %2929 = vmatpush2.msra.mxu0 0.0
      %2930 = vmatprep.subr.mxu0 0.0
      %2931 = vmatpush2.msra.mxu0 0.0
      %2932 = vmatprep.subr.mxu0 0.0
      %2933 = vmatpush2.msra.mxu0 0.0
      %2934 = vmatprep.subr.mxu0 0.0
      %2935 = vmatpush2.msra.mxu0 0.0
      %2936 = vmatprep.subr.mxu0 0.0
      %2937 = vmatpush2.msra.mxu0 0.0
      %2938 = vmatprep.mubr.f32.mxu0 0.0
      %2939 = vmatmul.mubr.f32.gmra.mxu0 %v2827
      %v2940 = vpop.f32.mrf.mxu0
      %v2941 = vadd.f32 0.0, %v2940
      %v2942 = vpop.f32.mrf.mxu0
      %2943 = vmatprep.mubr.f32.mxu0 0.0
      %2944 = vmatmul.mubr.f32.gmra.mxu0 %v2830
      %v2945 = vpop.f32.mrf.mxu0
      %v2946 = vadd.f32 0.0, %v2945
      %v2947 = vpop.f32.mrf.mxu0
      %2948 = vmatprep.mubr.f32.mxu0 0.0
      %2949 = vmatmul.mubr.f32.gmra.mxu0 %v2833
      %v2950 = vpop.f32.mrf.mxu0
      %v2951 = vadd.f32 0.0, %v2950
      %v2952 = vpop.f32.mrf.mxu0
      %2953 = vmatprep.mubr.f32.mxu0 0.0
      %2954 = vmatmul.mubr.f32.gmra.mxu0 %v2836
      %v2955 = vpop.f32.mrf.mxu0
      %v2956 = vadd.f32 0.0, %v2955
      %v2957 = vpop.f32.mrf.mxu0
      %2958 = vmatprep.mubr.f32.mxu0 0.0
      %2959 = vmatmul.mubr.f32.gmra.mxu0 %v2839
      %v2960 = vpop.f32.mrf.mxu0
      %v2961 = vadd.f32 0.0, %v2960
      %v2962 = vpop.f32.mrf.mxu0
      %2963 = vmatprep.mubr.f32.mxu0 0.0
      %2964 = vmatmul.mubr.f32.gmra.mxu0 %v2842
      %v2965 = vpop.f32.mrf.mxu0
      %v2966 = vadd.f32 0.0, %v2965
      %v2967 = vpop.f32.mrf.mxu0
      %2968 = vmatprep.mubr.f32.mxu0 0.0
      %2969 = vmatmul.mubr.f32.gmra.mxu0 %v2845
      %v2970 = vpop.f32.mrf.mxu0
      %v2971 = vadd.f32 0.0, %v2970
      %v2972 = vpop.f32.mrf.mxu0
      %2973 = vmatprep.mubr.f32.mxu0 0.0
      %2974 = vmatmul.mubr.f32.gmra.mxu0 %v2848
      %v2975 = vpop.f32.mrf.mxu0
      %v2976 = vadd.f32 0.0, %v2975
      %v2977 = vpop.f32.mrf.mxu0
      %2978 = vmatprep.mubr.f32.mxu0 0.0
      %2979 = vmatmul.mubr.f32.gmra.mxu0 %v2851
      %v2980 = vpop.f32.mrf.mxu0
      %v2981 = vadd.f32 0.0, %v2980
      %v2982 = vpop.f32.mrf.mxu0
      %2983 = vmatprep.mubr.f32.mxu0 0.0
      %2984 = vmatmul.mubr.f32.gmra.mxu0 %v2854
      %v2985 = vpop.f32.mrf.mxu0
      %v2986 = vadd.f32 0.0, %v2985
      %v2987 = vpop.f32.mrf.mxu0
      %2988 = vmatprep.mubr.f32.mxu0 0.0
      %2989 = vmatmul.mubr.f32.gmra.mxu0 %v2857
      %v2990 = vpop.f32.mrf.mxu0
      %v2991 = vadd.f32 0.0, %v2990
      %v2992 = vpop.f32.mrf.mxu0
      %2993 = vmatprep.mubr.f32.mxu0 0.0
      %2994 = vmatmul.mubr.f32.gmra.mxu0 %v2860
      %v2995 = vpop.f32.mrf.mxu0
      %v2996 = vadd.f32 0.0, %v2995
      %v2997 = vpop.f32.mrf.mxu0
      %2998 = vmatprep.mubr.f32.mxu0 0.0
      %2999 = vmatmul.mubr.f32.gmra.mxu0 %v2863
      %v3000 = vpop.f32.mrf.mxu0
      %v3001 = vadd.f32 0.0, %v3000
      %v3002 = vpop.f32.mrf.mxu0
      %3003 = vmatprep.mubr.f32.mxu0 0.0
      %3004 = vmatmul.mubr.f32.gmra.mxu0 %v2866
      %v3005 = vpop.f32.mrf.mxu0
      %v3006 = vadd.f32 0.0, %v3005
      %v3007 = vpop.f32.mrf.mxu0
      %3008 = vmatprep.mubr.f32.mxu0 0.0
      %3009 = vmatmul.mubr.f32.gmra.mxu0 %v2869
      %v3010 = vpop.f32.mrf.mxu0
      %v3011 = vadd.f32 0.0, %v3010
      %v3012 = vpop.f32.mrf.mxu0
      %3013 = vmatprep.mubr.f32.mxu0 0.0
      %3014 = vmatmul.mubr.f32.gmra.mxu0 %v2872
      %v3015 = vpop.f32.mrf.mxu0
      %v3016 = vadd.f32 0.0, %v3015
      %v3017 = vpop.f32.mrf.mxu0
      %3018 = vdwg.mxu0
      %v3020 = vsel %vm2121, %v2731, 0
      %v3023 = vsel %vm2121, %v2733, 0
      %v3026 = vsel %vm2121, %v2735, 0
      %v3029 = vsel %vm2121, %v2737, 0
      %v3032 = vsel %vm2121, %v2739, 0
      %v3035 = vsel %vm2121, %v2741, 0
      %v3038 = vsel %vm2121, %v2743, 0
      %v3041 = vsel %vm2121, %v2745, 0
      %v3044 = vsel %vm2121, %v2747, 0
      %v3047 = vsel %vm2121, %v2749, 0
      %v3050 = vsel %vm2121, %v2751, 0
      %v3053 = vsel %vm2121, %v2753, 0
      %v3056 = vsel %vm2121, %v2755, 0
      %v3059 = vsel %vm2121, %v2757, 0
      %v3062 = vsel %vm2121, %v2759, 0
      %v3065 = vsel %vm2121, %v2761, 0
      %3067 = vmatprep.subr.mxu0 0.0
      %3068 = vmatpush1.msra.mxu0 0.0
      %3069 = vmatprep.subr.mxu0 0.0
      %3070 = vmatpush1.msra.mxu0 0.0
      %3071 = vmatprep.subr.mxu0 0.0
      %3072 = vmatpush1.msra.mxu0 0.0
      %3073 = vmatprep.subr.mxu0 0.0
      %3074 = vmatpush1.msra.mxu0 0.0
      %3075 = vmatprep.subr.mxu0 0.0
      %3076 = vmatpush1.msra.mxu0 0.0
      %3077 = vmatprep.subr.mxu0 0.0
      %3078 = vmatpush1.msra.mxu0 0.0
      %3079 = vmatprep.subr.mxu0 0.0
      %3080 = vmatpush1.msra.mxu0 0.0
      %3081 = vmatprep.subr.mxu0 0.0
      %3082 = vmatpush1.msra.mxu0 0.0
      %3083 = vmatprep.subr.mxu0 0.0
      %3084 = vmatpush1.msra.mxu0 0.0
      %3085 = vmatprep.subr.mxu0 0.0
      %3086 = vmatpush1.msra.mxu0 0.0
      %3087 = vmatprep.subr.mxu0 0.0
      %3088 = vmatpush1.msra.mxu0 0.0
      %3089 = vmatprep.subr.mxu0 0.0
      %3090 = vmatpush1.msra.mxu0 0.0
      %3091 = vmatprep.subr.mxu0 0.0
      %3092 = vmatpush1.msra.mxu0 0.0
      %3093 = vmatprep.subr.mxu0 0.0
      %3094 = vmatpush1.msra.mxu0 0.0
      %3095 = vmatprep.subr.mxu0 0.0
      %3096 = vmatpush1.msra.mxu0 %v1270
      %3097 = vmatprep.subr.mxu0 0.0
      %3098 = vmatpush1.msra.mxu0 %v1265
      %3099 = vmatprep.subr.mxu0 0.0
      %3100 = vmatpush2.msra.mxu0 0.0
      %3101 = vmatprep.subr.mxu0 0.0
      %3102 = vmatpush2.msra.mxu0 0.0
      %3103 = vmatprep.subr.mxu0 0.0
      %3104 = vmatpush2.msra.mxu0 0.0
      %3105 = vmatprep.subr.mxu0 0.0
      %3106 = vmatpush2.msra.mxu0 0.0
      %3107 = vmatprep.subr.mxu0 0.0
      %3108 = vmatpush2.msra.mxu0 0.0
      %3109 = vmatprep.subr.mxu0 0.0
      %3110 = vmatpush2.msra.mxu0 0.0
      %3111 = vmatprep.subr.mxu0 0.0
      %3112 = vmatpush2.msra.mxu0 0.0
      %3113 = vmatprep.subr.mxu0 0.0
      %3114 = vmatpush2.msra.mxu0 0.0
      %3115 = vmatprep.subr.mxu0 0.0
      %3116 = vmatpush2.msra.mxu0 0.0
      %3117 = vmatprep.subr.mxu0 0.0
      %3118 = vmatpush2.msra.mxu0 0.0
      %3119 = vmatprep.subr.mxu0 0.0
      %3120 = vmatpush2.msra.mxu0 0.0
      %3121 = vmatprep.subr.mxu0 0.0
      %3122 = vmatpush2.msra.mxu0 0.0
      %3123 = vmatprep.subr.mxu0 0.0
      %3124 = vmatpush2.msra.mxu0 0.0
      %3125 = vmatprep.subr.mxu0 0.0
      %3126 = vmatpush2.msra.mxu0 0.0
      %3127 = vmatprep.subr.mxu0 0.0
      %3128 = vmatpush2.msra.mxu0 0.0
      %3129 = vmatprep.subr.mxu0 0.0
      %3130 = vmatpush2.msra.mxu0 0.0
      %3131 = vmatprep.mubr.f32.mxu0 0.0
      %3132 = vmatmul.mubr.f32.gmra.mxu0 %v3020
      %v3133 = vpop.f32.mrf.mxu0
      %v3134 = vadd.f32 0.0, %v3133
      %v3135 = vpop.f32.mrf.mxu0
      %3136 = vmatprep.mubr.f32.mxu0 0.0
      %3137 = vmatmul.mubr.f32.gmra.mxu0 %v3023
      %v3138 = vpop.f32.mrf.mxu0
      %v3139 = vadd.f32 0.0, %v3138
      %v3140 = vpop.f32.mrf.mxu0
      %3141 = vmatprep.mubr.f32.mxu0 0.0
      %3142 = vmatmul.mubr.f32.gmra.mxu0 %v3026
      %v3143 = vpop.f32.mrf.mxu0
      %v3144 = vadd.f32 0.0, %v3143
      %v3145 = vpop.f32.mrf.mxu0
      %3146 = vmatprep.mubr.f32.mxu0 0.0
      %3147 = vmatmul.mubr.f32.gmra.mxu0 %v3029
      %v3148 = vpop.f32.mrf.mxu0
      %v3149 = vadd.f32 0.0, %v3148
      %v3150 = vpop.f32.mrf.mxu0
      %3151 = vmatprep.mubr.f32.mxu0 0.0
      %3152 = vmatmul.mubr.f32.gmra.mxu0 %v3032
      %v3153 = vpop.f32.mrf.mxu0
      %v3154 = vadd.f32 0.0, %v3153
      %v3155 = vpop.f32.mrf.mxu0
      %3156 = vmatprep.mubr.f32.mxu0 0.0
      %3157 = vmatmul.mubr.f32.gmra.mxu0 %v3035
      %v3158 = vpop.f32.mrf.mxu0
      %v3159 = vadd.f32 0.0, %v3158
      %v3160 = vpop.f32.mrf.mxu0
      %3161 = vmatprep.mubr.f32.mxu0 0.0
      %3162 = vmatmul.mubr.f32.gmra.mxu0 %v3038
      %v3163 = vpop.f32.mrf.mxu0
      %v3164 = vadd.f32 0.0, %v3163
      %v3165 = vpop.f32.mrf.mxu0
      %3166 = vmatprep.mubr.f32.mxu0 0.0
      %3167 = vmatmul.mubr.f32.gmra.mxu0 %v3041
      %v3168 = vpop.f32.mrf.mxu0
      %v3169 = vadd.f32 0.0, %v3168
      %v3170 = vpop.f32.mrf.mxu0
      %3171 = vmatprep.mubr.f32.mxu0 0.0
      %3172 = vmatmul.mubr.f32.gmra.mxu0 %v3044
      %v3173 = vpop.f32.mrf.mxu0
      %v3174 = vadd.f32 0.0, %v3173
      %v3175 = vpop.f32.mrf.mxu0
      %3176 = vmatprep.mubr.f32.mxu0 0.0
      %3177 = vmatmul.mubr.f32.gmra.mxu0 %v3047
      %v3178 = vpop.f32.mrf.mxu0
      %v3179 = vadd.f32 0.0, %v3178
      %v3180 = vpop.f32.mrf.mxu0
      %3181 = vmatprep.mubr.f32.mxu0 0.0
      %3182 = vmatmul.mubr.f32.gmra.mxu0 %v3050
      %v3183 = vpop.f32.mrf.mxu0
      %v3184 = vadd.f32 0.0, %v3183
      %v3185 = vpop.f32.mrf.mxu0
      %3186 = vmatprep.mubr.f32.mxu0 0.0
      %3187 = vmatmul.mubr.f32.gmra.mxu0 %v3053
      %v3188 = vpop.f32.mrf.mxu0
      %v3189 = vadd.f32 0.0, %v3188
      %v3190 = vpop.f32.mrf.mxu0
      %3191 = vmatprep.mubr.f32.mxu0 0.0
      %3192 = vmatmul.mubr.f32.gmra.mxu0 %v3056
      %v3193 = vpop.f32.mrf.mxu0
      %v3194 = vadd.f32 0.0, %v3193
      %v3195 = vpop.f32.mrf.mxu0
      %3196 = vmatprep.mubr.f32.mxu0 0.0
      %3197 = vmatmul.mubr.f32.gmra.mxu0 %v3059
      %v3198 = vpop.f32.mrf.mxu0
      %v3199 = vadd.f32 0.0, %v3198
      %v3200 = vpop.f32.mrf.mxu0
      %3201 = vmatprep.mubr.f32.mxu0 0.0
      %3202 = vmatmul.mubr.f32.gmra.mxu0 %v3062
      %v3203 = vpop.f32.mrf.mxu0
      %v3204 = vadd.f32 0.0, %v3203
      %v3205 = vpop.f32.mrf.mxu0
      %3206 = vmatprep.mubr.f32.mxu0 0.0
      %3207 = vmatmul.mubr.f32.gmra.mxu0 %v3065
      %v3208 = vpop.f32.mrf.mxu0
      %v3209 = vadd.f32 0.0, %v3208
      %v3210 = vpop.f32.mrf.mxu0
      %3211 = vdwg.mxu0
      %v3213 = vsel %vm2121, %v2763, 0
      %v3216 = vsel %vm2121, %v2765, 0
      %v3219 = vsel %vm2121, %v2767, 0
      %v3222 = vsel %vm2121, %v2769, 0
      %v3225 = vsel %vm2121, %v2771, 0
      %v3228 = vsel %vm2121, %v2773, 0
      %v3231 = vsel %vm2121, %v2775, 0
      %v3234 = vsel %vm2121, %v2777, 0
      %v3237 = vsel %vm2121, %v2779, 0
      %v3240 = vsel %vm2121, %v2781, 0
      %v3243 = vsel %vm2121, %v2783, 0
      %v3246 = vsel %vm2121, %v2785, 0
      %v3249 = vsel %vm2121, %v2787, 0
      %v3252 = vsel %vm2121, %v2789, 0
      %v3255 = vsel %vm2121, %v2791, 0
      %v3258 = vsel %vm2121, %v2793, 0
      %3260 = vmatprep.subr.mxu0 0.0
      %3261 = vmatpush1.msra.mxu0 0.0
      %3262 = vmatprep.subr.mxu0 0.0
      %3263 = vmatpush1.msra.mxu0 0.0
      %3264 = vmatprep.subr.mxu0 0.0
      %3265 = vmatpush1.msra.mxu0 0.0
      %3266 = vmatprep.subr.mxu0 0.0
      %3267 = vmatpush1.msra.mxu0 0.0
      %3268 = vmatprep.subr.mxu0 0.0
      %3269 = vmatpush1.msra.mxu0 0.0
      %3270 = vmatprep.subr.mxu0 0.0
      %3271 = vmatpush1.msra.mxu0 0.0
      %3272 = vmatprep.subr.mxu0 0.0
      %3273 = vmatpush1.msra.mxu0 0.0
      %3274 = vmatprep.subr.mxu0 0.0
      %3275 = vmatpush1.msra.mxu0 0.0
      %3276 = vmatprep.subr.mxu0 0.0
      %3277 = vmatpush1.msra.mxu0 0.0
      %3278 = vmatprep.subr.mxu0 0.0
      %3279 = vmatpush1.msra.mxu0 0.0
      %3280 = vmatprep.subr.mxu0 0.0
      %3281 = vmatpush1.msra.mxu0 0.0
      %3282 = vmatprep.subr.mxu0 0.0
      %3283 = vmatpush1.msra.mxu0 0.0
      %3284 = vmatprep.subr.mxu0 0.0
      %3285 = vmatpush1.msra.mxu0 0.0
      %3286 = vmatprep.subr.mxu0 0.0
      %3287 = vmatpush1.msra.mxu0 0.0
      %3288 = vmatprep.subr.mxu0 0.0
      %3289 = vmatpush1.msra.mxu0 %v1260
      %3290 = vmatprep.subr.mxu0 0.0
      %3291 = vmatpush1.msra.mxu0 %v1255
      %3292 = vmatprep.subr.mxu0 0.0
      %3293 = vmatpush2.msra.mxu0 0.0
      %3294 = vmatprep.subr.mxu0 0.0
      %3295 = vmatpush2.msra.mxu0 0.0
      %3296 = vmatprep.subr.mxu0 0.0
      %3297 = vmatpush2.msra.mxu0 0.0
      %3298 = vmatprep.subr.mxu0 0.0
      %3299 = vmatpush2.msra.mxu0 0.0
      %3300 = vmatprep.subr.mxu0 0.0
      %3301 = vmatpush2.msra.mxu0 0.0
      %3302 = vmatprep.subr.mxu0 0.0
      %3303 = vmatpush2.msra.mxu0 0.0
      %3304 = vmatprep.subr.mxu0 0.0
      %3305 = vmatpush2.msra.mxu0 0.0
      %3306 = vmatprep.subr.mxu0 0.0
      %3307 = vmatpush2.msra.mxu0 0.0
      %3308 = vmatprep.subr.mxu0 0.0
      %3309 = vmatpush2.msra.mxu0 0.0
      %3310 = vmatprep.subr.mxu0 0.0
      %3311 = vmatpush2.msra.mxu0 0.0
      %3312 = vmatprep.subr.mxu0 0.0
      %3313 = vmatpush2.msra.mxu0 0.0
      %3314 = vmatprep.subr.mxu0 0.0
      %3315 = vmatpush2.msra.mxu0 0.0
      %3316 = vmatprep.subr.mxu0 0.0
      %3317 = vmatpush2.msra.mxu0 0.0
      %3318 = vmatprep.subr.mxu0 0.0
      %3319 = vmatpush2.msra.mxu0 0.0
      %3320 = vmatprep.subr.mxu0 0.0
      %3321 = vmatpush2.msra.mxu0 0.0
      %3322 = vmatprep.subr.mxu0 0.0
      %3323 = vmatpush2.msra.mxu0 0.0
      %3324 = vmatprep.mubr.f32.mxu0 0.0
      %3325 = vmatmul.mubr.f32.gmra.mxu0 %v3213
      %v3326 = vpop.f32.mrf.mxu0
      %v3327 = vadd.f32 0.0, %v3326
      %v3328 = vpop.f32.mrf.mxu0
      %3329 = vmatprep.mubr.f32.mxu0 0.0
      %3330 = vmatmul.mubr.f32.gmra.mxu0 %v3216
      %v3331 = vpop.f32.mrf.mxu0
      %v3332 = vadd.f32 0.0, %v3331
      %v3333 = vpop.f32.mrf.mxu0
      %3334 = vmatprep.mubr.f32.mxu0 0.0
      %3335 = vmatmul.mubr.f32.gmra.mxu0 %v3219
      %v3336 = vpop.f32.mrf.mxu0
      %v3337 = vadd.f32 0.0, %v3336
      %v3338 = vpop.f32.mrf.mxu0
      %3339 = vmatprep.mubr.f32.mxu0 0.0
      %3340 = vmatmul.mubr.f32.gmra.mxu0 %v3222
      %v3341 = vpop.f32.mrf.mxu0
      %v3342 = vadd.f32 0.0, %v3341
      %v3343 = vpop.f32.mrf.mxu0
      %3344 = vmatprep.mubr.f32.mxu0 0.0
      %3345 = vmatmul.mubr.f32.gmra.mxu0 %v3225
      %v3346 = vpop.f32.mrf.mxu0
      %v3347 = vadd.f32 0.0, %v3346
      %v3348 = vpop.f32.mrf.mxu0
      %3349 = vmatprep.mubr.f32.mxu0 0.0
      %3350 = vmatmul.mubr.f32.gmra.mxu0 %v3228
      %v3351 = vpop.f32.mrf.mxu0
      %v3352 = vadd.f32 0.0, %v3351
      %v3353 = vpop.f32.mrf.mxu0
      %3354 = vmatprep.mubr.f32.mxu0 0.0
      %3355 = vmatmul.mubr.f32.gmra.mxu0 %v3231
      %v3356 = vpop.f32.mrf.mxu0
      %v3357 = vadd.f32 0.0, %v3356
      %v3358 = vpop.f32.mrf.mxu0
      %3359 = vmatprep.mubr.f32.mxu0 0.0
      %3360 = vmatmul.mubr.f32.gmra.mxu0 %v3234
      %v3361 = vpop.f32.mrf.mxu0
      %v3362 = vadd.f32 0.0, %v3361
      %v3363 = vpop.f32.mrf.mxu0
      %3364 = vmatprep.mubr.f32.mxu0 0.0
      %3365 = vmatmul.mubr.f32.gmra.mxu0 %v3237
      %v3366 = vpop.f32.mrf.mxu0
      %v3367 = vadd.f32 0.0, %v3366
      %v3368 = vpop.f32.mrf.mxu0
      %3369 = vmatprep.mubr.f32.mxu0 0.0
      %3370 = vmatmul.mubr.f32.gmra.mxu0 %v3240
      %v3371 = vpop.f32.mrf.mxu0
      %v3372 = vadd.f32 0.0, %v3371
      %v3373 = vpop.f32.mrf.mxu0
      %3374 = vmatprep.mubr.f32.mxu0 0.0
      %3375 = vmatmul.mubr.f32.gmra.mxu0 %v3243
      %v3376 = vpop.f32.mrf.mxu0
      %v3377 = vadd.f32 0.0, %v3376
      %v3378 = vpop.f32.mrf.mxu0
      %3379 = vmatprep.mubr.f32.mxu0 0.0
      %3380 = vmatmul.mubr.f32.gmra.mxu0 %v3246
      %v3381 = vpop.f32.mrf.mxu0
      %v3382 = vadd.f32 0.0, %v3381
      %v3383 = vpop.f32.mrf.mxu0
      %3384 = vmatprep.mubr.f32.mxu0 0.0
      %3385 = vmatmul.mubr.f32.gmra.mxu0 %v3249
      %v3386 = vpop.f32.mrf.mxu0
      %v3387 = vadd.f32 0.0, %v3386
      %v3388 = vpop.f32.mrf.mxu0
      %3389 = vmatprep.mubr.f32.mxu0 0.0
      %3390 = vmatmul.mubr.f32.gmra.mxu0 %v3252
      %v3391 = vpop.f32.mrf.mxu0
      %v3392 = vadd.f32 0.0, %v3391
      %v3393 = vpop.f32.mrf.mxu0
      %3394 = vmatprep.mubr.f32.mxu0 0.0
      %3395 = vmatmul.mubr.f32.gmra.mxu0 %v3255
      %v3396 = vpop.f32.mrf.mxu0
      %v3397 = vadd.f32 0.0, %v3396
      %v3398 = vpop.f32.mrf.mxu0
      %3399 = vmatprep.mubr.f32.mxu0 0.0
      %3400 = vmatmul.mubr.f32.gmra.mxu0 %v3258
      %v3401 = vpop.f32.mrf.mxu0
      %v3402 = vadd.f32 0.0, %v3401
      %v3403 = vpop.f32.mrf.mxu0
      %3404 = vdwg.mxu0
      %v3406 = vsel %vm2121, %v2795, 0
      %v3409 = vsel %vm2121, %v2797, 0
      %v3412 = vsel %vm2121, %v2799, 0
      %v3415 = vsel %vm2121, %v2801, 0
      %v3418 = vsel %vm2121, %v2803, 0
      %v3421 = vsel %vm2121, %v2805, 0
      %v3424 = vsel %vm2121, %v2807, 0
      %v3427 = vsel %vm2121, %v2809, 0
      %v3430 = vsel %vm2121, %v2811, 0
      %v3433 = vsel %vm2121, %v2813, 0
      %v3436 = vsel %vm2121, %v2815, 0
      %v3439 = vsel %vm2121, %v2817, 0
      %v3442 = vsel %vm2121, %v2819, 0
      %v3445 = vsel %vm2121, %v2821, 0
      %v3448 = vsel %vm2121, %v2823, 0
      %v3451 = vsel %vm2121, %v2825, 0
      %3453 = vmatprep.subr.mxu0 0.0
      %3454 = vmatpush1.msra.mxu0 0.0
      %3455 = vmatprep.subr.mxu0 0.0
      %3456 = vmatpush1.msra.mxu0 0.0
      %3457 = vmatprep.subr.mxu0 0.0
      %3458 = vmatpush1.msra.mxu0 0.0
      %3459 = vmatprep.subr.mxu0 0.0
      %3460 = vmatpush1.msra.mxu0 0.0
      %3461 = vmatprep.subr.mxu0 0.0
      %3462 = vmatpush1.msra.mxu0 0.0
      %3463 = vmatprep.subr.mxu0 0.0
      %3464 = vmatpush1.msra.mxu0 0.0
      %3465 = vmatprep.subr.mxu0 0.0
      %3466 = vmatpush1.msra.mxu0 0.0
      %3467 = vmatprep.subr.mxu0 0.0
      %3468 = vmatpush1.msra.mxu0 0.0
      %3469 = vmatprep.subr.mxu0 0.0
      %3470 = vmatpush1.msra.mxu0 0.0
      %3471 = vmatprep.subr.mxu0 0.0
      %3472 = vmatpush1.msra.mxu0 0.0
      %3473 = vmatprep.subr.mxu0 0.0
      %3474 = vmatpush1.msra.mxu0 0.0
      %3475 = vmatprep.subr.mxu0 0.0
      %3476 = vmatpush1.msra.mxu0 0.0
      %3477 = vmatprep.subr.mxu0 0.0
      %3478 = vmatpush1.msra.mxu0 0.0
      %3479 = vmatprep.subr.mxu0 0.0
      %3480 = vmatpush1.msra.mxu0 0.0
      %3481 = vmatprep.subr.mxu0 0.0
      %3482 = vmatpush1.msra.mxu0 %v1270
      %3483 = vmatprep.subr.mxu0 0.0
      %3484 = vmatpush1.msra.mxu0 %v1265
      %3485 = vmatprep.subr.mxu0 0.0
      %3486 = vmatpush2.msra.mxu0 0.0
      %3487 = vmatprep.subr.mxu0 0.0
      %3488 = vmatpush2.msra.mxu0 0.0
      %3489 = vmatprep.subr.mxu0 0.0
      %3490 = vmatpush2.msra.mxu0 0.0
      %3491 = vmatprep.subr.mxu0 0.0
      %3492 = vmatpush2.msra.mxu0 0.0
      %3493 = vmatprep.subr.mxu0 0.0
      %3494 = vmatpush2.msra.mxu0 0.0
      %3495 = vmatprep.subr.mxu0 0.0
      %3496 = vmatpush2.msra.mxu0 0.0
      %3497 = vmatprep.subr.mxu0 0.0
      %3498 = vmatpush2.msra.mxu0 0.0
      %3499 = vmatprep.subr.mxu0 0.0
      %3500 = vmatpush2.msra.mxu0 0.0
      %3501 = vmatprep.subr.mxu0 0.0
      %3502 = vmatpush2.msra.mxu0 0.0
      %3503 = vmatprep.subr.mxu0 0.0
      %3504 = vmatpush2.msra.mxu0 0.0
      %3505 = vmatprep.subr.mxu0 0.0
      %3506 = vmatpush2.msra.mxu0 0.0
      %3507 = vmatprep.subr.mxu0 0.0
      %3508 = vmatpush2.msra.mxu0 0.0
      %3509 = vmatprep.subr.mxu0 0.0
      %3510 = vmatpush2.msra.mxu0 0.0
      %3511 = vmatprep.subr.mxu0 0.0
      %3512 = vmatpush2.msra.mxu0 0.0
      %3513 = vmatprep.subr.mxu0 0.0
      %3514 = vmatpush2.msra.mxu0 0.0
      %3515 = vmatprep.subr.mxu0 0.0
      %3516 = vmatpush2.msra.mxu0 0.0
      %3517 = vmatprep.mubr.f32.mxu0 0.0
      %3518 = vmatmul.mubr.f32.gmra.mxu0 %v3406
      %v3519 = vpop.f32.mrf.mxu0
      %v3520 = vadd.f32 0.0, %v3519
      %v3521 = vpop.f32.mrf.mxu0
      %3522 = vmatprep.mubr.f32.mxu0 0.0
      %3523 = vmatmul.mubr.f32.gmra.mxu0 %v3409
      %v3524 = vpop.f32.mrf.mxu0
      %v3525 = vadd.f32 0.0, %v3524
      %v3526 = vpop.f32.mrf.mxu0
      %3527 = vmatprep.mubr.f32.mxu0 0.0
      %3528 = vmatmul.mubr.f32.gmra.mxu0 %v3412
      %v3529 = vpop.f32.mrf.mxu0
      %v3530 = vadd.f32 0.0, %v3529
      %v3531 = vpop.f32.mrf.mxu0
      %3532 = vmatprep.mubr.f32.mxu0 0.0
      %3533 = vmatmul.mubr.f32.gmra.mxu0 %v3415
      %v3534 = vpop.f32.mrf.mxu0
      %v3535 = vadd.f32 0.0, %v3534
      %v3536 = vpop.f32.mrf.mxu0
      %3537 = vmatprep.mubr.f32.mxu0 0.0
      %3538 = vmatmul.mubr.f32.gmra.mxu0 %v3418
      %v3539 = vpop.f32.mrf.mxu0
      %v3540 = vadd.f32 0.0, %v3539
      %v3541 = vpop.f32.mrf.mxu0
      %3542 = vmatprep.mubr.f32.mxu0 0.0
      %3543 = vmatmul.mubr.f32.gmra.mxu0 %v3421
      %v3544 = vpop.f32.mrf.mxu0
      %v3545 = vadd.f32 0.0, %v3544
      %v3546 = vpop.f32.mrf.mxu0
      %3547 = vmatprep.mubr.f32.mxu0 0.0
      %3548 = vmatmul.mubr.f32.gmra.mxu0 %v3424
      %v3549 = vpop.f32.mrf.mxu0
      %v3550 = vadd.f32 0.0, %v3549
      %v3551 = vpop.f32.mrf.mxu0
      %3552 = vmatprep.mubr.f32.mxu0 0.0
      %3553 = vmatmul.mubr.f32.gmra.mxu0 %v3427
      %v3554 = vpop.f32.mrf.mxu0
      %v3555 = vadd.f32 0.0, %v3554
      %v3556 = vpop.f32.mrf.mxu0
      %3557 = vmatprep.mubr.f32.mxu0 0.0
      %3558 = vmatmul.mubr.f32.gmra.mxu0 %v3430
      %v3559 = vpop.f32.mrf.mxu0
      %v3560 = vadd.f32 0.0, %v3559
      %v3561 = vpop.f32.mrf.mxu0
      %3562 = vmatprep.mubr.f32.mxu0 0.0
      %3563 = vmatmul.mubr.f32.gmra.mxu0 %v3433
      %v3564 = vpop.f32.mrf.mxu0
      %v3565 = vadd.f32 0.0, %v3564
      %v3566 = vpop.f32.mrf.mxu0
      %3567 = vmatprep.mubr.f32.mxu0 0.0
      %3568 = vmatmul.mubr.f32.gmra.mxu0 %v3436
      %v3569 = vpop.f32.mrf.mxu0
      %v3570 = vadd.f32 0.0, %v3569
      %v3571 = vpop.f32.mrf.mxu0
      %3572 = vmatprep.mubr.f32.mxu0 0.0
      %3573 = vmatmul.mubr.f32.gmra.mxu0 %v3439
      %v3574 = vpop.f32.mrf.mxu0
      %v3575 = vadd.f32 0.0, %v3574
      %v3576 = vpop.f32.mrf.mxu0
      %3577 = vmatprep.mubr.f32.mxu0 0.0
      %3578 = vmatmul.mubr.f32.gmra.mxu0 %v3442
      %v3579 = vpop.f32.mrf.mxu0
      %v3580 = vadd.f32 0.0, %v3579
      %v3581 = vpop.f32.mrf.mxu0
      %3582 = vmatprep.mubr.f32.mxu0 0.0
      %3583 = vmatmul.mubr.f32.gmra.mxu0 %v3445
      %v3584 = vpop.f32.mrf.mxu0
      %v3585 = vadd.f32 0.0, %v3584
      %v3586 = vpop.f32.mrf.mxu0
      %3587 = vmatprep.mubr.f32.mxu0 0.0
      %3588 = vmatmul.mubr.f32.gmra.mxu0 %v3448
      %v3589 = vpop.f32.mrf.mxu0
      %v3590 = vadd.f32 0.0, %v3589
      %v3591 = vpop.f32.mrf.mxu0
      %3592 = vmatprep.mubr.f32.mxu0 0.0
      %3593 = vmatmul.mubr.f32.gmra.mxu0 %v3451
      %v3594 = vpop.f32.mrf.mxu0
      %v3595 = vadd.f32 0.0, %v3594
      %v3596 = vpop.f32.mrf.mxu0
      %3597 = vdwg.mxu0
      %v3598 = vld [vmem:[%s575] sm:$0xff]
      %v3599 = vld [vmem:[%s575 + $0x8] sm:$0xff]
      %v3600 = vld [vmem:[%s575 + $0x10] sm:$0xff]
      %v3601 = vld [vmem:[%s575 + $0x18] sm:$0xff]
      %v3602 = vld [vmem:[%s575 + $0x20] sm:$0xff]
      %v3603 = vld [vmem:[%s575 + $0x28] sm:$0xff]
      %v3604 = vld [vmem:[%s575 + $0x30] sm:$0xff]
      %v3605 = vld [vmem:[%s575 + $0x38] sm:$0xff]
      %v3606 = vld [vmem:[%s578] sm:$0x1]
      %v3608 = vlaneseq
      %v3609 = vshrl.u32 %v3608, 7
      %v3610 = vsub.s32 0, %v3609
      %v3611 = vrot.slane %v3606, %v3610
      %v3614 = vsel %vm1075, %v2941, 0
      %v3617 = vsel %vm1075, %v2946, 0
      %v3620 = vsel %vm1075, %v2951, 0
      %v3623 = vsel %vm1075, %v2956, 0
      %v3626 = vsel %vm1075, %v2961, 0
      %v3629 = vsel %vm1075, %v2966, 0
      %v3632 = vsel %vm1075, %v2971, 0
      %v3635 = vsel %vm1075, %v2976, 0
      %v3638 = vsel %vm1075, %v2981, 0
      %v3641 = vsel %vm1075, %v2986, 0
      %v3644 = vsel %vm1075, %v2991, 0
      %v3647 = vsel %vm1075, %v2996, 0
      %v3650 = vsel %vm1075, %v3001, 0
      %v3653 = vsel %vm1075, %v3006, 0
      %v3656 = vsel %vm1075, %v3011, 0
      %v3659 = vsel %vm1075, %v3016, 0
      %v3662 = vsel %vm1075, %v3134, 0
      %v3665 = vsel %vm1075, %v3139, 0
      %v3668 = vsel %vm1075, %v3144, 0
      %v3671 = vsel %vm1075, %v3149, 0
      %v3674 = vsel %vm1075, %v3154, 0
      %v3677 = vsel %vm1075, %v3159, 0
      %v3680 = vsel %vm1075, %v3164, 0
      %v3683 = vsel %vm1075, %v3169, 0
      %v3686 = vsel %vm1075, %v3174, 0
      %v3689 = vsel %vm1075, %v3179, 0
      %v3692 = vsel %vm1075, %v3184, 0
      %v3695 = vsel %vm1075, %v3189, 0
      %v3698 = vsel %vm1075, %v3194, 0
      %v3701 = vsel %vm1075, %v3199, 0
      %v3704 = vsel %vm1075, %v3204, 0
      %v3707 = vsel %vm1075, %v3209, 0
      %v3710 = vsel %vm1075, %v3327, 0
      %v3713 = vsel %vm1075, %v3332, 0
      %v3716 = vsel %vm1075, %v3337, 0
      %v3719 = vsel %vm1075, %v3342, 0
      %v3722 = vsel %vm1075, %v3347, 0
      %v3725 = vsel %vm1075, %v3352, 0
      %v3728 = vsel %vm1075, %v3357, 0
      %v3731 = vsel %vm1075, %v3362, 0
      %v3734 = vsel %vm1075, %v3367, 0
      %v3737 = vsel %vm1075, %v3372, 0
      %v3740 = vsel %vm1075, %v3377, 0
      %v3743 = vsel %vm1075, %v3382, 0
      %v3746 = vsel %vm1075, %v3387, 0
      %v3749 = vsel %vm1075, %v3392, 0
      %v3752 = vsel %vm1075, %v3397, 0
      %v3755 = vsel %vm1075, %v3402, 0
      %v3758 = vsel %vm1075, %v3520, 0
      %v3761 = vsel %vm1075, %v3525, 0
      %v3764 = vsel %vm1075, %v3530, 0
      %v3767 = vsel %vm1075, %v3535, 0
      %v3770 = vsel %vm1075, %v3540, 0
      %v3773 = vsel %vm1075, %v3545, 0
      %v3776 = vsel %vm1075, %v3550, 0
      %v3779 = vsel %vm1075, %v3555, 0
      %v3782 = vsel %vm1075, %v3560, 0
      %v3785 = vsel %vm1075, %v3565, 0
      %v3788 = vsel %vm1075, %v3570, 0
      %v3791 = vsel %vm1075, %v3575, 0
      %v3794 = vsel %vm1075, %v3580, 0
      %v3797 = vsel %vm1075, %v3585, 0
      %v3800 = vsel %vm1075, %v3590, 0
      %v3803 = vsel %vm1075, %v3595, 0
      %3805 = vmatprep.subr.mxu0 0.0
      %3806 = vmatpush1.msra.mxu0 0.0
      %3807 = vmatprep.subr.mxu0 0.0
      %3808 = vmatpush1.msra.mxu0 0.0
      %3809 = vmatprep.subr.mxu0 0.0
      %3810 = vmatpush1.msra.mxu0 0.0
      %3811 = vmatprep.subr.mxu0 0.0
      %3812 = vmatpush1.msra.mxu0 0.0
      %3813 = vmatprep.subr.mxu0 0.0
      %3814 = vmatpush1.msra.mxu0 0.0
      %3815 = vmatprep.subr.mxu0 0.0
      %3816 = vmatpush1.msra.mxu0 0.0
      %3817 = vmatprep.subr.mxu0 0.0
      %3818 = vmatpush1.msra.mxu0 0.0
      %3819 = vmatprep.subr.mxu0 0.0
      %3820 = vmatpush1.msra.mxu0 0.0
      %3821 = vmatprep.subr.mxu0 0.0
      %3822 = vmatpush1.msra.mxu0 %v3605
      %3823 = vmatprep.subr.mxu0 0.0
      %3824 = vmatpush1.msra.mxu0 %v3604
      %3825 = vmatprep.subr.mxu0 0.0
      %3826 = vmatpush1.msra.mxu0 %v3603
      %3827 = vmatprep.subr.mxu0 0.0
      %3828 = vmatpush1.msra.mxu0 %v3602
      %3829 = vmatprep.subr.mxu0 0.0
      %3830 = vmatpush1.msra.mxu0 %v3601
      %3831 = vmatprep.subr.mxu0 0.0
      %3832 = vmatpush1.msra.mxu0 %v3600
      %3833 = vmatprep.subr.mxu0 0.0
      %3834 = vmatpush1.msra.mxu0 %v3599
      %3835 = vmatprep.subr.mxu0 0.0
      %3836 = vmatpush1.msra.mxu0 %v3598
      %3837 = vmatprep.subr.mxu0 0.0
      %3838 = vmatpush2.msra.mxu0 0.0
      %3839 = vmatprep.subr.mxu0 0.0
      %3840 = vmatpush2.msra.mxu0 0.0
      %3841 = vmatprep.subr.mxu0 0.0
      %3842 = vmatpush2.msra.mxu0 0.0
      %3843 = vmatprep.subr.mxu0 0.0
      %3844 = vmatpush2.msra.mxu0 0.0
      %3845 = vmatprep.subr.mxu0 0.0
      %3846 = vmatpush2.msra.mxu0 0.0
      %3847 = vmatprep.subr.mxu0 0.0
      %3848 = vmatpush2.msra.mxu0 0.0
      %3849 = vmatprep.subr.mxu0 0.0
      %3850 = vmatpush2.msra.mxu0 0.0
      %3851 = vmatprep.subr.mxu0 0.0
      %3852 = vmatpush2.msra.mxu0 0.0
      %3853 = vmatprep.subr.mxu0 0.0
      %3854 = vmatpush2.msra.mxu0 0.0
      %3855 = vmatprep.subr.mxu0 0.0
      %3856 = vmatpush2.msra.mxu0 0.0
      %3857 = vmatprep.subr.mxu0 0.0
      %3858 = vmatpush2.msra.mxu0 0.0
      %3859 = vmatprep.subr.mxu0 0.0
      %3860 = vmatpush2.msra.mxu0 0.0
      %3861 = vmatprep.subr.mxu0 0.0
      %3862 = vmatpush2.msra.mxu0 0.0
      %3863 = vmatprep.subr.mxu0 0.0
      %3864 = vmatpush2.msra.mxu0 0.0
      %3865 = vmatprep.subr.mxu0 0.0
      %3866 = vmatpush2.msra.mxu0 0.0
      %3867 = vmatprep.subr.mxu0 0.0
      %3868 = vmatpush2.msra.mxu0 0.0
      %3869 = vmatprep.mubr.f32.mxu0 0.0
      %3870 = vmatmul.mubr.f32.gmra.mxu0 %v3614
      %v3871 = vpop.f32.mrf.mxu0
      %v3872 = vadd.f32 %v3611, %v3871
      %v3873 = vpop.f32.mrf.mxu0
      %3874 = vmatprep.mubr.f32.mxu0 0.0
      %3875 = vmatmul.mubr.f32.gmra.mxu0 %v3617
      %v3876 = vpop.f32.mrf.mxu0
      %v3877 = vadd.f32 %v3611, %v3876
      %v3878 = vpop.f32.mrf.mxu0
      %3879 = vmatprep.mubr.f32.mxu0 0.0
      %3880 = vmatmul.mubr.f32.gmra.mxu0 %v3620
      %v3881 = vpop.f32.mrf.mxu0
      %v3882 = vadd.f32 %v3611, %v3881
      %v3883 = vpop.f32.mrf.mxu0
      %3884 = vmatprep.mubr.f32.mxu0 0.0
      %3885 = vmatmul.mubr.f32.gmra.mxu0 %v3623
      %v3886 = vpop.f32.mrf.mxu0
      %v3887 = vadd.f32 %v3611, %v3886
      %v3888 = vpop.f32.mrf.mxu0
      %3889 = vmatprep.mubr.f32.mxu0 0.0
      %3890 = vmatmul.mubr.f32.gmra.mxu0 %v3626
      %v3891 = vpop.f32.mrf.mxu0
      %v3892 = vadd.f32 %v3611, %v3891
      %v3893 = vpop.f32.mrf.mxu0
      %3894 = vmatprep.mubr.f32.mxu0 0.0
      %3895 = vmatmul.mubr.f32.gmra.mxu0 %v3629
      %v3896 = vpop.f32.mrf.mxu0
      %v3897 = vadd.f32 %v3611, %v3896
      %v3898 = vpop.f32.mrf.mxu0
      %3899 = vmatprep.mubr.f32.mxu0 0.0
      %3900 = vmatmul.mubr.f32.gmra.mxu0 %v3632
      %v3901 = vpop.f32.mrf.mxu0
      %v3902 = vadd.f32 %v3611, %v3901
      %v3903 = vpop.f32.mrf.mxu0
      %3904 = vmatprep.mubr.f32.mxu0 0.0
      %3905 = vmatmul.mubr.f32.gmra.mxu0 %v3635
      %v3906 = vpop.f32.mrf.mxu0
      %v3907 = vadd.f32 %v3611, %v3906
      %v3908 = vpop.f32.mrf.mxu0
      %3909 = vmatprep.mubr.f32.mxu0 0.0
      %3910 = vmatmul.mubr.f32.gmra.mxu0 %v3638
      %v3911 = vpop.f32.mrf.mxu0
      %v3912 = vadd.f32 %v3611, %v3911
      %v3913 = vpop.f32.mrf.mxu0
      %3914 = vmatprep.mubr.f32.mxu0 0.0
      %3915 = vmatmul.mubr.f32.gmra.mxu0 %v3641
      %v3916 = vpop.f32.mrf.mxu0
      %v3917 = vadd.f32 %v3611, %v3916
      %v3918 = vpop.f32.mrf.mxu0
      %3919 = vmatprep.mubr.f32.mxu0 0.0
      %3920 = vmatmul.mubr.f32.gmra.mxu0 %v3644
      %v3921 = vpop.f32.mrf.mxu0
      %v3922 = vadd.f32 %v3611, %v3921
      %v3923 = vpop.f32.mrf.mxu0
      %3924 = vmatprep.mubr.f32.mxu0 0.0
      %3925 = vmatmul.mubr.f32.gmra.mxu0 %v3647
      %v3926 = vpop.f32.mrf.mxu0
      %v3927 = vadd.f32 %v3611, %v3926
      %v3928 = vpop.f32.mrf.mxu0
      %3929 = vmatprep.mubr.f32.mxu0 0.0
      %3930 = vmatmul.mubr.f32.gmra.mxu0 %v3650
      %v3931 = vpop.f32.mrf.mxu0
      %v3932 = vadd.f32 %v3611, %v3931
      %v3933 = vpop.f32.mrf.mxu0
      %3934 = vmatprep.mubr.f32.mxu0 0.0
      %3935 = vmatmul.mubr.f32.gmra.mxu0 %v3653
      %v3936 = vpop.f32.mrf.mxu0
      %v3937 = vadd.f32 %v3611, %v3936
      %v3938 = vpop.f32.mrf.mxu0
      %3939 = vmatprep.mubr.f32.mxu0 0.0
      %3940 = vmatmul.mubr.f32.gmra.mxu0 %v3656
      %v3941 = vpop.f32.mrf.mxu0
      %v3942 = vadd.f32 %v3611, %v3941
      %v3943 = vpop.f32.mrf.mxu0
      %3944 = vmatprep.mubr.f32.mxu0 0.0
      %3945 = vmatmul.mubr.f32.gmra.mxu0 %v3659
      %v3946 = vpop.f32.mrf.mxu0
      %v3947 = vadd.f32 %v3611, %v3946
      %v3948 = vpop.f32.mrf.mxu0
      %3949 = vmatprep.mubr.f32.mxu0 0.0
      %3950 = vmatmul.mubr.f32.gmra.mxu0 %v3662
      %v3951 = vpop.f32.mrf.mxu0
      %v3952 = vadd.f32 %v3611, %v3951
      %v3953 = vpop.f32.mrf.mxu0
      %3954 = vmatprep.mubr.f32.mxu0 0.0
      %3955 = vmatmul.mubr.f32.gmra.mxu0 %v3665
      %v3956 = vpop.f32.mrf.mxu0
      %v3957 = vadd.f32 %v3611, %v3956
      %v3958 = vpop.f32.mrf.mxu0
      %3959 = vmatprep.mubr.f32.mxu0 0.0
      %3960 = vmatmul.mubr.f32.gmra.mxu0 %v3668
      %v3961 = vpop.f32.mrf.mxu0
      %v3962 = vadd.f32 %v3611, %v3961
      %v3963 = vpop.f32.mrf.mxu0
      %3964 = vmatprep.mubr.f32.mxu0 0.0
      %3965 = vmatmul.mubr.f32.gmra.mxu0 %v3671
      %v3966 = vpop.f32.mrf.mxu0
      %v3967 = vadd.f32 %v3611, %v3966
      %v3968 = vpop.f32.mrf.mxu0
      %3969 = vmatprep.mubr.f32.mxu0 0.0
      %3970 = vmatmul.mubr.f32.gmra.mxu0 %v3674
      %v3971 = vpop.f32.mrf.mxu0
      %v3972 = vadd.f32 %v3611, %v3971
      %v3973 = vpop.f32.mrf.mxu0
      %3974 = vmatprep.mubr.f32.mxu0 0.0
      %3975 = vmatmul.mubr.f32.gmra.mxu0 %v3677
      %v3976 = vpop.f32.mrf.mxu0
      %v3977 = vadd.f32 %v3611, %v3976
      %v3978 = vpop.f32.mrf.mxu0
      %3979 = vmatprep.mubr.f32.mxu0 0.0
      %3980 = vmatmul.mubr.f32.gmra.mxu0 %v3680
      %v3981 = vpop.f32.mrf.mxu0
      %v3982 = vadd.f32 %v3611, %v3981
      %v3983 = vpop.f32.mrf.mxu0
      %3984 = vmatprep.mubr.f32.mxu0 0.0
      %3985 = vmatmul.mubr.f32.gmra.mxu0 %v3683
      %v3986 = vpop.f32.mrf.mxu0
      %v3987 = vadd.f32 %v3611, %v3986
      %v3988 = vpop.f32.mrf.mxu0
      %3989 = vmatprep.mubr.f32.mxu0 0.0
      %3990 = vmatmul.mubr.f32.gmra.mxu0 %v3686
      %v3991 = vpop.f32.mrf.mxu0
      %v3992 = vadd.f32 %v3611, %v3991
      %v3993 = vpop.f32.mrf.mxu0
      %3994 = vmatprep.mubr.f32.mxu0 0.0
      %3995 = vmatmul.mubr.f32.gmra.mxu0 %v3689
      %v3996 = vpop.f32.mrf.mxu0
      %v3997 = vadd.f32 %v3611, %v3996
      %v3998 = vpop.f32.mrf.mxu0
      %3999 = vmatprep.mubr.f32.mxu0 0.0
      %4000 = vmatmul.mubr.f32.gmra.mxu0 %v3692
      %v4001 = vpop.f32.mrf.mxu0
      %v4002 = vadd.f32 %v3611, %v4001
      %v4003 = vpop.f32.mrf.mxu0
      %4004 = vmatprep.mubr.f32.mxu0 0.0
      %4005 = vmatmul.mubr.f32.gmra.mxu0 %v3695
      %v4006 = vpop.f32.mrf.mxu0
      %v4007 = vadd.f32 %v3611, %v4006
      %v4008 = vpop.f32.mrf.mxu0
      %4009 = vmatprep.mubr.f32.mxu0 0.0
      %4010 = vmatmul.mubr.f32.gmra.mxu0 %v3698
      %v4011 = vpop.f32.mrf.mxu0
      %v4012 = vadd.f32 %v3611, %v4011
      %v4013 = vpop.f32.mrf.mxu0
      %4014 = vmatprep.mubr.f32.mxu0 0.0
      %4015 = vmatmul.mubr.f32.gmra.mxu0 %v3701
      %v4016 = vpop.f32.mrf.mxu0
      %v4017 = vadd.f32 %v3611, %v4016
      %v4018 = vpop.f32.mrf.mxu0
      %4019 = vmatprep.mubr.f32.mxu0 0.0
      %4020 = vmatmul.mubr.f32.gmra.mxu0 %v3704
      %v4021 = vpop.f32.mrf.mxu0
      %v4022 = vadd.f32 %v3611, %v4021
      %v4023 = vpop.f32.mrf.mxu0
      %4024 = vmatprep.mubr.f32.mxu0 0.0
      %4025 = vmatmul.mubr.f32.gmra.mxu0 %v3707
      %v4026 = vpop.f32.mrf.mxu0
      %v4027 = vadd.f32 %v3611, %v4026
      %v4028 = vpop.f32.mrf.mxu0
      %4029 = vmatprep.mubr.f32.mxu0 0.0
      %4030 = vmatmul.mubr.f32.gmra.mxu0 %v3710
      %v4031 = vpop.f32.mrf.mxu0
      %v4032 = vadd.f32 %v3611, %v4031
      %v4033 = vpop.f32.mrf.mxu0
      %4034 = vmatprep.mubr.f32.mxu0 0.0
      %4035 = vmatmul.mubr.f32.gmra.mxu0 %v3713
      %v4036 = vpop.f32.mrf.mxu0
      %v4037 = vadd.f32 %v3611, %v4036
      %v4038 = vpop.f32.mrf.mxu0
      %4039 = vmatprep.mubr.f32.mxu0 0.0
      %4040 = vmatmul.mubr.f32.gmra.mxu0 %v3716
      %v4041 = vpop.f32.mrf.mxu0
      %v4042 = vadd.f32 %v3611, %v4041
      %v4043 = vpop.f32.mrf.mxu0
      %4044 = vmatprep.mubr.f32.mxu0 0.0
      %4045 = vmatmul.mubr.f32.gmra.mxu0 %v3719
      %v4046 = vpop.f32.mrf.mxu0
      %v4047 = vadd.f32 %v3611, %v4046
      %v4048 = vpop.f32.mrf.mxu0
      %4049 = vmatprep.mubr.f32.mxu0 0.0
      %4050 = vmatmul.mubr.f32.gmra.mxu0 %v3722
      %v4051 = vpop.f32.mrf.mxu0
      %v4052 = vadd.f32 %v3611, %v4051
      %v4053 = vpop.f32.mrf.mxu0
      %4054 = vmatprep.mubr.f32.mxu0 0.0
      %4055 = vmatmul.mubr.f32.gmra.mxu0 %v3725
      %v4056 = vpop.f32.mrf.mxu0
      %v4057 = vadd.f32 %v3611, %v4056
      %v4058 = vpop.f32.mrf.mxu0
      %4059 = vmatprep.mubr.f32.mxu0 0.0
      %4060 = vmatmul.mubr.f32.gmra.mxu0 %v3728
      %v4061 = vpop.f32.mrf.mxu0
      %v4062 = vadd.f32 %v3611, %v4061
      %v4063 = vpop.f32.mrf.mxu0
      %4064 = vmatprep.mubr.f32.mxu0 0.0
      %4065 = vmatmul.mubr.f32.gmra.mxu0 %v3731
      %v4066 = vpop.f32.mrf.mxu0
      %v4067 = vadd.f32 %v3611, %v4066
      %v4068 = vpop.f32.mrf.mxu0
      %4069 = vmatprep.mubr.f32.mxu0 0.0
      %4070 = vmatmul.mubr.f32.gmra.mxu0 %v3734
      %v4071 = vpop.f32.mrf.mxu0
      %v4072 = vadd.f32 %v3611, %v4071
      %v4073 = vpop.f32.mrf.mxu0
      %4074 = vmatprep.mubr.f32.mxu0 0.0
      %4075 = vmatmul.mubr.f32.gmra.mxu0 %v3737
      %v4076 = vpop.f32.mrf.mxu0
      %v4077 = vadd.f32 %v3611, %v4076
      %v4078 = vpop.f32.mrf.mxu0
      %4079 = vmatprep.mubr.f32.mxu0 0.0
      %4080 = vmatmul.mubr.f32.gmra.mxu0 %v3740
      %v4081 = vpop.f32.mrf.mxu0
      %v4082 = vadd.f32 %v3611, %v4081
      %v4083 = vpop.f32.mrf.mxu0
      %4084 = vmatprep.mubr.f32.mxu0 0.0
      %4085 = vmatmul.mubr.f32.gmra.mxu0 %v3743
      %v4086 = vpop.f32.mrf.mxu0
      %v4087 = vadd.f32 %v3611, %v4086
      %v4088 = vpop.f32.mrf.mxu0
      %4089 = vmatprep.mubr.f32.mxu0 0.0
      %4090 = vmatmul.mubr.f32.gmra.mxu0 %v3746
      %v4091 = vpop.f32.mrf.mxu0
      %v4092 = vadd.f32 %v3611, %v4091
      %v4093 = vpop.f32.mrf.mxu0
      %4094 = vmatprep.mubr.f32.mxu0 0.0
      %4095 = vmatmul.mubr.f32.gmra.mxu0 %v3749
      %v4096 = vpop.f32.mrf.mxu0
      %v4097 = vadd.f32 %v3611, %v4096
      %v4098 = vpop.f32.mrf.mxu0
      %4099 = vmatprep.mubr.f32.mxu0 0.0
      %4100 = vmatmul.mubr.f32.gmra.mxu0 %v3752
      %v4101 = vpop.f32.mrf.mxu0
      %v4102 = vadd.f32 %v3611, %v4101
      %v4103 = vpop.f32.mrf.mxu0
      %4104 = vmatprep.mubr.f32.mxu0 0.0
      %4105 = vmatmul.mubr.f32.gmra.mxu0 %v3755
      %v4106 = vpop.f32.mrf.mxu0
      %v4107 = vadd.f32 %v3611, %v4106
      %v4108 = vpop.f32.mrf.mxu0
      %4109 = vmatprep.mubr.f32.mxu0 0.0
      %4110 = vmatmul.mubr.f32.gmra.mxu0 %v3758
      %v4111 = vpop.f32.mrf.mxu0
      %v4112 = vadd.f32 %v3611, %v4111
      %v4113 = vpop.f32.mrf.mxu0
      %4114 = vmatprep.mubr.f32.mxu0 0.0
      %4115 = vmatmul.mubr.f32.gmra.mxu0 %v3761
      %v4116 = vpop.f32.mrf.mxu0
      %v4117 = vadd.f32 %v3611, %v4116
      %v4118 = vpop.f32.mrf.mxu0
      %4119 = vmatprep.mubr.f32.mxu0 0.0
      %4120 = vmatmul.mubr.f32.gmra.mxu0 %v3764
      %v4121 = vpop.f32.mrf.mxu0
      %v4122 = vadd.f32 %v3611, %v4121
      %v4123 = vpop.f32.mrf.mxu0
      %4124 = vmatprep.mubr.f32.mxu0 0.0
      %4125 = vmatmul.mubr.f32.gmra.mxu0 %v3767
      %v4126 = vpop.f32.mrf.mxu0
      %v4127 = vadd.f32 %v3611, %v4126
      %v4128 = vpop.f32.mrf.mxu0
      %4129 = vmatprep.mubr.f32.mxu0 0.0
      %4130 = vmatmul.mubr.f32.gmra.mxu0 %v3770
      %v4131 = vpop.f32.mrf.mxu0
      %v4132 = vadd.f32 %v3611, %v4131
      %v4133 = vpop.f32.mrf.mxu0
      %4134 = vmatprep.mubr.f32.mxu0 0.0
      %4135 = vmatmul.mubr.f32.gmra.mxu0 %v3773
      %v4136 = vpop.f32.mrf.mxu0
      %v4137 = vadd.f32 %v3611, %v4136
      %v4138 = vpop.f32.mrf.mxu0
      %4139 = vmatprep.mubr.f32.mxu0 0.0
      %4140 = vmatmul.mubr.f32.gmra.mxu0 %v3776
      %v4141 = vpop.f32.mrf.mxu0
      %v4142 = vadd.f32 %v3611, %v4141
      %v4143 = vpop.f32.mrf.mxu0
      %4144 = vmatprep.mubr.f32.mxu0 0.0
      %4145 = vmatmul.mubr.f32.gmra.mxu0 %v3779
      %v4146 = vpop.f32.mrf.mxu0
      %v4147 = vadd.f32 %v3611, %v4146
      %v4148 = vpop.f32.mrf.mxu0
      %4149 = vmatprep.mubr.f32.mxu0 0.0
      %4150 = vmatmul.mubr.f32.gmra.mxu0 %v3782
      %v4151 = vpop.f32.mrf.mxu0
      %v4152 = vadd.f32 %v3611, %v4151
      %v4153 = vpop.f32.mrf.mxu0
      %4154 = vmatprep.mubr.f32.mxu0 0.0
      %4155 = vmatmul.mubr.f32.gmra.mxu0 %v3785
      %v4156 = vpop.f32.mrf.mxu0
      %v4157 = vadd.f32 %v3611, %v4156
      %v4158 = vpop.f32.mrf.mxu0
      %4159 = vmatprep.mubr.f32.mxu0 0.0
      %4160 = vmatmul.mubr.f32.gmra.mxu0 %v3788
      %v4161 = vpop.f32.mrf.mxu0
      %v4162 = vadd.f32 %v3611, %v4161
      %v4163 = vpop.f32.mrf.mxu0
      %4164 = vmatprep.mubr.f32.mxu0 0.0
      %4165 = vmatmul.mubr.f32.gmra.mxu0 %v3791
      %v4166 = vpop.f32.mrf.mxu0
      %v4167 = vadd.f32 %v3611, %v4166
      %v4168 = vpop.f32.mrf.mxu0
      %4169 = vmatprep.mubr.f32.mxu0 0.0
      %4170 = vmatmul.mubr.f32.gmra.mxu0 %v3794
      %v4171 = vpop.f32.mrf.mxu0
      %v4172 = vadd.f32 %v3611, %v4171
      %v4173 = vpop.f32.mrf.mxu0
      %4174 = vmatprep.mubr.f32.mxu0 0.0
      %4175 = vmatmul.mubr.f32.gmra.mxu0 %v3797
      %v4176 = vpop.f32.mrf.mxu0
      %v4177 = vadd.f32 %v3611, %v4176
      %v4178 = vpop.f32.mrf.mxu0
      %4179 = vmatprep.mubr.f32.mxu0 0.0
      %4180 = vmatmul.mubr.f32.gmra.mxu0 %v3800
      %v4181 = vpop.f32.mrf.mxu0
      %v4182 = vadd.f32 %v3611, %v4181
      %v4183 = vpop.f32.mrf.mxu0
      %4184 = vmatprep.mubr.f32.mxu0 0.0
      %4185 = vmatmul.mubr.f32.gmra.mxu0 %v3803
      %v4186 = vpop.f32.mrf.mxu0
      %v4187 = vadd.f32 %v3611, %v4186
      %v4188 = vpop.f32.mrf.mxu0
      %4189 = vdwg.mxu0
      %v4190 = vld [vmem:[%s10] sm:$0xff]
      %v4191 = vld [vmem:[%s10 + $0x8] sm:$0xff]
      %v4192 = vld [vmem:[%s10 + $0x10] sm:$0xff]
      %v4193 = vld [vmem:[%s10 + $0x18] sm:$0xff]
      %v4194 = vld [vmem:[%s10 + $0x20] sm:$0xff]
      %v4195 = vld [vmem:[%s10 + $0x28] sm:$0xff]
      %v4196 = vld [vmem:[%s10 + $0x30] sm:$0xff]
      %v4197 = vld [vmem:[%s10 + $0x38] sm:$0xff]
      %v4198 = vld [vmem:[%s11] sm:$0x1]
      %v4200 = vlaneseq
      %v4201 = vshrl.u32 %v4200, 7
      %v4202 = vsub.s32 0, %v4201
      %v4203 = vrot.slane %v4198, %v4202
      %v4206 = vsel %vm1075, %v3872, 0
      %v4209 = vsel %vm1075, %v3877, 0
      %v4212 = vsel %vm1075, %v3882, 0
      %v4215 = vsel %vm1075, %v3887, 0
      %v4218 = vsel %vm1075, %v3892, 0
      %v4221 = vsel %vm1075, %v3897, 0
      %v4224 = vsel %vm1075, %v3902, 0
      %v4227 = vsel %vm1075, %v3907, 0
      %v4230 = vsel %vm1075, %v3912, 0
      %v4233 = vsel %vm1075, %v3917, 0
      %v4236 = vsel %vm1075, %v3922, 0
      %v4239 = vsel %vm1075, %v3927, 0
      %v4242 = vsel %vm1075, %v3932, 0
      %v4245 = vsel %vm1075, %v3937, 0
      %v4248 = vsel %vm1075, %v3942, 0
      %v4251 = vsel %vm1075, %v3947, 0
      %v4254 = vsel %vm1075, %v3952, 0
      %v4257 = vsel %vm1075, %v3957, 0
      %v4260 = vsel %vm1075, %v3962, 0
      %v4263 = vsel %vm1075, %v3967, 0
      %v4266 = vsel %vm1075, %v3972, 0
      %v4269 = vsel %vm1075, %v3977, 0
      %v4272 = vsel %vm1075, %v3982, 0
      %v4275 = vsel %vm1075, %v3987, 0
      %v4278 = vsel %vm1075, %v3992, 0
      %v4281 = vsel %vm1075, %v3997, 0
      %v4284 = vsel %vm1075, %v4002, 0
      %v4287 = vsel %vm1075, %v4007, 0
      %v4290 = vsel %vm1075, %v4012, 0
      %v4293 = vsel %vm1075, %v4017, 0
      %v4296 = vsel %vm1075, %v4022, 0
      %v4299 = vsel %vm1075, %v4027, 0
      %v4302 = vsel %vm1075, %v4032, 0
      %v4305 = vsel %vm1075, %v4037, 0
      %v4308 = vsel %vm1075, %v4042, 0
      %v4311 = vsel %vm1075, %v4047, 0
      %v4314 = vsel %vm1075, %v4052, 0
      %v4317 = vsel %vm1075, %v4057, 0
      %v4320 = vsel %vm1075, %v4062, 0
      %v4323 = vsel %vm1075, %v4067, 0
      %v4326 = vsel %vm1075, %v4072, 0
      %v4329 = vsel %vm1075, %v4077, 0
      %v4332 = vsel %vm1075, %v4082, 0
      %v4335 = vsel %vm1075, %v4087, 0
      %v4338 = vsel %vm1075, %v4092, 0
      %v4341 = vsel %vm1075, %v4097, 0
      %v4344 = vsel %vm1075, %v4102, 0
      %v4347 = vsel %vm1075, %v4107, 0
      %v4350 = vsel %vm1075, %v4112, 0
      %v4353 = vsel %vm1075, %v4117, 0
      %v4356 = vsel %vm1075, %v4122, 0
      %v4359 = vsel %vm1075, %v4127, 0
      %v4362 = vsel %vm1075, %v4132, 0
      %v4365 = vsel %vm1075, %v4137, 0
      %v4368 = vsel %vm1075, %v4142, 0
      %v4371 = vsel %vm1075, %v4147, 0
      %v4374 = vsel %vm1075, %v4152, 0
      %v4377 = vsel %vm1075, %v4157, 0
      %v4380 = vsel %vm1075, %v4162, 0
      %v4383 = vsel %vm1075, %v4167, 0
      %v4386 = vsel %vm1075, %v4172, 0
      %v4389 = vsel %vm1075, %v4177, 0
      %v4392 = vsel %vm1075, %v4182, 0
      %v4395 = vsel %vm1075, %v4187, 0
      %4397 = vmatprep.subr.mxu0 0.0
      %4398 = vmatpush1.msra.mxu0 0.0
      %4399 = vmatprep.subr.mxu0 0.0
      %4400 = vmatpush1.msra.mxu0 0.0
      %4401 = vmatprep.subr.mxu0 0.0
      %4402 = vmatpush1.msra.mxu0 0.0
      %4403 = vmatprep.subr.mxu0 0.0
      %4404 = vmatpush1.msra.mxu0 0.0
      %4405 = vmatprep.subr.mxu0 0.0
      %4406 = vmatpush1.msra.mxu0 0.0
      %4407 = vmatprep.subr.mxu0 0.0
      %4408 = vmatpush1.msra.mxu0 0.0
      %4409 = vmatprep.subr.mxu0 0.0
      %4410 = vmatpush1.msra.mxu0 0.0
      %4411 = vmatprep.subr.mxu0 0.0
      %4412 = vmatpush1.msra.mxu0 0.0
      %4413 = vmatprep.subr.mxu0 0.0
      %4414 = vmatpush1.msra.mxu0 %v4197
      %4415 = vmatprep.subr.mxu0 0.0
      %4416 = vmatpush1.msra.mxu0 %v4196
      %4417 = vmatprep.subr.mxu0 0.0
      %4418 = vmatpush1.msra.mxu0 %v4195
      %4419 = vmatprep.subr.mxu0 0.0
      %4420 = vmatpush1.msra.mxu0 %v4194
      %4421 = vmatprep.subr.mxu0 0.0
      %4422 = vmatpush1.msra.mxu0 %v4193
      %4423 = vmatprep.subr.mxu0 0.0
      %4424 = vmatpush1.msra.mxu0 %v4192
      %4425 = vmatprep.subr.mxu0 0.0
      %4426 = vmatpush1.msra.mxu0 %v4191
      %4427 = vmatprep.subr.mxu0 0.0
      %4428 = vmatpush1.msra.mxu0 %v4190
      %4429 = vmatprep.subr.mxu0 0.0
      %4430 = vmatpush2.msra.mxu0 0.0
      %4431 = vmatprep.subr.mxu0 0.0
      %4432 = vmatpush2.msra.mxu0 0.0
      %4433 = vmatprep.subr.mxu0 0.0
      %4434 = vmatpush2.msra.mxu0 0.0
      %4435 = vmatprep.subr.mxu0 0.0
      %4436 = vmatpush2.msra.mxu0 0.0
      %4437 = vmatprep.subr.mxu0 0.0
      %4438 = vmatpush2.msra.mxu0 0.0
      %4439 = vmatprep.subr.mxu0 0.0
      %4440 = vmatpush2.msra.mxu0 0.0
      %4441 = vmatprep.subr.mxu0 0.0
      %4442 = vmatpush2.msra.mxu0 0.0
      %4443 = vmatprep.subr.mxu0 0.0
      %4444 = vmatpush2.msra.mxu0 0.0
      %4445 = vmatprep.subr.mxu0 0.0
      %4446 = vmatpush2.msra.mxu0 0.0
      %4447 = vmatprep.subr.mxu0 0.0
      %4448 = vmatpush2.msra.mxu0 0.0
      %4449 = vmatprep.subr.mxu0 0.0
      %4450 = vmatpush2.msra.mxu0 0.0
      %4451 = vmatprep.subr.mxu0 0.0
      %4452 = vmatpush2.msra.mxu0 0.0
      %4453 = vmatprep.subr.mxu0 0.0
      %4454 = vmatpush2.msra.mxu0 0.0
      %4455 = vmatprep.subr.mxu0 0.0
      %4456 = vmatpush2.msra.mxu0 0.0
      %4457 = vmatprep.subr.mxu0 0.0
      %4458 = vmatpush2.msra.mxu0 0.0
      %4459 = vmatprep.subr.mxu0 0.0
      %4460 = vmatpush2.msra.mxu0 0.0
      %4461 = vmatprep.mubr.f32.mxu0 0.0
      %4462 = vmatmul.mubr.f32.gmra.mxu0 %v4206
      %v4463 = vpop.f32.mrf.mxu0
      %v4464 = vadd.f32 %v4203, %v4463
      %v4465 = vpop.f32.mrf.mxu0
      %4466 = vmatprep.mubr.f32.mxu0 0.0
      %4467 = vmatmul.mubr.f32.gmra.mxu0 %v4209
      %v4468 = vpop.f32.mrf.mxu0
      %v4469 = vadd.f32 %v4203, %v4468
      %v4470 = vpop.f32.mrf.mxu0
      %4471 = vmatprep.mubr.f32.mxu0 0.0
      %4472 = vmatmul.mubr.f32.gmra.mxu0 %v4212
      %v4473 = vpop.f32.mrf.mxu0
      %v4474 = vadd.f32 %v4203, %v4473
      %v4475 = vpop.f32.mrf.mxu0
      %4476 = vmatprep.mubr.f32.mxu0 0.0
      %4477 = vmatmul.mubr.f32.gmra.mxu0 %v4215
      %v4478 = vpop.f32.mrf.mxu0
      %v4479 = vadd.f32 %v4203, %v4478
      %v4480 = vpop.f32.mrf.mxu0
      %4481 = vmatprep.mubr.f32.mxu0 0.0
      %4482 = vmatmul.mubr.f32.gmra.mxu0 %v4218
      %v4483 = vpop.f32.mrf.mxu0
      %v4484 = vadd.f32 %v4203, %v4483
      %v4485 = vpop.f32.mrf.mxu0
      %4486 = vmatprep.mubr.f32.mxu0 0.0
      %4487 = vmatmul.mubr.f32.gmra.mxu0 %v4221
      %v4488 = vpop.f32.mrf.mxu0
      %v4489 = vadd.f32 %v4203, %v4488
      %v4490 = vpop.f32.mrf.mxu0
      %4491 = vmatprep.mubr.f32.mxu0 0.0
      %4492 = vmatmul.mubr.f32.gmra.mxu0 %v4224
      %v4493 = vpop.f32.mrf.mxu0
      %v4494 = vadd.f32 %v4203, %v4493
      %v4495 = vpop.f32.mrf.mxu0
      %4496 = vmatprep.mubr.f32.mxu0 0.0
      %4497 = vmatmul.mubr.f32.gmra.mxu0 %v4227
      %v4498 = vpop.f32.mrf.mxu0
      %v4499 = vadd.f32 %v4203, %v4498
      %v4500 = vpop.f32.mrf.mxu0
      %4501 = vmatprep.mubr.f32.mxu0 0.0
      %4502 = vmatmul.mubr.f32.gmra.mxu0 %v4230
      %v4503 = vpop.f32.mrf.mxu0
      %v4504 = vadd.f32 %v4203, %v4503
      %v4505 = vpop.f32.mrf.mxu0
      %4506 = vmatprep.mubr.f32.mxu0 0.0
      %4507 = vmatmul.mubr.f32.gmra.mxu0 %v4233
      %v4508 = vpop.f32.mrf.mxu0
      %v4509 = vadd.f32 %v4203, %v4508
      %v4510 = vpop.f32.mrf.mxu0
      %4511 = vmatprep.mubr.f32.mxu0 0.0
      %4512 = vmatmul.mubr.f32.gmra.mxu0 %v4236
      %v4513 = vpop.f32.mrf.mxu0
      %v4514 = vadd.f32 %v4203, %v4513
      %v4515 = vpop.f32.mrf.mxu0
      %4516 = vmatprep.mubr.f32.mxu0 0.0
      %4517 = vmatmul.mubr.f32.gmra.mxu0 %v4239
      %v4518 = vpop.f32.mrf.mxu0
      %v4519 = vadd.f32 %v4203, %v4518
      %v4520 = vpop.f32.mrf.mxu0
      %4521 = vmatprep.mubr.f32.mxu0 0.0
      %4522 = vmatmul.mubr.f32.gmra.mxu0 %v4242
      %v4523 = vpop.f32.mrf.mxu0
      %v4524 = vadd.f32 %v4203, %v4523
      %v4525 = vpop.f32.mrf.mxu0
      %4526 = vmatprep.mubr.f32.mxu0 0.0
      %4527 = vmatmul.mubr.f32.gmra.mxu0 %v4245
      %v4528 = vpop.f32.mrf.mxu0
      %v4529 = vadd.f32 %v4203, %v4528
      %v4530 = vpop.f32.mrf.mxu0
      %4531 = vmatprep.mubr.f32.mxu0 0.0
      %4532 = vmatmul.mubr.f32.gmra.mxu0 %v4248
      %v4533 = vpop.f32.mrf.mxu0
      %v4534 = vadd.f32 %v4203, %v4533
      %v4535 = vpop.f32.mrf.mxu0
      %4536 = vmatprep.mubr.f32.mxu0 0.0
      %4537 = vmatmul.mubr.f32.gmra.mxu0 %v4251
      %v4538 = vpop.f32.mrf.mxu0
      %v4539 = vadd.f32 %v4203, %v4538
      %v4540 = vpop.f32.mrf.mxu0
      %4541 = vmatprep.mubr.f32.mxu0 0.0
      %4542 = vmatmul.mubr.f32.gmra.mxu0 %v4254
      %v4543 = vpop.f32.mrf.mxu0
      %v4544 = vadd.f32 %v4203, %v4543
      %v4545 = vpop.f32.mrf.mxu0
      %4546 = vmatprep.mubr.f32.mxu0 0.0
      %4547 = vmatmul.mubr.f32.gmra.mxu0 %v4257
      %v4548 = vpop.f32.mrf.mxu0
      %v4549 = vadd.f32 %v4203, %v4548
      %v4550 = vpop.f32.mrf.mxu0
      %4551 = vmatprep.mubr.f32.mxu0 0.0
      %4552 = vmatmul.mubr.f32.gmra.mxu0 %v4260
      %v4553 = vpop.f32.mrf.mxu0
      %v4554 = vadd.f32 %v4203, %v4553
      %v4555 = vpop.f32.mrf.mxu0
      %4556 = vmatprep.mubr.f32.mxu0 0.0
      %4557 = vmatmul.mubr.f32.gmra.mxu0 %v4263
      %v4558 = vpop.f32.mrf.mxu0
      %v4559 = vadd.f32 %v4203, %v4558
      %v4560 = vpop.f32.mrf.mxu0
      %4561 = vmatprep.mubr.f32.mxu0 0.0
      %4562 = vmatmul.mubr.f32.gmra.mxu0 %v4266
      %v4563 = vpop.f32.mrf.mxu0
      %v4564 = vadd.f32 %v4203, %v4563
      %v4565 = vpop.f32.mrf.mxu0
      %4566 = vmatprep.mubr.f32.mxu0 0.0
      %4567 = vmatmul.mubr.f32.gmra.mxu0 %v4269
      %v4568 = vpop.f32.mrf.mxu0
      %v4569 = vadd.f32 %v4203, %v4568
      %v4570 = vpop.f32.mrf.mxu0
      %4571 = vmatprep.mubr.f32.mxu0 0.0
      %4572 = vmatmul.mubr.f32.gmra.mxu0 %v4272
      %v4573 = vpop.f32.mrf.mxu0
      %v4574 = vadd.f32 %v4203, %v4573
      %v4575 = vpop.f32.mrf.mxu0
      %4576 = vmatprep.mubr.f32.mxu0 0.0
      %4577 = vmatmul.mubr.f32.gmra.mxu0 %v4275
      %v4578 = vpop.f32.mrf.mxu0
      %v4579 = vadd.f32 %v4203, %v4578
      %v4580 = vpop.f32.mrf.mxu0
      %4581 = vmatprep.mubr.f32.mxu0 0.0
      %4582 = vmatmul.mubr.f32.gmra.mxu0 %v4278
      %v4583 = vpop.f32.mrf.mxu0
      %v4584 = vadd.f32 %v4203, %v4583
      %v4585 = vpop.f32.mrf.mxu0
      %4586 = vmatprep.mubr.f32.mxu0 0.0
      %4587 = vmatmul.mubr.f32.gmra.mxu0 %v4281
      %v4588 = vpop.f32.mrf.mxu0
      %v4589 = vadd.f32 %v4203, %v4588
      %v4590 = vpop.f32.mrf.mxu0
      %4591 = vmatprep.mubr.f32.mxu0 0.0
      %4592 = vmatmul.mubr.f32.gmra.mxu0 %v4284
      %v4593 = vpop.f32.mrf.mxu0
      %v4594 = vadd.f32 %v4203, %v4593
      %v4595 = vpop.f32.mrf.mxu0
      %4596 = vmatprep.mubr.f32.mxu0 0.0
      %4597 = vmatmul.mubr.f32.gmra.mxu0 %v4287
      %v4598 = vpop.f32.mrf.mxu0
      %v4599 = vadd.f32 %v4203, %v4598
      %v4600 = vpop.f32.mrf.mxu0
      %4601 = vmatprep.mubr.f32.mxu0 0.0
      %4602 = vmatmul.mubr.f32.gmra.mxu0 %v4290
      %v4603 = vpop.f32.mrf.mxu0
      %v4604 = vadd.f32 %v4203, %v4603
      %v4605 = vpop.f32.mrf.mxu0
      %4606 = vmatprep.mubr.f32.mxu0 0.0
      %4607 = vmatmul.mubr.f32.gmra.mxu0 %v4293
      %v4608 = vpop.f32.mrf.mxu0
      %v4609 = vadd.f32 %v4203, %v4608
      %v4610 = vpop.f32.mrf.mxu0
      %4611 = vmatprep.mubr.f32.mxu0 0.0
      %4612 = vmatmul.mubr.f32.gmra.mxu0 %v4296
      %v4613 = vpop.f32.mrf.mxu0
      %v4614 = vadd.f32 %v4203, %v4613
      %v4615 = vpop.f32.mrf.mxu0
      %4616 = vmatprep.mubr.f32.mxu0 0.0
      %4617 = vmatmul.mubr.f32.gmra.mxu0 %v4299
      %v4618 = vpop.f32.mrf.mxu0
      %v4619 = vadd.f32 %v4203, %v4618
      %v4620 = vpop.f32.mrf.mxu0
      %4621 = vmatprep.mubr.f32.mxu0 0.0
      %4622 = vmatmul.mubr.f32.gmra.mxu0 %v4302
      %v4623 = vpop.f32.mrf.mxu0
      %v4624 = vadd.f32 %v4203, %v4623
      %v4625 = vpop.f32.mrf.mxu0
      %4626 = vmatprep.mubr.f32.mxu0 0.0
      %4627 = vmatmul.mubr.f32.gmra.mxu0 %v4305
      %v4628 = vpop.f32.mrf.mxu0
      %v4629 = vadd.f32 %v4203, %v4628
      %v4630 = vpop.f32.mrf.mxu0
      %4631 = vmatprep.mubr.f32.mxu0 0.0
      %4632 = vmatmul.mubr.f32.gmra.mxu0 %v4308
      %v4633 = vpop.f32.mrf.mxu0
      %v4634 = vadd.f32 %v4203, %v4633
      %v4635 = vpop.f32.mrf.mxu0
      %4636 = vmatprep.mubr.f32.mxu0 0.0
      %4637 = vmatmul.mubr.f32.gmra.mxu0 %v4311
      %v4638 = vpop.f32.mrf.mxu0
      %v4639 = vadd.f32 %v4203, %v4638
      %v4640 = vpop.f32.mrf.mxu0
      %4641 = vmatprep.mubr.f32.mxu0 0.0
      %4642 = vmatmul.mubr.f32.gmra.mxu0 %v4314
      %v4643 = vpop.f32.mrf.mxu0
      %v4644 = vadd.f32 %v4203, %v4643
      %v4645 = vpop.f32.mrf.mxu0
      %4646 = vmatprep.mubr.f32.mxu0 0.0
      %4647 = vmatmul.mubr.f32.gmra.mxu0 %v4317
      %v4648 = vpop.f32.mrf.mxu0
      %v4649 = vadd.f32 %v4203, %v4648
      %v4650 = vpop.f32.mrf.mxu0
      %4651 = vmatprep.mubr.f32.mxu0 0.0
      %4652 = vmatmul.mubr.f32.gmra.mxu0 %v4320
      %v4653 = vpop.f32.mrf.mxu0
      %v4654 = vadd.f32 %v4203, %v4653
      %v4655 = vpop.f32.mrf.mxu0
      %4656 = vmatprep.mubr.f32.mxu0 0.0
      %4657 = vmatmul.mubr.f32.gmra.mxu0 %v4323
      %v4658 = vpop.f32.mrf.mxu0
      %v4659 = vadd.f32 %v4203, %v4658
      %v4660 = vpop.f32.mrf.mxu0
      %4661 = vmatprep.mubr.f32.mxu0 0.0
      %4662 = vmatmul.mubr.f32.gmra.mxu0 %v4326
      %v4663 = vpop.f32.mrf.mxu0
      %v4664 = vadd.f32 %v4203, %v4663
      %v4665 = vpop.f32.mrf.mxu0
      %4666 = vmatprep.mubr.f32.mxu0 0.0
      %4667 = vmatmul.mubr.f32.gmra.mxu0 %v4329
      %v4668 = vpop.f32.mrf.mxu0
      %v4669 = vadd.f32 %v4203, %v4668
      %v4670 = vpop.f32.mrf.mxu0
      %4671 = vmatprep.mubr.f32.mxu0 0.0
      %4672 = vmatmul.mubr.f32.gmra.mxu0 %v4332
      %v4673 = vpop.f32.mrf.mxu0
      %v4674 = vadd.f32 %v4203, %v4673
      %v4675 = vpop.f32.mrf.mxu0
      %4676 = vmatprep.mubr.f32.mxu0 0.0
      %4677 = vmatmul.mubr.f32.gmra.mxu0 %v4335
      %v4678 = vpop.f32.mrf.mxu0
      %v4679 = vadd.f32 %v4203, %v4678
      %v4680 = vpop.f32.mrf.mxu0
      %4681 = vmatprep.mubr.f32.mxu0 0.0
      %4682 = vmatmul.mubr.f32.gmra.mxu0 %v4338
      %v4683 = vpop.f32.mrf.mxu0
      %v4684 = vadd.f32 %v4203, %v4683
      %v4685 = vpop.f32.mrf.mxu0
      %4686 = vmatprep.mubr.f32.mxu0 0.0
      %4687 = vmatmul.mubr.f32.gmra.mxu0 %v4341
      %v4688 = vpop.f32.mrf.mxu0
      %v4689 = vadd.f32 %v4203, %v4688
      %v4690 = vpop.f32.mrf.mxu0
      %4691 = vmatprep.mubr.f32.mxu0 0.0
      %4692 = vmatmul.mubr.f32.gmra.mxu0 %v4344
      %v4693 = vpop.f32.mrf.mxu0
      %v4694 = vadd.f32 %v4203, %v4693
      %v4695 = vpop.f32.mrf.mxu0
      %4696 = vmatprep.mubr.f32.mxu0 0.0
      %4697 = vmatmul.mubr.f32.gmra.mxu0 %v4347
      %v4698 = vpop.f32.mrf.mxu0
      %v4699 = vadd.f32 %v4203, %v4698
      %v4700 = vpop.f32.mrf.mxu0
      %4701 = vmatprep.mubr.f32.mxu0 0.0
      %4702 = vmatmul.mubr.f32.gmra.mxu0 %v4350
      %v4703 = vpop.f32.mrf.mxu0
      %v4704 = vadd.f32 %v4203, %v4703
      %v4705 = vpop.f32.mrf.mxu0
      %4706 = vmatprep.mubr.f32.mxu0 0.0
      %4707 = vmatmul.mubr.f32.gmra.mxu0 %v4353
      %v4708 = vpop.f32.mrf.mxu0
      %v4709 = vadd.f32 %v4203, %v4708
      %v4710 = vpop.f32.mrf.mxu0
      %4711 = vmatprep.mubr.f32.mxu0 0.0
      %4712 = vmatmul.mubr.f32.gmra.mxu0 %v4356
      %v4713 = vpop.f32.mrf.mxu0
      %v4714 = vadd.f32 %v4203, %v4713
      %v4715 = vpop.f32.mrf.mxu0
      %4716 = vmatprep.mubr.f32.mxu0 0.0
      %4717 = vmatmul.mubr.f32.gmra.mxu0 %v4359
      %v4718 = vpop.f32.mrf.mxu0
      %v4719 = vadd.f32 %v4203, %v4718
      %v4720 = vpop.f32.mrf.mxu0
      %4721 = vmatprep.mubr.f32.mxu0 0.0
      %4722 = vmatmul.mubr.f32.gmra.mxu0 %v4362
      %v4723 = vpop.f32.mrf.mxu0
      %v4724 = vadd.f32 %v4203, %v4723
      %v4725 = vpop.f32.mrf.mxu0
      %4726 = vmatprep.mubr.f32.mxu0 0.0
      %4727 = vmatmul.mubr.f32.gmra.mxu0 %v4365
      %v4728 = vpop.f32.mrf.mxu0
      %v4729 = vadd.f32 %v4203, %v4728
      %v4730 = vpop.f32.mrf.mxu0
      %4731 = vmatprep.mubr.f32.mxu0 0.0
      %4732 = vmatmul.mubr.f32.gmra.mxu0 %v4368
      %v4733 = vpop.f32.mrf.mxu0
      %v4734 = vadd.f32 %v4203, %v4733
      %v4735 = vpop.f32.mrf.mxu0
      %4736 = vmatprep.mubr.f32.mxu0 0.0
      %4737 = vmatmul.mubr.f32.gmra.mxu0 %v4371
      %v4738 = vpop.f32.mrf.mxu0
      %v4739 = vadd.f32 %v4203, %v4738
      %v4740 = vpop.f32.mrf.mxu0
      %4741 = vmatprep.mubr.f32.mxu0 0.0
      %4742 = vmatmul.mubr.f32.gmra.mxu0 %v4374
      %v4743 = vpop.f32.mrf.mxu0
      %v4744 = vadd.f32 %v4203, %v4743
      %v4745 = vpop.f32.mrf.mxu0
      %4746 = vmatprep.mubr.f32.mxu0 0.0
      %4747 = vmatmul.mubr.f32.gmra.mxu0 %v4377
      %v4748 = vpop.f32.mrf.mxu0
      %v4749 = vadd.f32 %v4203, %v4748
      %v4750 = vpop.f32.mrf.mxu0
      %4751 = vmatprep.mubr.f32.mxu0 0.0
      %4752 = vmatmul.mubr.f32.gmra.mxu0 %v4380
      %v4753 = vpop.f32.mrf.mxu0
      %v4754 = vadd.f32 %v4203, %v4753
      %v4755 = vpop.f32.mrf.mxu0
      %4756 = vmatprep.mubr.f32.mxu0 0.0
      %4757 = vmatmul.mubr.f32.gmra.mxu0 %v4383
      %v4758 = vpop.f32.mrf.mxu0
      %v4759 = vadd.f32 %v4203, %v4758
      %v4760 = vpop.f32.mrf.mxu0
      %4761 = vmatprep.mubr.f32.mxu0 0.0
      %4762 = vmatmul.mubr.f32.gmra.mxu0 %v4386
      %v4763 = vpop.f32.mrf.mxu0
      %v4764 = vadd.f32 %v4203, %v4763
      %v4765 = vpop.f32.mrf.mxu0
      %4766 = vmatprep.mubr.f32.mxu0 0.0
      %4767 = vmatmul.mubr.f32.gmra.mxu0 %v4389
      %v4768 = vpop.f32.mrf.mxu0
      %v4769 = vadd.f32 %v4203, %v4768
      %v4770 = vpop.f32.mrf.mxu0
      %4771 = vmatprep.mubr.f32.mxu0 0.0
      %4772 = vmatmul.mubr.f32.gmra.mxu0 %v4392
      %v4773 = vpop.f32.mrf.mxu0
      %v4774 = vadd.f32 %v4203, %v4773
      %v4775 = vpop.f32.mrf.mxu0
      %4776 = vmatprep.mubr.f32.mxu0 0.0
      %4777 = vmatmul.mubr.f32.gmra.mxu0 %v4395
      %v4778 = vpop.f32.mrf.mxu0
      %v4779 = vadd.f32 %v4203, %v4778
      %v4780 = vpop.f32.mrf.mxu0
      %4781 = vdwg.mxu0
      %v4782 = vmax.f32 %v4464, 0.0
      %v4783 = vmax.f32 %v4469, 0.0
      %v4784 = vmax.f32 %v4474, 0.0
      %v4785 = vmax.f32 %v4479, 0.0
      %v4786 = vmax.f32 %v4484, 0.0
      %v4787 = vmax.f32 %v4489, 0.0
      %v4788 = vmax.f32 %v4494, 0.0
      %v4789 = vmax.f32 %v4499, 0.0
      %v4790 = vmax.f32 %v4504, 0.0
      %v4791 = vmax.f32 %v4509, 0.0
      %v4792 = vmax.f32 %v4514, 0.0
      %v4793 = vmax.f32 %v4519, 0.0
      %v4794 = vmax.f32 %v4524, 0.0
      %v4795 = vmax.f32 %v4529, 0.0
      %v4796 = vmax.f32 %v4534, 0.0
      %v4797 = vmax.f32 %v4539, 0.0
      %v4798 = vmax.f32 %v4544, 0.0
      %v4799 = vmax.f32 %v4549, 0.0
      %v4800 = vmax.f32 %v4554, 0.0
      %v4801 = vmax.f32 %v4559, 0.0
      %v4802 = vmax.f32 %v4564, 0.0
      %v4803 = vmax.f32 %v4569, 0.0
      %v4804 = vmax.f32 %v4574, 0.0
      %v4805 = vmax.f32 %v4579, 0.0
      %v4806 = vmax.f32 %v4584, 0.0
      %v4807 = vmax.f32 %v4589, 0.0
      %v4808 = vmax.f32 %v4594, 0.0
      %v4809 = vmax.f32 %v4599, 0.0
      %v4810 = vmax.f32 %v4604, 0.0
      %v4811 = vmax.f32 %v4609, 0.0
      %v4812 = vmax.f32 %v4614, 0.0
      %v4813 = vmax.f32 %v4619, 0.0
      %v4814 = vmax.f32 %v4624, 0.0
      %v4815 = vmax.f32 %v4629, 0.0
      %v4816 = vmax.f32 %v4634, 0.0
      %v4817 = vmax.f32 %v4639, 0.0
      %v4818 = vmax.f32 %v4644, 0.0
      %v4819 = vmax.f32 %v4649, 0.0
      %v4820 = vmax.f32 %v4654, 0.0
      %v4821 = vmax.f32 %v4659, 0.0
      %v4822 = vmax.f32 %v4664, 0.0
      %v4823 = vmax.f32 %v4669, 0.0
      %v4824 = vmax.f32 %v4674, 0.0
      %v4825 = vmax.f32 %v4679, 0.0
      %v4826 = vmax.f32 %v4684, 0.0
      %v4827 = vmax.f32 %v4689, 0.0
      %v4828 = vmax.f32 %v4694, 0.0
      %v4829 = vmax.f32 %v4699, 0.0
      %v4830 = vmax.f32 %v4704, 0.0
      %v4831 = vmax.f32 %v4709, 0.0
      %v4832 = vmax.f32 %v4714, 0.0
      %v4833 = vmax.f32 %v4719, 0.0
      %v4834 = vmax.f32 %v4724, 0.0
      %v4835 = vmax.f32 %v4729, 0.0
      %v4836 = vmax.f32 %v4734, 0.0
      %v4837 = vmax.f32 %v4739, 0.0
      %v4838 = vmax.f32 %v4744, 0.0
      %v4839 = vmax.f32 %v4749, 0.0
      %v4840 = vmax.f32 %v4754, 0.0
      %v4841 = vmax.f32 %v4759, 0.0
      %v4842 = vmax.f32 %v4764, 0.0
      %v4843 = vmax.f32 %v4769, 0.0
      %v4844 = vmax.f32 %v4774, 0.0
      %v4845 = vmax.f32 %v4779, 0.0
      %v4846 = vld [vmem:[%s12] sm:$0xff]
      %v4847 = vld [vmem:[%s12 + $0x8] sm:$0xff]
      %v4848 = vld [vmem:[%s12 + $0x10] sm:$0xff]
      %v4849 = vld [vmem:[%s12 + $0x18] sm:$0xff]
      %v4850 = vld [vmem:[%s12 + $0x20] sm:$0xff]
      %v4851 = vld [vmem:[%s12 + $0x28] sm:$0xff]
      %v4852 = vld [vmem:[%s12 + $0x30] sm:$0xff]
      %v4853 = vld [vmem:[%s12 + $0x38] sm:$0xff]
      %v4854 = vld [vmem:[%s13] sm:$0x1]
      %v4856 = vlaneseq
      %v4857 = vshrl.u32 %v4856, 7
      %v4858 = vsub.s32 0, %v4857
      %v4859 = vrot.slane %v4854, %v4858
      %v4862 = vsel %vm1075, %v4782, 0
      %v4865 = vsel %vm1075, %v4783, 0
      %v4868 = vsel %vm1075, %v4784, 0
      %v4871 = vsel %vm1075, %v4785, 0
      %v4874 = vsel %vm1075, %v4786, 0
      %v4877 = vsel %vm1075, %v4787, 0
      %v4880 = vsel %vm1075, %v4788, 0
      %v4883 = vsel %vm1075, %v4789, 0
      %v4886 = vsel %vm1075, %v4790, 0
      %v4889 = vsel %vm1075, %v4791, 0
      %v4892 = vsel %vm1075, %v4792, 0
      %v4895 = vsel %vm1075, %v4793, 0
      %v4898 = vsel %vm1075, %v4794, 0
      %v4901 = vsel %vm1075, %v4795, 0
      %v4904 = vsel %vm1075, %v4796, 0
      %v4907 = vsel %vm1075, %v4797, 0
      %v4910 = vsel %vm1075, %v4798, 0
      %v4913 = vsel %vm1075, %v4799, 0
      %v4916 = vsel %vm1075, %v4800, 0
      %v4919 = vsel %vm1075, %v4801, 0
      %v4922 = vsel %vm1075, %v4802, 0
      %v4925 = vsel %vm1075, %v4803, 0
      %v4928 = vsel %vm1075, %v4804, 0
      %v4931 = vsel %vm1075, %v4805, 0
      %v4934 = vsel %vm1075, %v4806, 0
      %v4937 = vsel %vm1075, %v4807, 0
      %v4940 = vsel %vm1075, %v4808, 0
      %v4943 = vsel %vm1075, %v4809, 0
      %v4946 = vsel %vm1075, %v4810, 0
      %v4949 = vsel %vm1075, %v4811, 0
      %v4952 = vsel %vm1075, %v4812, 0
      %v4955 = vsel %vm1075, %v4813, 0
      %v4958 = vsel %vm1075, %v4814, 0
      %v4961 = vsel %vm1075, %v4815, 0
      %v4964 = vsel %vm1075, %v4816, 0
      %v4967 = vsel %vm1075, %v4817, 0
      %v4970 = vsel %vm1075, %v4818, 0
      %v4973 = vsel %vm1075, %v4819, 0
      %v4976 = vsel %vm1075, %v4820, 0
      %v4979 = vsel %vm1075, %v4821, 0
      %v4982 = vsel %vm1075, %v4822, 0
      %v4985 = vsel %vm1075, %v4823, 0
      %v4988 = vsel %vm1075, %v4824, 0
      %v4991 = vsel %vm1075, %v4825, 0
      %v4994 = vsel %vm1075, %v4826, 0
      %v4997 = vsel %vm1075, %v4827, 0
      %v5000 = vsel %vm1075, %v4828, 0
      %v5003 = vsel %vm1075, %v4829, 0
      %v5006 = vsel %vm1075, %v4830, 0
      %v5009 = vsel %vm1075, %v4831, 0
      %v5012 = vsel %vm1075, %v4832, 0
      %v5015 = vsel %vm1075, %v4833, 0
      %v5018 = vsel %vm1075, %v4834, 0
      %v5021 = vsel %vm1075, %v4835, 0
      %v5024 = vsel %vm1075, %v4836, 0
      %v5027 = vsel %vm1075, %v4837, 0
      %v5030 = vsel %vm1075, %v4838, 0
      %v5033 = vsel %vm1075, %v4839, 0
      %v5036 = vsel %vm1075, %v4840, 0
      %v5039 = vsel %vm1075, %v4841, 0
      %v5042 = vsel %vm1075, %v4842, 0
      %v5045 = vsel %vm1075, %v4843, 0
      %v5048 = vsel %vm1075, %v4844, 0
      %v5051 = vsel %vm1075, %v4845, 0
      %5053 = vmatprep.subr.mxu0 0.0
      %5054 = vmatpush1.msra.mxu0 0.0
      %5055 = vmatprep.subr.mxu0 0.0
      %5056 = vmatpush1.msra.mxu0 0.0
      %5057 = vmatprep.subr.mxu0 0.0
      %5058 = vmatpush1.msra.mxu0 0.0
      %5059 = vmatprep.subr.mxu0 0.0
      %5060 = vmatpush1.msra.mxu0 0.0
      %5061 = vmatprep.subr.mxu0 0.0
      %5062 = vmatpush1.msra.mxu0 0.0
      %5063 = vmatprep.subr.mxu0 0.0
      %5064 = vmatpush1.msra.mxu0 0.0
      %5065 = vmatprep.subr.mxu0 0.0
      %5066 = vmatpush1.msra.mxu0 0.0
      %5067 = vmatprep.subr.mxu0 0.0
      %5068 = vmatpush1.msra.mxu0 0.0
      %5069 = vmatprep.subr.mxu0 0.0
      %5070 = vmatpush1.msra.mxu0 %v4853
      %5071 = vmatprep.subr.mxu0 0.0
      %5072 = vmatpush1.msra.mxu0 %v4852
      %5073 = vmatprep.subr.mxu0 0.0
      %5074 = vmatpush1.msra.mxu0 %v4851
      %5075 = vmatprep.subr.mxu0 0.0
      %5076 = vmatpush1.msra.mxu0 %v4850
      %5077 = vmatprep.subr.mxu0 0.0
      %5078 = vmatpush1.msra.mxu0 %v4849
      %5079 = vmatprep.subr.mxu0 0.0
      %5080 = vmatpush1.msra.mxu0 %v4848
      %5081 = vmatprep.subr.mxu0 0.0
      %5082 = vmatpush1.msra.mxu0 %v4847
      %5083 = vmatprep.subr.mxu0 0.0
      %5084 = vmatpush1.msra.mxu0 %v4846
      %5085 = vmatprep.subr.mxu0 0.0
      %5086 = vmatpush2.msra.mxu0 0.0
      %5087 = vmatprep.subr.mxu0 0.0
      %5088 = vmatpush2.msra.mxu0 0.0
      %5089 = vmatprep.subr.mxu0 0.0
      %5090 = vmatpush2.msra.mxu0 0.0
      %5091 = vmatprep.subr.mxu0 0.0
      %5092 = vmatpush2.msra.mxu0 0.0
      %5093 = vmatprep.subr.mxu0 0.0
      %5094 = vmatpush2.msra.mxu0 0.0
      %5095 = vmatprep.subr.mxu0 0.0
      %5096 = vmatpush2.msra.mxu0 0.0
      %5097 = vmatprep.subr.mxu0 0.0
      %5098 = vmatpush2.msra.mxu0 0.0
      %5099 = vmatprep.subr.mxu0 0.0
      %5100 = vmatpush2.msra.mxu0 0.0
      %5101 = vmatprep.subr.mxu0 0.0
      %5102 = vmatpush2.msra.mxu0 0.0
      %5103 = vmatprep.subr.mxu0 0.0
      %5104 = vmatpush2.msra.mxu0 0.0
      %5105 = vmatprep.subr.mxu0 0.0
      %5106 = vmatpush2.msra.mxu0 0.0
      %5107 = vmatprep.subr.mxu0 0.0
      %5108 = vmatpush2.msra.mxu0 0.0
      %5109 = vmatprep.subr.mxu0 0.0
      %5110 = vmatpush2.msra.mxu0 0.0
      %5111 = vmatprep.subr.mxu0 0.0
      %5112 = vmatpush2.msra.mxu0 0.0
      %5113 = vmatprep.subr.mxu0 0.0
      %5114 = vmatpush2.msra.mxu0 0.0
      %5115 = vmatprep.subr.mxu0 0.0
      %5116 = vmatpush2.msra.mxu0 0.0
      %5117 = vmatprep.mubr.f32.mxu0 0.0
      %5118 = vmatmul.mubr.f32.gmra.mxu0 %v4862
      %v5119 = vpop.f32.mrf.mxu0
      %v5120 = vadd.f32 %v4859, %v5119
      %v5121 = vpop.f32.mrf.mxu0
      %5122 = vmatprep.mubr.f32.mxu0 0.0
      %5123 = vmatmul.mubr.f32.gmra.mxu0 %v4865
      %v5124 = vpop.f32.mrf.mxu0
      %v5125 = vadd.f32 %v4859, %v5124
      %v5126 = vpop.f32.mrf.mxu0
      %5127 = vmatprep.mubr.f32.mxu0 0.0
      %5128 = vmatmul.mubr.f32.gmra.mxu0 %v4868
      %v5129 = vpop.f32.mrf.mxu0
      %v5130 = vadd.f32 %v4859, %v5129
      %v5131 = vpop.f32.mrf.mxu0
      %5132 = vmatprep.mubr.f32.mxu0 0.0
      %5133 = vmatmul.mubr.f32.gmra.mxu0 %v4871
      %v5134 = vpop.f32.mrf.mxu0
      %v5135 = vadd.f32 %v4859, %v5134
      %v5136 = vpop.f32.mrf.mxu0
      %5137 = vmatprep.mubr.f32.mxu0 0.0
      %5138 = vmatmul.mubr.f32.gmra.mxu0 %v4874
      %v5139 = vpop.f32.mrf.mxu0
      %v5140 = vadd.f32 %v4859, %v5139
      %v5141 = vpop.f32.mrf.mxu0
      %5142 = vmatprep.mubr.f32.mxu0 0.0
      %5143 = vmatmul.mubr.f32.gmra.mxu0 %v4877
      %v5144 = vpop.f32.mrf.mxu0
      %v5145 = vadd.f32 %v4859, %v5144
      %v5146 = vpop.f32.mrf.mxu0
      %5147 = vmatprep.mubr.f32.mxu0 0.0
      %5148 = vmatmul.mubr.f32.gmra.mxu0 %v4880
      %v5149 = vpop.f32.mrf.mxu0
      %v5150 = vadd.f32 %v4859, %v5149
      %v5151 = vpop.f32.mrf.mxu0
      %5152 = vmatprep.mubr.f32.mxu0 0.0
      %5153 = vmatmul.mubr.f32.gmra.mxu0 %v4883
      %v5154 = vpop.f32.mrf.mxu0
      %v5155 = vadd.f32 %v4859, %v5154
      %v5156 = vpop.f32.mrf.mxu0
      %5157 = vmatprep.mubr.f32.mxu0 0.0
      %5158 = vmatmul.mubr.f32.gmra.mxu0 %v4886
      %v5159 = vpop.f32.mrf.mxu0
      %v5160 = vadd.f32 %v4859, %v5159
      %v5161 = vpop.f32.mrf.mxu0
      %5162 = vmatprep.mubr.f32.mxu0 0.0
      %5163 = vmatmul.mubr.f32.gmra.mxu0 %v4889
      %v5164 = vpop.f32.mrf.mxu0
      %v5165 = vadd.f32 %v4859, %v5164
      %v5166 = vpop.f32.mrf.mxu0
      %5167 = vmatprep.mubr.f32.mxu0 0.0
      %5168 = vmatmul.mubr.f32.gmra.mxu0 %v4892
      %v5169 = vpop.f32.mrf.mxu0
      %v5170 = vadd.f32 %v4859, %v5169
      %v5171 = vpop.f32.mrf.mxu0
      %5172 = vmatprep.mubr.f32.mxu0 0.0
      %5173 = vmatmul.mubr.f32.gmra.mxu0 %v4895
      %v5174 = vpop.f32.mrf.mxu0
      %v5175 = vadd.f32 %v4859, %v5174
      %v5176 = vpop.f32.mrf.mxu0
      %5177 = vmatprep.mubr.f32.mxu0 0.0
      %5178 = vmatmul.mubr.f32.gmra.mxu0 %v4898
      %v5179 = vpop.f32.mrf.mxu0
      %v5180 = vadd.f32 %v4859, %v5179
      %v5181 = vpop.f32.mrf.mxu0
      %5182 = vmatprep.mubr.f32.mxu0 0.0
      %5183 = vmatmul.mubr.f32.gmra.mxu0 %v4901
      %v5184 = vpop.f32.mrf.mxu0
      %v5185 = vadd.f32 %v4859, %v5184
      %v5186 = vpop.f32.mrf.mxu0
      %5187 = vmatprep.mubr.f32.mxu0 0.0
      %5188 = vmatmul.mubr.f32.gmra.mxu0 %v4904
      %v5189 = vpop.f32.mrf.mxu0
      %v5190 = vadd.f32 %v4859, %v5189
      %v5191 = vpop.f32.mrf.mxu0
      %5192 = vmatprep.mubr.f32.mxu0 0.0
      %5193 = vmatmul.mubr.f32.gmra.mxu0 %v4907
      %v5194 = vpop.f32.mrf.mxu0
      %v5195 = vadd.f32 %v4859, %v5194
      %v5196 = vpop.f32.mrf.mxu0
      %5197 = vmatprep.mubr.f32.mxu0 0.0
      %5198 = vmatmul.mubr.f32.gmra.mxu0 %v4910
      %v5199 = vpop.f32.mrf.mxu0
      %v5200 = vadd.f32 %v4859, %v5199
      %v5201 = vpop.f32.mrf.mxu0
      %5202 = vmatprep.mubr.f32.mxu0 0.0
      %5203 = vmatmul.mubr.f32.gmra.mxu0 %v4913
      %v5204 = vpop.f32.mrf.mxu0
      %v5205 = vadd.f32 %v4859, %v5204
      %v5206 = vpop.f32.mrf.mxu0
      %5207 = vmatprep.mubr.f32.mxu0 0.0
      %5208 = vmatmul.mubr.f32.gmra.mxu0 %v4916
      %v5209 = vpop.f32.mrf.mxu0
      %v5210 = vadd.f32 %v4859, %v5209
      %v5211 = vpop.f32.mrf.mxu0
      %5212 = vmatprep.mubr.f32.mxu0 0.0
      %5213 = vmatmul.mubr.f32.gmra.mxu0 %v4919
      %v5214 = vpop.f32.mrf.mxu0
      %v5215 = vadd.f32 %v4859, %v5214
      %v5216 = vpop.f32.mrf.mxu0
      %5217 = vmatprep.mubr.f32.mxu0 0.0
      %5218 = vmatmul.mubr.f32.gmra.mxu0 %v4922
      %v5219 = vpop.f32.mrf.mxu0
      %v5220 = vadd.f32 %v4859, %v5219
      %v5221 = vpop.f32.mrf.mxu0
      %5222 = vmatprep.mubr.f32.mxu0 0.0
      %5223 = vmatmul.mubr.f32.gmra.mxu0 %v4925
      %v5224 = vpop.f32.mrf.mxu0
      %v5225 = vadd.f32 %v4859, %v5224
      %v5226 = vpop.f32.mrf.mxu0
      %5227 = vmatprep.mubr.f32.mxu0 0.0
      %5228 = vmatmul.mubr.f32.gmra.mxu0 %v4928
      %v5229 = vpop.f32.mrf.mxu0
      %v5230 = vadd.f32 %v4859, %v5229
      %v5231 = vpop.f32.mrf.mxu0
      %5232 = vmatprep.mubr.f32.mxu0 0.0
      %5233 = vmatmul.mubr.f32.gmra.mxu0 %v4931
      %v5234 = vpop.f32.mrf.mxu0
      %v5235 = vadd.f32 %v4859, %v5234
      %v5236 = vpop.f32.mrf.mxu0
      %5237 = vmatprep.mubr.f32.mxu0 0.0
      %5238 = vmatmul.mubr.f32.gmra.mxu0 %v4934
      %v5239 = vpop.f32.mrf.mxu0
      %v5240 = vadd.f32 %v4859, %v5239
      %v5241 = vpop.f32.mrf.mxu0
      %5242 = vmatprep.mubr.f32.mxu0 0.0
      %5243 = vmatmul.mubr.f32.gmra.mxu0 %v4937
      %v5244 = vpop.f32.mrf.mxu0
      %v5245 = vadd.f32 %v4859, %v5244
      %v5246 = vpop.f32.mrf.mxu0
      %5247 = vmatprep.mubr.f32.mxu0 0.0
      %5248 = vmatmul.mubr.f32.gmra.mxu0 %v4940
      %v5249 = vpop.f32.mrf.mxu0
      %v5250 = vadd.f32 %v4859, %v5249
      %v5251 = vpop.f32.mrf.mxu0
      %5252 = vmatprep.mubr.f32.mxu0 0.0
      %5253 = vmatmul.mubr.f32.gmra.mxu0 %v4943
      %v5254 = vpop.f32.mrf.mxu0
      %v5255 = vadd.f32 %v4859, %v5254
      %v5256 = vpop.f32.mrf.mxu0
      %5257 = vmatprep.mubr.f32.mxu0 0.0
      %5258 = vmatmul.mubr.f32.gmra.mxu0 %v4946
      %v5259 = vpop.f32.mrf.mxu0
      %v5260 = vadd.f32 %v4859, %v5259
      %v5261 = vpop.f32.mrf.mxu0
      %5262 = vmatprep.mubr.f32.mxu0 0.0
      %5263 = vmatmul.mubr.f32.gmra.mxu0 %v4949
      %v5264 = vpop.f32.mrf.mxu0
      %v5265 = vadd.f32 %v4859, %v5264
      %v5266 = vpop.f32.mrf.mxu0
      %5267 = vmatprep.mubr.f32.mxu0 0.0
      %5268 = vmatmul.mubr.f32.gmra.mxu0 %v4952
      %v5269 = vpop.f32.mrf.mxu0
      %v5270 = vadd.f32 %v4859, %v5269
      %v5271 = vpop.f32.mrf.mxu0
      %5272 = vmatprep.mubr.f32.mxu0 0.0
      %5273 = vmatmul.mubr.f32.gmra.mxu0 %v4955
      %v5274 = vpop.f32.mrf.mxu0
      %v5275 = vadd.f32 %v4859, %v5274
      %v5276 = vpop.f32.mrf.mxu0
      %5277 = vmatprep.mubr.f32.mxu0 0.0
      %5278 = vmatmul.mubr.f32.gmra.mxu0 %v4958
      %v5279 = vpop.f32.mrf.mxu0
      %v5280 = vadd.f32 %v4859, %v5279
      %v5281 = vpop.f32.mrf.mxu0
      %5282 = vmatprep.mubr.f32.mxu0 0.0
      %5283 = vmatmul.mubr.f32.gmra.mxu0 %v4961
      %v5284 = vpop.f32.mrf.mxu0
      %v5285 = vadd.f32 %v4859, %v5284
      %v5286 = vpop.f32.mrf.mxu0
      %5287 = vmatprep.mubr.f32.mxu0 0.0
      %5288 = vmatmul.mubr.f32.gmra.mxu0 %v4964
      %v5289 = vpop.f32.mrf.mxu0
      %v5290 = vadd.f32 %v4859, %v5289
      %v5291 = vpop.f32.mrf.mxu0
      %5292 = vmatprep.mubr.f32.mxu0 0.0
      %5293 = vmatmul.mubr.f32.gmra.mxu0 %v4967
      %v5294 = vpop.f32.mrf.mxu0
      %v5295 = vadd.f32 %v4859, %v5294
      %v5296 = vpop.f32.mrf.mxu0
      %5297 = vmatprep.mubr.f32.mxu0 0.0
      %5298 = vmatmul.mubr.f32.gmra.mxu0 %v4970
      %v5299 = vpop.f32.mrf.mxu0
      %v5300 = vadd.f32 %v4859, %v5299
      %v5301 = vpop.f32.mrf.mxu0
      %5302 = vmatprep.mubr.f32.mxu0 0.0
      %5303 = vmatmul.mubr.f32.gmra.mxu0 %v4973
      %v5304 = vpop.f32.mrf.mxu0
      %v5305 = vadd.f32 %v4859, %v5304
      %v5306 = vpop.f32.mrf.mxu0
      %5307 = vmatprep.mubr.f32.mxu0 0.0
      %5308 = vmatmul.mubr.f32.gmra.mxu0 %v4976
      %v5309 = vpop.f32.mrf.mxu0
      %v5310 = vadd.f32 %v4859, %v5309
      %v5311 = vpop.f32.mrf.mxu0
      %5312 = vmatprep.mubr.f32.mxu0 0.0
      %5313 = vmatmul.mubr.f32.gmra.mxu0 %v4979
      %v5314 = vpop.f32.mrf.mxu0
      %v5315 = vadd.f32 %v4859, %v5314
      %v5316 = vpop.f32.mrf.mxu0
      %5317 = vmatprep.mubr.f32.mxu0 0.0
      %5318 = vmatmul.mubr.f32.gmra.mxu0 %v4982
      %v5319 = vpop.f32.mrf.mxu0
      %v5320 = vadd.f32 %v4859, %v5319
      %v5321 = vpop.f32.mrf.mxu0
      %5322 = vmatprep.mubr.f32.mxu0 0.0
      %5323 = vmatmul.mubr.f32.gmra.mxu0 %v4985
      %v5324 = vpop.f32.mrf.mxu0
      %v5325 = vadd.f32 %v4859, %v5324
      %v5326 = vpop.f32.mrf.mxu0
      %5327 = vmatprep.mubr.f32.mxu0 0.0
      %5328 = vmatmul.mubr.f32.gmra.mxu0 %v4988
      %v5329 = vpop.f32.mrf.mxu0
      %v5330 = vadd.f32 %v4859, %v5329
      %v5331 = vpop.f32.mrf.mxu0
      %5332 = vmatprep.mubr.f32.mxu0 0.0
      %5333 = vmatmul.mubr.f32.gmra.mxu0 %v4991
      %v5334 = vpop.f32.mrf.mxu0
      %v5335 = vadd.f32 %v4859, %v5334
      %v5336 = vpop.f32.mrf.mxu0
      %5337 = vmatprep.mubr.f32.mxu0 0.0
      %5338 = vmatmul.mubr.f32.gmra.mxu0 %v4994
      %v5339 = vpop.f32.mrf.mxu0
      %v5340 = vadd.f32 %v4859, %v5339
      %v5341 = vpop.f32.mrf.mxu0
      %5342 = vmatprep.mubr.f32.mxu0 0.0
      %5343 = vmatmul.mubr.f32.gmra.mxu0 %v4997
      %v5344 = vpop.f32.mrf.mxu0
      %v5345 = vadd.f32 %v4859, %v5344
      %v5346 = vpop.f32.mrf.mxu0
      %5347 = vmatprep.mubr.f32.mxu0 0.0
      %5348 = vmatmul.mubr.f32.gmra.mxu0 %v5000
      %v5349 = vpop.f32.mrf.mxu0
      %v5350 = vadd.f32 %v4859, %v5349
      %v5351 = vpop.f32.mrf.mxu0
      %5352 = vmatprep.mubr.f32.mxu0 0.0
      %5353 = vmatmul.mubr.f32.gmra.mxu0 %v5003
      %v5354 = vpop.f32.mrf.mxu0
      %v5355 = vadd.f32 %v4859, %v5354
      %v5356 = vpop.f32.mrf.mxu0
      %5357 = vmatprep.mubr.f32.mxu0 0.0
      %5358 = vmatmul.mubr.f32.gmra.mxu0 %v5006
      %v5359 = vpop.f32.mrf.mxu0
      %v5360 = vadd.f32 %v4859, %v5359
      %v5361 = vpop.f32.mrf.mxu0
      %5362 = vmatprep.mubr.f32.mxu0 0.0
      %5363 = vmatmul.mubr.f32.gmra.mxu0 %v5009
      %v5364 = vpop.f32.mrf.mxu0
      %v5365 = vadd.f32 %v4859, %v5364
      %v5366 = vpop.f32.mrf.mxu0
      %5367 = vmatprep.mubr.f32.mxu0 0.0
      %5368 = vmatmul.mubr.f32.gmra.mxu0 %v5012
      %v5369 = vpop.f32.mrf.mxu0
      %v5370 = vadd.f32 %v4859, %v5369
      %v5371 = vpop.f32.mrf.mxu0
      %5372 = vmatprep.mubr.f32.mxu0 0.0
      %5373 = vmatmul.mubr.f32.gmra.mxu0 %v5015
      %v5374 = vpop.f32.mrf.mxu0
      %v5375 = vadd.f32 %v4859, %v5374
      %v5376 = vpop.f32.mrf.mxu0
      %5377 = vmatprep.mubr.f32.mxu0 0.0
      %5378 = vmatmul.mubr.f32.gmra.mxu0 %v5018
      %v5379 = vpop.f32.mrf.mxu0
      %v5380 = vadd.f32 %v4859, %v5379
      %v5381 = vpop.f32.mrf.mxu0
      %5382 = vmatprep.mubr.f32.mxu0 0.0
      %5383 = vmatmul.mubr.f32.gmra.mxu0 %v5021
      %v5384 = vpop.f32.mrf.mxu0
      %v5385 = vadd.f32 %v4859, %v5384
      %v5386 = vpop.f32.mrf.mxu0
      %5387 = vmatprep.mubr.f32.mxu0 0.0
      %5388 = vmatmul.mubr.f32.gmra.mxu0 %v5024
      %v5389 = vpop.f32.mrf.mxu0
      %v5390 = vadd.f32 %v4859, %v5389
      %v5391 = vpop.f32.mrf.mxu0
      %5392 = vmatprep.mubr.f32.mxu0 0.0
      %5393 = vmatmul.mubr.f32.gmra.mxu0 %v5027
      %v5394 = vpop.f32.mrf.mxu0
      %v5395 = vadd.f32 %v4859, %v5394
      %v5396 = vpop.f32.mrf.mxu0
      %5397 = vmatprep.mubr.f32.mxu0 0.0
      %5398 = vmatmul.mubr.f32.gmra.mxu0 %v5030
      %v5399 = vpop.f32.mrf.mxu0
      %v5400 = vadd.f32 %v4859, %v5399
      %v5401 = vpop.f32.mrf.mxu0
      %5402 = vmatprep.mubr.f32.mxu0 0.0
      %5403 = vmatmul.mubr.f32.gmra.mxu0 %v5033
      %v5404 = vpop.f32.mrf.mxu0
      %v5405 = vadd.f32 %v4859, %v5404
      %v5406 = vpop.f32.mrf.mxu0
      %5407 = vmatprep.mubr.f32.mxu0 0.0
      %5408 = vmatmul.mubr.f32.gmra.mxu0 %v5036
      %v5409 = vpop.f32.mrf.mxu0
      %v5410 = vadd.f32 %v4859, %v5409
      %v5411 = vpop.f32.mrf.mxu0
      %5412 = vmatprep.mubr.f32.mxu0 0.0
      %5413 = vmatmul.mubr.f32.gmra.mxu0 %v5039
      %v5414 = vpop.f32.mrf.mxu0
      %v5415 = vadd.f32 %v4859, %v5414
      %v5416 = vpop.f32.mrf.mxu0
      %5417 = vmatprep.mubr.f32.mxu0 0.0
      %5418 = vmatmul.mubr.f32.gmra.mxu0 %v5042
      %v5419 = vpop.f32.mrf.mxu0
      %v5420 = vadd.f32 %v4859, %v5419
      %v5421 = vpop.f32.mrf.mxu0
      %5422 = vmatprep.mubr.f32.mxu0 0.0
      %5423 = vmatmul.mubr.f32.gmra.mxu0 %v5045
      %v5424 = vpop.f32.mrf.mxu0
      %v5425 = vadd.f32 %v4859, %v5424
      %v5426 = vpop.f32.mrf.mxu0
      %5427 = vmatprep.mubr.f32.mxu0 0.0
      %5428 = vmatmul.mubr.f32.gmra.mxu0 %v5048
      %v5429 = vpop.f32.mrf.mxu0
      %v5430 = vadd.f32 %v4859, %v5429
      %v5431 = vpop.f32.mrf.mxu0
      %5432 = vmatprep.mubr.f32.mxu0 0.0
      %5433 = vmatmul.mubr.f32.gmra.mxu0 %v5051
      %v5434 = vpop.f32.mrf.mxu0
      %v5435 = vadd.f32 %v4859, %v5434
      %v5436 = vpop.f32.mrf.mxu0
      %5437 = vdwg.mxu0
      %vm5438 = vcmask 261120
      %5439 = vst.msk [vmem:[%s583] sm:$0xff] %vm5438, %v5120
      %5440 = vst.msk [vmem:[%s583 + $0x8] sm:$0xff] %vm5438, %v5125
      %5441 = vst.msk [vmem:[%s583 + $0x10] sm:$0xff] %vm5438, %v5130
      %5442 = vst.msk [vmem:[%s583 + $0x18] sm:$0xff] %vm5438, %v5135
      %5443 = vst.msk [vmem:[%s583 + $0x20] sm:$0xff] %vm5438, %v5140
      %5444 = vst.msk [vmem:[%s583 + $0x28] sm:$0xff] %vm5438, %v5145
      %5445 = vst.msk [vmem:[%s583 + $0x30] sm:$0xff] %vm5438, %v5150
      %5446 = vst.msk [vmem:[%s583 + $0x38] sm:$0xff] %vm5438, %v5155
      %5447 = vst.msk [vmem:[%s583 + $0x40] sm:$0xff] %vm5438, %v5160
      %5448 = vst.msk [vmem:[%s583 + $0x48] sm:$0xff] %vm5438, %v5165
      %5449 = vst.msk [vmem:[%s583 + $0x50] sm:$0xff] %vm5438, %v5170
      %5450 = vst.msk [vmem:[%s583 + $0x58] sm:$0xff] %vm5438, %v5175
      %5451 = vst.msk [vmem:[%s583 + $0x60] sm:$0xff] %vm5438, %v5180
      %5452 = vst.msk [vmem:[%s583 + $0x68] sm:$0xff] %vm5438, %v5185
      %5453 = vst.msk [vmem:[%s583 + $0x70] sm:$0xff] %vm5438, %v5190
      %5454 = vst.msk [vmem:[%s583 + $0x78] sm:$0xff] %vm5438, %v5195
      %5455 = vst.msk [vmem:[%s583 + $0x80] sm:$0xff] %vm5438, %v5200
      %5456 = vst.msk [vmem:[%s583 + $0x88] sm:$0xff] %vm5438, %v5205
      %5457 = vst.msk [vmem:[%s583 + $0x90] sm:$0xff] %vm5438, %v5210
      %5458 = vst.msk [vmem:[%s583 + $0x98] sm:$0xff] %vm5438, %v5215
      %5459 = vst.msk [vmem:[%s583 + $0xa0] sm:$0xff] %vm5438, %v5220
      %5460 = vst.msk [vmem:[%s583 + $0xa8] sm:$0xff] %vm5438, %v5225
      %5461 = vst.msk [vmem:[%s583 + $0xb0] sm:$0xff] %vm5438, %v5230
      %5462 = vst.msk [vmem:[%s583 + $0xb8] sm:$0xff] %vm5438, %v5235
      %5463 = vst.msk [vmem:[%s583 + $0xc0] sm:$0xff] %vm5438, %v5240
      %5464 = vst.msk [vmem:[%s583 + $0xc8] sm:$0xff] %vm5438, %v5245
      %5465 = vst.msk [vmem:[%s583 + $0xd0] sm:$0xff] %vm5438, %v5250
      %5466 = vst.msk [vmem:[%s583 + $0xd8] sm:$0xff] %vm5438, %v5255
      %5467 = vst.msk [vmem:[%s583 + $0xe0] sm:$0xff] %vm5438, %v5260
      %5468 = vst.msk [vmem:[%s583 + $0xe8] sm:$0xff] %vm5438, %v5265
      %5469 = vst.msk [vmem:[%s583 + $0xf0] sm:$0xff] %vm5438, %v5270
      %5470 = vst.msk [vmem:[%s583 + $0xf8] sm:$0xff] %vm5438, %v5275
      %5471 = vst.msk [vmem:[%s583 + $0x100] sm:$0xff] %vm5438, %v5280
      %5472 = vst.msk [vmem:[%s583 + $0x108] sm:$0xff] %vm5438, %v5285
      %5473 = vst.msk [vmem:[%s583 + $0x110] sm:$0xff] %vm5438, %v5290
      %5474 = vst.msk [vmem:[%s583 + $0x118] sm:$0xff] %vm5438, %v5295
      %5475 = vst.msk [vmem:[%s583 + $0x120] sm:$0xff] %vm5438, %v5300
      %5476 = vst.msk [vmem:[%s583 + $0x128] sm:$0xff] %vm5438, %v5305
      %5477 = vst.msk [vmem:[%s583 + $0x130] sm:$0xff] %vm5438, %v5310
      %5478 = vst.msk [vmem:[%s583 + $0x138] sm:$0xff] %vm5438, %v5315
      %5479 = vst.msk [vmem:[%s583 + $0x140] sm:$0xff] %vm5438, %v5320
      %5480 = vst.msk [vmem:[%s583 + $0x148] sm:$0xff] %vm5438, %v5325
      %5481 = vst.msk [vmem:[%s583 + $0x150] sm:$0xff] %vm5438, %v5330
      %5482 = vst.msk [vmem:[%s583 + $0x158] sm:$0xff] %vm5438, %v5335
      %5483 = vst.msk [vmem:[%s583 + $0x160] sm:$0xff] %vm5438, %v5340
      %5484 = vst.msk [vmem:[%s583 + $0x168] sm:$0xff] %vm5438, %v5345
      %5485 = vst.msk [vmem:[%s583 + $0x170] sm:$0xff] %vm5438, %v5350
      %5486 = vst.msk [vmem:[%s583 + $0x178] sm:$0xff] %vm5438, %v5355
      %5487 = vst.msk [vmem:[%s583 + $0x180] sm:$0xff] %vm5438, %v5360
      %5488 = vst.msk [vmem:[%s583 + $0x188] sm:$0xff] %vm5438, %v5365
      %5489 = vst.msk [vmem:[%s583 + $0x190] sm:$0xff] %vm5438, %v5370
      %5490 = vst.msk [vmem:[%s583 + $0x198] sm:$0xff] %vm5438, %v5375
      %5491 = vst.msk [vmem:[%s583 + $0x1a0] sm:$0xff] %vm5438, %v5380
      %5492 = vst.msk [vmem:[%s583 + $0x1a8] sm:$0xff] %vm5438, %v5385
      %5493 = vst.msk [vmem:[%s583 + $0x1b0] sm:$0xff] %vm5438, %v5390
      %5494 = vst.msk [vmem:[%s583 + $0x1b8] sm:$0xff] %vm5438, %v5395
      %5495 = vst.msk [vmem:[%s583 + $0x1c0] sm:$0xff] %vm5438, %v5400
      %5496 = vst.msk [vmem:[%s583 + $0x1c8] sm:$0xff] %vm5438, %v5405
      %5497 = vst.msk [vmem:[%s583 + $0x1d0] sm:$0xff] %vm5438, %v5410
      %5498 = vst.msk [vmem:[%s583 + $0x1d8] sm:$0xff] %vm5438, %v5415
      %5499 = vst.msk [vmem:[%s583 + $0x1e0] sm:$0xff] %vm5438, %v5420
      %5500 = vst.msk [vmem:[%s583 + $0x1e8] sm:$0xff] %vm5438, %v5425
      %5501 = vst.msk [vmem:[%s583 + $0x1f0] sm:$0xff] %vm5438, %v5430
      %5502 = vst.msk [vmem:[%s583 + $0x1f8] sm:$0xff] %vm5438, %v5435
      %p5503 = scmp.lt.s32.totalorder %s25, 1
      %s5504 = scalar_select %p5503, %s25, 1
      %s5505 = smul.addr %s5504, 64
      %s5506 = smul.addr %s5505, 8
      %s5507 = scalar_lea.vmem %s14, %s5506
      // Predicated region
      $region77: #{_forward_impl.5} parent=75 // pred_check
        %p5508 = pneg %p377
      $region78: #{_forward_impl.5} parent=75 // pred_check_branch
        %5510 = sbr.rel (%p5508) target = $region80
      $region79: #{_forward_impl.5} parent=75 // pred_region
        _
      $region80: #{_forward_impl.5} parent=75 // pred_fallthru
        _
    $region76: #{_forward_impl.5} parent=5 // pred_fallthru
      _
    %p5511 = scmp.le.s32.totalorder 2, %s20
    // Predicated region
    $region81: #{_forward_impl.5} parent=5 // pred_check
      %p5512 = pneg %p5511
    $region82: #{_forward_impl.5} parent=5 // pred_check_branch
      %5514 = sbr.rel (%p5512) target = $region84
    $region83: #{_forward_impl.5} parent=5 // pred_region
      %s5515 = ssub.s32 %s20, 2
      // Predicated region
      $region85: #{_forward_impl.5} parent=83 // pred_check
        %p5516 = pneg %p383
      $region86: #{_forward_impl.5} parent=83 // pred_check_branch
        %5518 = sbr.rel (%p5516) target = $region88
      $region87: #{_forward_impl.5} parent=83 // pred_region
        %p5519 = scmp.lt.s32.totalorder %s26, 1
        %s5520 = scalar_select %p5519, %s26, 1
        %s5521 = smul.addr %s5520, 64
        %s5522 = smul.addr %s5521, 8
        %s5523 = scalar_lea.vmem %s14, %s5522
      $region88: #{_forward_impl.5} parent=83 // pred_fallthru
        _
    $region84: #{_forward_impl.5} parent=5 // pred_fallthru
      _
  $region6: #{_forward_impl.5} parent=0 // loop_footer
    %s24 = sadd.s32 1, %s20
  $region7: #{_forward_impl.5} parent=0 // loop_footer_branch
    %19 = sbr.rel target = $region3
  $region8: #{_forward_impl.5} parent=0 // loop_exit
    _

</llo_original>
